<compile_context>
chip_gen: v7x
topology: tpu7x:2x2x1
jax: 0.10.0
libtpu: 0.0.40
codegen_flags: <defaults>
</compile_context>

<pallas_src>
import functools

import jax
import jax.numpy as jnp
from jax import lax
from jax.experimental import pallas as pl
from jax.experimental.pallas import tpu as pltpu

C_IN = 300        # embedding dim (Conv1d(300, ...))
NC1 = 32          # first-stage conv channels per branch
NC2 = 64          # second-stage conv channels per branch
GC1 = 2 * NC1     # 64  : two branches stacked along conv1 C_out
GC2 = 2 * NC2     # 128 : two branches stacked along conv2 C_out (block-diag)
NFEAT = 6 * NC2   # 384
POOL = 3          # max_pool1d(kernel=3) -> stride 3, padding 1, floor mode


# ----------------------------------------------------------------------------
# Fused Pallas kernel: all six branches, TB batch elements per grid step
# ----------------------------------------------------------------------------
def _cnn2_kernel(x_ref, wA_ref, bA_ref, wB_ref, bB_ref, wC_ref, bC_ref,
                 w2A_ref, b2A_ref, w2B_ref, b2B_ref, w2C_ref, b2C_ref,
                 o_ref, zbuf_ref, *, L, TB):
    """x_ref : (TB*(L+4), 300) bf16   zero-padded embeddings, batch-flattened
       w{A,B,C}_ref : (K1, 300, 64) bf16   conv1 weights (two branches stacked)
       b{A,B,C}_ref : (1, 64) f32
       w2*_ref : (3, 64, 128) f32   conv2 weights (block-diagonal per pair)
       b2*_ref : (1, 128) f32
       o_ref  : (TB, 384) f32       per-sequence global-max features
       zbuf_ref: VMEM scratch used as conv2's zero-padded (padding=1) input."""
    Lpad = L + 4

    def run_group(w1_ref, b1_ref, w2_ref, b2_ref, K1, off, col):
        L1 = (Lpad - 2 * off) - K1 + 1      # conv1 output length per sequence
        Lp = (L1 - 1) // POOL + 1           # pooled length (PyTorch floor mode)
        PC = (TB - 1) * Lpad + L1           # rows of batch-flattened conv1 out
        CH = Lp + 2                         # per-sequence chunk in zbuf

        # ---- conv1 + bias + ReLU (batch flattened into the matmul M dim) ----
        # Row q of c1 holds sequence b = q // Lpad at conv position i = q % Lpad;
        # rows that straddle two sequences are junk and are never read below.
        acc = jnp.dot(x_ref[off:off + PC, :], w1_ref[0],
                      preferred_element_type=jnp.float32)
        for k in range(1, K1):
            acc = acc + jnp.dot(x_ref[off + k:off + k + PC, :], w1_ref[k],
                                preferred_element_type=jnp.float32)
        c1 = jnp.maximum(acc + b1_ref[...], 0.0)               # (PC, 64) f32

        # ---- max_pool1d(3, stride 3, padding 1): pooled rows go straight ----
        # ---- into the zero-initialised conv2 input buffer (rows 0 / Lp+1 ----
        # ---- of every per-sequence chunk stay zero == Conv1d padding=1) -----
        zbuf_ref[0:TB * CH, :] = jnp.zeros((TB * CH, GC1), jnp.float32)
        for b in range(TB):
            base = b * Lpad
            for j in range(Lp):
                lo = base + max(0, POOL * j - 1)
                hi = base + min(L1, POOL * j + 2)
                zbuf_ref[b * CH + 1 + j:b * CH + 2 + j, :] = jnp.max(
                    c1[lo:hi, :], axis=0, keepdims=True)

        # ---- conv2 (kernel 3, padding 1) with block-diagonal 64->128 weights -
        M2 = TB * CH - 2
        acc2 = jnp.dot(zbuf_ref[0:M2, :], w2_ref[0],
                       preferred_element_type=jnp.float32)
        for k in range(1, 3):
            acc2 = acc2 + jnp.dot(zbuf_ref[k:k + M2, :], w2_ref[k],
                                  preferred_element_type=jnp.float32)
        c2 = jnp.maximum(acc2 + b2_ref[...], 0.0)              # (M2, 128) f32

        # ---- global max over length, one 128-lane-aligned store per sequence
        for b in range(TB):
            o_ref[b:b + 1, col:col + GC2] = jnp.max(
                c2[b * CH:b * CH + Lp, :], axis=0, keepdims=True)

    run_group(wA_ref, bA_ref, w2A_ref, b2A_ref, 3, 1, 0)        # conv1 / conv4
    run_group(wB_ref, bB_ref, w2B_ref, b2B_ref, 4, 0, GC2)      # conv2 / conv5
    run_group(wC_ref, bC_ref, w2C_ref, b2C_ref, 5, 0, 2 * GC2)  # conv3 / conv6


# ----------------------------------------------------------------------------
# Weight stacking helpers (pairs sharing a conv1 kernel size)
# ----------------------------------------------------------------------------
def _stack_conv1(params, n_a, n_b):
    w = jnp.concatenate([params[n_a][0], params[n_b][0]], axis=2)   # (K,300,64)
    b = jnp.concatenate([params[n_a][1], params[n_b][1]]).reshape(1, GC1)
    return w.astype(jnp.bfloat16), b.astype(jnp.float32)


def _stack_conv2(params, n_a, n_b):
    wa, ba = params[n_a]
    wb, bb = params[n_b]
    zero = jnp.zeros_like(wa)
    w = jnp.concatenate([jnp.concatenate([wa, zero], axis=2),
                         jnp.concatenate([zero, wb], axis=2)], axis=1)  # (3,64,128)
    b = jnp.concatenate([ba, bb]).reshape(1, GC2)
    return w.astype(jnp.float32), b.astype(jnp.float32)


# ----------------------------------------------------------------------------
# Full forward (training=False, so dropout is the identity)
# ----------------------------------------------------------------------------
def cnn2_forward(tokens, params, tb=8):
    """CNN2.forward(batch, training=False). tokens: (B, L) int32 -> (B,) logits.

    tb = batch elements per grid step (multiple of 8).  On v7x keep B/tb >= 4-8
    so both TensorCores get several grid steps; for realistic L size tb so
    2 * tb * (L+4) * 300 * 2B stays well under the scoped VMEM limit."""
    emb = params["emb"]
    x = emb[tokens]                                    # (B, L, 300) f32, NLC
    B, L, _ = x.shape
    Lpad = L + 4                                       # single shared pad=2
    Bp = ((B + tb - 1) // tb) * tb                     # pad batch to tile size
    xf = jnp.pad(x, ((0, Bp - B), (2, 2), (0, 0))).astype(jnp.bfloat16)
    xf = xf.reshape(Bp * Lpad, C_IN)                   # batch-flattened

    # w and w_static are initialised to the same embedding table, so
    # x_dynamic == x_static; branches 4-6 only differ in their conv weights.
    wA, bA = _stack_conv1(params, "c1", "c4")          # k=3 pair
    wB, bB = _stack_conv1(params, "c2", "c5")          # k=4 pair
    wC, bC = _stack_conv1(params, "c3", "c6")          # k=5 pair
    w2A, b2A = _stack_conv2(params, "c21", "c24")
    w2B, b2B = _stack_conv2(params, "c22", "c25")
    w2C, b2C = _stack_conv2(params, "c23", "c26")

    max_lp = max((l1 - 1) // POOL + 1 for l1 in (L, L + 1, L))
    kern = functools.partial(_cnn2_kernel, L=L, TB=tb)

    def wspec1(k):
        return pl.BlockSpec((k, C_IN, GC1), lambda g: (0, 0, 0))

    feats = pl.pallas_call(
        kern,
        out_shape=jax.ShapeDtypeStruct((Bp, NFEAT), jnp.float32),
        grid=(Bp // tb,),
        in_specs=[
            pl.BlockSpec((tb * Lpad, C_IN), lambda g: (g, 0)),
            wspec1(3), pl.BlockSpec((1, GC1), lambda g: (0, 0)),
            wspec1(4), pl.BlockSpec((1, GC1), lambda g: (0, 0)),
            wspec1(5), pl.BlockSpec((1, GC1), lambda g: (0, 0)),
            pl.BlockSpec((3, GC1, GC2), lambda g: (0, 0, 0)),
            pl.BlockSpec((1, GC2), lambda g: (0, 0)),
            pl.BlockSpec((3, GC1, GC2), lambda g: (0, 0, 0)),
            pl.BlockSpec((1, GC2), lambda g: (0, 0)),
            pl.BlockSpec((3, GC1, GC2), lambda g: (0, 0, 0)),
            pl.BlockSpec((1, GC2), lambda g: (0, 0)),
        ],
        out_specs=pl.BlockSpec((tb, NFEAT), lambda g: (g, 0)),
        scratch_shapes=[pltpu.VMEM((tb * (max_lp + 2), GC1), jnp.float32)],
        compiler_params=pltpu.CompilerParams(dimension_semantics=("parallel",)),
    )(xf, wA, bA, wB, bB, wC, bC, w2A, b2A, w2B, b2B, w2C, b2C)

    feats = feats[:B]     # (B, 384); 64-wide blocks: [z21, z24, z22, z25, z23, z26]

    # Final Linear(384, 1): permute its rows to the kernel's feature order and
    # let XLA fuse the tiny matmul (no dedicated pallas_call).
    fc_w = params["fc_w"].reshape(6, NC2, 1)[
        jnp.array([0, 3, 1, 4, 2, 5])].reshape(NFEAT, 1)
    # TODO(synk): F.dropout(z, 0.5, training) is the identity at inference
    # (training=False), so it is omitted.
    y = feats @ fc_w + params["fc_b"]
    return y[:, 0]        # .squeeze()


# ----------------------------------------------------------------------------
# Pure-JAX reference (lax.conv / lax.reduce_window) for verification.
# conv1 uses bf16 inputs/weights with f32 accumulation, matching the kernel.
# ----------------------------------------------------------------------------
def cnn2_reference(tokens, params):
    emb = params["emb"]
    x = jnp.transpose(emb[tokens], (0, 2, 1))          # (B, 300, L)  NCL
    x_bf = x.astype(jnp.bfloat16)

    def conv1d(v, w_kio, b, pad):
        w = jnp.transpose(w_kio, (2, 1, 0)).astype(v.dtype)   # (C_out, C_in, K)
        out = lax.conv_general_dilated(
            v, w, (1,), [(pad, pad)],
            dimension_numbers=("NCH", "OIH", "NCH"),
            preferred_element_type=jnp.float32)
        return out + b[None, :, None]

    def maxpool3(v):
        return lax.reduce_window(v, -jnp.inf, lax.max,
                                 (1, 1, 3), (1, 1, 3),
                                 [(0, 0), (0, 0), (1, 1)])

    relu = lambda v: jnp.maximum(v, 0.0)
    cfgs = [("c1", "c21", 1), ("c2", "c22", 2), ("c3", "c23", 2),
            ("c4", "c24", 1), ("c5", "c25", 2), ("c6", "c26", 2)]
    feats = []
    for n1, n2, p in cfgs:
        w1, b1 = params[n1]
        w2, b2 = params[n2]
        c = relu(conv1d(x_bf, w1, b1, p))   # conv1 in bf16 (like the kernel)
        zz = maxpool3(c)
        c2 = relu(conv1d(zz, w2, b2, 1))    # conv2 in f32 (like the kernel)
        feats.append(jnp.max(c2, axis=2))
    zc = jnp.concatenate(feats, axis=1)
    return (zc @ params["fc_w"] + params["fc_b"])[:, 0]


# ----------------------------------------------------------------------------
def init_params(key, vocab_size):
    ks = iter(jax.random.split(key, 32))
    p = {"emb": jax.random.normal(next(ks), (vocab_size, C_IN),
                                  jnp.float32) * 0.1}
    first_ks = {"c1": 3, "c2": 4, "c3": 5, "c4": 3, "c5": 4, "c6": 5}
    for name, k in first_ks.items():
        w = jax.random.normal(next(ks), (k, C_IN, NC1), jnp.float32) * 0.05
        b = jax.random.normal(next(ks), (NC1,), jnp.float32) * 0.05
        p[name] = (w, b)
    for name in ["c21", "c22", "c23", "c24", "c25", "c26"]:
        w = jax.random.normal(next(ks), (3, NC1, NC2), jnp.float32) * 0.05
        b = jax.random.normal(next(ks), (NC2,), jnp.float32) * 0.05
        p[name] = (w, b)
    p["fc_w"] = jax.random.normal(next(ks), (NC2 * 6, 1), jnp.float32) * 0.05
    p["fc_b"] = jax.random.normal(next(ks), (1,), jnp.float32) * 0.05
    return p


if __name__ == "__main__":
    VOCAB, B, L = 50, 2, 12
    key = jax.random.PRNGKey(0)
    k_par, k_tok = jax.random.split(key)
    params = init_params(k_par, VOCAB)
    tokens = jax.random.randint(k_tok, (B, L), 0, VOCAB, dtype=jnp.int32)

    fwd = jax.jit(lambda t: cnn2_forward(t, params))
    y = jax.block_until_ready(fwd(tokens))

    y_ref = jax.block_until_ready(cnn2_reference(tokens, params))
    assert y.shape == (B,)
    assert jnp.allclose(y, y_ref, atol=2e-3, rtol=2e-3), (y, y_ref)
    print("KERNEL_OK")
</pallas_src>

<mosaic_0001>
module attributes {stable_mosaic.version = 11 : i64} {
  func.func @_cnn2_kernel(%arg0: i32, %arg1: memref<128x300xbf16, #tpu.memory_space<vmem>>, %arg2: memref<3x300x64xbf16, #tpu.memory_space<vmem>>, %arg3: memref<1x64xf32, #tpu.memory_space<vmem>>, %arg4: memref<4x300x64xbf16, #tpu.memory_space<vmem>>, %arg5: memref<1x64xf32, #tpu.memory_space<vmem>>, %arg6: memref<5x300x64xbf16, #tpu.memory_space<vmem>>, %arg7: memref<1x64xf32, #tpu.memory_space<vmem>>, %arg8: memref<3x64x128xf32, #tpu.memory_space<vmem>>, %arg9: memref<1x128xf32, #tpu.memory_space<vmem>>, %arg10: memref<3x64x128xf32, #tpu.memory_space<vmem>>, %arg11: memref<1x128xf32, #tpu.memory_space<vmem>>, %arg12: memref<3x64x128xf32, #tpu.memory_space<vmem>>, %arg13: memref<1x128xf32, #tpu.memory_space<vmem>>, %arg14: memref<8x384xf32, #tpu.memory_space<vmem>>, %arg15: memref<56x64xf32, #tpu.memory_space<vmem>>) attributes {dimension_semantics = [#tpu.dimension_semantics<parallel>], iteration_bounds = array<i64: 1>, scalar_prefetch = 0 : i64, scratch_operands = 1 : i64, tpu.core_type = #tpu.core_type<tc>, window_params = [{transform_indices = @transform_0, window_bounds = array<i64: 128, 300>}, {pipeline_mode = #tpu.pipeline_mode<synchronous>, transform_indices = @transform_1, window_bounds = array<i64: 3, 300, 64>}, {pipeline_mode = #tpu.pipeline_mode<synchronous>, transform_indices = @transform_2, window_bounds = array<i64: 1, 64>}, {pipeline_mode = #tpu.pipeline_mode<synchronous>, transform_indices = @transform_3, window_bounds = array<i64: 4, 300, 64>}, {pipeline_mode = #tpu.pipeline_mode<synchronous>, transform_indices = @transform_4, window_bounds = array<i64: 1, 64>}, {pipeline_mode = #tpu.pipeline_mode<synchronous>, transform_indices = @transform_5, window_bounds = array<i64: 5, 300, 64>}, {pipeline_mode = #tpu.pipeline_mode<synchronous>, transform_indices = @transform_6, window_bounds = array<i64: 1, 64>}, {pipeline_mode = #tpu.pipeline_mode<synchronous>, transform_indices = @transform_7, window_bounds = array<i64: 3, 64, 128>}, {pipeline_mode = #tpu.pipeline_mode<synchronous>, transform_indices = @transform_8, window_bounds = array<i64: 1, 128>}, {pipeline_mode = #tpu.pipeline_mode<synchronous>, transform_indices = @transform_9, window_bounds = array<i64: 3, 64, 128>}, {pipeline_mode = #tpu.pipeline_mode<synchronous>, transform_indices = @transform_10, window_bounds = array<i64: 1, 128>}, {pipeline_mode = #tpu.pipeline_mode<synchronous>, transform_indices = @transform_11, window_bounds = array<i64: 3, 64, 128>}, {pipeline_mode = #tpu.pipeline_mode<synchronous>, transform_indices = @transform_12, window_bounds = array<i64: 1, 128>}, {transform_indices = @transform_13, window_bounds = array<i64: 8, 384>}]} {
    %c1 = arith.constant 1 : index
    %c0 = arith.constant 0 : index
    %0 = vector.load %arg1[%c1, %c0] : memref<128x300xbf16, #tpu.memory_space<vmem>>, vector<124x300xbf16>
    %c0_0 = arith.constant 0 : index
    %c0_1 = arith.constant 0 : index
    %c0_2 = arith.constant 0 : index
    %1 = vector.load %arg2[%c0_0, %c0_1, %c0_2] : memref<3x300x64xbf16, #tpu.memory_space<vmem>>, vector<1x300x64xbf16>
    %2 = vector.shape_cast %1 : vector<1x300x64xbf16> to vector<300x64xbf16>
    %cst = arith.constant dense<0.000000e+00> : vector<124x64xf32>
    %3 = tpu.matmul %0, %2, %cst {dimension_numbers = #tpu.dot_dimension_numbers<[1], [0], [0], [1], [0, 0, 1, 1], [], []>} : vector<124x300xbf16>, vector<300x64xbf16>, vector<124x64xf32> -> vector<124x64xf32>
    %c2 = arith.constant 2 : index
    %c0_3 = arith.constant 0 : index
    %4 = vector.load %arg1[%c2, %c0_3] : memref<128x300xbf16, #tpu.memory_space<vmem>>, vector<124x300xbf16>
    %c1_4 = arith.constant 1 : index
    %c0_5 = arith.constant 0 : index
    %c0_6 = arith.constant 0 : index
    %5 = vector.load %arg2[%c1_4, %c0_5, %c0_6] : memref<3x300x64xbf16, #tpu.memory_space<vmem>>, vector<1x300x64xbf16>
    %6 = vector.shape_cast %5 : vector<1x300x64xbf16> to vector<300x64xbf16>
    %cst_7 = arith.constant dense<0.000000e+00> : vector<124x64xf32>
    %7 = tpu.matmul %4, %6, %cst_7 {dimension_numbers = #tpu.dot_dimension_numbers<[1], [0], [0], [1], [0, 0, 1, 1], [], []>} : vector<124x300xbf16>, vector<300x64xbf16>, vector<124x64xf32> -> vector<124x64xf32>
    %8 = arith.addf %3, %7 : vector<124x64xf32>
    %c3 = arith.constant 3 : index
    %c0_8 = arith.constant 0 : index
    %9 = vector.load %arg1[%c3, %c0_8] : memref<128x300xbf16, #tpu.memory_space<vmem>>, vector<124x300xbf16>
    %c2_9 = arith.constant 2 : index
    %c0_10 = arith.constant 0 : index
    %c0_11 = arith.constant 0 : index
    %10 = vector.load %arg2[%c2_9, %c0_10, %c0_11] : memref<3x300x64xbf16, #tpu.memory_space<vmem>>, vector<1x300x64xbf16>
    %11 = vector.shape_cast %10 : vector<1x300x64xbf16> to vector<300x64xbf16>
    %cst_12 = arith.constant dense<0.000000e+00> : vector<124x64xf32>
    %12 = tpu.matmul %9, %11, %cst_12 {dimension_numbers = #tpu.dot_dimension_numbers<[1], [0], [0], [1], [0, 0, 1, 1], [], []>} : vector<124x300xbf16>, vector<300x64xbf16>, vector<124x64xf32> -> vector<124x64xf32>
    %13 = arith.addf %8, %12 : vector<124x64xf32>
    %c0_13 = arith.constant 0 : index
    %c0_14 = arith.constant 0 : index
    %14 = vector.load %arg3[%c0_13, %c0_14] : memref<1x64xf32, #tpu.memory_space<vmem>>, vector<1x64xf32>
    %15 = vector.broadcast %14 : vector<1x64xf32> to vector<124x64xf32>
    %16 = arith.addf %13, %15 : vector<124x64xf32>
    %cst_15 = arith.constant 0.000000e+00 : f32
    %17 = vector.broadcast %cst_15 : f32 to vector<124x64xf32>
    %18 = arith.maximumf %16, %17 : vector<124x64xf32>
    %cst_16 = arith.constant 0.000000e+00 : f32
    %19 = vector.broadcast %cst_16 : f32 to vector<48x64xf32>
    %c0_17 = arith.constant 0 : index
    %c0_18 = arith.constant 0 : index
    %20 = vector.load %arg15[%c0_17, %c0_18] : memref<56x64xf32, #tpu.memory_space<vmem>>, vector<48x64xf32>
    tpu.vector_store %arg15[%c0_17, %c0_18], %19 {strides = array<i32>} : memref<56x64xf32, #tpu.memory_space<vmem>>, vector<48x64xf32>,
    %21 = vector.extract_strided_slice %18 {offsets = [0, 0], sizes = [2, 64], strides = [1, 1]} : vector<124x64xf32> to vector<2x64xf32>
    %cst_19 = arith.constant dense<0xFF800000> : vector<64xf32>
    %22 = vector.multi_reduction <maximumf>, %21, %cst_19 [0] : vector<2x64xf32> to vector<64xf32>
    %23 = vector.shape_cast %22 : vector<64xf32> to vector<1x64xf32>
    %c1_20 = arith.constant 1 : index
    %c0_21 = arith.constant 0 : index
    %24 = vector.load %arg15[%c1_20, %c0_21] : memref<56x64xf32, #tpu.memory_space<vmem>>, vector<1x64xf32>
    tpu.vector_store %arg15[%c1_20, %c0_21], %23 {strides = array<i32>} : memref<56x64xf32, #tpu.memory_space<vmem>>, vector<1x64xf32>,
    %25 = vector.extract_strided_slice %18 {offsets = [2, 0], sizes = [3, 64], strides = [1, 1]} : vector<124x64xf32> to vector<3x64xf32>
    %cst_22 = arith.constant dense<0xFF800000> : vector<64xf32>
    %26 = vector.multi_reduction <maximumf>, %25, %cst_22 [0] : vector<3x64xf32> to vector<64xf32>
    %27 = vector.shape_cast %26 : vector<64xf32> to vector<1x64xf32>
    %c2_23 = arith.constant 2 : index
    %c0_24 = arith.constant 0 : index
    %28 = vector.load %arg15[%c2_23, %c0_24] : memref<56x64xf32, #tpu.memory_space<vmem>>, vector<1x64xf32>
    tpu.vector_store %arg15[%c2_23, %c0_24], %27 {strides = array<i32>} : memref<56x64xf32, #tpu.memory_space<vmem>>, vector<1x64xf32>,
    %29 = vector.extract_strided_slice %18 {offsets = [5, 0], sizes = [3, 64], strides = [1, 1]} : vector<124x64xf32> to vector<3x64xf32>
    %cst_25 = arith.constant dense<0xFF800000> : vector<64xf32>
    %30 = vector.multi_reduction <maximumf>, %29, %cst_25 [0] : vector<3x64xf32> to vector<64xf32>
    %31 = vector.shape_cast %30 : vector<64xf32> to vector<1x64xf32>
    %c3_26 = arith.constant 3 : index
    %c0_27 = arith.constant 0 : index
    %32 = vector.load %arg15[%c3_26, %c0_27] : memref<56x64xf32, #tpu.memory_space<vmem>>, vector<1x64xf32>
    tpu.vector_store %arg15[%c3_26, %c0_27], %31 {strides = array<i32>} : memref<56x64xf32, #tpu.memory_space<vmem>>, vector<1x64xf32>,
    %33 = vector.extract_strided_slice %18 {offsets = [8, 0], sizes = [3, 64], strides = [1, 1]} : vector<124x64xf32> to vector<3x64xf32>
    %cst_28 = arith.constant dense<0xFF800000> : vector<64xf32>
    %34 = vector.multi_reduction <maximumf>, %33, %cst_28 [0] : vector<3x64xf32> to vector<64xf32>
    %35 = vector.shape_cast %34 : vector<64xf32> to vector<1x64xf32>
    %c4 = arith.constant 4 : index
    %c0_29 = arith.constant 0 : index
    %36 = vector.load %arg15[%c4, %c0_29] : memref<56x64xf32, #tpu.memory_space<vmem>>, vector<1x64xf32>
    tpu.vector_store %arg15[%c4, %c0_29], %35 {strides = array<i32>} : memref<56x64xf32, #tpu.memory_space<vmem>>, vector<1x64xf32>,
    %37 = vector.extract_strided_slice %18 {offsets = [16, 0], sizes = [2, 64], strides = [1, 1]} : vector<124x64xf32> to vector<2x64xf32>
    %cst_30 = arith.constant dense<0xFF800000> : vector<64xf32>
    %38 = vector.multi_reduction <maximumf>, %37, %cst_30 [0] : vector<2x64xf32> to vector<64xf32>
    %39 = vector.shape_cast %38 : vector<64xf32> to vector<1x64xf32>
    %c7 = arith.constant 7 : index
    %c0_31 = arith.constant 0 : index
    %40 = vector.load %arg15[%c7, %c0_31] : memref<56x64xf32, #tpu.memory_space<vmem>>, vector<1x64xf32>
    tpu.vector_store %arg15[%c7, %c0_31], %39 {strides = array<i32>} : memref<56x64xf32, #tpu.memory_space<vmem>>, vector<1x64xf32>,
    %41 = vector.extract_strided_slice %18 {offsets = [18, 0], sizes = [3, 64], strides = [1, 1]} : vector<124x64xf32> to vector<3x64xf32>
    %cst_32 = arith.constant dense<0xFF800000> : vector<64xf32>
    %42 = vector.multi_reduction <maximumf>, %41, %cst_32 [0] : vector<3x64xf32> to vector<64xf32>
    %43 = vector.shape_cast %42 : vector<64xf32> to vector<1x64xf32>
    %c8 = arith.constant 8 : index
    %c0_33 = arith.constant 0 : index
    %44 = vector.load %arg15[%c8, %c0_33] : memref<56x64xf32, #tpu.memory_space<vmem>>, vector<1x64xf32>
    tpu.vector_store %arg15[%c8, %c0_33], %43 {strides = array<i32>} : memref<56x64xf32, #tpu.memory_space<vmem>>, vector<1x64xf32>,
    %45 = vector.extract_strided_slice %18 {offsets = [21, 0], sizes = [3, 64], strides = [1, 1]} : vector<124x64xf32> to vector<3x64xf32>
    %cst_34 = arith.constant dense<0xFF800000> : vector<64xf32>
    %46 = vector.multi_reduction <maximumf>, %45, %cst_34 [0] : vector<3x64xf32> to vector<64xf32>
    %47 = vector.shape_cast %46 : vector<64xf32> to vector<1x64xf32>
    %c9 = arith.constant 9 : index
    %c0_35 = arith.constant 0 : index
    %48 = vector.load %arg15[%c9, %c0_35] : memref<56x64xf32, #tpu.memory_space<vmem>>, vector<1x64xf32>
    tpu.vector_store %arg15[%c9, %c0_35], %47 {strides = array<i32>} : memref<56x64xf32, #tpu.memory_space<vmem>>, vector<1x64xf32>,
    %49 = vector.extract_strided_slice %18 {offsets = [24, 0], sizes = [3, 64], strides = [1, 1]} : vector<124x64xf32> to vector<3x64xf32>
    %cst_36 = arith.constant dense<0xFF800000> : vector<64xf32>
    %50 = vector.multi_reduction <maximumf>, %49, %cst_36 [0] : vector<3x64xf32> to vector<64xf32>
    %51 = vector.shape_cast %50 : vector<64xf32> to vector<1x64xf32>
    %c10 = arith.constant 10 : index
    %c0_37 = arith.constant 0 : index
    %52 = vector.load %arg15[%c10, %c0_37] : memref<56x64xf32, #tpu.memory_space<vmem>>, vector<1x64xf32>
    tpu.vector_store %arg15[%c10, %c0_37], %51 {strides = array<i32>} : memref<56x64xf32, #tpu.memory_space<vmem>>, vector<1x64xf32>,
    %53 = vector.extract_strided_slice %18 {offsets = [32, 0], sizes = [2, 64], strides = [1, 1]} : vector<124x64xf32> to vector<2x64xf32>
    %cst_38 = arith.constant dense<0xFF800000> : vector<64xf32>
    %54 = vector.multi_reduction <maximumf>, %53, %cst_38 [0] : vector<2x64xf32> to vector<64xf32>
    %55 = vector.shape_cast %54 : vector<64xf32> to vector<1x64xf32>
    %c13 = arith.constant 13 : index
    %c0_39 = arith.constant 0 : index
    %56 = vector.load %arg15[%c13, %c0_39] : memref<56x64xf32, #tpu.memory_space<vmem>>, vector<1x64xf32>
    tpu.vector_store %arg15[%c13, %c0_39], %55 {strides = array<i32>} : memref<56x64xf32, #tpu.memory_space<vmem>>, vector<1x64xf32>,
    %57 = vector.extract_strided_slice %18 {offsets = [34, 0], sizes = [3, 64], strides = [1, 1]} : vector<124x64xf32> to vector<3x64xf32>
    %cst_40 = arith.constant dense<0xFF800000> : vector<64xf32>
    %58 = vector.multi_reduction <maximumf>, %57, %cst_40 [0] : vector<3x64xf32> to vector<64xf32>
    %59 = vector.shape_cast %58 : vector<64xf32> to vector<1x64xf32>
    %c14 = arith.constant 14 : index
    %c0_41 = arith.constant 0 : index
    %60 = vector.load %arg15[%c14, %c0_41] : memref<56x64xf32, #tpu.memory_space<vmem>>, vector<1x64xf32>
    tpu.vector_store %arg15[%c14, %c0_41], %59 {strides = array<i32>} : memref<56x64xf32, #tpu.memory_space<vmem>>, vector<1x64xf32>,
    %61 = vector.extract_strided_slice %18 {offsets = [37, 0], sizes = [3, 64], strides = [1, 1]} : vector<124x64xf32> to vector<3x64xf32>
    %cst_42 = arith.constant dense<0xFF800000> : vector<64xf32>
    %62 = vector.multi_reduction <maximumf>, %61, %cst_42 [0] : vector<3x64xf32> to vector<64xf32>
    %63 = vector.shape_cast %62 : vector<64xf32> to vector<1x64xf32>
    %c15 = arith.constant 15 : index
    %c0_43 = arith.constant 0 : index
    %64 = vector.load %arg15[%c15, %c0_43] : memref<56x64xf32, #tpu.memory_space<vmem>>, vector<1x64xf32>
    tpu.vector_store %arg15[%c15, %c0_43], %63 {strides = array<i32>} : memref<56x64xf32, #tpu.memory_space<vmem>>, vector<1x64xf32>,
    %65 = vector.extract_strided_slice %18 {offsets = [40, 0], sizes = [3, 64], strides = [1, 1]} : vector<124x64xf32> to vector<3x64xf32>
    %cst_44 = arith.constant dense<0xFF800000> : vector<64xf32>
    %66 = vector.multi_reduction <maximumf>, %65, %cst_44 [0] : vector<3x64xf32> to vector<64xf32>
    %67 = vector.shape_cast %66 : vector<64xf32> to vector<1x64xf32>
    %c16 = arith.constant 16 : index
    %c0_45 = arith.constant 0 : index
    %68 = vector.load %arg15[%c16, %c0_45] : memref<56x64xf32, #tpu.memory_space<vmem>>, vector<1x64xf32>
    tpu.vector_store %arg15[%c16, %c0_45], %67 {strides = array<i32>} : memref<56x64xf32, #tpu.memory_space<vmem>>, vector<1x64xf32>,
    %69 = vector.extract_strided_slice %18 {offsets = [48, 0], sizes = [2, 64], strides = [1, 1]} : vector<124x64xf32> to vector<2x64xf32>
    %cst_46 = arith.constant dense<0xFF800000> : vector<64xf32>
    %70 = vector.multi_reduction <maximumf>, %69, %cst_46 [0] : vector<2x64xf32> to vector<64xf32>
    %71 = vector.shape_cast %70 : vector<64xf32> to vector<1x64xf32>
    %c19 = arith.constant 19 : index
    %c0_47 = arith.constant 0 : index
    %72 = vector.load %arg15[%c19, %c0_47] : memref<56x64xf32, #tpu.memory_space<vmem>>, vector<1x64xf32>
    tpu.vector_store %arg15[%c19, %c0_47], %71 {strides = array<i32>} : memref<56x64xf32, #tpu.memory_space<vmem>>, vector<1x64xf32>,
    %73 = vector.extract_strided_slice %18 {offsets = [50, 0], sizes = [3, 64], strides = [1, 1]} : vector<124x64xf32> to vector<3x64xf32>
    %cst_48 = arith.constant dense<0xFF800000> : vector<64xf32>
    %74 = vector.multi_reduction <maximumf>, %73, %cst_48 [0] : vector<3x64xf32> to vector<64xf32>
    %75 = vector.shape_cast %74 : vector<64xf32> to vector<1x64xf32>
    %c20 = arith.constant 20 : index
    %c0_49 = arith.constant 0 : index
    %76 = vector.load %arg15[%c20, %c0_49] : memref<56x64xf32, #tpu.memory_space<vmem>>, vector<1x64xf32>
    tpu.vector_store %arg15[%c20, %c0_49], %75 {strides = array<i32>} : memref<56x64xf32, #tpu.memory_space<vmem>>, vector<1x64xf32>,
    %77 = vector.extract_strided_slice %18 {offsets = [53, 0], sizes = [3, 64], strides = [1, 1]} : vector<124x64xf32> to vector<3x64xf32>
    %cst_50 = arith.constant dense<0xFF800000> : vector<64xf32>
    %78 = vector.multi_reduction <maximumf>, %77, %cst_50 [0] : vector<3x64xf32> to vector<64xf32>
    %79 = vector.shape_cast %78 : vector<64xf32> to vector<1x64xf32>
    %c21 = arith.constant 21 : index
    %c0_51 = arith.constant 0 : index
    %80 = vector.load %arg15[%c21, %c0_51] : memref<56x64xf32, #tpu.memory_space<vmem>>, vector<1x64xf32>
    tpu.vector_store %arg15[%c21, %c0_51], %79 {strides = array<i32>} : memref<56x64xf32, #tpu.memory_space<vmem>>, vector<1x64xf32>,
    %81 = vector.extract_strided_slice %18 {offsets = [56, 0], sizes = [3, 64], strides = [1, 1]} : vector<124x64xf32> to vector<3x64xf32>
    %cst_52 = arith.constant dense<0xFF800000> : vector<64xf32>
    %82 = vector.multi_reduction <maximumf>, %81, %cst_52 [0] : vector<3x64xf32> to vector<64xf32>
    %83 = vector.shape_cast %82 : vector<64xf32> to vector<1x64xf32>
    %c22 = arith.constant 22 : index
    %c0_53 = arith.constant 0 : index
    %84 = vector.load %arg15[%c22, %c0_53] : memref<56x64xf32, #tpu.memory_space<vmem>>, vector<1x64xf32>
    tpu.vector_store %arg15[%c22, %c0_53], %83 {strides = array<i32>} : memref<56x64xf32, #tpu.memory_space<vmem>>, vector<1x64xf32>,
    %85 = vector.extract_strided_slice %18 {offsets = [64, 0], sizes = [2, 64], strides = [1, 1]} : vector<124x64xf32> to vector<2x64xf32>
    %cst_54 = arith.constant dense<0xFF800000> : vector<64xf32>
    %86 = vector.multi_reduction <maximumf>, %85, %cst_54 [0] : vector<2x64xf32> to vector<64xf32>
    %87 = vector.shape_cast %86 : vector<64xf32> to vector<1x64xf32>
    %c25 = arith.constant 25 : index
    %c0_55 = arith.constant 0 : index
    %88 = vector.load %arg15[%c25, %c0_55] : memref<56x64xf32, #tpu.memory_space<vmem>>, vector<1x64xf32>
    tpu.vector_store %arg15[%c25, %c0_55], %87 {strides = array<i32>} : memref<56x64xf32, #tpu.memory_space<vmem>>, vector<1x64xf32>,
    %89 = vector.extract_strided_slice %18 {offsets = [66, 0], sizes = [3, 64], strides = [1, 1]} : vector<124x64xf32> to vector<3x64xf32>
    %cst_56 = arith.constant dense<0xFF800000> : vector<64xf32>
    %90 = vector.multi_reduction <maximumf>, %89, %cst_56 [0] : vector<3x64xf32> to vector<64xf32>
    %91 = vector.shape_cast %90 : vector<64xf32> to vector<1x64xf32>
    %c26 = arith.constant 26 : index
    %c0_57 = arith.constant 0 : index
    %92 = vector.load %arg15[%c26, %c0_57] : memref<56x64xf32, #tpu.memory_space<vmem>>, vector<1x64xf32>
    tpu.vector_store %arg15[%c26, %c0_57], %91 {strides = array<i32>} : memref<56x64xf32, #tpu.memory_space<vmem>>, vector<1x64xf32>,
    %93 = vector.extract_strided_slice %18 {offsets = [69, 0], sizes = [3, 64], strides = [1, 1]} : vector<124x64xf32> to vector<3x64xf32>
    %cst_58 = arith.constant dense<0xFF800000> : vector<64xf32>
    %94 = vector.multi_reduction <maximumf>, %93, %cst_58 [0] : vector<3x64xf32> to vector<64xf32>
    %95 = vector.shape_cast %94 : vector<64xf32> to vector<1x64xf32>
    %c27 = arith.constant 27 : index
    %c0_59 = arith.constant 0 : index
    %96 = vector.load %arg15[%c27, %c0_59] : memref<56x64xf32, #tpu.memory_space<vmem>>, vector<1x64xf32>
    tpu.vector_store %arg15[%c27, %c0_59], %95 {strides = array<i32>} : memref<56x64xf32, #tpu.memory_space<vmem>>, vector<1x64xf32>,
    %97 = vector.extract_strided_slice %18 {offsets = [72, 0], sizes = [3, 64], strides = [1, 1]} : vector<124x64xf32> to vector<3x64xf32>
    %cst_60 = arith.constant dense<0xFF800000> : vector<64xf32>
    %98 = vector.multi_reduction <maximumf>, %97, %cst_60 [0] : vector<3x64xf32> to vector<64xf32>
    %99 = vector.shape_cast %98 : vector<64xf32> to vector<1x64xf32>
    %c28 = arith.constant 28 : index
    %c0_61 = arith.constant 0 : index
    %100 = vector.load %arg15[%c28, %c0_61] : memref<56x64xf32, #tpu.memory_space<vmem>>, vector<1x64xf32>
    tpu.vector_store %arg15[%c28, %c0_61], %99 {strides = array<i32>} : memref<56x64xf32, #tpu.memory_space<vmem>>, vector<1x64xf32>,
    %101 = vector.extract_strided_slice %18 {offsets = [80, 0], sizes = [2, 64], strides = [1, 1]} : vector<124x64xf32> to vector<2x64xf32>
    %cst_62 = arith.constant dense<0xFF800000> : vector<64xf32>
    %102 = vector.multi_reduction <maximumf>, %101, %cst_62 [0] : vector<2x64xf32> to vector<64xf32>
    %103 = vector.shape_cast %102 : vector<64xf32> to vector<1x64xf32>
    %c31 = arith.constant 31 : index
    %c0_63 = arith.constant 0 : index
    %104 = vector.load %arg15[%c31, %c0_63] : memref<56x64xf32, #tpu.memory_space<vmem>>, vector<1x64xf32>
    tpu.vector_store %arg15[%c31, %c0_63], %103 {strides = array<i32>} : memref<56x64xf32, #tpu.memory_space<vmem>>, vector<1x64xf32>,
    %105 = vector.extract_strided_slice %18 {offsets = [82, 0], sizes = [3, 64], strides = [1, 1]} : vector<124x64xf32> to vector<3x64xf32>
    %cst_64 = arith.constant dense<0xFF800000> : vector<64xf32>
    %106 = vector.multi_reduction <maximumf>, %105, %cst_64 [0] : vector<3x64xf32> to vector<64xf32>
    %107 = vector.shape_cast %106 : vector<64xf32> to vector<1x64xf32>
    %c32 = arith.constant 32 : index
    %c0_65 = arith.constant 0 : index
    %108 = vector.load %arg15[%c32, %c0_65] : memref<56x64xf32, #tpu.memory_space<vmem>>, vector<1x64xf32>
    tpu.vector_store %arg15[%c32, %c0_65], %107 {strides = array<i32>} : memref<56x64xf32, #tpu.memory_space<vmem>>, vector<1x64xf32>,
    %109 = vector.extract_strided_slice %18 {offsets = [85, 0], sizes = [3, 64], strides = [1, 1]} : vector<124x64xf32> to vector<3x64xf32>
    %cst_66 = arith.constant dense<0xFF800000> : vector<64xf32>
    %110 = vector.multi_reduction <maximumf>, %109, %cst_66 [0] : vector<3x64xf32> to vector<64xf32>
    %111 = vector.shape_cast %110 : vector<64xf32> to vector<1x64xf32>
    %c33 = arith.constant 33 : index
    %c0_67 = arith.constant 0 : index
    %112 = vector.load %arg15[%c33, %c0_67] : memref<56x64xf32, #tpu.memory_space<vmem>>, vector<1x64xf32>
    tpu.vector_store %arg15[%c33, %c0_67], %111 {strides = array<i32>} : memref<56x64xf32, #tpu.memory_space<vmem>>, vector<1x64xf32>,
    %113 = vector.extract_strided_slice %18 {offsets = [88, 0], sizes = [3, 64], strides = [1, 1]} : vector<124x64xf32> to vector<3x64xf32>
    %cst_68 = arith.constant dense<0xFF800000> : vector<64xf32>
    %114 = vector.multi_reduction <maximumf>, %113, %cst_68 [0] : vector<3x64xf32> to vector<64xf32>
    %115 = vector.shape_cast %114 : vector<64xf32> to vector<1x64xf32>
    %c34 = arith.constant 34 : index
    %c0_69 = arith.constant 0 : index
    %116 = vector.load %arg15[%c34, %c0_69] : memref<56x64xf32, #tpu.memory_space<vmem>>, vector<1x64xf32>
    tpu.vector_store %arg15[%c34, %c0_69], %115 {strides = array<i32>} : memref<56x64xf32, #tpu.memory_space<vmem>>, vector<1x64xf32>,
    %117 = vector.extract_strided_slice %18 {offsets = [96, 0], sizes = [2, 64], strides = [1, 1]} : vector<124x64xf32> to vector<2x64xf32>
    %cst_70 = arith.constant dense<0xFF800000> : vector<64xf32>
    %118 = vector.multi_reduction <maximumf>, %117, %cst_70 [0] : vector<2x64xf32> to vector<64xf32>
    %119 = vector.shape_cast %118 : vector<64xf32> to vector<1x64xf32>
    %c37 = arith.constant 37 : index
    %c0_71 = arith.constant 0 : index
    %120 = vector.load %arg15[%c37, %c0_71] : memref<56x64xf32, #tpu.memory_space<vmem>>, vector<1x64xf32>
    tpu.vector_store %arg15[%c37, %c0_71], %119 {strides = array<i32>} : memref<56x64xf32, #tpu.memory_space<vmem>>, vector<1x64xf32>,
    %121 = vector.extract_strided_slice %18 {offsets = [98, 0], sizes = [3, 64], strides = [1, 1]} : vector<124x64xf32> to vector<3x64xf32>
    %cst_72 = arith.constant dense<0xFF800000> : vector<64xf32>
    %122 = vector.multi_reduction <maximumf>, %121, %cst_72 [0] : vector<3x64xf32> to vector<64xf32>
    %123 = vector.shape_cast %122 : vector<64xf32> to vector<1x64xf32>
    %c38 = arith.constant 38 : index
    %c0_73 = arith.constant 0 : index
    %124 = vector.load %arg15[%c38, %c0_73] : memref<56x64xf32, #tpu.memory_space<vmem>>, vector<1x64xf32>
    tpu.vector_store %arg15[%c38, %c0_73], %123 {strides = array<i32>} : memref<56x64xf32, #tpu.memory_space<vmem>>, vector<1x64xf32>,
    %125 = vector.extract_strided_slice %18 {offsets = [101, 0], sizes = [3, 64], strides = [1, 1]} : vector<124x64xf32> to vector<3x64xf32>
    %cst_74 = arith.constant dense<0xFF800000> : vector<64xf32>
    %126 = vector.multi_reduction <maximumf>, %125, %cst_74 [0] : vector<3x64xf32> to vector<64xf32>
    %127 = vector.shape_cast %126 : vector<64xf32> to vector<1x64xf32>
    %c39 = arith.constant 39 : index
    %c0_75 = arith.constant 0 : index
    %128 = vector.load %arg15[%c39, %c0_75] : memref<56x64xf32, #tpu.memory_space<vmem>>, vector<1x64xf32>
    tpu.vector_store %arg15[%c39, %c0_75], %127 {strides = array<i32>} : memref<56x64xf32, #tpu.memory_space<vmem>>, vector<1x64xf32>,
    %129 = vector.extract_strided_slice %18 {offsets = [104, 0], sizes = [3, 64], strides = [1, 1]} : vector<124x64xf32> to vector<3x64xf32>
    %cst_76 = arith.constant dense<0xFF800000> : vector<64xf32>
    %130 = vector.multi_reduction <maximumf>, %129, %cst_76 [0] : vector<3x64xf32> to vector<64xf32>
    %131 = vector.shape_cast %130 : vector<64xf32> to vector<1x64xf32>
    %c40 = arith.constant 40 : index
    %c0_77 = arith.constant 0 : index
    %132 = vector.load %arg15[%c40, %c0_77] : memref<56x64xf32, #tpu.memory_space<vmem>>, vector<1x64xf32>
    tpu.vector_store %arg15[%c40, %c0_77], %131 {strides = array<i32>} : memref<56x64xf32, #tpu.memory_space<vmem>>, vector<1x64xf32>,
    %133 = vector.extract_strided_slice %18 {offsets = [112, 0], sizes = [2, 64], strides = [1, 1]} : vector<124x64xf32> to vector<2x64xf32>
    %cst_78 = arith.constant dense<0xFF800000> : vector<64xf32>
    %134 = vector.multi_reduction <maximumf>, %133, %cst_78 [0] : vector<2x64xf32> to vector<64xf32>
    %135 = vector.shape_cast %134 : vector<64xf32> to vector<1x64xf32>
    %c43 = arith.constant 43 : index
    %c0_79 = arith.constant 0 : index
    %136 = vector.load %arg15[%c43, %c0_79] : memref<56x64xf32, #tpu.memory_space<vmem>>, vector<1x64xf32>
    tpu.vector_store %arg15[%c43, %c0_79], %135 {strides = array<i32>} : memref<56x64xf32, #tpu.memory_space<vmem>>, vector<1x64xf32>,
    %137 = vector.extract_strided_slice %18 {offsets = [114, 0], sizes = [3, 64], strides = [1, 1]} : vector<124x64xf32> to vector<3x64xf32>
    %cst_80 = arith.constant dense<0xFF800000> : vector<64xf32>
    %138 = vector.multi_reduction <maximumf>, %137, %cst_80 [0] : vector<3x64xf32> to vector<64xf32>
    %139 = vector.shape_cast %138 : vector<64xf32> to vector<1x64xf32>
    %c44 = arith.constant 44 : index
    %c0_81 = arith.constant 0 : index
    %140 = vector.load %arg15[%c44, %c0_81] : memref<56x64xf32, #tpu.memory_space<vmem>>, vector<1x64xf32>
    tpu.vector_store %arg15[%c44, %c0_81], %139 {strides = array<i32>} : memref<56x64xf32, #tpu.memory_space<vmem>>, vector<1x64xf32>,
    %141 = vector.extract_strided_slice %18 {offsets = [117, 0], sizes = [3, 64], strides = [1, 1]} : vector<124x64xf32> to vector<3x64xf32>
    %cst_82 = arith.constant dense<0xFF800000> : vector<64xf32>
    %142 = vector.multi_reduction <maximumf>, %141, %cst_82 [0] : vector<3x64xf32> to vector<64xf32>
    %143 = vector.shape_cast %142 : vector<64xf32> to vector<1x64xf32>
    %c45 = arith.constant 45 : index
    %c0_83 = arith.constant 0 : index
    %144 = vector.load %arg15[%c45, %c0_83] : memref<56x64xf32, #tpu.memory_space<vmem>>, vector<1x64xf32>
    tpu.vector_store %arg15[%c45, %c0_83], %143 {strides = array<i32>} : memref<56x64xf32, #tpu.memory_space<vmem>>, vector<1x64xf32>,
    %145 = vector.extract_strided_slice %18 {offsets = [120, 0], sizes = [3, 64], strides = [1, 1]} : vector<124x64xf32> to vector<3x64xf32>
    %cst_84 = arith.constant dense<0xFF800000> : vector<64xf32>
    %146 = vector.multi_reduction <maximumf>, %145, %cst_84 [0] : vector<3x64xf32> to vector<64xf32>
    %147 = vector.shape_cast %146 : vector<64xf32> to vector<1x64xf32>
    %c46 = arith.constant 46 : index
    %c0_85 = arith.constant 0 : index
    %148 = vector.load %arg15[%c46, %c0_85] : memref<56x64xf32, #tpu.memory_space<vmem>>, vector<1x64xf32>
    tpu.vector_store %arg15[%c46, %c0_85], %147 {strides = array<i32>} : memref<56x64xf32, #tpu.memory_space<vmem>>, vector<1x64xf32>,
    %c0_86 = arith.constant 0 : index
    %c0_87 = arith.constant 0 : index
    %149 = vector.load %arg15[%c0_86, %c0_87] : memref<56x64xf32, #tpu.memory_space<vmem>>, vector<46x64xf32>
    %c0_88 = arith.constant 0 : index
    %c0_89 = arith.constant 0 : index
    %c0_90 = arith.constant 0 : index
    %150 = vector.load %arg8[%c0_88, %c0_89, %c0_90] : memref<3x64x128xf32, #tpu.memory_space<vmem>>, vector<1x64x128xf32>
    %151 = vector.shape_cast %150 : vector<1x64x128xf32> to vector<64x128xf32>
    %cst_91 = arith.constant dense<0.000000e+00> : vector<46x128xf32>
    %152 = tpu.matmul %149, %151, %cst_91 {dimension_numbers = #tpu.dot_dimension_numbers<[1], [0], [0], [1], [0, 0, 1, 1], [], []>} : vector<46x64xf32>, vector<64x128xf32>, vector<46x128xf32> -> vector<46x128xf32>
    %c1_92 = arith.constant 1 : index
    %c0_93 = arith.constant 0 : index
    %153 = vector.load %arg15[%c1_92, %c0_93] : memref<56x64xf32, #tpu.memory_space<vmem>>, vector<46x64xf32>
    %c1_94 = arith.constant 1 : index
    %c0_95 = arith.constant 0 : index
    %c0_96 = arith.constant 0 : index
    %154 = vector.load %arg8[%c1_94, %c0_95, %c0_96] : memref<3x64x128xf32, #tpu.memory_space<vmem>>, vector<1x64x128xf32>
    %155 = vector.shape_cast %154 : vector<1x64x128xf32> to vector<64x128xf32>
    %cst_97 = arith.constant dense<0.000000e+00> : vector<46x128xf32>
    %156 = tpu.matmul %153, %155, %cst_97 {dimension_numbers = #tpu.dot_dimension_numbers<[1], [0], [0], [1], [0, 0, 1, 1], [], []>} : vector<46x64xf32>, vector<64x128xf32>, vector<46x128xf32> -> vector<46x128xf32>
    %157 = arith.addf %152, %156 : vector<46x128xf32>
    %c2_98 = arith.constant 2 : index
    %c0_99 = arith.constant 0 : index
    %158 = vector.load %arg15[%c2_98, %c0_99] : memref<56x64xf32, #tpu.memory_space<vmem>>, vector<46x64xf32>
    %c2_100 = arith.constant 2 : index
    %c0_101 = arith.constant 0 : index
    %c0_102 = arith.constant 0 : index
    %159 = vector.load %arg8[%c2_100, %c0_101, %c0_102] : memref<3x64x128xf32, #tpu.memory_space<vmem>>, vector<1x64x128xf32>
    %160 = vector.shape_cast %159 : vector<1x64x128xf32> to vector<64x128xf32>
    %cst_103 = arith.constant dense<0.000000e+00> : vector<46x128xf32>
    %161 = tpu.matmul %158, %160, %cst_103 {dimension_numbers = #tpu.dot_dimension_numbers<[1], [0], [0], [1], [0, 0, 1, 1], [], []>} : vector<46x64xf32>, vector<64x128xf32>, vector<46x128xf32> -> vector<46x128xf32>
    %162 = arith.addf %157, %161 : vector<46x128xf32>
    %c0_104 = arith.constant 0 : index
    %c0_105 = arith.constant 0 : index
    %163 = vector.load %arg9[%c0_104, %c0_105] : memref<1x128xf32, #tpu.memory_space<vmem>>, vector<1x128xf32>
    %164 = vector.broadcast %163 : vector<1x128xf32> to vector<46x128xf32>
    %165 = arith.addf %162, %164 : vector<46x128xf32>
    %cst_106 = arith.constant 0.000000e+00 : f32
    %166 = vector.broadcast %cst_106 : f32 to vector<46x128xf32>
    %167 = arith.maximumf %165, %166 : vector<46x128xf32>
    %168 = vector.extract_strided_slice %167 {offsets = [0, 0], sizes = [4, 128], strides = [1, 1]} : vector<46x128xf32> to vector<4x128xf32>
    %cst_107 = arith.constant dense<0xFF800000> : vector<128xf32>
    %169 = vector.multi_reduction <maximumf>, %168, %cst_107 [0] : vector<4x128xf32> to vector<128xf32>
    %170 = vector.shape_cast %169 : vector<128xf32> to vector<1x128xf32>
    %c0_108 = arith.constant 0 : index
    %c0_109 = arith.constant 0 : index
    %171 = vector.load %arg14[%c0_108, %c0_109] : memref<8x384xf32, #tpu.memory_space<vmem>>, vector<1x128xf32>
    tpu.vector_store %arg14[%c0_108, %c0_109], %170 {strides = array<i32>} : memref<8x384xf32, #tpu.memory_space<vmem>>, vector<1x128xf32>,
    %172 = vector.extract_strided_slice %167 {offsets = [6, 0], sizes = [4, 128], strides = [1, 1]} : vector<46x128xf32> to vector<4x128xf32>
    %cst_110 = arith.constant dense<0xFF800000> : vector<128xf32>
    %173 = vector.multi_reduction <maximumf>, %172, %cst_110 [0] : vector<4x128xf32> to vector<128xf32>
    %174 = vector.shape_cast %173 : vector<128xf32> to vector<1x128xf32>
    %c1_111 = arith.constant 1 : index
    %c0_112 = arith.constant 0 : index
    %175 = vector.load %arg14[%c1_111, %c0_112] : memref<8x384xf32, #tpu.memory_space<vmem>>, vector<1x128xf32>
    tpu.vector_store %arg14[%c1_111, %c0_112], %174 {strides = array<i32>} : memref<8x384xf32, #tpu.memory_space<vmem>>, vector<1x128xf32>,
    %176 = vector.extract_strided_slice %167 {offsets = [12, 0], sizes = [4, 128], strides = [1, 1]} : vector<46x128xf32> to vector<4x128xf32>
    %cst_113 = arith.constant dense<0xFF800000> : vector<128xf32>
    %177 = vector.multi_reduction <maximumf>, %176, %cst_113 [0] : vector<4x128xf32> to vector<128xf32>
    %178 = vector.shape_cast %177 : vector<128xf32> to vector<1x128xf32>
    %c2_114 = arith.constant 2 : index
    %c0_115 = arith.constant 0 : index
    %179 = vector.load %arg14[%c2_114, %c0_115] : memref<8x384xf32, #tpu.memory_space<vmem>>, vector<1x128xf32>
    tpu.vector_store %arg14[%c2_114, %c0_115], %178 {strides = array<i32>} : memref<8x384xf32, #tpu.memory_space<vmem>>, vector<1x128xf32>,
    %180 = vector.extract_strided_slice %167 {offsets = [18, 0], sizes = [4, 128], strides = [1, 1]} : vector<46x128xf32> to vector<4x128xf32>
    %cst_116 = arith.constant dense<0xFF800000> : vector<128xf32>
    %181 = vector.multi_reduction <maximumf>, %180, %cst_116 [0] : vector<4x128xf32> to vector<128xf32>
    %182 = vector.shape_cast %181 : vector<128xf32> to vector<1x128xf32>
    %c3_117 = arith.constant 3 : index
    %c0_118 = arith.constant 0 : index
    %183 = vector.load %arg14[%c3_117, %c0_118] : memref<8x384xf32, #tpu.memory_space<vmem>>, vector<1x128xf32>
    tpu.vector_store %arg14[%c3_117, %c0_118], %182 {strides = array<i32>} : memref<8x384xf32, #tpu.memory_space<vmem>>, vector<1x128xf32>,
    %184 = vector.extract_strided_slice %167 {offsets = [24, 0], sizes = [4, 128], strides = [1, 1]} : vector<46x128xf32> to vector<4x128xf32>
    %cst_119 = arith.constant dense<0xFF800000> : vector<128xf32>
    %185 = vector.multi_reduction <maximumf>, %184, %cst_119 [0] : vector<4x128xf32> to vector<128xf32>
    %186 = vector.shape_cast %185 : vector<128xf32> to vector<1x128xf32>
    %c4_120 = arith.constant 4 : index
    %c0_121 = arith.constant 0 : index
    %187 = vector.load %arg14[%c4_120, %c0_121] : memref<8x384xf32, #tpu.memory_space<vmem>>, vector<1x128xf32>
    tpu.vector_store %arg14[%c4_120, %c0_121], %186 {strides = array<i32>} : memref<8x384xf32, #tpu.memory_space<vmem>>, vector<1x128xf32>,
    %188 = vector.extract_strided_slice %167 {offsets = [30, 0], sizes = [4, 128], strides = [1, 1]} : vector<46x128xf32> to vector<4x128xf32>
    %cst_122 = arith.constant dense<0xFF800000> : vector<128xf32>
    %189 = vector.multi_reduction <maximumf>, %188, %cst_122 [0] : vector<4x128xf32> to vector<128xf32>
    %190 = vector.shape_cast %189 : vector<128xf32> to vector<1x128xf32>
    %c5 = arith.constant 5 : index
    %c0_123 = arith.constant 0 : index
    %191 = vector.load %arg14[%c5, %c0_123] : memref<8x384xf32, #tpu.memory_space<vmem>>, vector<1x128xf32>
    tpu.vector_store %arg14[%c5, %c0_123], %190 {strides = array<i32>} : memref<8x384xf32, #tpu.memory_space<vmem>>, vector<1x128xf32>,
    %192 = vector.extract_strided_slice %167 {offsets = [36, 0], sizes = [4, 128], strides = [1, 1]} : vector<46x128xf32> to vector<4x128xf32>
    %cst_124 = arith.constant dense<0xFF800000> : vector<128xf32>
    %193 = vector.multi_reduction <maximumf>, %192, %cst_124 [0] : vector<4x128xf32> to vector<128xf32>
    %194 = vector.shape_cast %193 : vector<128xf32> to vector<1x128xf32>
    %c6 = arith.constant 6 : index
    %c0_125 = arith.constant 0 : index
    %195 = vector.load %arg14[%c6, %c0_125] : memref<8x384xf32, #tpu.memory_space<vmem>>, vector<1x128xf32>
    tpu.vector_store %arg14[%c6, %c0_125], %194 {strides = array<i32>} : memref<8x384xf32, #tpu.memory_space<vmem>>, vector<1x128xf32>,
    %196 = vector.extract_strided_slice %167 {offsets = [42, 0], sizes = [4, 128], strides = [1, 1]} : vector<46x128xf32> to vector<4x128xf32>
    %cst_126 = arith.constant dense<0xFF800000> : vector<128xf32>
    %197 = vector.multi_reduction <maximumf>, %196, %cst_126 [0] : vector<4x128xf32> to vector<128xf32>
    %198 = vector.shape_cast %197 : vector<128xf32> to vector<1x128xf32>
    %c7_127 = arith.constant 7 : index
    %c0_128 = arith.constant 0 : index
    %199 = vector.load %arg14[%c7_127, %c0_128] : memref<8x384xf32, #tpu.memory_space<vmem>>, vector<1x128xf32>
    tpu.vector_store %arg14[%c7_127, %c0_128], %198 {strides = array<i32>} : memref<8x384xf32, #tpu.memory_space<vmem>>, vector<1x128xf32>,
    %c0_129 = arith.constant 0 : index
    %c0_130 = arith.constant 0 : index
    %200 = vector.load %arg1[%c0_129, %c0_130] : memref<128x300xbf16, #tpu.memory_space<vmem>>, vector<125x300xbf16>
    %c0_131 = arith.constant 0 : index
    %c0_132 = arith.constant 0 : index
    %c0_133 = arith.constant 0 : index
    %201 = vector.load %arg4[%c0_131, %c0_132, %c0_133] : memref<4x300x64xbf16, #tpu.memory_space<vmem>>, vector<1x300x64xbf16>
    %202 = vector.shape_cast %201 : vector<1x300x64xbf16> to vector<300x64xbf16>
    %cst_134 = arith.constant dense<0.000000e+00> : vector<125x64xf32>
    %203 = tpu.matmul %200, %202, %cst_134 {dimension_numbers = #tpu.dot_dimension_numbers<[1], [0], [0], [1], [0, 0, 1, 1], [], []>} : vector<125x300xbf16>, vector<300x64xbf16>, vector<125x64xf32> -> vector<125x64xf32>
    %c1_135 = arith.constant 1 : index
    %c0_136 = arith.constant 0 : index
    %204 = vector.load %arg1[%c1_135, %c0_136] : memref<128x300xbf16, #tpu.memory_space<vmem>>, vector<125x300xbf16>
    %c1_137 = arith.constant 1 : index
    %c0_138 = arith.constant 0 : index
    %c0_139 = arith.constant 0 : index
    %205 = vector.load %arg4[%c1_137, %c0_138, %c0_139] : memref<4x300x64xbf16, #tpu.memory_space<vmem>>, vector<1x300x64xbf16>
    %206 = vector.shape_cast %205 : vector<1x300x64xbf16> to vector<300x64xbf16>
    %cst_140 = arith.constant dense<0.000000e+00> : vector<125x64xf32>
    %207 = tpu.matmul %204, %206, %cst_140 {dimension_numbers = #tpu.dot_dimension_numbers<[1], [0], [0], [1], [0, 0, 1, 1], [], []>} : vector<125x300xbf16>, vector<300x64xbf16>, vector<125x64xf32> -> vector<125x64xf32>
    %208 = arith.addf %203, %207 : vector<125x64xf32>
    %c2_141 = arith.constant 2 : index
    %c0_142 = arith.constant 0 : index
    %209 = vector.load %arg1[%c2_141, %c0_142] : memref<128x300xbf16, #tpu.memory_space<vmem>>, vector<125x300xbf16>
    %c2_143 = arith.constant 2 : index
    %c0_144 = arith.constant 0 : index
    %c0_145 = arith.constant 0 : index
    %210 = vector.load %arg4[%c2_143, %c0_144, %c0_145] : memref<4x300x64xbf16, #tpu.memory_space<vmem>>, vector<1x300x64xbf16>
    %211 = vector.shape_cast %210 : vector<1x300x64xbf16> to vector<300x64xbf16>
    %cst_146 = arith.constant dense<0.000000e+00> : vector<125x64xf32>
    %212 = tpu.matmul %209, %211, %cst_146 {dimension_numbers = #tpu.dot_dimension_numbers<[1], [0], [0], [1], [0, 0, 1, 1], [], []>} : vector<125x300xbf16>, vector<300x64xbf16>, vector<125x64xf32> -> vector<125x64xf32>
    %213 = arith.addf %208, %212 : vector<125x64xf32>
    %c3_147 = arith.constant 3 : index
    %c0_148 = arith.constant 0 : index
    %214 = vector.load %arg1[%c3_147, %c0_148] : memref<128x300xbf16, #tpu.memory_space<vmem>>, vector<125x300xbf16>
    %c3_149 = arith.constant 3 : index
    %c0_150 = arith.constant 0 : index
    %c0_151 = arith.constant 0 : index
    %215 = vector.load %arg4[%c3_149, %c0_150, %c0_151] : memref<4x300x64xbf16, #tpu.memory_space<vmem>>, vector<1x300x64xbf16>
    %216 = vector.shape_cast %215 : vector<1x300x64xbf16> to vector<300x64xbf16>
    %cst_152 = arith.constant dense<0.000000e+00> : vector<125x64xf32>
    %217 = tpu.matmul %214, %216, %cst_152 {dimension_numbers = #tpu.dot_dimension_numbers<[1], [0], [0], [1], [0, 0, 1, 1], [], []>} : vector<125x300xbf16>, vector<300x64xbf16>, vector<125x64xf32> -> vector<125x64xf32>
    %218 = arith.addf %213, %217 : vector<125x64xf32>
    %c0_153 = arith.constant 0 : index
    %c0_154 = arith.constant 0 : index
    %219 = vector.load %arg5[%c0_153, %c0_154] : memref<1x64xf32, #tpu.memory_space<vmem>>, vector<1x64xf32>
    %220 = vector.broadcast %219 : vector<1x64xf32> to vector<125x64xf32>
    %221 = arith.addf %218, %220 : vector<125x64xf32>
    %cst_155 = arith.constant 0.000000e+00 : f32
    %222 = vector.broadcast %cst_155 : f32 to vector<125x64xf32>
    %223 = arith.maximumf %221, %222 : vector<125x64xf32>
    %cst_156 = arith.constant 0.000000e+00 : f32
    %224 = vector.broadcast %cst_156 : f32 to vector<56x64xf32>
    %c0_157 = arith.constant 0 : index
    %c0_158 = arith.constant 0 : index
    %225 = vector.load %arg15[%c0_157, %c0_158] : memref<56x64xf32, #tpu.memory_space<vmem>>, vector<56x64xf32>
    tpu.vector_store %arg15[%c0_157, %c0_158], %224 {strides = array<i32>} : memref<56x64xf32, #tpu.memory_space<vmem>>, vector<56x64xf32>,
    %226 = vector.extract_strided_slice %223 {offsets = [0, 0], sizes = [2, 64], strides = [1, 1]} : vector<125x64xf32> to vector<2x64xf32>
    %cst_159 = arith.constant dense<0xFF800000> : vector<64xf32>
    %227 = vector.multi_reduction <maximumf>, %226, %cst_159 [0] : vector<2x64xf32> to vector<64xf32>
    %228 = vector.shape_cast %227 : vector<64xf32> to vector<1x64xf32>
    %c1_160 = arith.constant 1 : index
    %c0_161 = arith.constant 0 : index
    %229 = vector.load %arg15[%c1_160, %c0_161] : memref<56x64xf32, #tpu.memory_space<vmem>>, vector<1x64xf32>
    tpu.vector_store %arg15[%c1_160, %c0_161], %228 {strides = array<i32>} : memref<56x64xf32, #tpu.memory_space<vmem>>, vector<1x64xf32>,
    %230 = vector.extract_strided_slice %223 {offsets = [2, 0], sizes = [3, 64], strides = [1, 1]} : vector<125x64xf32> to vector<3x64xf32>
    %cst_162 = arith.constant dense<0xFF800000> : vector<64xf32>
    %231 = vector.multi_reduction <maximumf>, %230, %cst_162 [0] : vector<3x64xf32> to vector<64xf32>
    %232 = vector.shape_cast %231 : vector<64xf32> to vector<1x64xf32>
    %c2_163 = arith.constant 2 : index
    %c0_164 = arith.constant 0 : index
    %233 = vector.load %arg15[%c2_163, %c0_164] : memref<56x64xf32, #tpu.memory_space<vmem>>, vector<1x64xf32>
    tpu.vector_store %arg15[%c2_163, %c0_164], %232 {strides = array<i32>} : memref<56x64xf32, #tpu.memory_space<vmem>>, vector<1x64xf32>,
    %234 = vector.extract_strided_slice %223 {offsets = [5, 0], sizes = [3, 64], strides = [1, 1]} : vector<125x64xf32> to vector<3x64xf32>
    %cst_165 = arith.constant dense<0xFF800000> : vector<64xf32>
    %235 = vector.multi_reduction <maximumf>, %234, %cst_165 [0] : vector<3x64xf32> to vector<64xf32>
    %236 = vector.shape_cast %235 : vector<64xf32> to vector<1x64xf32>
    %c3_166 = arith.constant 3 : index
    %c0_167 = arith.constant 0 : index
    %237 = vector.load %arg15[%c3_166, %c0_167] : memref<56x64xf32, #tpu.memory_space<vmem>>, vector<1x64xf32>
    tpu.vector_store %arg15[%c3_166, %c0_167], %236 {strides = array<i32>} : memref<56x64xf32, #tpu.memory_space<vmem>>, vector<1x64xf32>,
    %238 = vector.extract_strided_slice %223 {offsets = [8, 0], sizes = [3, 64], strides = [1, 1]} : vector<125x64xf32> to vector<3x64xf32>
    %cst_168 = arith.constant dense<0xFF800000> : vector<64xf32>
    %239 = vector.multi_reduction <maximumf>, %238, %cst_168 [0] : vector<3x64xf32> to vector<64xf32>
    %240 = vector.shape_cast %239 : vector<64xf32> to vector<1x64xf32>
    %c4_169 = arith.constant 4 : index
    %c0_170 = arith.constant 0 : index
    %241 = vector.load %arg15[%c4_169, %c0_170] : memref<56x64xf32, #tpu.memory_space<vmem>>, vector<1x64xf32>
    tpu.vector_store %arg15[%c4_169, %c0_170], %240 {strides = array<i32>} : memref<56x64xf32, #tpu.memory_space<vmem>>, vector<1x64xf32>,
    %242 = vector.extract_strided_slice %223 {offsets = [11, 0], sizes = [2, 64], strides = [1, 1]} : vector<125x64xf32> to vector<2x64xf32>
    %cst_171 = arith.constant dense<0xFF800000> : vector<64xf32>
    %243 = vector.multi_reduction <maximumf>, %242, %cst_171 [0] : vector<2x64xf32> to vector<64xf32>
    %244 = vector.shape_cast %243 : vector<64xf32> to vector<1x64xf32>
    %c5_172 = arith.constant 5 : index
    %c0_173 = arith.constant 0 : index
    %245 = vector.load %arg15[%c5_172, %c0_173] : memref<56x64xf32, #tpu.memory_space<vmem>>, vector<1x64xf32>
    tpu.vector_store %arg15[%c5_172, %c0_173], %244 {strides = array<i32>} : memref<56x64xf32, #tpu.memory_space<vmem>>, vector<1x64xf32>,
    %246 = vector.extract_strided_slice %223 {offsets = [16, 0], sizes = [2, 64], strides = [1, 1]} : vector<125x64xf32> to vector<2x64xf32>
    %cst_174 = arith.constant dense<0xFF800000> : vector<64xf32>
    %247 = vector.multi_reduction <maximumf>, %246, %cst_174 [0] : vector<2x64xf32> to vector<64xf32>
    %248 = vector.shape_cast %247 : vector<64xf32> to vector<1x64xf32>
    %c8_175 = arith.constant 8 : index
    %c0_176 = arith.constant 0 : index
    %249 = vector.load %arg15[%c8_175, %c0_176] : memref<56x64xf32, #tpu.memory_space<vmem>>, vector<1x64xf32>
    tpu.vector_store %arg15[%c8_175, %c0_176], %248 {strides = array<i32>} : memref<56x64xf32, #tpu.memory_space<vmem>>, vector<1x64xf32>,
    %250 = vector.extract_strided_slice %223 {offsets = [18, 0], sizes = [3, 64], strides = [1, 1]} : vector<125x64xf32> to vector<3x64xf32>
    %cst_177 = arith.constant dense<0xFF800000> : vector<64xf32>
    %251 = vector.multi_reduction <maximumf>, %250, %cst_177 [0] : vector<3x64xf32> to vector<64xf32>
    %252 = vector.shape_cast %251 : vector<64xf32> to vector<1x64xf32>
    %c9_178 = arith.constant 9 : index
    %c0_179 = arith.constant 0 : index
    %253 = vector.load %arg15[%c9_178, %c0_179] : memref<56x64xf32, #tpu.memory_space<vmem>>, vector<1x64xf32>
    tpu.vector_store %arg15[%c9_178, %c0_179], %252 {strides = array<i32>} : memref<56x64xf32, #tpu.memory_space<vmem>>, vector<1x64xf32>,
    %254 = vector.extract_strided_slice %223 {offsets = [21, 0], sizes = [3, 64], strides = [1, 1]} : vector<125x64xf32> to vector<3x64xf32>
    %cst_180 = arith.constant dense<0xFF800000> : vector<64xf32>
    %255 = vector.multi_reduction <maximumf>, %254, %cst_180 [0] : vector<3x64xf32> to vector<64xf32>
    %256 = vector.shape_cast %255 : vector<64xf32> to vector<1x64xf32>
    %c10_181 = arith.constant 10 : index
    %c0_182 = arith.constant 0 : index
    %257 = vector.load %arg15[%c10_181, %c0_182] : memref<56x64xf32, #tpu.memory_space<vmem>>, vector<1x64xf32>
    tpu.vector_store %arg15[%c10_181, %c0_182], %256 {strides = array<i32>} : memref<56x64xf32, #tpu.memory_space<vmem>>, vector<1x64xf32>,
    %258 = vector.extract_strided_slice %223 {offsets = [24, 0], sizes = [3, 64], strides = [1, 1]} : vector<125x64xf32> to vector<3x64xf32>
    %cst_183 = arith.constant dense<0xFF800000> : vector<64xf32>
    %259 = vector.multi_reduction <maximumf>, %258, %cst_183 [0] : vector<3x64xf32> to vector<64xf32>
    %260 = vector.shape_cast %259 : vector<64xf32> to vector<1x64xf32>
    %c11 = arith.constant 11 : index
    %c0_184 = arith.constant 0 : index
    %261 = vector.load %arg15[%c11, %c0_184] : memref<56x64xf32, #tpu.memory_space<vmem>>, vector<1x64xf32>
    tpu.vector_store %arg15[%c11, %c0_184], %260 {strides = array<i32>} : memref<56x64xf32, #tpu.memory_space<vmem>>, vector<1x64xf32>,
    %262 = vector.extract_strided_slice %223 {offsets = [27, 0], sizes = [2, 64], strides = [1, 1]} : vector<125x64xf32> to vector<2x64xf32>
    %cst_185 = arith.constant dense<0xFF800000> : vector<64xf32>
    %263 = vector.multi_reduction <maximumf>, %262, %cst_185 [0] : vector<2x64xf32> to vector<64xf32>
    %264 = vector.shape_cast %263 : vector<64xf32> to vector<1x64xf32>
    %c12 = arith.constant 12 : index
    %c0_186 = arith.constant 0 : index
    %265 = vector.load %arg15[%c12, %c0_186] : memref<56x64xf32, #tpu.memory_space<vmem>>, vector<1x64xf32>
    tpu.vector_store %arg15[%c12, %c0_186], %264 {strides = array<i32>} : memref<56x64xf32, #tpu.memory_space<vmem>>, vector<1x64xf32>,
    %266 = vector.extract_strided_slice %223 {offsets = [32, 0], sizes = [2, 64], strides = [1, 1]} : vector<125x64xf32> to vector<2x64xf32>
    %cst_187 = arith.constant dense<0xFF800000> : vector<64xf32>
    %267 = vector.multi_reduction <maximumf>, %266, %cst_187 [0] : vector<2x64xf32> to vector<64xf32>
    %268 = vector.shape_cast %267 : vector<64xf32> to vector<1x64xf32>
    %c15_188 = arith.constant 15 : index
    %c0_189 = arith.constant 0 : index
    %269 = vector.load %arg15[%c15_188, %c0_189] : memref<56x64xf32, #tpu.memory_space<vmem>>, vector<1x64xf32>
    tpu.vector_store %arg15[%c15_188, %c0_189], %268 {strides = array<i32>} : memref<56x64xf32, #tpu.memory_space<vmem>>, vector<1x64xf32>,
    %270 = vector.extract_strided_slice %223 {offsets = [34, 0], sizes = [3, 64], strides = [1, 1]} : vector<125x64xf32> to vector<3x64xf32>
    %cst_190 = arith.constant dense<0xFF800000> : vector<64xf32>
    %271 = vector.multi_reduction <maximumf>, %270, %cst_190 [0] : vector<3x64xf32> to vector<64xf32>
    %272 = vector.shape_cast %271 : vector<64xf32> to vector<1x64xf32>
    %c16_191 = arith.constant 16 : index
    %c0_192 = arith.constant 0 : index
    %273 = vector.load %arg15[%c16_191, %c0_192] : memref<56x64xf32, #tpu.memory_space<vmem>>, vector<1x64xf32>
    tpu.vector_store %arg15[%c16_191, %c0_192], %272 {strides = array<i32>} : memref<56x64xf32, #tpu.memory_space<vmem>>, vector<1x64xf32>,
    %274 = vector.extract_strided_slice %223 {offsets = [37, 0], sizes = [3, 64], strides = [1, 1]} : vector<125x64xf32> to vector<3x64xf32>
    %cst_193 = arith.constant dense<0xFF800000> : vector<64xf32>
    %275 = vector.multi_reduction <maximumf>, %274, %cst_193 [0] : vector<3x64xf32> to vector<64xf32>
    %276 = vector.shape_cast %275 : vector<64xf32> to vector<1x64xf32>
    %c17 = arith.constant 17 : index
    %c0_194 = arith.constant 0 : index
    %277 = vector.load %arg15[%c17, %c0_194] : memref<56x64xf32, #tpu.memory_space<vmem>>, vector<1x64xf32>
    tpu.vector_store %arg15[%c17, %c0_194], %276 {strides = array<i32>} : memref<56x64xf32, #tpu.memory_space<vmem>>, vector<1x64xf32>,
    %278 = vector.extract_strided_slice %223 {offsets = [40, 0], sizes = [3, 64], strides = [1, 1]} : vector<125x64xf32> to vector<3x64xf32>
    %cst_195 = arith.constant dense<0xFF800000> : vector<64xf32>
    %279 = vector.multi_reduction <maximumf>, %278, %cst_195 [0] : vector<3x64xf32> to vector<64xf32>
    %280 = vector.shape_cast %279 : vector<64xf32> to vector<1x64xf32>
    %c18 = arith.constant 18 : index
    %c0_196 = arith.constant 0 : index
    %281 = vector.load %arg15[%c18, %c0_196] : memref<56x64xf32, #tpu.memory_space<vmem>>, vector<1x64xf32>
    tpu.vector_store %arg15[%c18, %c0_196], %280 {strides = array<i32>} : memref<56x64xf32, #tpu.memory_space<vmem>>, vector<1x64xf32>,
    %282 = vector.extract_strided_slice %223 {offsets = [43, 0], sizes = [2, 64], strides = [1, 1]} : vector<125x64xf32> to vector<2x64xf32>
    %cst_197 = arith.constant dense<0xFF800000> : vector<64xf32>
    %283 = vector.multi_reduction <maximumf>, %282, %cst_197 [0] : vector<2x64xf32> to vector<64xf32>
    %284 = vector.shape_cast %283 : vector<64xf32> to vector<1x64xf32>
    %c19_198 = arith.constant 19 : index
    %c0_199 = arith.constant 0 : index
    %285 = vector.load %arg15[%c19_198, %c0_199] : memref<56x64xf32, #tpu.memory_space<vmem>>, vector<1x64xf32>
    tpu.vector_store %arg15[%c19_198, %c0_199], %284 {strides = array<i32>} : memref<56x64xf32, #tpu.memory_space<vmem>>, vector<1x64xf32>,
    %286 = vector.extract_strided_slice %223 {offsets = [48, 0], sizes = [2, 64], strides = [1, 1]} : vector<125x64xf32> to vector<2x64xf32>
    %cst_200 = arith.constant dense<0xFF800000> : vector<64xf32>
    %287 = vector.multi_reduction <maximumf>, %286, %cst_200 [0] : vector<2x64xf32> to vector<64xf32>
    %288 = vector.shape_cast %287 : vector<64xf32> to vector<1x64xf32>
    %c22_201 = arith.constant 22 : index
    %c0_202 = arith.constant 0 : index
    %289 = vector.load %arg15[%c22_201, %c0_202] : memref<56x64xf32, #tpu.memory_space<vmem>>, vector<1x64xf32>
    tpu.vector_store %arg15[%c22_201, %c0_202], %288 {strides = array<i32>} : memref<56x64xf32, #tpu.memory_space<vmem>>, vector<1x64xf32>,
    %290 = vector.extract_strided_slice %223 {offsets = [50, 0], sizes = [3, 64], strides = [1, 1]} : vector<125x64xf32> to vector<3x64xf32>
    %cst_203 = arith.constant dense<0xFF800000> : vector<64xf32>
    %291 = vector.multi_reduction <maximumf>, %290, %cst_203 [0] : vector<3x64xf32> to vector<64xf32>
    %292 = vector.shape_cast %291 : vector<64xf32> to vector<1x64xf32>
    %c23 = arith.constant 23 : index
    %c0_204 = arith.constant 0 : index
    %293 = vector.load %arg15[%c23, %c0_204] : memref<56x64xf32, #tpu.memory_space<vmem>>, vector<1x64xf32>
    tpu.vector_store %arg15[%c23, %c0_204], %292 {strides = array<i32>} : memref<56x64xf32, #tpu.memory_space<vmem>>, vector<1x64xf32>,
    %294 = vector.extract_strided_slice %223 {offsets = [53, 0], sizes = [3, 64], strides = [1, 1]} : vector<125x64xf32> to vector<3x64xf32>
    %cst_205 = arith.constant dense<0xFF800000> : vector<64xf32>
    %295 = vector.multi_reduction <maximumf>, %294, %cst_205 [0] : vector<3x64xf32> to vector<64xf32>
    %296 = vector.shape_cast %295 : vector<64xf32> to vector<1x64xf32>
    %c24 = arith.constant 24 : index
    %c0_206 = arith.constant 0 : index
    %297 = vector.load %arg15[%c24, %c0_206] : memref<56x64xf32, #tpu.memory_space<vmem>>, vector<1x64xf32>
    tpu.vector_store %arg15[%c24, %c0_206], %296 {strides = array<i32>} : memref<56x64xf32, #tpu.memory_space<vmem>>, vector<1x64xf32>,
    %298 = vector.extract_strided_slice %223 {offsets = [56, 0], sizes = [3, 64], strides = [1, 1]} : vector<125x64xf32> to vector<3x64xf32>
    %cst_207 = arith.constant dense<0xFF800000> : vector<64xf32>
    %299 = vector.multi_reduction <maximumf>, %298, %cst_207 [0] : vector<3x64xf32> to vector<64xf32>
    %300 = vector.shape_cast %299 : vector<64xf32> to vector<1x64xf32>
    %c25_208 = arith.constant 25 : index
    %c0_209 = arith.constant 0 : index
    %301 = vector.load %arg15[%c25_208, %c0_209] : memref<56x64xf32, #tpu.memory_space<vmem>>, vector<1x64xf32>
    tpu.vector_store %arg15[%c25_208, %c0_209], %300 {strides = array<i32>} : memref<56x64xf32, #tpu.memory_space<vmem>>, vector<1x64xf32>,
    %302 = vector.extract_strided_slice %223 {offsets = [59, 0], sizes = [2, 64], strides = [1, 1]} : vector<125x64xf32> to vector<2x64xf32>
    %cst_210 = arith.constant dense<0xFF800000> : vector<64xf32>
    %303 = vector.multi_reduction <maximumf>, %302, %cst_210 [0] : vector<2x64xf32> to vector<64xf32>
    %304 = vector.shape_cast %303 : vector<64xf32> to vector<1x64xf32>
    %c26_211 = arith.constant 26 : index
    %c0_212 = arith.constant 0 : index
    %305 = vector.load %arg15[%c26_211, %c0_212] : memref<56x64xf32, #tpu.memory_space<vmem>>, vector<1x64xf32>
    tpu.vector_store %arg15[%c26_211, %c0_212], %304 {strides = array<i32>} : memref<56x64xf32, #tpu.memory_space<vmem>>, vector<1x64xf32>,
    %306 = vector.extract_strided_slice %223 {offsets = [64, 0], sizes = [2, 64], strides = [1, 1]} : vector<125x64xf32> to vector<2x64xf32>
    %cst_213 = arith.constant dense<0xFF800000> : vector<64xf32>
    %307 = vector.multi_reduction <maximumf>, %306, %cst_213 [0] : vector<2x64xf32> to vector<64xf32>
    %308 = vector.shape_cast %307 : vector<64xf32> to vector<1x64xf32>
    %c29 = arith.constant 29 : index
    %c0_214 = arith.constant 0 : index
    %309 = vector.load %arg15[%c29, %c0_214] : memref<56x64xf32, #tpu.memory_space<vmem>>, vector<1x64xf32>
    tpu.vector_store %arg15[%c29, %c0_214], %308 {strides = array<i32>} : memref<56x64xf32, #tpu.memory_space<vmem>>, vector<1x64xf32>,
    %310 = vector.extract_strided_slice %223 {offsets = [66, 0], sizes = [3, 64], strides = [1, 1]} : vector<125x64xf32> to vector<3x64xf32>
    %cst_215 = arith.constant dense<0xFF800000> : vector<64xf32>
    %311 = vector.multi_reduction <maximumf>, %310, %cst_215 [0] : vector<3x64xf32> to vector<64xf32>
    %312 = vector.shape_cast %311 : vector<64xf32> to vector<1x64xf32>
    %c30 = arith.constant 30 : index
    %c0_216 = arith.constant 0 : index
    %313 = vector.load %arg15[%c30, %c0_216] : memref<56x64xf32, #tpu.memory_space<vmem>>, vector<1x64xf32>
    tpu.vector_store %arg15[%c30, %c0_216], %312 {strides = array<i32>} : memref<56x64xf32, #tpu.memory_space<vmem>>, vector<1x64xf32>,
    %314 = vector.extract_strided_slice %223 {offsets = [69, 0], sizes = [3, 64], strides = [1, 1]} : vector<125x64xf32> to vector<3x64xf32>
    %cst_217 = arith.constant dense<0xFF800000> : vector<64xf32>
    %315 = vector.multi_reduction <maximumf>, %314, %cst_217 [0] : vector<3x64xf32> to vector<64xf32>
    %316 = vector.shape_cast %315 : vector<64xf32> to vector<1x64xf32>
    %c31_218 = arith.constant 31 : index
    %c0_219 = arith.constant 0 : index
    %317 = vector.load %arg15[%c31_218, %c0_219] : memref<56x64xf32, #tpu.memory_space<vmem>>, vector<1x64xf32>
    tpu.vector_store %arg15[%c31_218, %c0_219], %316 {strides = array<i32>} : memref<56x64xf32, #tpu.memory_space<vmem>>, vector<1x64xf32>,
    %318 = vector.extract_strided_slice %223 {offsets = [72, 0], sizes = [3, 64], strides = [1, 1]} : vector<125x64xf32> to vector<3x64xf32>
    %cst_220 = arith.constant dense<0xFF800000> : vector<64xf32>
    %319 = vector.multi_reduction <maximumf>, %318, %cst_220 [0] : vector<3x64xf32> to vector<64xf32>
    %320 = vector.shape_cast %319 : vector<64xf32> to vector<1x64xf32>
    %c32_221 = arith.constant 32 : index
    %c0_222 = arith.constant 0 : index
    %321 = vector.load %arg15[%c32_221, %c0_222] : memref<56x64xf32, #tpu.memory_space<vmem>>, vector<1x64xf32>
    tpu.vector_store %arg15[%c32_221, %c0_222], %320 {strides = array<i32>} : memref<56x64xf32, #tpu.memory_space<vmem>>, vector<1x64xf32>,
    %322 = vector.extract_strided_slice %223 {offsets = [75, 0], sizes = [2, 64], strides = [1, 1]} : vector<125x64xf32> to vector<2x64xf32>
    %cst_223 = arith.constant dense<0xFF800000> : vector<64xf32>
    %323 = vector.multi_reduction <maximumf>, %322, %cst_223 [0] : vector<2x64xf32> to vector<64xf32>
    %324 = vector.shape_cast %323 : vector<64xf32> to vector<1x64xf32>
    %c33_224 = arith.constant 33 : index
    %c0_225 = arith.constant 0 : index
    %325 = vector.load %arg15[%c33_224, %c0_225] : memref<56x64xf32, #tpu.memory_space<vmem>>, vector<1x64xf32>
    tpu.vector_store %arg15[%c33_224, %c0_225], %324 {strides = array<i32>} : memref<56x64xf32, #tpu.memory_space<vmem>>, vector<1x64xf32>,
    %326 = vector.extract_strided_slice %223 {offsets = [80, 0], sizes = [2, 64], strides = [1, 1]} : vector<125x64xf32> to vector<2x64xf32>
    %cst_226 = arith.constant dense<0xFF800000> : vector<64xf32>
    %327 = vector.multi_reduction <maximumf>, %326, %cst_226 [0] : vector<2x64xf32> to vector<64xf32>
    %328 = vector.shape_cast %327 : vector<64xf32> to vector<1x64xf32>
    %c36 = arith.constant 36 : index
    %c0_227 = arith.constant 0 : index
    %329 = vector.load %arg15[%c36, %c0_227] : memref<56x64xf32, #tpu.memory_space<vmem>>, vector<1x64xf32>
    tpu.vector_store %arg15[%c36, %c0_227], %328 {strides = array<i32>} : memref<56x64xf32, #tpu.memory_space<vmem>>, vector<1x64xf32>,
    %330 = vector.extract_strided_slice %223 {offsets = [82, 0], sizes = [3, 64], strides = [1, 1]} : vector<125x64xf32> to vector<3x64xf32>
    %cst_228 = arith.constant dense<0xFF800000> : vector<64xf32>
    %331 = vector.multi_reduction <maximumf>, %330, %cst_228 [0] : vector<3x64xf32> to vector<64xf32>
    %332 = vector.shape_cast %331 : vector<64xf32> to vector<1x64xf32>
    %c37_229 = arith.constant 37 : index
    %c0_230 = arith.constant 0 : index
    %333 = vector.load %arg15[%c37_229, %c0_230] : memref<56x64xf32, #tpu.memory_space<vmem>>, vector<1x64xf32>
    tpu.vector_store %arg15[%c37_229, %c0_230], %332 {strides = array<i32>} : memref<56x64xf32, #tpu.memory_space<vmem>>, vector<1x64xf32>,
    %334 = vector.extract_strided_slice %223 {offsets = [85, 0], sizes = [3, 64], strides = [1, 1]} : vector<125x64xf32> to vector<3x64xf32>
    %cst_231 = arith.constant dense<0xFF800000> : vector<64xf32>
    %335 = vector.multi_reduction <maximumf>, %334, %cst_231 [0] : vector<3x64xf32> to vector<64xf32>
    %336 = vector.shape_cast %335 : vector<64xf32> to vector<1x64xf32>
    %c38_232 = arith.constant 38 : index
    %c0_233 = arith.constant 0 : index
    %337 = vector.load %arg15[%c38_232, %c0_233] : memref<56x64xf32, #tpu.memory_space<vmem>>, vector<1x64xf32>
    tpu.vector_store %arg15[%c38_232, %c0_233], %336 {strides = array<i32>} : memref<56x64xf32, #tpu.memory_space<vmem>>, vector<1x64xf32>,
    %338 = vector.extract_strided_slice %223 {offsets = [88, 0], sizes = [3, 64], strides = [1, 1]} : vector<125x64xf32> to vector<3x64xf32>
    %cst_234 = arith.constant dense<0xFF800000> : vector<64xf32>
    %339 = vector.multi_reduction <maximumf>, %338, %cst_234 [0] : vector<3x64xf32> to vector<64xf32>
    %340 = vector.shape_cast %339 : vector<64xf32> to vector<1x64xf32>
    %c39_235 = arith.constant 39 : index
    %c0_236 = arith.constant 0 : index
    %341 = vector.load %arg15[%c39_235, %c0_236] : memref<56x64xf32, #tpu.memory_space<vmem>>, vector<1x64xf32>
    tpu.vector_store %arg15[%c39_235, %c0_236], %340 {strides = array<i32>} : memref<56x64xf32, #tpu.memory_space<vmem>>, vector<1x64xf32>,
    %342 = vector.extract_strided_slice %223 {offsets = [91, 0], sizes = [2, 64], strides = [1, 1]} : vector<125x64xf32> to vector<2x64xf32>
    %cst_237 = arith.constant dense<0xFF800000> : vector<64xf32>
    %343 = vector.multi_reduction <maximumf>, %342, %cst_237 [0] : vector<2x64xf32> to vector<64xf32>
    %344 = vector.shape_cast %343 : vector<64xf32> to vector<1x64xf32>
    %c40_238 = arith.constant 40 : index
    %c0_239 = arith.constant 0 : index
    %345 = vector.load %arg15[%c40_238, %c0_239] : memref<56x64xf32, #tpu.memory_space<vmem>>, vector<1x64xf32>
    tpu.vector_store %arg15[%c40_238, %c0_239], %344 {strides = array<i32>} : memref<56x64xf32, #tpu.memory_space<vmem>>, vector<1x64xf32>,
    %346 = vector.extract_strided_slice %223 {offsets = [96, 0], sizes = [2, 64], strides = [1, 1]} : vector<125x64xf32> to vector<2x64xf32>
    %cst_240 = arith.constant dense<0xFF800000> : vector<64xf32>
    %347 = vector.multi_reduction <maximumf>, %346, %cst_240 [0] : vector<2x64xf32> to vector<64xf32>
    %348 = vector.shape_cast %347 : vector<64xf32> to vector<1x64xf32>
    %c43_241 = arith.constant 43 : index
    %c0_242 = arith.constant 0 : index
    %349 = vector.load %arg15[%c43_241, %c0_242] : memref<56x64xf32, #tpu.memory_space<vmem>>, vector<1x64xf32>
    tpu.vector_store %arg15[%c43_241, %c0_242], %348 {strides = array<i32>} : memref<56x64xf32, #tpu.memory_space<vmem>>, vector<1x64xf32>,
    %350 = vector.extract_strided_slice %223 {offsets = [98, 0], sizes = [3, 64], strides = [1, 1]} : vector<125x64xf32> to vector<3x64xf32>
    %cst_243 = arith.constant dense<0xFF800000> : vector<64xf32>
    %351 = vector.multi_reduction <maximumf>, %350, %cst_243 [0] : vector<3x64xf32> to vector<64xf32>
    %352 = vector.shape_cast %351 : vector<64xf32> to vector<1x64xf32>
    %c44_244 = arith.constant 44 : index
    %c0_245 = arith.constant 0 : index
    %353 = vector.load %arg15[%c44_244, %c0_245] : memref<56x64xf32, #tpu.memory_space<vmem>>, vector<1x64xf32>
    tpu.vector_store %arg15[%c44_244, %c0_245], %352 {strides = array<i32>} : memref<56x64xf32, #tpu.memory_space<vmem>>, vector<1x64xf32>,
    %354 = vector.extract_strided_slice %223 {offsets = [101, 0], sizes = [3, 64], strides = [1, 1]} : vector<125x64xf32> to vector<3x64xf32>
    %cst_246 = arith.constant dense<0xFF800000> : vector<64xf32>
    %355 = vector.multi_reduction <maximumf>, %354, %cst_246 [0] : vector<3x64xf32> to vector<64xf32>
    %356 = vector.shape_cast %355 : vector<64xf32> to vector<1x64xf32>
    %c45_247 = arith.constant 45 : index
    %c0_248 = arith.constant 0 : index
    %357 = vector.load %arg15[%c45_247, %c0_248] : memref<56x64xf32, #tpu.memory_space<vmem>>, vector<1x64xf32>
    tpu.vector_store %arg15[%c45_247, %c0_248], %356 {strides = array<i32>} : memref<56x64xf32, #tpu.memory_space<vmem>>, vector<1x64xf32>,
    %358 = vector.extract_strided_slice %223 {offsets = [104, 0], sizes = [3, 64], strides = [1, 1]} : vector<125x64xf32> to vector<3x64xf32>
    %cst_249 = arith.constant dense<0xFF800000> : vector<64xf32>
    %359 = vector.multi_reduction <maximumf>, %358, %cst_249 [0] : vector<3x64xf32> to vector<64xf32>
    %360 = vector.shape_cast %359 : vector<64xf32> to vector<1x64xf32>
    %c46_250 = arith.constant 46 : index
    %c0_251 = arith.constant 0 : index
    %361 = vector.load %arg15[%c46_250, %c0_251] : memref<56x64xf32, #tpu.memory_space<vmem>>, vector<1x64xf32>
    tpu.vector_store %arg15[%c46_250, %c0_251], %360 {strides = array<i32>} : memref<56x64xf32, #tpu.memory_space<vmem>>, vector<1x64xf32>,
    %362 = vector.extract_strided_slice %223 {offsets = [107, 0], sizes = [2, 64], strides = [1, 1]} : vector<125x64xf32> to vector<2x64xf32>
    %cst_252 = arith.constant dense<0xFF800000> : vector<64xf32>
    %363 = vector.multi_reduction <maximumf>, %362, %cst_252 [0] : vector<2x64xf32> to vector<64xf32>
    %364 = vector.shape_cast %363 : vector<64xf32> to vector<1x64xf32>
    %c47 = arith.constant 47 : index
    %c0_253 = arith.constant 0 : index
    %365 = vector.load %arg15[%c47, %c0_253] : memref<56x64xf32, #tpu.memory_space<vmem>>, vector<1x64xf32>
    tpu.vector_store %arg15[%c47, %c0_253], %364 {strides = array<i32>} : memref<56x64xf32, #tpu.memory_space<vmem>>, vector<1x64xf32>,
    %366 = vector.extract_strided_slice %223 {offsets = [112, 0], sizes = [2, 64], strides = [1, 1]} : vector<125x64xf32> to vector<2x64xf32>
    %cst_254 = arith.constant dense<0xFF800000> : vector<64xf32>
    %367 = vector.multi_reduction <maximumf>, %366, %cst_254 [0] : vector<2x64xf32> to vector<64xf32>
    %368 = vector.shape_cast %367 : vector<64xf32> to vector<1x64xf32>
    %c50 = arith.constant 50 : index
    %c0_255 = arith.constant 0 : index
    %369 = vector.load %arg15[%c50, %c0_255] : memref<56x64xf32, #tpu.memory_space<vmem>>, vector<1x64xf32>
    tpu.vector_store %arg15[%c50, %c0_255], %368 {strides = array<i32>} : memref<56x64xf32, #tpu.memory_space<vmem>>, vector<1x64xf32>,
    %370 = vector.extract_strided_slice %223 {offsets = [114, 0], sizes = [3, 64], strides = [1, 1]} : vector<125x64xf32> to vector<3x64xf32>
    %cst_256 = arith.constant dense<0xFF800000> : vector<64xf32>
    %371 = vector.multi_reduction <maximumf>, %370, %cst_256 [0] : vector<3x64xf32> to vector<64xf32>
    %372 = vector.shape_cast %371 : vector<64xf32> to vector<1x64xf32>
    %c51 = arith.constant 51 : index
    %c0_257 = arith.constant 0 : index
    %373 = vector.load %arg15[%c51, %c0_257] : memref<56x64xf32, #tpu.memory_space<vmem>>, vector<1x64xf32>
    tpu.vector_store %arg15[%c51, %c0_257], %372 {strides = array<i32>} : memref<56x64xf32, #tpu.memory_space<vmem>>, vector<1x64xf32>,
    %374 = vector.extract_strided_slice %223 {offsets = [117, 0], sizes = [3, 64], strides = [1, 1]} : vector<125x64xf32> to vector<3x64xf32>
    %cst_258 = arith.constant dense<0xFF800000> : vector<64xf32>
    %375 = vector.multi_reduction <maximumf>, %374, %cst_258 [0] : vector<3x64xf32> to vector<64xf32>
    %376 = vector.shape_cast %375 : vector<64xf32> to vector<1x64xf32>
    %c52 = arith.constant 52 : index
    %c0_259 = arith.constant 0 : index
    %377 = vector.load %arg15[%c52, %c0_259] : memref<56x64xf32, #tpu.memory_space<vmem>>, vector<1x64xf32>
    tpu.vector_store %arg15[%c52, %c0_259], %376 {strides = array<i32>} : memref<56x64xf32, #tpu.memory_space<vmem>>, vector<1x64xf32>,
    %378 = vector.extract_strided_slice %223 {offsets = [120, 0], sizes = [3, 64], strides = [1, 1]} : vector<125x64xf32> to vector<3x64xf32>
    %cst_260 = arith.constant dense<0xFF800000> : vector<64xf32>
    %379 = vector.multi_reduction <maximumf>, %378, %cst_260 [0] : vector<3x64xf32> to vector<64xf32>
    %380 = vector.shape_cast %379 : vector<64xf32> to vector<1x64xf32>
    %c53 = arith.constant 53 : index
    %c0_261 = arith.constant 0 : index
    %381 = vector.load %arg15[%c53, %c0_261] : memref<56x64xf32, #tpu.memory_space<vmem>>, vector<1x64xf32>
    tpu.vector_store %arg15[%c53, %c0_261], %380 {strides = array<i32>} : memref<56x64xf32, #tpu.memory_space<vmem>>, vector<1x64xf32>,
    %382 = vector.extract_strided_slice %223 {offsets = [123, 0], sizes = [2, 64], strides = [1, 1]} : vector<125x64xf32> to vector<2x64xf32>
    %cst_262 = arith.constant dense<0xFF800000> : vector<64xf32>
    %383 = vector.multi_reduction <maximumf>, %382, %cst_262 [0] : vector<2x64xf32> to vector<64xf32>
    %384 = vector.shape_cast %383 : vector<64xf32> to vector<1x64xf32>
    %c54 = arith.constant 54 : index
    %c0_263 = arith.constant 0 : index
    %385 = vector.load %arg15[%c54, %c0_263] : memref<56x64xf32, #tpu.memory_space<vmem>>, vector<1x64xf32>
    tpu.vector_store %arg15[%c54, %c0_263], %384 {strides = array<i32>} : memref<56x64xf32, #tpu.memory_space<vmem>>, vector<1x64xf32>,
    %c0_264 = arith.constant 0 : index
    %c0_265 = arith.constant 0 : index
    %386 = vector.load %arg15[%c0_264, %c0_265] : memref<56x64xf32, #tpu.memory_space<vmem>>, vector<54x64xf32>
    %c0_266 = arith.constant 0 : index
    %c0_267 = arith.constant 0 : index
    %c0_268 = arith.constant 0 : index
    %387 = vector.load %arg10[%c0_266, %c0_267, %c0_268] : memref<3x64x128xf32, #tpu.memory_space<vmem>>, vector<1x64x128xf32>
    %388 = vector.shape_cast %387 : vector<1x64x128xf32> to vector<64x128xf32>
    %cst_269 = arith.constant dense<0.000000e+00> : vector<54x128xf32>
    %389 = tpu.matmul %386, %388, %cst_269 {dimension_numbers = #tpu.dot_dimension_numbers<[1], [0], [0], [1], [0, 0, 1, 1], [], []>} : vector<54x64xf32>, vector<64x128xf32>, vector<54x128xf32> -> vector<54x128xf32>
    %c1_270 = arith.constant 1 : index
    %c0_271 = arith.constant 0 : index
    %390 = vector.load %arg15[%c1_270, %c0_271] : memref<56x64xf32, #tpu.memory_space<vmem>>, vector<54x64xf32>
    %c1_272 = arith.constant 1 : index
    %c0_273 = arith.constant 0 : index
    %c0_274 = arith.constant 0 : index
    %391 = vector.load %arg10[%c1_272, %c0_273, %c0_274] : memref<3x64x128xf32, #tpu.memory_space<vmem>>, vector<1x64x128xf32>
    %392 = vector.shape_cast %391 : vector<1x64x128xf32> to vector<64x128xf32>
    %cst_275 = arith.constant dense<0.000000e+00> : vector<54x128xf32>
    %393 = tpu.matmul %390, %392, %cst_275 {dimension_numbers = #tpu.dot_dimension_numbers<[1], [0], [0], [1], [0, 0, 1, 1], [], []>} : vector<54x64xf32>, vector<64x128xf32>, vector<54x128xf32> -> vector<54x128xf32>
    %394 = arith.addf %389, %393 : vector<54x128xf32>
    %c2_276 = arith.constant 2 : index
    %c0_277 = arith.constant 0 : index
    %395 = vector.load %arg15[%c2_276, %c0_277] : memref<56x64xf32, #tpu.memory_space<vmem>>, vector<54x64xf32>
    %c2_278 = arith.constant 2 : index
    %c0_279 = arith.constant 0 : index
    %c0_280 = arith.constant 0 : index
    %396 = vector.load %arg10[%c2_278, %c0_279, %c0_280] : memref<3x64x128xf32, #tpu.memory_space<vmem>>, vector<1x64x128xf32>
    %397 = vector.shape_cast %396 : vector<1x64x128xf32> to vector<64x128xf32>
    %cst_281 = arith.constant dense<0.000000e+00> : vector<54x128xf32>
    %398 = tpu.matmul %395, %397, %cst_281 {dimension_numbers = #tpu.dot_dimension_numbers<[1], [0], [0], [1], [0, 0, 1, 1], [], []>} : vector<54x64xf32>, vector<64x128xf32>, vector<54x128xf32> -> vector<54x128xf32>
    %399 = arith.addf %394, %398 : vector<54x128xf32>
    %c0_282 = arith.constant 0 : index
    %c0_283 = arith.constant 0 : index
    %400 = vector.load %arg11[%c0_282, %c0_283] : memref<1x128xf32, #tpu.memory_space<vmem>>, vector<1x128xf32>
    %401 = vector.broadcast %400 : vector<1x128xf32> to vector<54x128xf32>
    %402 = arith.addf %399, %401 : vector<54x128xf32>
    %cst_284 = arith.constant 0.000000e+00 : f32
    %403 = vector.broadcast %cst_284 : f32 to vector<54x128xf32>
    %404 = arith.maximumf %402, %403 : vector<54x128xf32>
    %405 = vector.extract_strided_slice %404 {offsets = [0, 0], sizes = [5, 128], strides = [1, 1]} : vector<54x128xf32> to vector<5x128xf32>
    %cst_285 = arith.constant dense<0xFF800000> : vector<128xf32>
    %406 = vector.multi_reduction <maximumf>, %405, %cst_285 [0] : vector<5x128xf32> to vector<128xf32>
    %407 = vector.shape_cast %406 : vector<128xf32> to vector<1x128xf32>
    %c0_286 = arith.constant 0 : index
    %c128 = arith.constant 128 : index
    %408 = vector.load %arg14[%c0_286, %c128] : memref<8x384xf32, #tpu.memory_space<vmem>>, vector<1x128xf32>
    tpu.vector_store %arg14[%c0_286, %c128], %407 {strides = array<i32>} : memref<8x384xf32, #tpu.memory_space<vmem>>, vector<1x128xf32>,
    %409 = vector.extract_strided_slice %404 {offsets = [7, 0], sizes = [5, 128], strides = [1, 1]} : vector<54x128xf32> to vector<5x128xf32>
    %cst_287 = arith.constant dense<0xFF800000> : vector<128xf32>
    %410 = vector.multi_reduction <maximumf>, %409, %cst_287 [0] : vector<5x128xf32> to vector<128xf32>
    %411 = vector.shape_cast %410 : vector<128xf32> to vector<1x128xf32>
    %c1_288 = arith.constant 1 : index
    %c128_289 = arith.constant 128 : index
    %412 = vector.load %arg14[%c1_288, %c128_289] : memref<8x384xf32, #tpu.memory_space<vmem>>, vector<1x128xf32>
    tpu.vector_store %arg14[%c1_288, %c128_289], %411 {strides = array<i32>} : memref<8x384xf32, #tpu.memory_space<vmem>>, vector<1x128xf32>,
    %413 = vector.extract_strided_slice %404 {offsets = [14, 0], sizes = [5, 128], strides = [1, 1]} : vector<54x128xf32> to vector<5x128xf32>
    %cst_290 = arith.constant dense<0xFF800000> : vector<128xf32>
    %414 = vector.multi_reduction <maximumf>, %413, %cst_290 [0] : vector<5x128xf32> to vector<128xf32>
    %415 = vector.shape_cast %414 : vector<128xf32> to vector<1x128xf32>
    %c2_291 = arith.constant 2 : index
    %c128_292 = arith.constant 128 : index
    %416 = vector.load %arg14[%c2_291, %c128_292] : memref<8x384xf32, #tpu.memory_space<vmem>>, vector<1x128xf32>
    tpu.vector_store %arg14[%c2_291, %c128_292], %415 {strides = array<i32>} : memref<8x384xf32, #tpu.memory_space<vmem>>, vector<1x128xf32>,
    %417 = vector.extract_strided_slice %404 {offsets = [21, 0], sizes = [5, 128], strides = [1, 1]} : vector<54x128xf32> to vector<5x128xf32>
    %cst_293 = arith.constant dense<0xFF800000> : vector<128xf32>
    %418 = vector.multi_reduction <maximumf>, %417, %cst_293 [0] : vector<5x128xf32> to vector<128xf32>
    %419 = vector.shape_cast %418 : vector<128xf32> to vector<1x128xf32>
    %c3_294 = arith.constant 3 : index
    %c128_295 = arith.constant 128 : index
    %420 = vector.load %arg14[%c3_294, %c128_295] : memref<8x384xf32, #tpu.memory_space<vmem>>, vector<1x128xf32>
    tpu.vector_store %arg14[%c3_294, %c128_295], %419 {strides = array<i32>} : memref<8x384xf32, #tpu.memory_space<vmem>>, vector<1x128xf32>,
    %421 = vector.extract_strided_slice %404 {offsets = [28, 0], sizes = [5, 128], strides = [1, 1]} : vector<54x128xf32> to vector<5x128xf32>
    %cst_296 = arith.constant dense<0xFF800000> : vector<128xf32>
    %422 = vector.multi_reduction <maximumf>, %421, %cst_296 [0] : vector<5x128xf32> to vector<128xf32>
    %423 = vector.shape_cast %422 : vector<128xf32> to vector<1x128xf32>
    %c4_297 = arith.constant 4 : index
    %c128_298 = arith.constant 128 : index
    %424 = vector.load %arg14[%c4_297, %c128_298] : memref<8x384xf32, #tpu.memory_space<vmem>>, vector<1x128xf32>
    tpu.vector_store %arg14[%c4_297, %c128_298], %423 {strides = array<i32>} : memref<8x384xf32, #tpu.memory_space<vmem>>, vector<1x128xf32>,
    %425 = vector.extract_strided_slice %404 {offsets = [35, 0], sizes = [5, 128], strides = [1, 1]} : vector<54x128xf32> to vector<5x128xf32>
    %cst_299 = arith.constant dense<0xFF800000> : vector<128xf32>
    %426 = vector.multi_reduction <maximumf>, %425, %cst_299 [0] : vector<5x128xf32> to vector<128xf32>
    %427 = vector.shape_cast %426 : vector<128xf32> to vector<1x128xf32>
    %c5_300 = arith.constant 5 : index
    %c128_301 = arith.constant 128 : index
    %428 = vector.load %arg14[%c5_300, %c128_301] : memref<8x384xf32, #tpu.memory_space<vmem>>, vector<1x128xf32>
    tpu.vector_store %arg14[%c5_300, %c128_301], %427 {strides = array<i32>} : memref<8x384xf32, #tpu.memory_space<vmem>>, vector<1x128xf32>,
    %429 = vector.extract_strided_slice %404 {offsets = [42, 0], sizes = [5, 128], strides = [1, 1]} : vector<54x128xf32> to vector<5x128xf32>
    %cst_302 = arith.constant dense<0xFF800000> : vector<128xf32>
    %430 = vector.multi_reduction <maximumf>, %429, %cst_302 [0] : vector<5x128xf32> to vector<128xf32>
    %431 = vector.shape_cast %430 : vector<128xf32> to vector<1x128xf32>
    %c6_303 = arith.constant 6 : index
    %c128_304 = arith.constant 128 : index
    %432 = vector.load %arg14[%c6_303, %c128_304] : memref<8x384xf32, #tpu.memory_space<vmem>>, vector<1x128xf32>
    tpu.vector_store %arg14[%c6_303, %c128_304], %431 {strides = array<i32>} : memref<8x384xf32, #tpu.memory_space<vmem>>, vector<1x128xf32>,
    %433 = vector.extract_strided_slice %404 {offsets = [49, 0], sizes = [5, 128], strides = [1, 1]} : vector<54x128xf32> to vector<5x128xf32>
    %cst_305 = arith.constant dense<0xFF800000> : vector<128xf32>
    %434 = vector.multi_reduction <maximumf>, %433, %cst_305 [0] : vector<5x128xf32> to vector<128xf32>
    %435 = vector.shape_cast %434 : vector<128xf32> to vector<1x128xf32>
    %c7_306 = arith.constant 7 : index
    %c128_307 = arith.constant 128 : index
    %436 = vector.load %arg14[%c7_306, %c128_307] : memref<8x384xf32, #tpu.memory_space<vmem>>, vector<1x128xf32>
    tpu.vector_store %arg14[%c7_306, %c128_307], %435 {strides = array<i32>} : memref<8x384xf32, #tpu.memory_space<vmem>>, vector<1x128xf32>,
    %c0_308 = arith.constant 0 : index
    %c0_309 = arith.constant 0 : index
    %437 = vector.load %arg1[%c0_308, %c0_309] : memref<128x300xbf16, #tpu.memory_space<vmem>>, vector<124x300xbf16>
    %c0_310 = arith.constant 0 : index
    %c0_311 = arith.constant 0 : index
    %c0_312 = arith.constant 0 : index
    %438 = vector.load %arg6[%c0_310, %c0_311, %c0_312] : memref<5x300x64xbf16, #tpu.memory_space<vmem>>, vector<1x300x64xbf16>
    %439 = vector.shape_cast %438 : vector<1x300x64xbf16> to vector<300x64xbf16>
    %cst_313 = arith.constant dense<0.000000e+00> : vector<124x64xf32>
    %440 = tpu.matmul %437, %439, %cst_313 {dimension_numbers = #tpu.dot_dimension_numbers<[1], [0], [0], [1], [0, 0, 1, 1], [], []>} : vector<124x300xbf16>, vector<300x64xbf16>, vector<124x64xf32> -> vector<124x64xf32>
    %c1_314 = arith.constant 1 : index
    %c0_315 = arith.constant 0 : index
    %441 = vector.load %arg1[%c1_314, %c0_315] : memref<128x300xbf16, #tpu.memory_space<vmem>>, vector<124x300xbf16>
    %c1_316 = arith.constant 1 : index
    %c0_317 = arith.constant 0 : index
    %c0_318 = arith.constant 0 : index
    %442 = vector.load %arg6[%c1_316, %c0_317, %c0_318] : memref<5x300x64xbf16, #tpu.memory_space<vmem>>, vector<1x300x64xbf16>
    %443 = vector.shape_cast %442 : vector<1x300x64xbf16> to vector<300x64xbf16>
    %cst_319 = arith.constant dense<0.000000e+00> : vector<124x64xf32>
    %444 = tpu.matmul %441, %443, %cst_319 {dimension_numbers = #tpu.dot_dimension_numbers<[1], [0], [0], [1], [0, 0, 1, 1], [], []>} : vector<124x300xbf16>, vector<300x64xbf16>, vector<124x64xf32> -> vector<124x64xf32>
    %445 = arith.addf %440, %444 : vector<124x64xf32>
    %c2_320 = arith.constant 2 : index
    %c0_321 = arith.constant 0 : index
    %446 = vector.load %arg1[%c2_320, %c0_321] : memref<128x300xbf16, #tpu.memory_space<vmem>>, vector<124x300xbf16>
    %c2_322 = arith.constant 2 : index
    %c0_323 = arith.constant 0 : index
    %c0_324 = arith.constant 0 : index
    %447 = vector.load %arg6[%c2_322, %c0_323, %c0_324] : memref<5x300x64xbf16, #tpu.memory_space<vmem>>, vector<1x300x64xbf16>
    %448 = vector.shape_cast %447 : vector<1x300x64xbf16> to vector<300x64xbf16>
    %cst_325 = arith.constant dense<0.000000e+00> : vector<124x64xf32>
    %449 = tpu.matmul %446, %448, %cst_325 {dimension_numbers = #tpu.dot_dimension_numbers<[1], [0], [0], [1], [0, 0, 1, 1], [], []>} : vector<124x300xbf16>, vector<300x64xbf16>, vector<124x64xf32> -> vector<124x64xf32>
    %450 = arith.addf %445, %449 : vector<124x64xf32>
    %c3_326 = arith.constant 3 : index
    %c0_327 = arith.constant 0 : index
    %451 = vector.load %arg1[%c3_326, %c0_327] : memref<128x300xbf16, #tpu.memory_space<vmem>>, vector<124x300xbf16>
    %c3_328 = arith.constant 3 : index
    %c0_329 = arith.constant 0 : index
    %c0_330 = arith.constant 0 : index
    %452 = vector.load %arg6[%c3_328, %c0_329, %c0_330] : memref<5x300x64xbf16, #tpu.memory_space<vmem>>, vector<1x300x64xbf16>
    %453 = vector.shape_cast %452 : vector<1x300x64xbf16> to vector<300x64xbf16>
    %cst_331 = arith.constant dense<0.000000e+00> : vector<124x64xf32>
    %454 = tpu.matmul %451, %453, %cst_331 {dimension_numbers = #tpu.dot_dimension_numbers<[1], [0], [0], [1], [0, 0, 1, 1], [], []>} : vector<124x300xbf16>, vector<300x64xbf16>, vector<124x64xf32> -> vector<124x64xf32>
    %455 = arith.addf %450, %454 : vector<124x64xf32>
    %c4_332 = arith.constant 4 : index
    %c0_333 = arith.constant 0 : index
    %456 = vector.load %arg1[%c4_332, %c0_333] : memref<128x300xbf16, #tpu.memory_space<vmem>>, vector<124x300xbf16>
    %c4_334 = arith.constant 4 : index
    %c0_335 = arith.constant 0 : index
    %c0_336 = arith.constant 0 : index
    %457 = vector.load %arg6[%c4_334, %c0_335, %c0_336] : memref<5x300x64xbf16, #tpu.memory_space<vmem>>, vector<1x300x64xbf16>
    %458 = vector.shape_cast %457 : vector<1x300x64xbf16> to vector<300x64xbf16>
    %cst_337 = arith.constant dense<0.000000e+00> : vector<124x64xf32>
    %459 = tpu.matmul %456, %458, %cst_337 {dimension_numbers = #tpu.dot_dimension_numbers<[1], [0], [0], [1], [0, 0, 1, 1], [], []>} : vector<124x300xbf16>, vector<300x64xbf16>, vector<124x64xf32> -> vector<124x64xf32>
    %460 = arith.addf %455, %459 : vector<124x64xf32>
    %c0_338 = arith.constant 0 : index
    %c0_339 = arith.constant 0 : index
    %461 = vector.load %arg7[%c0_338, %c0_339] : memref<1x64xf32, #tpu.memory_space<vmem>>, vector<1x64xf32>
    %462 = vector.broadcast %461 : vector<1x64xf32> to vector<124x64xf32>
    %463 = arith.addf %460, %462 : vector<124x64xf32>
    %cst_340 = arith.constant 0.000000e+00 : f32
    %464 = vector.broadcast %cst_340 : f32 to vector<124x64xf32>
    %465 = arith.maximumf %463, %464 : vector<124x64xf32>
    %cst_341 = arith.constant 0.000000e+00 : f32
    %466 = vector.broadcast %cst_341 : f32 to vector<48x64xf32>
    %c0_342 = arith.constant 0 : index
    %c0_343 = arith.constant 0 : index
    %467 = vector.load %arg15[%c0_342, %c0_343] : memref<56x64xf32, #tpu.memory_space<vmem>>, vector<48x64xf32>
    tpu.vector_store %arg15[%c0_342, %c0_343], %466 {strides = array<i32>} : memref<56x64xf32, #tpu.memory_space<vmem>>, vector<48x64xf32>,
    %468 = vector.extract_strided_slice %465 {offsets = [0, 0], sizes = [2, 64], strides = [1, 1]} : vector<124x64xf32> to vector<2x64xf32>
    %cst_344 = arith.constant dense<0xFF800000> : vector<64xf32>
    %469 = vector.multi_reduction <maximumf>, %468, %cst_344 [0] : vector<2x64xf32> to vector<64xf32>
    %470 = vector.shape_cast %469 : vector<64xf32> to vector<1x64xf32>
    %c1_345 = arith.constant 1 : index
    %c0_346 = arith.constant 0 : index
    %471 = vector.load %arg15[%c1_345, %c0_346] : memref<56x64xf32, #tpu.memory_space<vmem>>, vector<1x64xf32>
    tpu.vector_store %arg15[%c1_345, %c0_346], %470 {strides = array<i32>} : memref<56x64xf32, #tpu.memory_space<vmem>>, vector<1x64xf32>,
    %472 = vector.extract_strided_slice %465 {offsets = [2, 0], sizes = [3, 64], strides = [1, 1]} : vector<124x64xf32> to vector<3x64xf32>
    %cst_347 = arith.constant dense<0xFF800000> : vector<64xf32>
    %473 = vector.multi_reduction <maximumf>, %472, %cst_347 [0] : vector<3x64xf32> to vector<64xf32>
    %474 = vector.shape_cast %473 : vector<64xf32> to vector<1x64xf32>
    %c2_348 = arith.constant 2 : index
    %c0_349 = arith.constant 0 : index
    %475 = vector.load %arg15[%c2_348, %c0_349] : memref<56x64xf32, #tpu.memory_space<vmem>>, vector<1x64xf32>
    tpu.vector_store %arg15[%c2_348, %c0_349], %474 {strides = array<i32>} : memref<56x64xf32, #tpu.memory_space<vmem>>, vector<1x64xf32>,
    %476 = vector.extract_strided_slice %465 {offsets = [5, 0], sizes = [3, 64], strides = [1, 1]} : vector<124x64xf32> to vector<3x64xf32>
    %cst_350 = arith.constant dense<0xFF800000> : vector<64xf32>
    %477 = vector.multi_reduction <maximumf>, %476, %cst_350 [0] : vector<3x64xf32> to vector<64xf32>
    %478 = vector.shape_cast %477 : vector<64xf32> to vector<1x64xf32>
    %c3_351 = arith.constant 3 : index
    %c0_352 = arith.constant 0 : index
    %479 = vector.load %arg15[%c3_351, %c0_352] : memref<56x64xf32, #tpu.memory_space<vmem>>, vector<1x64xf32>
    tpu.vector_store %arg15[%c3_351, %c0_352], %478 {strides = array<i32>} : memref<56x64xf32, #tpu.memory_space<vmem>>, vector<1x64xf32>,
    %480 = vector.extract_strided_slice %465 {offsets = [8, 0], sizes = [3, 64], strides = [1, 1]} : vector<124x64xf32> to vector<3x64xf32>
    %cst_353 = arith.constant dense<0xFF800000> : vector<64xf32>
    %481 = vector.multi_reduction <maximumf>, %480, %cst_353 [0] : vector<3x64xf32> to vector<64xf32>
    %482 = vector.shape_cast %481 : vector<64xf32> to vector<1x64xf32>
    %c4_354 = arith.constant 4 : index
    %c0_355 = arith.constant 0 : index
    %483 = vector.load %arg15[%c4_354, %c0_355] : memref<56x64xf32, #tpu.memory_space<vmem>>, vector<1x64xf32>
    tpu.vector_store %arg15[%c4_354, %c0_355], %482 {strides = array<i32>} : memref<56x64xf32, #tpu.memory_space<vmem>>, vector<1x64xf32>,
    %484 = vector.extract_strided_slice %465 {offsets = [16, 0], sizes = [2, 64], strides = [1, 1]} : vector<124x64xf32> to vector<2x64xf32>
    %cst_356 = arith.constant dense<0xFF800000> : vector<64xf32>
    %485 = vector.multi_reduction <maximumf>, %484, %cst_356 [0] : vector<2x64xf32> to vector<64xf32>
    %486 = vector.shape_cast %485 : vector<64xf32> to vector<1x64xf32>
    %c7_357 = arith.constant 7 : index
    %c0_358 = arith.constant 0 : index
    %487 = vector.load %arg15[%c7_357, %c0_358] : memref<56x64xf32, #tpu.memory_space<vmem>>, vector<1x64xf32>
    tpu.vector_store %arg15[%c7_357, %c0_358], %486 {strides = array<i32>} : memref<56x64xf32, #tpu.memory_space<vmem>>, vector<1x64xf32>,
    %488 = vector.extract_strided_slice %465 {offsets = [18, 0], sizes = [3, 64], strides = [1, 1]} : vector<124x64xf32> to vector<3x64xf32>
    %cst_359 = arith.constant dense<0xFF800000> : vector<64xf32>
    %489 = vector.multi_reduction <maximumf>, %488, %cst_359 [0] : vector<3x64xf32> to vector<64xf32>
    %490 = vector.shape_cast %489 : vector<64xf32> to vector<1x64xf32>
    %c8_360 = arith.constant 8 : index
    %c0_361 = arith.constant 0 : index
    %491 = vector.load %arg15[%c8_360, %c0_361] : memref<56x64xf32, #tpu.memory_space<vmem>>, vector<1x64xf32>
    tpu.vector_store %arg15[%c8_360, %c0_361], %490 {strides = array<i32>} : memref<56x64xf32, #tpu.memory_space<vmem>>, vector<1x64xf32>,
    %492 = vector.extract_strided_slice %465 {offsets = [21, 0], sizes = [3, 64], strides = [1, 1]} : vector<124x64xf32> to vector<3x64xf32>
    %cst_362 = arith.constant dense<0xFF800000> : vector<64xf32>
    %493 = vector.multi_reduction <maximumf>, %492, %cst_362 [0] : vector<3x64xf32> to vector<64xf32>
    %494 = vector.shape_cast %493 : vector<64xf32> to vector<1x64xf32>
    %c9_363 = arith.constant 9 : index
    %c0_364 = arith.constant 0 : index
    %495 = vector.load %arg15[%c9_363, %c0_364] : memref<56x64xf32, #tpu.memory_space<vmem>>, vector<1x64xf32>
    tpu.vector_store %arg15[%c9_363, %c0_364], %494 {strides = array<i32>} : memref<56x64xf32, #tpu.memory_space<vmem>>, vector<1x64xf32>,
    %496 = vector.extract_strided_slice %465 {offsets = [24, 0], sizes = [3, 64], strides = [1, 1]} : vector<124x64xf32> to vector<3x64xf32>
    %cst_365 = arith.constant dense<0xFF800000> : vector<64xf32>
    %497 = vector.multi_reduction <maximumf>, %496, %cst_365 [0] : vector<3x64xf32> to vector<64xf32>
    %498 = vector.shape_cast %497 : vector<64xf32> to vector<1x64xf32>
    %c10_366 = arith.constant 10 : index
    %c0_367 = arith.constant 0 : index
    %499 = vector.load %arg15[%c10_366, %c0_367] : memref<56x64xf32, #tpu.memory_space<vmem>>, vector<1x64xf32>
    tpu.vector_store %arg15[%c10_366, %c0_367], %498 {strides = array<i32>} : memref<56x64xf32, #tpu.memory_space<vmem>>, vector<1x64xf32>,
    %500 = vector.extract_strided_slice %465 {offsets = [32, 0], sizes = [2, 64], strides = [1, 1]} : vector<124x64xf32> to vector<2x64xf32>
    %cst_368 = arith.constant dense<0xFF800000> : vector<64xf32>
    %501 = vector.multi_reduction <maximumf>, %500, %cst_368 [0] : vector<2x64xf32> to vector<64xf32>
    %502 = vector.shape_cast %501 : vector<64xf32> to vector<1x64xf32>
    %c13_369 = arith.constant 13 : index
    %c0_370 = arith.constant 0 : index
    %503 = vector.load %arg15[%c13_369, %c0_370] : memref<56x64xf32, #tpu.memory_space<vmem>>, vector<1x64xf32>
    tpu.vector_store %arg15[%c13_369, %c0_370], %502 {strides = array<i32>} : memref<56x64xf32, #tpu.memory_space<vmem>>, vector<1x64xf32>,
    %504 = vector.extract_strided_slice %465 {offsets = [34, 0], sizes = [3, 64], strides = [1, 1]} : vector<124x64xf32> to vector<3x64xf32>
    %cst_371 = arith.constant dense<0xFF800000> : vector<64xf32>
    %505 = vector.multi_reduction <maximumf>, %504, %cst_371 [0] : vector<3x64xf32> to vector<64xf32>
    %506 = vector.shape_cast %505 : vector<64xf32> to vector<1x64xf32>
    %c14_372 = arith.constant 14 : index
    %c0_373 = arith.constant 0 : index
    %507 = vector.load %arg15[%c14_372, %c0_373] : memref<56x64xf32, #tpu.memory_space<vmem>>, vector<1x64xf32>
    tpu.vector_store %arg15[%c14_372, %c0_373], %506 {strides = array<i32>} : memref<56x64xf32, #tpu.memory_space<vmem>>, vector<1x64xf32>,
    %508 = vector.extract_strided_slice %465 {offsets = [37, 0], sizes = [3, 64], strides = [1, 1]} : vector<124x64xf32> to vector<3x64xf32>
    %cst_374 = arith.constant dense<0xFF800000> : vector<64xf32>
    %509 = vector.multi_reduction <maximumf>, %508, %cst_374 [0] : vector<3x64xf32> to vector<64xf32>
    %510 = vector.shape_cast %509 : vector<64xf32> to vector<1x64xf32>
    %c15_375 = arith.constant 15 : index
    %c0_376 = arith.constant 0 : index
    %511 = vector.load %arg15[%c15_375, %c0_376] : memref<56x64xf32, #tpu.memory_space<vmem>>, vector<1x64xf32>
    tpu.vector_store %arg15[%c15_375, %c0_376], %510 {strides = array<i32>} : memref<56x64xf32, #tpu.memory_space<vmem>>, vector<1x64xf32>,
    %512 = vector.extract_strided_slice %465 {offsets = [40, 0], sizes = [3, 64], strides = [1, 1]} : vector<124x64xf32> to vector<3x64xf32>
    %cst_377 = arith.constant dense<0xFF800000> : vector<64xf32>
    %513 = vector.multi_reduction <maximumf>, %512, %cst_377 [0] : vector<3x64xf32> to vector<64xf32>
    %514 = vector.shape_cast %513 : vector<64xf32> to vector<1x64xf32>
    %c16_378 = arith.constant 16 : index
    %c0_379 = arith.constant 0 : index
    %515 = vector.load %arg15[%c16_378, %c0_379] : memref<56x64xf32, #tpu.memory_space<vmem>>, vector<1x64xf32>
    tpu.vector_store %arg15[%c16_378, %c0_379], %514 {strides = array<i32>} : memref<56x64xf32, #tpu.memory_space<vmem>>, vector<1x64xf32>,
    %516 = vector.extract_strided_slice %465 {offsets = [48, 0], sizes = [2, 64], strides = [1, 1]} : vector<124x64xf32> to vector<2x64xf32>
    %cst_380 = arith.constant dense<0xFF800000> : vector<64xf32>
    %517 = vector.multi_reduction <maximumf>, %516, %cst_380 [0] : vector<2x64xf32> to vector<64xf32>
    %518 = vector.shape_cast %517 : vector<64xf32> to vector<1x64xf32>
    %c19_381 = arith.constant 19 : index
    %c0_382 = arith.constant 0 : index
    %519 = vector.load %arg15[%c19_381, %c0_382] : memref<56x64xf32, #tpu.memory_space<vmem>>, vector<1x64xf32>
    tpu.vector_store %arg15[%c19_381, %c0_382], %518 {strides = array<i32>} : memref<56x64xf32, #tpu.memory_space<vmem>>, vector<1x64xf32>,
    %520 = vector.extract_strided_slice %465 {offsets = [50, 0], sizes = [3, 64], strides = [1, 1]} : vector<124x64xf32> to vector<3x64xf32>
    %cst_383 = arith.constant dense<0xFF800000> : vector<64xf32>
    %521 = vector.multi_reduction <maximumf>, %520, %cst_383 [0] : vector<3x64xf32> to vector<64xf32>
    %522 = vector.shape_cast %521 : vector<64xf32> to vector<1x64xf32>
    %c20_384 = arith.constant 20 : index
    %c0_385 = arith.constant 0 : index
    %523 = vector.load %arg15[%c20_384, %c0_385] : memref<56x64xf32, #tpu.memory_space<vmem>>, vector<1x64xf32>
    tpu.vector_store %arg15[%c20_384, %c0_385], %522 {strides = array<i32>} : memref<56x64xf32, #tpu.memory_space<vmem>>, vector<1x64xf32>,
    %524 = vector.extract_strided_slice %465 {offsets = [53, 0], sizes = [3, 64], strides = [1, 1]} : vector<124x64xf32> to vector<3x64xf32>
    %cst_386 = arith.constant dense<0xFF800000> : vector<64xf32>
    %525 = vector.multi_reduction <maximumf>, %524, %cst_386 [0] : vector<3x64xf32> to vector<64xf32>
    %526 = vector.shape_cast %525 : vector<64xf32> to vector<1x64xf32>
    %c21_387 = arith.constant 21 : index
    %c0_388 = arith.constant 0 : index
    %527 = vector.load %arg15[%c21_387, %c0_388] : memref<56x64xf32, #tpu.memory_space<vmem>>, vector<1x64xf32>
    tpu.vector_store %arg15[%c21_387, %c0_388], %526 {strides = array<i32>} : memref<56x64xf32, #tpu.memory_space<vmem>>, vector<1x64xf32>,
    %528 = vector.extract_strided_slice %465 {offsets = [56, 0], sizes = [3, 64], strides = [1, 1]} : vector<124x64xf32> to vector<3x64xf32>
    %cst_389 = arith.constant dense<0xFF800000> : vector<64xf32>
    %529 = vector.multi_reduction <maximumf>, %528, %cst_389 [0] : vector<3x64xf32> to vector<64xf32>
    %530 = vector.shape_cast %529 : vector<64xf32> to vector<1x64xf32>
    %c22_390 = arith.constant 22 : index
    %c0_391 = arith.constant 0 : index
    %531 = vector.load %arg15[%c22_390, %c0_391] : memref<56x64xf32, #tpu.memory_space<vmem>>, vector<1x64xf32>
    tpu.vector_store %arg15[%c22_390, %c0_391], %530 {strides = array<i32>} : memref<56x64xf32, #tpu.memory_space<vmem>>, vector<1x64xf32>,
    %532 = vector.extract_strided_slice %465 {offsets = [64, 0], sizes = [2, 64], strides = [1, 1]} : vector<124x64xf32> to vector<2x64xf32>
    %cst_392 = arith.constant dense<0xFF800000> : vector<64xf32>
    %533 = vector.multi_reduction <maximumf>, %532, %cst_392 [0] : vector<2x64xf32> to vector<64xf32>
    %534 = vector.shape_cast %533 : vector<64xf32> to vector<1x64xf32>
    %c25_393 = arith.constant 25 : index
    %c0_394 = arith.constant 0 : index
    %535 = vector.load %arg15[%c25_393, %c0_394] : memref<56x64xf32, #tpu.memory_space<vmem>>, vector<1x64xf32>
    tpu.vector_store %arg15[%c25_393, %c0_394], %534 {strides = array<i32>} : memref<56x64xf32, #tpu.memory_space<vmem>>, vector<1x64xf32>,
    %536 = vector.extract_strided_slice %465 {offsets = [66, 0], sizes = [3, 64], strides = [1, 1]} : vector<124x64xf32> to vector<3x64xf32>
    %cst_395 = arith.constant dense<0xFF800000> : vector<64xf32>
    %537 = vector.multi_reduction <maximumf>, %536, %cst_395 [0] : vector<3x64xf32> to vector<64xf32>
    %538 = vector.shape_cast %537 : vector<64xf32> to vector<1x64xf32>
    %c26_396 = arith.constant 26 : index
    %c0_397 = arith.constant 0 : index
    %539 = vector.load %arg15[%c26_396, %c0_397] : memref<56x64xf32, #tpu.memory_space<vmem>>, vector<1x64xf32>
    tpu.vector_store %arg15[%c26_396, %c0_397], %538 {strides = array<i32>} : memref<56x64xf32, #tpu.memory_space<vmem>>, vector<1x64xf32>,
    %540 = vector.extract_strided_slice %465 {offsets = [69, 0], sizes = [3, 64], strides = [1, 1]} : vector<124x64xf32> to vector<3x64xf32>
    %cst_398 = arith.constant dense<0xFF800000> : vector<64xf32>
    %541 = vector.multi_reduction <maximumf>, %540, %cst_398 [0] : vector<3x64xf32> to vector<64xf32>
    %542 = vector.shape_cast %541 : vector<64xf32> to vector<1x64xf32>
    %c27_399 = arith.constant 27 : index
    %c0_400 = arith.constant 0 : index
    %543 = vector.load %arg15[%c27_399, %c0_400] : memref<56x64xf32, #tpu.memory_space<vmem>>, vector<1x64xf32>
    tpu.vector_store %arg15[%c27_399, %c0_400], %542 {strides = array<i32>} : memref<56x64xf32, #tpu.memory_space<vmem>>, vector<1x64xf32>,
    %544 = vector.extract_strided_slice %465 {offsets = [72, 0], sizes = [3, 64], strides = [1, 1]} : vector<124x64xf32> to vector<3x64xf32>
    %cst_401 = arith.constant dense<0xFF800000> : vector<64xf32>
    %545 = vector.multi_reduction <maximumf>, %544, %cst_401 [0] : vector<3x64xf32> to vector<64xf32>
    %546 = vector.shape_cast %545 : vector<64xf32> to vector<1x64xf32>
    %c28_402 = arith.constant 28 : index
    %c0_403 = arith.constant 0 : index
    %547 = vector.load %arg15[%c28_402, %c0_403] : memref<56x64xf32, #tpu.memory_space<vmem>>, vector<1x64xf32>
    tpu.vector_store %arg15[%c28_402, %c0_403], %546 {strides = array<i32>} : memref<56x64xf32, #tpu.memory_space<vmem>>, vector<1x64xf32>,
    %548 = vector.extract_strided_slice %465 {offsets = [80, 0], sizes = [2, 64], strides = [1, 1]} : vector<124x64xf32> to vector<2x64xf32>
    %cst_404 = arith.constant dense<0xFF800000> : vector<64xf32>
    %549 = vector.multi_reduction <maximumf>, %548, %cst_404 [0] : vector<2x64xf32> to vector<64xf32>
    %550 = vector.shape_cast %549 : vector<64xf32> to vector<1x64xf32>
    %c31_405 = arith.constant 31 : index
    %c0_406 = arith.constant 0 : index
    %551 = vector.load %arg15[%c31_405, %c0_406] : memref<56x64xf32, #tpu.memory_space<vmem>>, vector<1x64xf32>
    tpu.vector_store %arg15[%c31_405, %c0_406], %550 {strides = array<i32>} : memref<56x64xf32, #tpu.memory_space<vmem>>, vector<1x64xf32>,
    %552 = vector.extract_strided_slice %465 {offsets = [82, 0], sizes = [3, 64], strides = [1, 1]} : vector<124x64xf32> to vector<3x64xf32>
    %cst_407 = arith.constant dense<0xFF800000> : vector<64xf32>
    %553 = vector.multi_reduction <maximumf>, %552, %cst_407 [0] : vector<3x64xf32> to vector<64xf32>
    %554 = vector.shape_cast %553 : vector<64xf32> to vector<1x64xf32>
    %c32_408 = arith.constant 32 : index
    %c0_409 = arith.constant 0 : index
    %555 = vector.load %arg15[%c32_408, %c0_409] : memref<56x64xf32, #tpu.memory_space<vmem>>, vector<1x64xf32>
    tpu.vector_store %arg15[%c32_408, %c0_409], %554 {strides = array<i32>} : memref<56x64xf32, #tpu.memory_space<vmem>>, vector<1x64xf32>,
    %556 = vector.extract_strided_slice %465 {offsets = [85, 0], sizes = [3, 64], strides = [1, 1]} : vector<124x64xf32> to vector<3x64xf32>
    %cst_410 = arith.constant dense<0xFF800000> : vector<64xf32>
    %557 = vector.multi_reduction <maximumf>, %556, %cst_410 [0] : vector<3x64xf32> to vector<64xf32>
    %558 = vector.shape_cast %557 : vector<64xf32> to vector<1x64xf32>
    %c33_411 = arith.constant 33 : index
    %c0_412 = arith.constant 0 : index
    %559 = vector.load %arg15[%c33_411, %c0_412] : memref<56x64xf32, #tpu.memory_space<vmem>>, vector<1x64xf32>
    tpu.vector_store %arg15[%c33_411, %c0_412], %558 {strides = array<i32>} : memref<56x64xf32, #tpu.memory_space<vmem>>, vector<1x64xf32>,
    %560 = vector.extract_strided_slice %465 {offsets = [88, 0], sizes = [3, 64], strides = [1, 1]} : vector<124x64xf32> to vector<3x64xf32>
    %cst_413 = arith.constant dense<0xFF800000> : vector<64xf32>
    %561 = vector.multi_reduction <maximumf>, %560, %cst_413 [0] : vector<3x64xf32> to vector<64xf32>
    %562 = vector.shape_cast %561 : vector<64xf32> to vector<1x64xf32>
    %c34_414 = arith.constant 34 : index
    %c0_415 = arith.constant 0 : index
    %563 = vector.load %arg15[%c34_414, %c0_415] : memref<56x64xf32, #tpu.memory_space<vmem>>, vector<1x64xf32>
    tpu.vector_store %arg15[%c34_414, %c0_415], %562 {strides = array<i32>} : memref<56x64xf32, #tpu.memory_space<vmem>>, vector<1x64xf32>,
    %564 = vector.extract_strided_slice %465 {offsets = [96, 0], sizes = [2, 64], strides = [1, 1]} : vector<124x64xf32> to vector<2x64xf32>
    %cst_416 = arith.constant dense<0xFF800000> : vector<64xf32>
    %565 = vector.multi_reduction <maximumf>, %564, %cst_416 [0] : vector<2x64xf32> to vector<64xf32>
    %566 = vector.shape_cast %565 : vector<64xf32> to vector<1x64xf32>
    %c37_417 = arith.constant 37 : index
    %c0_418 = arith.constant 0 : index
    %567 = vector.load %arg15[%c37_417, %c0_418] : memref<56x64xf32, #tpu.memory_space<vmem>>, vector<1x64xf32>
    tpu.vector_store %arg15[%c37_417, %c0_418], %566 {strides = array<i32>} : memref<56x64xf32, #tpu.memory_space<vmem>>, vector<1x64xf32>,
    %568 = vector.extract_strided_slice %465 {offsets = [98, 0], sizes = [3, 64], strides = [1, 1]} : vector<124x64xf32> to vector<3x64xf32>
    %cst_419 = arith.constant dense<0xFF800000> : vector<64xf32>
    %569 = vector.multi_reduction <maximumf>, %568, %cst_419 [0] : vector<3x64xf32> to vector<64xf32>
    %570 = vector.shape_cast %569 : vector<64xf32> to vector<1x64xf32>
    %c38_420 = arith.constant 38 : index
    %c0_421 = arith.constant 0 : index
    %571 = vector.load %arg15[%c38_420, %c0_421] : memref<56x64xf32, #tpu.memory_space<vmem>>, vector<1x64xf32>
    tpu.vector_store %arg15[%c38_420, %c0_421], %570 {strides = array<i32>} : memref<56x64xf32, #tpu.memory_space<vmem>>, vector<1x64xf32>,
    %572 = vector.extract_strided_slice %465 {offsets = [101, 0], sizes = [3, 64], strides = [1, 1]} : vector<124x64xf32> to vector<3x64xf32>
    %cst_422 = arith.constant dense<0xFF800000> : vector<64xf32>
    %573 = vector.multi_reduction <maximumf>, %572, %cst_422 [0] : vector<3x64xf32> to vector<64xf32>
    %574 = vector.shape_cast %573 : vector<64xf32> to vector<1x64xf32>
    %c39_423 = arith.constant 39 : index
    %c0_424 = arith.constant 0 : index
    %575 = vector.load %arg15[%c39_423, %c0_424] : memref<56x64xf32, #tpu.memory_space<vmem>>, vector<1x64xf32>
    tpu.vector_store %arg15[%c39_423, %c0_424], %574 {strides = array<i32>} : memref<56x64xf32, #tpu.memory_space<vmem>>, vector<1x64xf32>,
    %576 = vector.extract_strided_slice %465 {offsets = [104, 0], sizes = [3, 64], strides = [1, 1]} : vector<124x64xf32> to vector<3x64xf32>
    %cst_425 = arith.constant dense<0xFF800000> : vector<64xf32>
    %577 = vector.multi_reduction <maximumf>, %576, %cst_425 [0] : vector<3x64xf32> to vector<64xf32>
    %578 = vector.shape_cast %577 : vector<64xf32> to vector<1x64xf32>
    %c40_426 = arith.constant 40 : index
    %c0_427 = arith.constant 0 : index
    %579 = vector.load %arg15[%c40_426, %c0_427] : memref<56x64xf32, #tpu.memory_space<vmem>>, vector<1x64xf32>
    tpu.vector_store %arg15[%c40_426, %c0_427], %578 {strides = array<i32>} : memref<56x64xf32, #tpu.memory_space<vmem>>, vector<1x64xf32>,
    %580 = vector.extract_strided_slice %465 {offsets = [112, 0], sizes = [2, 64], strides = [1, 1]} : vector<124x64xf32> to vector<2x64xf32>
    %cst_428 = arith.constant dense<0xFF800000> : vector<64xf32>
    %581 = vector.multi_reduction <maximumf>, %580, %cst_428 [0] : vector<2x64xf32> to vector<64xf32>
    %582 = vector.shape_cast %581 : vector<64xf32> to vector<1x64xf32>
    %c43_429 = arith.constant 43 : index
    %c0_430 = arith.constant 0 : index
    %583 = vector.load %arg15[%c43_429, %c0_430] : memref<56x64xf32, #tpu.memory_space<vmem>>, vector<1x64xf32>
    tpu.vector_store %arg15[%c43_429, %c0_430], %582 {strides = array<i32>} : memref<56x64xf32, #tpu.memory_space<vmem>>, vector<1x64xf32>,
    %584 = vector.extract_strided_slice %465 {offsets = [114, 0], sizes = [3, 64], strides = [1, 1]} : vector<124x64xf32> to vector<3x64xf32>
    %cst_431 = arith.constant dense<0xFF800000> : vector<64xf32>
    %585 = vector.multi_reduction <maximumf>, %584, %cst_431 [0] : vector<3x64xf32> to vector<64xf32>
    %586 = vector.shape_cast %585 : vector<64xf32> to vector<1x64xf32>
    %c44_432 = arith.constant 44 : index
    %c0_433 = arith.constant 0 : index
    %587 = vector.load %arg15[%c44_432, %c0_433] : memref<56x64xf32, #tpu.memory_space<vmem>>, vector<1x64xf32>
    tpu.vector_store %arg15[%c44_432, %c0_433], %586 {strides = array<i32>} : memref<56x64xf32, #tpu.memory_space<vmem>>, vector<1x64xf32>,
    %588 = vector.extract_strided_slice %465 {offsets = [117, 0], sizes = [3, 64], strides = [1, 1]} : vector<124x64xf32> to vector<3x64xf32>
    %cst_434 = arith.constant dense<0xFF800000> : vector<64xf32>
    %589 = vector.multi_reduction <maximumf>, %588, %cst_434 [0] : vector<3x64xf32> to vector<64xf32>
    %590 = vector.shape_cast %589 : vector<64xf32> to vector<1x64xf32>
    %c45_435 = arith.constant 45 : index
    %c0_436 = arith.constant 0 : index
    %591 = vector.load %arg15[%c45_435, %c0_436] : memref<56x64xf32, #tpu.memory_space<vmem>>, vector<1x64xf32>
    tpu.vector_store %arg15[%c45_435, %c0_436], %590 {strides = array<i32>} : memref<56x64xf32, #tpu.memory_space<vmem>>, vector<1x64xf32>,
    %592 = vector.extract_strided_slice %465 {offsets = [120, 0], sizes = [3, 64], strides = [1, 1]} : vector<124x64xf32> to vector<3x64xf32>
    %cst_437 = arith.constant dense<0xFF800000> : vector<64xf32>
    %593 = vector.multi_reduction <maximumf>, %592, %cst_437 [0] : vector<3x64xf32> to vector<64xf32>
    %594 = vector.shape_cast %593 : vector<64xf32> to vector<1x64xf32>
    %c46_438 = arith.constant 46 : index
    %c0_439 = arith.constant 0 : index
    %595 = vector.load %arg15[%c46_438, %c0_439] : memref<56x64xf32, #tpu.memory_space<vmem>>, vector<1x64xf32>
    tpu.vector_store %arg15[%c46_438, %c0_439], %594 {strides = array<i32>} : memref<56x64xf32, #tpu.memory_space<vmem>>, vector<1x64xf32>,
    %c0_440 = arith.constant 0 : index
    %c0_441 = arith.constant 0 : index
    %596 = vector.load %arg15[%c0_440, %c0_441] : memref<56x64xf32, #tpu.memory_space<vmem>>, vector<46x64xf32>
    %c0_442 = arith.constant 0 : index
    %c0_443 = arith.constant 0 : index
    %c0_444 = arith.constant 0 : index
    %597 = vector.load %arg12[%c0_442, %c0_443, %c0_444] : memref<3x64x128xf32, #tpu.memory_space<vmem>>, vector<1x64x128xf32>
    %598 = vector.shape_cast %597 : vector<1x64x128xf32> to vector<64x128xf32>
    %cst_445 = arith.constant dense<0.000000e+00> : vector<46x128xf32>
    %599 = tpu.matmul %596, %598, %cst_445 {dimension_numbers = #tpu.dot_dimension_numbers<[1], [0], [0], [1], [0, 0, 1, 1], [], []>} : vector<46x64xf32>, vector<64x128xf32>, vector<46x128xf32> -> vector<46x128xf32>
    %c1_446 = arith.constant 1 : index
    %c0_447 = arith.constant 0 : index
    %600 = vector.load %arg15[%c1_446, %c0_447] : memref<56x64xf32, #tpu.memory_space<vmem>>, vector<46x64xf32>
    %c1_448 = arith.constant 1 : index
    %c0_449 = arith.constant 0 : index
    %c0_450 = arith.constant 0 : index
    %601 = vector.load %arg12[%c1_448, %c0_449, %c0_450] : memref<3x64x128xf32, #tpu.memory_space<vmem>>, vector<1x64x128xf32>
    %602 = vector.shape_cast %601 : vector<1x64x128xf32> to vector<64x128xf32>
    %cst_451 = arith.constant dense<0.000000e+00> : vector<46x128xf32>
    %603 = tpu.matmul %600, %602, %cst_451 {dimension_numbers = #tpu.dot_dimension_numbers<[1], [0], [0], [1], [0, 0, 1, 1], [], []>} : vector<46x64xf32>, vector<64x128xf32>, vector<46x128xf32> -> vector<46x128xf32>
    %604 = arith.addf %599, %603 : vector<46x128xf32>
    %c2_452 = arith.constant 2 : index
    %c0_453 = arith.constant 0 : index
    %605 = vector.load %arg15[%c2_452, %c0_453] : memref<56x64xf32, #tpu.memory_space<vmem>>, vector<46x64xf32>
    %c2_454 = arith.constant 2 : index
    %c0_455 = arith.constant 0 : index
    %c0_456 = arith.constant 0 : index
    %606 = vector.load %arg12[%c2_454, %c0_455, %c0_456] : memref<3x64x128xf32, #tpu.memory_space<vmem>>, vector<1x64x128xf32>
    %607 = vector.shape_cast %606 : vector<1x64x128xf32> to vector<64x128xf32>
    %cst_457 = arith.constant dense<0.000000e+00> : vector<46x128xf32>
    %608 = tpu.matmul %605, %607, %cst_457 {dimension_numbers = #tpu.dot_dimension_numbers<[1], [0], [0], [1], [0, 0, 1, 1], [], []>} : vector<46x64xf32>, vector<64x128xf32>, vector<46x128xf32> -> vector<46x128xf32>
    %609 = arith.addf %604, %608 : vector<46x128xf32>
    %c0_458 = arith.constant 0 : index
    %c0_459 = arith.constant 0 : index
    %610 = vector.load %arg13[%c0_458, %c0_459] : memref<1x128xf32, #tpu.memory_space<vmem>>, vector<1x128xf32>
    %611 = vector.broadcast %610 : vector<1x128xf32> to vector<46x128xf32>
    %612 = arith.addf %609, %611 : vector<46x128xf32>
    %cst_460 = arith.constant 0.000000e+00 : f32
    %613 = vector.broadcast %cst_460 : f32 to vector<46x128xf32>
    %614 = arith.maximumf %612, %613 : vector<46x128xf32>
    %615 = vector.extract_strided_slice %614 {offsets = [0, 0], sizes = [4, 128], strides = [1, 1]} : vector<46x128xf32> to vector<4x128xf32>
    %cst_461 = arith.constant dense<0xFF800000> : vector<128xf32>
    %616 = vector.multi_reduction <maximumf>, %615, %cst_461 [0] : vector<4x128xf32> to vector<128xf32>
    %617 = vector.shape_cast %616 : vector<128xf32> to vector<1x128xf32>
    %c0_462 = arith.constant 0 : index
    %c256 = arith.constant 256 : index
    %618 = vector.load %arg14[%c0_462, %c256] : memref<8x384xf32, #tpu.memory_space<vmem>>, vector<1x128xf32>
    tpu.vector_store %arg14[%c0_462, %c256], %617 {strides = array<i32>} : memref<8x384xf32, #tpu.memory_space<vmem>>, vector<1x128xf32>,
    %619 = vector.extract_strided_slice %614 {offsets = [6, 0], sizes = [4, 128], strides = [1, 1]} : vector<46x128xf32> to vector<4x128xf32>
    %cst_463 = arith.constant dense<0xFF800000> : vector<128xf32>
    %620 = vector.multi_reduction <maximumf>, %619, %cst_463 [0] : vector<4x128xf32> to vector<128xf32>
    %621 = vector.shape_cast %620 : vector<128xf32> to vector<1x128xf32>
    %c1_464 = arith.constant 1 : index
    %c256_465 = arith.constant 256 : index
    %622 = vector.load %arg14[%c1_464, %c256_465] : memref<8x384xf32, #tpu.memory_space<vmem>>, vector<1x128xf32>
    tpu.vector_store %arg14[%c1_464, %c256_465], %621 {strides = array<i32>} : memref<8x384xf32, #tpu.memory_space<vmem>>, vector<1x128xf32>,
    %623 = vector.extract_strided_slice %614 {offsets = [12, 0], sizes = [4, 128], strides = [1, 1]} : vector<46x128xf32> to vector<4x128xf32>
    %cst_466 = arith.constant dense<0xFF800000> : vector<128xf32>
    %624 = vector.multi_reduction <maximumf>, %623, %cst_466 [0] : vector<4x128xf32> to vector<128xf32>
    %625 = vector.shape_cast %624 : vector<128xf32> to vector<1x128xf32>
    %c2_467 = arith.constant 2 : index
    %c256_468 = arith.constant 256 : index
    %626 = vector.load %arg14[%c2_467, %c256_468] : memref<8x384xf32, #tpu.memory_space<vmem>>, vector<1x128xf32>
    tpu.vector_store %arg14[%c2_467, %c256_468], %625 {strides = array<i32>} : memref<8x384xf32, #tpu.memory_space<vmem>>, vector<1x128xf32>,
    %627 = vector.extract_strided_slice %614 {offsets = [18, 0], sizes = [4, 128], strides = [1, 1]} : vector<46x128xf32> to vector<4x128xf32>
    %cst_469 = arith.constant dense<0xFF800000> : vector<128xf32>
    %628 = vector.multi_reduction <maximumf>, %627, %cst_469 [0] : vector<4x128xf32> to vector<128xf32>
    %629 = vector.shape_cast %628 : vector<128xf32> to vector<1x128xf32>
    %c3_470 = arith.constant 3 : index
    %c256_471 = arith.constant 256 : index
    %630 = vector.load %arg14[%c3_470, %c256_471] : memref<8x384xf32, #tpu.memory_space<vmem>>, vector<1x128xf32>
    tpu.vector_store %arg14[%c3_470, %c256_471], %629 {strides = array<i32>} : memref<8x384xf32, #tpu.memory_space<vmem>>, vector<1x128xf32>,
    %631 = vector.extract_strided_slice %614 {offsets = [24, 0], sizes = [4, 128], strides = [1, 1]} : vector<46x128xf32> to vector<4x128xf32>
    %cst_472 = arith.constant dense<0xFF800000> : vector<128xf32>
    %632 = vector.multi_reduction <maximumf>, %631, %cst_472 [0] : vector<4x128xf32> to vector<128xf32>
    %633 = vector.shape_cast %632 : vector<128xf32> to vector<1x128xf32>
    %c4_473 = arith.constant 4 : index
    %c256_474 = arith.constant 256 : index
    %634 = vector.load %arg14[%c4_473, %c256_474] : memref<8x384xf32, #tpu.memory_space<vmem>>, vector<1x128xf32>
    tpu.vector_store %arg14[%c4_473, %c256_474], %633 {strides = array<i32>} : memref<8x384xf32, #tpu.memory_space<vmem>>, vector<1x128xf32>,
    %635 = vector.extract_strided_slice %614 {offsets = [30, 0], sizes = [4, 128], strides = [1, 1]} : vector<46x128xf32> to vector<4x128xf32>
    %cst_475 = arith.constant dense<0xFF800000> : vector<128xf32>
    %636 = vector.multi_reduction <maximumf>, %635, %cst_475 [0] : vector<4x128xf32> to vector<128xf32>
    %637 = vector.shape_cast %636 : vector<128xf32> to vector<1x128xf32>
    %c5_476 = arith.constant 5 : index
    %c256_477 = arith.constant 256 : index
    %638 = vector.load %arg14[%c5_476, %c256_477] : memref<8x384xf32, #tpu.memory_space<vmem>>, vector<1x128xf32>
    tpu.vector_store %arg14[%c5_476, %c256_477], %637 {strides = array<i32>} : memref<8x384xf32, #tpu.memory_space<vmem>>, vector<1x128xf32>,
    %639 = vector.extract_strided_slice %614 {offsets = [36, 0], sizes = [4, 128], strides = [1, 1]} : vector<46x128xf32> to vector<4x128xf32>
    %cst_478 = arith.constant dense<0xFF800000> : vector<128xf32>
    %640 = vector.multi_reduction <maximumf>, %639, %cst_478 [0] : vector<4x128xf32> to vector<128xf32>
    %641 = vector.shape_cast %640 : vector<128xf32> to vector<1x128xf32>
    %c6_479 = arith.constant 6 : index
    %c256_480 = arith.constant 256 : index
    %642 = vector.load %arg14[%c6_479, %c256_480] : memref<8x384xf32, #tpu.memory_space<vmem>>, vector<1x128xf32>
    tpu.vector_store %arg14[%c6_479, %c256_480], %641 {strides = array<i32>} : memref<8x384xf32, #tpu.memory_space<vmem>>, vector<1x128xf32>,
    %643 = vector.extract_strided_slice %614 {offsets = [42, 0], sizes = [4, 128], strides = [1, 1]} : vector<46x128xf32> to vector<4x128xf32>
    %cst_481 = arith.constant dense<0xFF800000> : vector<128xf32>
    %644 = vector.multi_reduction <maximumf>, %643, %cst_481 [0] : vector<4x128xf32> to vector<128xf32>
    %645 = vector.shape_cast %644 : vector<128xf32> to vector<1x128xf32>
    %c7_482 = arith.constant 7 : index
    %c256_483 = arith.constant 256 : index
    %646 = vector.load %arg14[%c7_482, %c256_483] : memref<8x384xf32, #tpu.memory_space<vmem>>, vector<1x128xf32>
    tpu.vector_store %arg14[%c7_482, %c256_483], %645 {strides = array<i32>} : memref<8x384xf32, #tpu.memory_space<vmem>>, vector<1x128xf32>,
    return
  }
  func.func @transform_0(%arg0: i32) -> (i32, i32) {
    %c0_i32 = arith.constant 0 : i32
    %c0_i32_0 = arith.constant 0 : i32
    return %arg0, %c0_i32 : i32, i32
  }
  func.func @transform_1(%arg0: i32) -> (i32, i32, i32) {
    %c0_i32 = arith.constant 0 : i32
    %c0_i32_0 = arith.constant 0 : i32
    %c0_i32_1 = arith.constant 0 : i32
    %c0_i32_2 = arith.constant 0 : i32
    return %c0_i32, %c0_i32_0, %c0_i32_1 : i32, i32, i32
  }
  func.func @transform_2(%arg0: i32) -> (i32, i32) {
    %c0_i32 = arith.constant 0 : i32
    %c0_i32_0 = arith.constant 0 : i32
    %c0_i32_1 = arith.constant 0 : i32
    return %c0_i32, %c0_i32_0 : i32, i32
  }
  func.func @transform_3(%arg0: i32) -> (i32, i32, i32) {
    %c0_i32 = arith.constant 0 : i32
    %c0_i32_0 = arith.constant 0 : i32
    %c0_i32_1 = arith.constant 0 : i32
    %c0_i32_2 = arith.constant 0 : i32
    return %c0_i32, %c0_i32_0, %c0_i32_1 : i32, i32, i32
  }
  func.func @transform_4(%arg0: i32) -> (i32, i32) {
    %c0_i32 = arith.constant 0 : i32
    %c0_i32_0 = arith.constant 0 : i32
    %c0_i32_1 = arith.constant 0 : i32
    return %c0_i32, %c0_i32_0 : i32, i32
  }
  func.func @transform_5(%arg0: i32) -> (i32, i32, i32) {
    %c0_i32 = arith.constant 0 : i32
    %c0_i32_0 = arith.constant 0 : i32
    %c0_i32_1 = arith.constant 0 : i32
    %c0_i32_2 = arith.constant 0 : i32
    return %c0_i32, %c0_i32_0, %c0_i32_1 : i32, i32, i32
  }
  func.func @transform_6(%arg0: i32) -> (i32, i32) {
    %c0_i32 = arith.constant 0 : i32
    %c0_i32_0 = arith.constant 0 : i32
    %c0_i32_1 = arith.constant 0 : i32
    return %c0_i32, %c0_i32_0 : i32, i32
  }
  func.func @transform_7(%arg0: i32) -> (i32, i32, i32) {
    %c0_i32 = arith.constant 0 : i32
    %c0_i32_0 = arith.constant 0 : i32
    %c0_i32_1 = arith.constant 0 : i32
    %c0_i32_2 = arith.constant 0 : i32
    return %c0_i32, %c0_i32_0, %c0_i32_1 : i32, i32, i32
  }
  func.func @transform_8(%arg0: i32) -> (i32, i32) {
    %c0_i32 = arith.constant 0 : i32
    %c0_i32_0 = arith.constant 0 : i32
    %c0_i32_1 = arith.constant 0 : i32
    return %c0_i32, %c0_i32_0 : i32, i32
  }
  func.func @transform_9(%arg0: i32) -> (i32, i32, i32) {
    %c0_i32 = arith.constant 0 : i32
    %c0_i32_0 = arith.constant 0 : i32
    %c0_i32_1 = arith.constant 0 : i32
    %c0_i32_2 = arith.constant 0 : i32
    return %c0_i32, %c0_i32_0, %c0_i32_1 : i32, i32, i32
  }
  func.func @transform_10(%arg0: i32) -> (i32, i32) {
    %c0_i32 = arith.constant 0 : i32
    %c0_i32_0 = arith.constant 0 : i32
    %c0_i32_1 = arith.constant 0 : i32
    return %c0_i32, %c0_i32_0 : i32, i32
  }
  func.func @transform_11(%arg0: i32) -> (i32, i32, i32) {
    %c0_i32 = arith.constant 0 : i32
    %c0_i32_0 = arith.constant 0 : i32
    %c0_i32_1 = arith.constant 0 : i32
    %c0_i32_2 = arith.constant 0 : i32
    return %c0_i32, %c0_i32_0, %c0_i32_1 : i32, i32, i32
  }
  func.func @transform_12(%arg0: i32) -> (i32, i32) {
    %c0_i32 = arith.constant 0 : i32
    %c0_i32_0 = arith.constant 0 : i32
    %c0_i32_1 = arith.constant 0 : i32
    return %c0_i32, %c0_i32_0 : i32, i32
  }
  func.func @transform_13(%arg0: i32) -> (i32, i32) {
    %c0_i32 = arith.constant 0 : i32
    %c0_i32_0 = arith.constant 0 : i32
    return %arg0, %c0_i32 : i32, i32
  }
}

</mosaic_0001>

<llo_original>
// kernel: _lambda_.1
$region0: #{_lambda_.1}
  #allocation0 [shape = 'u32[]', space=smem, size = 0x4, offset = 0x4, fixed_abs, tag = 'smem constant byte address 0x4 - core index']
  #allocation1 [shape = 'u32[144,128]{1,0:T(1,128)}', space=vmem, size = 0x12000, scoped, tag = 'internal scratch']
  #allocation2 [shape = 'f32[56,64]{1,0:T(8,128)}', space=vmem, size = 0x7000, scoped, tag = 'scratch operand']
  %s0 = inlined_call_operand.vmem [shape: bf16[128,300], index: 0, kind: input, shape index: {}]
  %s1 = inlined_call_operand.hbm [shape: bf16[3,300,64], index: 1, kind: input, shape index: {}]
  %s2 = inlined_call_operand.vmem [shape: f32[1,64], index: 2, kind: input, shape index: {}]
  %s3 = inlined_call_operand.hbm [shape: bf16[4,300,64], index: 3, kind: input, shape index: {}]
  %s4 = inlined_call_operand.vmem [shape: f32[1,64], index: 4, kind: input, shape index: {}]
  %s5 = inlined_call_operand.vmem [shape: bf16[5,300,64], index: 5, kind: input, shape index: {}]
  %s6 = inlined_call_operand.vmem [shape: f32[1,64], index: 6, kind: input, shape index: {}]
  %s7 = inlined_call_operand.hbm [shape: f32[3,64,128], index: 7, kind: input, shape index: {}]
  %s8 = inlined_call_operand.vmem [shape: f32[1,128], index: 8, kind: input, shape index: {}]
  %s9 = inlined_call_operand.hbm [shape: f32[3,64,128], index: 9, kind: input, shape index: {}]
  %s10 = inlined_call_operand.vmem [shape: f32[1,128], index: 10, kind: input, shape index: {}]
  %s11 = inlined_call_operand.hbm [shape: f32[3,64,128], index: 11, kind: input, shape index: {}]
  %s12 = inlined_call_operand.vmem [shape: f32[1,128], index: 12, kind: input, shape index: {}]
  %s13 = inlined_call_operand.vmem [shape: f32[8,384], index: 13, kind: output, shape index: {}]
  %s14 = sld [smem:[#allocation0]]
  $region82: #{_lambda_.1} parent=0
    _
  %s16 = ssub.s32 1, %s14
  %s17 = scalar_select 0, %s16, %s14
  $region1: #{_lambda_.1} parent=0
    #allocation3 [shape = 'u8[233472]{0}', space=vmem, size = 0x39000, scoped, tag = 'input window, operand 1, single buffered']
    #allocation4 [shape = 's32[1]{0}', space=sflag, size = 0x4, scoped, tag = 'scoped memory for _lambda_.1']
    #allocation5 [shape = 'u8[311296]{0}', space=vmem, size = 0x4c000, scoped, tag = 'input window, operand 3, single buffered']
    #allocation6 [shape = 's32[1]{0}', space=sflag, size = 0x4, scoped, tag = 'scoped memory for _lambda_.1']
    #allocation7 [shape = 'u8[98304]{0}', space=vmem, size = 0x18000, scoped, tag = 'input window, operand 7, single buffered']
    #allocation8 [shape = 'u8[98304]{0}', space=vmem, size = 0x18000, scoped, tag = 'input window, operand 9, single buffered']
    #allocation9 [shape = 's32[1]{0}', space=sflag, size = 0x4, scoped, tag = 'scoped memory for _lambda_.1']
    #allocation10 [shape = 'u8[98304]{0}', space=vmem, size = 0x18000, scoped, tag = 'input window, operand 11, single buffered']
    %18 = vsyncpa [#allocation4], 0
    %19 = vsyncpa [#allocation6], 0
    %20 = vsyncpa [#allocation9], 0
    // Predicated region
    $region2: #{_lambda_.1} parent=1 // pred_check
      _
    $region3: #{_lambda_.1} parent=1 // pred_check_branch
      %22 = sbr.rel (0) target = $region5
    $region4: #{_lambda_.1} parent=1 // pred_region
      _
    $region5: #{_lambda_.1} parent=1 // pred_fallthru
      _
    // Predicated region
    $region6: #{_lambda_.1} parent=1 // pred_check
      _
    $region7: #{_lambda_.1} parent=1 // pred_check_branch
      %24 = sbr.rel (0) target = $region9
    $region8: #{_lambda_.1} parent=1 // pred_region
      %s26 = ssub.s32 7296, 7296
      %27 = vsyncadd [#allocation4], %s26
      %s28 = sshll.u32 [#allocation3], 4
      %s29 = int_to_ptr.vmem [resolvable:$true] %s28
      %34 = dma.hbm_to_vmem [thread:$0]  %s1, 7296, %s29, [#allocation4], 64, 64, 4
    $region9: #{_lambda_.1} parent=1 // pred_fallthru
      _
    // Predicated region
    $region10: #{_lambda_.1} parent=1 // pred_check
      _
    $region11: #{_lambda_.1} parent=1 // pred_check_branch
      %36 = sbr.rel (0) target = $region13
    $region12: #{_lambda_.1} parent=1 // pred_region
      _
    $region13: #{_lambda_.1} parent=1 // pred_fallthru
      _
    // Predicated region
    $region14: #{_lambda_.1} parent=1 // pred_check
      _
    $region15: #{_lambda_.1} parent=1 // pred_check_branch
      %38 = sbr.rel (0) target = $region17
    $region16: #{_lambda_.1} parent=1 // pred_region
      %s40 = ssub.s32 9728, 9728
      %41 = vsyncadd [#allocation6], %s40
      %s42 = sshll.u32 [#allocation5], 4
      %s43 = int_to_ptr.vmem [resolvable:$true] %s42
      %48 = dma.hbm_to_vmem [thread:$0]  %s3, 9728, %s43, [#allocation6], 64, 64, 4
    $region17: #{_lambda_.1} parent=1 // pred_fallthru
      _
    // Predicated region
    $region18: #{_lambda_.1} parent=1 // pred_check
      _
    $region19: #{_lambda_.1} parent=1 // pred_check_branch
      %50 = sbr.rel (0) target = $region21
    $region20: #{_lambda_.1} parent=1 // pred_region
      _
    $region21: #{_lambda_.1} parent=1 // pred_fallthru
      _
    // Predicated region
    $region22: #{_lambda_.1} parent=1 // pred_check
      _
    $region23: #{_lambda_.1} parent=1 // pred_check_branch
      %52 = sbr.rel (0) target = $region25
    $region24: #{_lambda_.1} parent=1 // pred_region
      _
    $region25: #{_lambda_.1} parent=1 // pred_fallthru
      _
    // Predicated region
    $region26: #{_lambda_.1} parent=1 // pred_check
      _
    $region27: #{_lambda_.1} parent=1 // pred_check_branch
      %54 = sbr.rel (0) target = $region29
    $region28: #{_lambda_.1} parent=1 // pred_region
      _
    $region29: #{_lambda_.1} parent=1 // pred_fallthru
      _
    // Predicated region
    $region30: #{_lambda_.1} parent=1 // pred_check
      _
    $region31: #{_lambda_.1} parent=1 // pred_check_branch
      %56 = sbr.rel (0) target = $region33
    $region32: #{_lambda_.1} parent=1 // pred_region
      %s58 = ssub.s32 3072, 3072
      %59 = vsyncadd [#allocation6], %s58
      %s60 = sshll.u32 [#allocation7], 4
      %s61 = int_to_ptr.vmem [resolvable:$true] %s60
      %66 = dma.hbm_to_vmem [thread:$0]  %s7, 3072, %s61, [#allocation6], 128, 128, 8
    $region33: #{_lambda_.1} parent=1 // pred_fallthru
      _
    // Predicated region
    $region34: #{_lambda_.1} parent=1 // pred_check
      _
    $region35: #{_lambda_.1} parent=1 // pred_check_branch
      %68 = sbr.rel (0) target = $region37
    $region36: #{_lambda_.1} parent=1 // pred_region
      _
    $region37: #{_lambda_.1} parent=1 // pred_fallthru
      _
    // Predicated region
    $region38: #{_lambda_.1} parent=1 // pred_check
      _
    $region39: #{_lambda_.1} parent=1 // pred_check_branch
      %70 = sbr.rel (0) target = $region41
    $region40: #{_lambda_.1} parent=1 // pred_region
      %s72 = ssub.s32 3072, 3072
      %73 = vsyncadd [#allocation9], %s72
      %s74 = sshll.u32 [#allocation8], 4
      %s75 = int_to_ptr.vmem [resolvable:$true] %s74
      %80 = dma.hbm_to_vmem [thread:$0]  %s9, 3072, %s75, [#allocation9], 128, 128, 8
    $region41: #{_lambda_.1} parent=1 // pred_fallthru
      _
    // Predicated region
    $region42: #{_lambda_.1} parent=1 // pred_check
      _
    $region43: #{_lambda_.1} parent=1 // pred_check_branch
      %82 = sbr.rel (0) target = $region45
    $region44: #{_lambda_.1} parent=1 // pred_region
      _
    $region45: #{_lambda_.1} parent=1 // pred_fallthru
      _
    // Predicated region
    $region46: #{_lambda_.1} parent=1 // pred_check
      _
    $region47: #{_lambda_.1} parent=1 // pred_check_branch
      %84 = sbr.rel (0) target = $region49
    $region48: #{_lambda_.1} parent=1 // pred_region
      %s86 = ssub.s32 3072, 3072
      %87 = vsyncadd [#allocation9], %s86
      %s88 = sshll.u32 [#allocation10], 4
      %s89 = int_to_ptr.vmem [resolvable:$true] %s88
      %94 = dma.hbm_to_vmem [thread:$0]  %s11, 3072, %s89, [#allocation9], 128, 128, 8
    $region49: #{_lambda_.1} parent=1 // pred_fallthru
      _
    // Predicated region
    $region50: #{_lambda_.1} parent=1 // pred_check
      _
    $region51: #{_lambda_.1} parent=1 // pred_check_branch
      %96 = sbr.rel (0) target = $region53
    $region52: #{_lambda_.1} parent=1 // pred_region
      _
    $region53: #{_lambda_.1} parent=1 // pred_fallthru
      _
    // Predicated region
    $region54: #{_lambda_.1} parent=1 // pred_check
      _
    $region55: #{_lambda_.1} parent=1 // pred_check_branch
      %98 = sbr.rel (0) target = $region57
    $region56: #{_lambda_.1} parent=1 // pred_region
      %99 = dma.done [#allocation4], 7296
    $region57: #{_lambda_.1} parent=1 // pred_fallthru
      _
    // Predicated region
    $region58: #{_lambda_.1} parent=1 // pred_check
      _
    $region59: #{_lambda_.1} parent=1 // pred_check_branch
      %101 = sbr.rel (0) target = $region61
    $region60: #{_lambda_.1} parent=1 // pred_region
      %102 = dma.done [#allocation6], 9728
    $region61: #{_lambda_.1} parent=1 // pred_fallthru
      _
    // Predicated region
    $region62: #{_lambda_.1} parent=1 // pred_check
      _
    $region63: #{_lambda_.1} parent=1 // pred_check_branch
      %104 = sbr.rel (0) target = $region65
    $region64: #{_lambda_.1} parent=1 // pred_region
      %105 = dma.done [#allocation6], 3072
    $region65: #{_lambda_.1} parent=1 // pred_fallthru
      _
    // Predicated region
    $region66: #{_lambda_.1} parent=1 // pred_check
      _
    $region67: #{_lambda_.1} parent=1 // pred_check_branch
      %107 = sbr.rel (0) target = $region69
    $region68: #{_lambda_.1} parent=1 // pred_region
      %108 = dma.done [#allocation9], 3072
    $region69: #{_lambda_.1} parent=1 // pred_fallthru
      _
    // Predicated region
    $region70: #{_lambda_.1} parent=1 // pred_check
      _
    $region71: #{_lambda_.1} parent=1 // pred_check_branch
      %110 = sbr.rel (0) target = $region73
    $region72: #{_lambda_.1} parent=1 // pred_region
      %111 = dma.done [#allocation9], 3072
    $region73: #{_lambda_.1} parent=1 // pred_fallthru
      _
    %v113 = vld [vmem:[%s0] sm:$0xff]
    %v114 = vld [vmem:[%s0 + $0x8] sm:$0xf]
    %v115 = vld [vmem:[%s0 + $0xc] sm:$0xff]
    %v116 = vld [vmem:[%s0 + $0x14] sm:$0xf]
    %v117 = vld [vmem:[%s0 + $0x18] sm:$0xff]
    %v118 = vld [vmem:[%s0 + $0x20] sm:$0xf]
    %v119 = vld [vmem:[%s0 + $0x24] sm:$0xff]
    %v120 = vld [vmem:[%s0 + $0x2c] sm:$0xf]
    %v121 = vld [vmem:[%s0 + $0x30] sm:$0xff]
    %v122 = vld [vmem:[%s0 + $0x38] sm:$0xf]
    %v123 = vld [vmem:[%s0 + $0x3c] sm:$0xff]
    %v124 = vld [vmem:[%s0 + $0x44] sm:$0xf]
    %v125 = vld [vmem:[%s0 + $0x48] sm:$0xff]
    %v126 = vld [vmem:[%s0 + $0x50] sm:$0xf]
    %v127 = vld [vmem:[%s0 + $0x54] sm:$0xff]
    %v128 = vld [vmem:[%s0 + $0x5c] sm:$0xf]
    %v129 = vld [vmem:[%s0 + $0x60] sm:$0xff]
    %v130 = vld [vmem:[%s0 + $0x68] sm:$0xf]
    %v131 = vld [vmem:[%s0 + $0x6c] sm:$0xff]
    %v132 = vld [vmem:[%s0 + $0x74] sm:$0xf]
    %v133 = vld [vmem:[%s0 + $0x78] sm:$0xff]
    %v134 = vld [vmem:[%s0 + $0x80] sm:$0xf]
    %v135 = vld [vmem:[%s0 + $0x84] sm:$0xff]
    %v136 = vld [vmem:[%s0 + $0x8c] sm:$0xf]
    %v137 = vld [vmem:[%s0 + $0x90] sm:$0xff]
    %v138 = vld [vmem:[%s0 + $0x98] sm:$0xf]
    %v139 = vld [vmem:[%s0 + $0x9c] sm:$0xff]
    %v140 = vld [vmem:[%s0 + $0xa4] sm:$0xf]
    %v141 = vld [vmem:[%s0 + $0xa8] sm:$0xff]
    %v142 = vld [vmem:[%s0 + $0xb0] sm:$0xf]
    %v143 = vld [vmem:[%s0 + $0xb4] sm:$0x77]
    %v144 = vld [vmem:[%s0 + $0xbc] sm:$0x7]
    %v145 = vld [vmem:[#allocation3] sm:$0xf]
    %v146 = vld [vmem:[#allocation3 + $0x4] sm:$0xf]
    %v147 = vld [vmem:[#allocation3 + $0x8] sm:$0xf]
    %v148 = vld [vmem:[#allocation3 + $0xc] sm:$0xf]
    %v149 = vld [vmem:[#allocation3 + $0x10] sm:$0xf]
    %v150 = vld [vmem:[#allocation3 + $0x14] sm:$0xf]
    %v151 = vld [vmem:[#allocation3 + $0x18] sm:$0xf]
    %v152 = vld [vmem:[#allocation3 + $0x1c] sm:$0xf]
    %v153 = vld [vmem:[#allocation3 + $0x20] sm:$0xf]
    %v154 = vld [vmem:[#allocation3 + $0x24] sm:$0xf]
    %v155 = vld [vmem:[#allocation3 + $0x28] sm:$0xf]
    %v156 = vld [vmem:[#allocation3 + $0x2c] sm:$0xf]
    %v157 = vld [vmem:[#allocation3 + $0x30] sm:$0xf]
    %v158 = vld [vmem:[#allocation3 + $0x34] sm:$0xf]
    %v159 = vld [vmem:[#allocation3 + $0x38] sm:$0xf]
    %v160 = vld [vmem:[#allocation3 + $0x3c] sm:$0xf]
    %v161 = vld [vmem:[#allocation3 + $0x40] sm:$0xf]
    %v162 = vld [vmem:[#allocation3 + $0x44] sm:$0xf]
    %v163 = vld [vmem:[#allocation3 + $0x48] sm:$0xf]
    %v164 = vld [vmem:[#allocation3 + $0x4c] sm:$0xf]
    %v165 = vld [vmem:[#allocation3 + $0x50] sm:$0xf]
    %v166 = vld [vmem:[#allocation3 + $0x54] sm:$0xf]
    %v167 = vld [vmem:[#allocation3 + $0x58] sm:$0xf]
    %v168 = vld [vmem:[#allocation3 + $0x5c] sm:$0xf]
    %v169 = vld [vmem:[#allocation3 + $0x60] sm:$0xf]
    %v170 = vld [vmem:[#allocation3 + $0x64] sm:$0xf]
    %v171 = vld [vmem:[#allocation3 + $0x68] sm:$0xf]
    %v172 = vld [vmem:[#allocation3 + $0x6c] sm:$0xf]
    %v173 = vld [vmem:[#allocation3 + $0x70] sm:$0xf]
    %v174 = vld [vmem:[#allocation3 + $0x74] sm:$0xf]
    %v175 = vld [vmem:[#allocation3 + $0x78] sm:$0xf]
    %v176 = vld [vmem:[#allocation3 + $0x7c] sm:$0xf]
    %v177 = vld [vmem:[#allocation3 + $0x80] sm:$0xf]
    %v178 = vld [vmem:[#allocation3 + $0x84] sm:$0xf]
    %v179 = vld [vmem:[#allocation3 + $0x88] sm:$0xf]
    %v180 = vld [vmem:[#allocation3 + $0x8c] sm:$0xf]
    %v181 = vld [vmem:[#allocation3 + $0x90] sm:$0xf]
    %v182 = vld [vmem:[#allocation3 + $0x94] sm:$0x3]
    %v183 = vld [vmem:[%s0] sm:$0xee]
    %v184 = vld [vmem:[%s0 + $0x8] sm:$0xe]
    %s185 = scalar_lea.vmem [#allocation3], 152
    %v186 = vld [vmem:[%s185] sm:$0xf]
    %v187 = vld [vmem:[%s185 + $0x4] sm:$0xf]
    %v188 = vld [vmem:[%s185 + $0x8] sm:$0xf]
    %v189 = vld [vmem:[%s185 + $0xc] sm:$0xf]
    %v190 = vld [vmem:[%s185 + $0x10] sm:$0xf]
    %v191 = vld [vmem:[%s185 + $0x14] sm:$0xf]
    %v192 = vld [vmem:[%s185 + $0x18] sm:$0xf]
    %v193 = vld [vmem:[%s185 + $0x1c] sm:$0xf]
    %v194 = vld [vmem:[%s185 + $0x20] sm:$0xf]
    %v195 = vld [vmem:[%s185 + $0x24] sm:$0xf]
    %v196 = vld [vmem:[%s185 + $0x28] sm:$0xf]
    %v197 = vld [vmem:[%s185 + $0x2c] sm:$0xf]
    %v198 = vld [vmem:[%s185 + $0x30] sm:$0xf]
    %v199 = vld [vmem:[%s185 + $0x34] sm:$0xf]
    %v200 = vld [vmem:[%s185 + $0x38] sm:$0xf]
    %v201 = vld [vmem:[%s185 + $0x3c] sm:$0xf]
    %v202 = vld [vmem:[%s185 + $0x40] sm:$0xf]
    %v203 = vld [vmem:[%s185 + $0x44] sm:$0xf]
    %v204 = vld [vmem:[%s185 + $0x48] sm:$0xf]
    %v205 = vld [vmem:[%s185 + $0x4c] sm:$0xf]
    %v206 = vld [vmem:[%s185 + $0x50] sm:$0xf]
    %v207 = vld [vmem:[%s185 + $0x54] sm:$0xf]
    %v208 = vld [vmem:[%s185 + $0x58] sm:$0xf]
    %v209 = vld [vmem:[%s185 + $0x5c] sm:$0xf]
    %v210 = vld [vmem:[%s185 + $0x60] sm:$0xf]
    %v211 = vld [vmem:[%s185 + $0x64] sm:$0xf]
    %v212 = vld [vmem:[%s185 + $0x68] sm:$0xf]
    %v213 = vld [vmem:[%s185 + $0x6c] sm:$0xf]
    %v214 = vld [vmem:[%s185 + $0x70] sm:$0xf]
    %v215 = vld [vmem:[%s185 + $0x74] sm:$0xf]
    %v216 = vld [vmem:[%s185 + $0x78] sm:$0xf]
    %v217 = vld [vmem:[%s185 + $0x7c] sm:$0xf]
    %v218 = vld [vmem:[%s185 + $0x80] sm:$0xf]
    %v219 = vld [vmem:[%s185 + $0x84] sm:$0xf]
    %v220 = vld [vmem:[%s185 + $0x88] sm:$0xf]
    %v221 = vld [vmem:[%s185 + $0x8c] sm:$0xf]
    %v222 = vld [vmem:[%s185 + $0x90] sm:$0xf]
    %v223 = vld [vmem:[%s185 + $0x94] sm:$0x3]
    %v256 = vunpack.c.l.b16 %v183
    %v257 = vunpack.c.h.b16 %v183
    %v258 = vunpack.c.l.b16 %v184
    %v259 = vunpack.c.l.b16 %v115
    %v260 = vunpack.c.h.b16 %v115
    %v261 = vunpack.c.l.b16 %v116
    %v262 = vunpack.c.l.b16 %v117
    %v263 = vunpack.c.h.b16 %v117
    %v264 = vunpack.c.l.b16 %v118
    %v265 = vunpack.c.l.b16 %v119
    %v266 = vunpack.c.h.b16 %v119
    %v267 = vunpack.c.l.b16 %v120
    %v268 = vunpack.c.l.b16 %v121
    %v269 = vunpack.c.h.b16 %v121
    %v270 = vunpack.c.l.b16 %v122
    %v271 = vunpack.c.l.b16 %v123
    %v272 = vunpack.c.h.b16 %v123
    %v273 = vunpack.c.l.b16 %v124
    %v274 = vunpack.c.l.b16 %v125
    %v275 = vunpack.c.h.b16 %v125
    %v276 = vunpack.c.l.b16 %v126
    %v277 = vunpack.c.l.b16 %v127
    %v278 = vunpack.c.h.b16 %v127
    %v279 = vunpack.c.l.b16 %v128
    %v280 = vunpack.c.l.b16 %v129
    %v281 = vunpack.c.h.b16 %v129
    %v282 = vunpack.c.l.b16 %v130
    %v283 = vunpack.c.l.b16 %v131
    %v284 = vunpack.c.h.b16 %v131
    %v285 = vunpack.c.l.b16 %v132
    %v286 = vunpack.c.l.b16 %v133
    %v287 = vunpack.c.h.b16 %v133
    %v288 = vunpack.c.l.b16 %v134
    %v289 = vunpack.c.l.b16 %v135
    %v290 = vunpack.c.h.b16 %v135
    %v291 = vunpack.c.l.b16 %v136
    %v292 = vunpack.c.l.b16 %v137
    %v293 = vunpack.c.h.b16 %v137
    %v294 = vunpack.c.l.b16 %v138
    %v295 = vunpack.c.l.b16 %v139
    %v296 = vunpack.c.h.b16 %v139
    %v297 = vunpack.c.l.b16 %v140
    %v298 = vunpack.c.l.b16 %v141
    %v299 = vunpack.c.h.b16 %v141
    %v300 = vunpack.c.l.b16 %v142
    %v301 = vunpack.c.l.b16 %v143
    %v302 = vunpack.c.h.b16 %v143
    %v303 = vunpack.c.l.b16 %v144
    %v304 = vpack.c.b16 %v259, %v256
    %v305 = vpack.c.b16 %v260, %v257
    %v306 = vpack.c.b16 %v261, %v258
    %v307 = vpack.c.b16 %v265, %v262
    %v308 = vpack.c.b16 %v266, %v263
    %v309 = vpack.c.b16 %v267, %v264
    %v310 = vpack.c.b16 %v271, %v268
    %v311 = vpack.c.b16 %v272, %v269
    %v312 = vpack.c.b16 %v273, %v270
    %v313 = vpack.c.b16 %v277, %v274
    %v314 = vpack.c.b16 %v278, %v275
    %v315 = vpack.c.b16 %v279, %v276
    %v316 = vpack.c.b16 %v283, %v280
    %v317 = vpack.c.b16 %v284, %v281
    %v318 = vpack.c.b16 %v285, %v282
    %v319 = vpack.c.b16 %v289, %v286
    %v320 = vpack.c.b16 %v290, %v287
    %v321 = vpack.c.b16 %v291, %v288
    %v322 = vpack.c.b16 %v295, %v292
    %v323 = vpack.c.b16 %v296, %v293
    %v324 = vpack.c.b16 %v297, %v294
    %v325 = vpack.c.b16 %v301, %v298
    %v326 = vpack.c.b16 %v302, %v299
    %v327 = vpack.c.b16 %v303, %v300
    %vm328 = vcmask 1046528
    %v329 = vrot.slane %v304, 1
    %v330 = vrot.slane %v307, 1
    %v331 = vsel %vm328, %v329, %v330
    %v332 = vrot.slane %v305, 1
    %v333 = vrot.slane %v308, 1
    %v334 = vsel %vm328, %v332, %v333
    %v335 = vrot.slane %v306, 1
    %v336 = vrot.slane %v309, 1
    %v337 = vsel %vm328, %v335, %v336
    %v338 = vrot.slane %v310, 1
    %v339 = vsel %vm328, %v330, %v338
    %v340 = vrot.slane %v311, 1
    %v341 = vsel %vm328, %v333, %v340
    %v342 = vrot.slane %v312, 1
    %v343 = vsel %vm328, %v336, %v342
    %v344 = vrot.slane %v313, 1
    %v345 = vsel %vm328, %v338, %v344
    %v346 = vrot.slane %v314, 1
    %v347 = vsel %vm328, %v340, %v346
    %v348 = vrot.slane %v315, 1
    %v349 = vsel %vm328, %v342, %v348
    %v350 = vrot.slane %v316, 1
    %v351 = vsel %vm328, %v344, %v350
    %v352 = vrot.slane %v317, 1
    %v353 = vsel %vm328, %v346, %v352
    %v354 = vrot.slane %v318, 1
    %v355 = vsel %vm328, %v348, %v354
    %v356 = vrot.slane %v319, 1
    %v357 = vsel %vm328, %v350, %v356
    %v358 = vrot.slane %v320, 1
    %v359 = vsel %vm328, %v352, %v358
    %v360 = vrot.slane %v321, 1
    %v361 = vsel %vm328, %v354, %v360
    %v362 = vrot.slane %v322, 1
    %v363 = vsel %vm328, %v356, %v362
    %v364 = vrot.slane %v323, 1
    %v365 = vsel %vm328, %v358, %v364
    %v366 = vrot.slane %v324, 1
    %v367 = vsel %vm328, %v360, %v366
    %v368 = vrot.slane %v325, 1
    %v369 = vsel %vm328, %v362, %v368
    %v370 = vrot.slane %v326, 1
    %v371 = vsel %vm328, %v364, %v370
    %v372 = vrot.slane %v327, 1
    %v373 = vsel %vm328, %v366, %v372
    %v428 = vunpack.c.l.b16 %v186
    %v429 = vunpack.c.l.b16 %v187
    %v430 = vunpack.c.l.b16 %v188
    %v431 = vunpack.c.l.b16 %v189
    %v432 = vunpack.c.l.b16 %v190
    %v433 = vunpack.c.l.b16 %v191
    %v434 = vunpack.c.l.b16 %v192
    %v435 = vunpack.c.l.b16 %v193
    %v436 = vunpack.c.l.b16 %v194
    %v437 = vunpack.c.l.b16 %v195
    %v438 = vunpack.c.l.b16 %v196
    %v439 = vunpack.c.l.b16 %v197
    %v440 = vunpack.c.l.b16 %v198
    %v441 = vunpack.c.l.b16 %v199
    %v442 = vunpack.c.l.b16 %v200
    %v443 = vunpack.c.l.b16 %v201
    %v444 = vunpack.c.l.b16 %v202
    %v445 = vunpack.c.l.b16 %v203
    %v446 = vunpack.c.l.b16 %v204
    %v447 = vunpack.c.l.b16 %v205
    %v448 = vunpack.c.l.b16 %v206
    %v449 = vunpack.c.l.b16 %v207
    %v450 = vunpack.c.l.b16 %v208
    %v451 = vunpack.c.l.b16 %v209
    %v452 = vunpack.c.l.b16 %v210
    %v453 = vunpack.c.l.b16 %v211
    %v454 = vunpack.c.l.b16 %v212
    %v455 = vunpack.c.l.b16 %v213
    %v456 = vunpack.c.l.b16 %v214
    %v457 = vunpack.c.l.b16 %v215
    %v458 = vunpack.c.l.b16 %v216
    %v459 = vunpack.c.l.b16 %v217
    %v460 = vunpack.c.l.b16 %v218
    %v461 = vunpack.c.l.b16 %v219
    %v462 = vunpack.c.l.b16 %v220
    %v463 = vunpack.c.l.b16 %v221
    %v464 = vunpack.c.l.b16 %v222
    %v465 = vunpack.c.l.b16 %v223
    %v466 = vpack.c.b16 %v429, %v428
    %v467 = vpack.c.b16 %v431, %v430
    %v468 = vpack.c.b16 %v433, %v432
    %v469 = vpack.c.b16 %v435, %v434
    %v470 = vpack.c.b16 %v437, %v436
    %v471 = vpack.c.b16 %v439, %v438
    %v472 = vpack.c.b16 %v441, %v440
    %v473 = vpack.c.b16 %v443, %v442
    %v474 = vpack.c.b16 %v445, %v444
    %v475 = vpack.c.b16 %v447, %v446
    %v476 = vpack.c.b16 %v449, %v448
    %v477 = vpack.c.b16 %v451, %v450
    %v478 = vpack.c.b16 %v453, %v452
    %v479 = vpack.c.b16 %v455, %v454
    %v480 = vpack.c.b16 %v457, %v456
    %v481 = vpack.c.b16 %v459, %v458
    %v482 = vpack.c.b16 %v461, %v460
    %v483 = vpack.c.b16 %v463, %v462
    %v484 = vpack.c.b16 %v465, %v464
    %vm503 = vcmask 359424
    %v505 = vsel %vm503, %v337, 0
    %v508 = vsel %vm503, %v343, 0
    %v511 = vsel %vm503, %v349, 0
    %v514 = vsel %vm503, %v355, 0
    %v517 = vsel %vm503, %v361, 0
    %v520 = vsel %vm503, %v367, 0
    %v523 = vsel %vm503, %v373, 0
    %v526 = vsel %vm503, %v372, 0
    %vm528 = vcmask 1045504
    %v530 = vsel %vm528, %v484, 0
    %532 = vmatprep.subr.bf16.mxu0 0
    %533 = vmatpush1.bf16.msra.mxu0 %v466
    %534 = vmatprep.subr.bf16.mxu0 0
    %535 = vmatpush1.bf16.msra.mxu0 %v467
    %536 = vmatprep.subr.bf16.mxu0 0
    %537 = vmatpush1.bf16.msra.mxu0 %v468
    %538 = vmatprep.subr.bf16.mxu0 0
    %539 = vmatpush1.bf16.msra.mxu0 %v469
    %540 = vmatprep.subr.bf16.mxu0 0
    %541 = vmatpush1.bf16.msra.mxu0 %v470
    %542 = vmatprep.subr.bf16.mxu0 0
    %543 = vmatpush1.bf16.msra.mxu0 %v471
    %544 = vmatprep.subr.bf16.mxu0 0
    %545 = vmatpush1.bf16.msra.mxu0 %v472
    %546 = vmatprep.subr.bf16.mxu0 0
    %547 = vmatpush1.bf16.msra.mxu0 %v473
    %548 = vmatprep.subr.bf16.mxu0 0
    %549 = vmatpush1.bf16.msra.mxu0 %v474
    %550 = vmatprep.subr.bf16.mxu0 0
    %551 = vmatpush1.bf16.msra.mxu0 %v475
    %552 = vmatprep.subr.bf16.mxu0 0
    %553 = vmatpush1.bf16.msra.mxu0 %v476
    %554 = vmatprep.subr.bf16.mxu0 0
    %555 = vmatpush1.bf16.msra.mxu0 %v477
    %556 = vmatprep.subr.bf16.mxu0 0
    %557 = vmatpush1.bf16.msra.mxu0 %v478
    %558 = vmatprep.subr.bf16.mxu0 0
    %559 = vmatpush1.bf16.msra.mxu0 %v479
    %560 = vmatprep.subr.bf16.mxu0 0
    %561 = vmatpush1.bf16.msra.mxu0 %v480
    %562 = vmatprep.subr.bf16.mxu0 0
    %563 = vmatpush1.bf16.msra.mxu0 %v481
    %564 = vmatprep.mubr.bf16.mxu0 %v334
    %565 = vmatmul.mubr.bf16.gmra.mrb[0].mxu0 %v331
    %v566 = vpop.f32.mrb[0].mxu0
    %v567 = vadd.f32 0.0, %v566
    %v568 = vpop.f32.mrb[0].mxu0
    %v569 = vpop.f32.mrb[0].mxu0
    %v570 = vadd.f32 0.0, %v569
    %v571 = vpop.f32.mrb[0].mxu0
    %572 = vmatprep.mubr.bf16.mxu0 %v341
    %573 = vmatmul.mubr.bf16.gmra.mrb[0].mxu0 %v339
    %v574 = vpop.f32.mrb[0].mxu0
    %v575 = vadd.f32 0.0, %v574
    %v576 = vpop.f32.mrb[0].mxu0
    %v577 = vpop.f32.mrb[0].mxu0
    %v578 = vadd.f32 0.0, %v577
    %v579 = vpop.f32.mrb[0].mxu0
    %580 = vmatprep.mubr.bf16.mxu0 %v347
    %581 = vmatmul.mubr.bf16.gmra.mrb[0].mxu0 %v345
    %v582 = vpop.f32.mrb[0].mxu0
    %v583 = vadd.f32 0.0, %v582
    %v584 = vpop.f32.mrb[0].mxu0
    %v585 = vpop.f32.mrb[0].mxu0
    %v586 = vadd.f32 0.0, %v585
    %v587 = vpop.f32.mrb[0].mxu0
    %588 = vmatprep.mubr.bf16.mxu0 %v353
    %589 = vmatmul.mubr.bf16.gmra.mrb[0].mxu0 %v351
    %v590 = vpop.f32.mrb[0].mxu0
    %v591 = vadd.f32 0.0, %v590
    %v592 = vpop.f32.mrb[0].mxu0
    %v593 = vpop.f32.mrb[0].mxu0
    %v594 = vadd.f32 0.0, %v593
    %v595 = vpop.f32.mrb[0].mxu0
    %596 = vmatprep.mubr.bf16.mxu0 %v359
    %597 = vmatmul.mubr.bf16.gmra.mrb[0].mxu0 %v357
    %v598 = vpop.f32.mrb[0].mxu0
    %v599 = vadd.f32 0.0, %v598
    %v600 = vpop.f32.mrb[0].mxu0
    %v601 = vpop.f32.mrb[0].mxu0
    %v602 = vadd.f32 0.0, %v601
    %v603 = vpop.f32.mrb[0].mxu0
    %604 = vmatprep.mubr.bf16.mxu0 %v365
    %605 = vmatmul.mubr.bf16.gmra.mrb[0].mxu0 %v363
    %v606 = vpop.f32.mrb[0].mxu0
    %v607 = vadd.f32 0.0, %v606
    %v608 = vpop.f32.mrb[0].mxu0
    %v609 = vpop.f32.mrb[0].mxu0
    %v610 = vadd.f32 0.0, %v609
    %v611 = vpop.f32.mrb[0].mxu0
    %612 = vmatprep.mubr.bf16.mxu0 %v371
    %613 = vmatmul.mubr.bf16.gmra.mrb[0].mxu0 %v369
    %v614 = vpop.f32.mrb[0].mxu0
    %v615 = vadd.f32 0.0, %v614
    %v616 = vpop.f32.mrb[0].mxu0
    %v617 = vpop.f32.mrb[0].mxu0
    %v618 = vadd.f32 0.0, %v617
    %v619 = vpop.f32.mrb[0].mxu0
    %620 = vmatprep.mubr.bf16.mxu0 %v370
    %621 = vmatmul.mubr.bf16.gmra.mrb[0].mxu0 %v368
    %v622 = vpop.f32.mrb[0].mxu0
    %v623 = vadd.f32 0.0, %v622
    %v624 = vpop.f32.mrb[0].mxu0
    %v625 = vpop.f32.mrb[0].mxu0
    %v626 = vadd.f32 0.0, %v625
    %v627 = vpop.f32.mrb[0].mxu0
    %628 = vdwg.mxu0
    %629 = vmatprep.subr.bf16.mxu0 0
    %630 = vmatpush1.bf16.msra.mxu0 %v482
    %631 = vmatprep.subr.bf16.mxu0 0
    %632 = vmatpush1.bf16.msra.mxu0 %v483
    %633 = vmatprep.subr.bf16.mxu0 0
    %634 = vmatpush1.bf16.msra.mxu0 %v530
    %635 = vmatprep.subr.bf16.mxu0 0
    %636 = vmatpush1.bf16.msra.mxu0 0
    %637 = vmatprep.subr.bf16.mxu0 0
    %638 = vmatpush1.bf16.msra.mxu0 0
    %639 = vmatprep.subr.bf16.mxu0 0
    %640 = vmatpush1.bf16.msra.mxu0 0
    %641 = vmatprep.subr.bf16.mxu0 0
    %642 = vmatpush1.bf16.msra.mxu0 0
    %643 = vmatprep.subr.bf16.mxu0 0
    %644 = vmatpush1.bf16.msra.mxu0 0
    %645 = vmatprep.subr.bf16.mxu0 0
    %646 = vmatpush1.bf16.msra.mxu0 0
    %647 = vmatprep.subr.bf16.mxu0 0
    %648 = vmatpush1.bf16.msra.mxu0 0
    %649 = vmatprep.subr.bf16.mxu0 0
    %650 = vmatpush1.bf16.msra.mxu0 0
    %651 = vmatprep.subr.bf16.mxu0 0
    %652 = vmatpush1.bf16.msra.mxu0 0
    %653 = vmatprep.subr.bf16.mxu0 0
    %654 = vmatpush1.bf16.msra.mxu0 0
    %655 = vmatprep.subr.bf16.mxu0 0
    %656 = vmatpush1.bf16.msra.mxu0 0
    %657 = vmatprep.subr.bf16.mxu0 0
    %658 = vmatpush1.bf16.msra.mxu0 0
    %659 = vmatprep.subr.bf16.mxu0 0
    %660 = vmatpush1.bf16.msra.mxu0 0
    %661 = vmatprep.mubr.bf16.mxu0 0
    %662 = vmatmul.mubr.bf16.gmra.mrb[0].mxu0 %v505
    %v663 = vpop.f32.mrb[0].mxu0
    %v664 = vadd.f32 %v567, %v663
    %v665 = vpop.f32.mrb[0].mxu0
    %v666 = vpop.f32.mrb[0].mxu0
    %v667 = vadd.f32 %v570, %v666
    %v668 = vpop.f32.mrb[0].mxu0
    %669 = vmatprep.mubr.bf16.mxu0 0
    %670 = vmatmul.mubr.bf16.gmra.mrb[0].mxu0 %v508
    %v671 = vpop.f32.mrb[0].mxu0
    %v672 = vadd.f32 %v575, %v671
    %v673 = vpop.f32.mrb[0].mxu0
    %v674 = vpop.f32.mrb[0].mxu0
    %v675 = vadd.f32 %v578, %v674
    %v676 = vpop.f32.mrb[0].mxu0
    %677 = vmatprep.mubr.bf16.mxu0 0
    %678 = vmatmul.mubr.bf16.gmra.mrb[0].mxu0 %v511
    %v679 = vpop.f32.mrb[0].mxu0
    %v680 = vadd.f32 %v583, %v679
    %v681 = vpop.f32.mrb[0].mxu0
    %v682 = vpop.f32.mrb[0].mxu0
    %v683 = vadd.f32 %v586, %v682
    %v684 = vpop.f32.mrb[0].mxu0
    %685 = vmatprep.mubr.bf16.mxu0 0
    %686 = vmatmul.mubr.bf16.gmra.mrb[0].mxu0 %v514
    %v687 = vpop.f32.mrb[0].mxu0
    %v688 = vadd.f32 %v591, %v687
    %v689 = vpop.f32.mrb[0].mxu0
    %v690 = vpop.f32.mrb[0].mxu0
    %v691 = vadd.f32 %v594, %v690
    %v692 = vpop.f32.mrb[0].mxu0
    %693 = vmatprep.mubr.bf16.mxu0 0
    %694 = vmatmul.mubr.bf16.gmra.mrb[0].mxu0 %v517
    %v695 = vpop.f32.mrb[0].mxu0
    %v696 = vadd.f32 %v599, %v695
    %v697 = vpop.f32.mrb[0].mxu0
    %v698 = vpop.f32.mrb[0].mxu0
    %v699 = vadd.f32 %v602, %v698
    %v700 = vpop.f32.mrb[0].mxu0
    %701 = vmatprep.mubr.bf16.mxu0 0
    %702 = vmatmul.mubr.bf16.gmra.mrb[0].mxu0 %v520
    %v703 = vpop.f32.mrb[0].mxu0
    %v704 = vadd.f32 %v607, %v703
    %v705 = vpop.f32.mrb[0].mxu0
    %v706 = vpop.f32.mrb[0].mxu0
    %v707 = vadd.f32 %v610, %v706
    %v708 = vpop.f32.mrb[0].mxu0
    %709 = vmatprep.mubr.bf16.mxu0 0
    %710 = vmatmul.mubr.bf16.gmra.mrb[0].mxu0 %v523
    %v711 = vpop.f32.mrb[0].mxu0
    %v712 = vadd.f32 %v615, %v711
    %v713 = vpop.f32.mrb[0].mxu0
    %v714 = vpop.f32.mrb[0].mxu0
    %v715 = vadd.f32 %v618, %v714
    %v716 = vpop.f32.mrb[0].mxu0
    %717 = vmatprep.mubr.bf16.mxu0 0
    %718 = vmatmul.mubr.bf16.gmra.mrb[0].mxu0 %v526
    %v719 = vpop.f32.mrb[0].mxu0
    %v720 = vadd.f32 %v623, %v719
    %v721 = vpop.f32.mrb[0].mxu0
    %v722 = vpop.f32.mrb[0].mxu0
    %v723 = vadd.f32 %v626, %v722
    %v724 = vpop.f32.mrb[0].mxu0
    %725 = vdwg.mxu0
    %v728 = vunpack.c.l.b16 %v113
    %v729 = vunpack.c.h.b16 %v113
    %v730 = vunpack.c.l.b16 %v114
    %v731 = vpack.c.b16 %v259, %v728
    %v732 = vpack.c.b16 %v260, %v729
    %v733 = vpack.c.b16 %v261, %v730
    %vm734 = vsmask.f32 7424
    %v736 = vshrl.u32 %v731, 16
    %v738 = vshll.u32 %v731, 16
    %v740 = vrot.slane %v738, 1
    %v741 = vor.u32 %v736, %v740
    %v743 = vshll.u32 %v307, 16
    %v745 = vrot.slane %v743, 1
    %v746 = vsel %vm734, %v741, %v745
    %v748 = vshrl.u32 %v732, 16
    %v750 = vshll.u32 %v732, 16
    %v752 = vrot.slane %v750, 1
    %v753 = vor.u32 %v748, %v752
    %v755 = vshll.u32 %v308, 16
    %v757 = vrot.slane %v755, 1
    %v758 = vsel %vm734, %v753, %v757
    %v760 = vshrl.u32 %v733, 16
    %v762 = vshll.u32 %v733, 16
    %v764 = vrot.slane %v762, 1
    %v765 = vor.u32 %v760, %v764
    %v767 = vshll.u32 %v309, 16
    %v769 = vrot.slane %v767, 1
    %v770 = vsel %vm734, %v765, %v769
    %v771 = vshrl.u32 %v307, 16
    %v773 = vor.u32 %v771, %v745
    %v775 = vshll.u32 %v310, 16
    %v777 = vrot.slane %v775, 1
    %v778 = vsel %vm734, %v773, %v777
    %v779 = vshrl.u32 %v308, 16
    %v781 = vor.u32 %v779, %v757
    %v783 = vshll.u32 %v311, 16
    %v785 = vrot.slane %v783, 1
    %v786 = vsel %vm734, %v781, %v785
    %v787 = vshrl.u32 %v309, 16
    %v789 = vor.u32 %v787, %v769
    %v791 = vshll.u32 %v312, 16
    %v793 = vrot.slane %v791, 1
    %v794 = vsel %vm734, %v789, %v793
    %v795 = vshrl.u32 %v310, 16
    %v797 = vor.u32 %v795, %v777
    %v799 = vshll.u32 %v313, 16
    %v801 = vrot.slane %v799, 1
    %v802 = vsel %vm734, %v797, %v801
    %v803 = vshrl.u32 %v311, 16
    %v805 = vor.u32 %v803, %v785
    %v807 = vshll.u32 %v314, 16
    %v809 = vrot.slane %v807, 1
    %v810 = vsel %vm734, %v805, %v809
    %v811 = vshrl.u32 %v312, 16
    %v813 = vor.u32 %v811, %v793
    %v815 = vshll.u32 %v315, 16
    %v817 = vrot.slane %v815, 1
    %v818 = vsel %vm734, %v813, %v817
    %v819 = vshrl.u32 %v313, 16
    %v821 = vor.u32 %v819, %v801
    %v823 = vshll.u32 %v316, 16
    %v825 = vrot.slane %v823, 1
    %v826 = vsel %vm734, %v821, %v825
    %v827 = vshrl.u32 %v314, 16
    %v829 = vor.u32 %v827, %v809
    %v831 = vshll.u32 %v317, 16
    %v833 = vrot.slane %v831, 1
    %v834 = vsel %vm734, %v829, %v833
    %v835 = vshrl.u32 %v315, 16
    %v837 = vor.u32 %v835, %v817
    %v839 = vshll.u32 %v318, 16
    %v841 = vrot.slane %v839, 1
    %v842 = vsel %vm734, %v837, %v841
    %v843 = vshrl.u32 %v316, 16
    %v845 = vor.u32 %v843, %v825
    %v847 = vshll.u32 %v319, 16
    %v849 = vrot.slane %v847, 1
    %v850 = vsel %vm734, %v845, %v849
    %v851 = vshrl.u32 %v317, 16
    %v853 = vor.u32 %v851, %v833
    %v855 = vshll.u32 %v320, 16
    %v857 = vrot.slane %v855, 1
    %v858 = vsel %vm734, %v853, %v857
    %v859 = vshrl.u32 %v318, 16
    %v861 = vor.u32 %v859, %v841
    %v863 = vshll.u32 %v321, 16
    %v865 = vrot.slane %v863, 1
    %v866 = vsel %vm734, %v861, %v865
    %v867 = vshrl.u32 %v319, 16
    %v869 = vor.u32 %v867, %v849
    %v871 = vshll.u32 %v322, 16
    %v873 = vrot.slane %v871, 1
    %v874 = vsel %vm734, %v869, %v873
    %v875 = vshrl.u32 %v320, 16
    %v877 = vor.u32 %v875, %v857
    %v879 = vshll.u32 %v323, 16
    %v881 = vrot.slane %v879, 1
    %v882 = vsel %vm734, %v877, %v881
    %v883 = vshrl.u32 %v321, 16
    %v885 = vor.u32 %v883, %v865
    %v887 = vshll.u32 %v324, 16
    %v889 = vrot.slane %v887, 1
    %v890 = vsel %vm734, %v885, %v889
    %v891 = vshrl.u32 %v322, 16
    %v893 = vor.u32 %v891, %v873
    %v895 = vshll.u32 %v325, 16
    %v897 = vrot.slane %v895, 1
    %v898 = vsel %vm734, %v893, %v897
    %v899 = vshrl.u32 %v323, 16
    %v901 = vor.u32 %v899, %v881
    %v903 = vshll.u32 %v326, 16
    %v905 = vrot.slane %v903, 1
    %v906 = vsel %vm734, %v901, %v905
    %v907 = vshrl.u32 %v324, 16
    %v909 = vor.u32 %v907, %v889
    %v911 = vshll.u32 %v327, 16
    %v913 = vrot.slane %v911, 1
    %v914 = vsel %vm734, %v909, %v913
    %v915 = vshrl.u32 %v325, 16
    %v917 = vor.u32 %v915, %v897
    %v918 = vshrl.u32 %v326, 16
    %v920 = vor.u32 %v918, %v905
    %v921 = vshrl.u32 %v327, 16
    %v923 = vor.u32 %v921, %v913
    %v978 = vunpack.c.l.b16 %v145
    %v979 = vunpack.c.l.b16 %v146
    %v980 = vunpack.c.l.b16 %v147
    %v981 = vunpack.c.l.b16 %v148
    %v982 = vunpack.c.l.b16 %v149
    %v983 = vunpack.c.l.b16 %v150
    %v984 = vunpack.c.l.b16 %v151
    %v985 = vunpack.c.l.b16 %v152
    %v986 = vunpack.c.l.b16 %v153
    %v987 = vunpack.c.l.b16 %v154
    %v988 = vunpack.c.l.b16 %v155
    %v989 = vunpack.c.l.b16 %v156
    %v990 = vunpack.c.l.b16 %v157
    %v991 = vunpack.c.l.b16 %v158
    %v992 = vunpack.c.l.b16 %v159
    %v993 = vunpack.c.l.b16 %v160
    %v994 = vunpack.c.l.b16 %v161
    %v995 = vunpack.c.l.b16 %v162
    %v996 = vunpack.c.l.b16 %v163
    %v997 = vunpack.c.l.b16 %v164
    %v998 = vunpack.c.l.b16 %v165
    %v999 = vunpack.c.l.b16 %v166
    %v1000 = vunpack.c.l.b16 %v167
    %v1001 = vunpack.c.l.b16 %v168
    %v1002 = vunpack.c.l.b16 %v169
    %v1003 = vunpack.c.l.b16 %v170
    %v1004 = vunpack.c.l.b16 %v171
    %v1005 = vunpack.c.l.b16 %v172
    %v1006 = vunpack.c.l.b16 %v173
    %v1007 = vunpack.c.l.b16 %v174
    %v1008 = vunpack.c.l.b16 %v175
    %v1009 = vunpack.c.l.b16 %v176
    %v1010 = vunpack.c.l.b16 %v177
    %v1011 = vunpack.c.l.b16 %v178
    %v1012 = vunpack.c.l.b16 %v179
    %v1013 = vunpack.c.l.b16 %v180
    %v1014 = vunpack.c.l.b16 %v181
    %v1015 = vunpack.c.l.b16 %v182
    %v1016 = vpack.c.b16 %v979, %v978
    %v1017 = vpack.c.b16 %v981, %v980
    %v1018 = vpack.c.b16 %v983, %v982
    %v1019 = vpack.c.b16 %v985, %v984
    %v1020 = vpack.c.b16 %v987, %v986
    %v1021 = vpack.c.b16 %v989, %v988
    %v1022 = vpack.c.b16 %v991, %v990
    %v1023 = vpack.c.b16 %v993, %v992
    %v1024 = vpack.c.b16 %v995, %v994
    %v1025 = vpack.c.b16 %v997, %v996
    %v1026 = vpack.c.b16 %v999, %v998
    %v1027 = vpack.c.b16 %v1001, %v1000
    %v1028 = vpack.c.b16 %v1003, %v1002
    %v1029 = vpack.c.b16 %v1005, %v1004
    %v1030 = vpack.c.b16 %v1007, %v1006
    %v1031 = vpack.c.b16 %v1009, %v1008
    %v1032 = vpack.c.b16 %v1011, %v1010
    %v1033 = vpack.c.b16 %v1013, %v1012
    %v1034 = vpack.c.b16 %v1015, %v1014
    %v1054 = vsel %vm503, %v770, 0
    %v1057 = vsel %vm503, %v794, 0
    %v1060 = vsel %vm503, %v818, 0
    %v1063 = vsel %vm503, %v842, 0
    %v1066 = vsel %vm503, %v866, 0
    %v1069 = vsel %vm503, %v890, 0
    %v1072 = vsel %vm503, %v914, 0
    %v1075 = vsel %vm503, %v923, 0
    %v1078 = vsel %vm528, %v1034, 0
    %1080 = vmatprep.subr.bf16.mxu0 0
    %1081 = vmatpush1.bf16.msra.mxu0 %v1016
    %1082 = vmatprep.subr.bf16.mxu0 0
    %1083 = vmatpush1.bf16.msra.mxu0 %v1017
    %1084 = vmatprep.subr.bf16.mxu0 0
    %1085 = vmatpush1.bf16.msra.mxu0 %v1018
    %1086 = vmatprep.subr.bf16.mxu0 0
    %1087 = vmatpush1.bf16.msra.mxu0 %v1019
    %1088 = vmatprep.subr.bf16.mxu0 0
    %1089 = vmatpush1.bf16.msra.mxu0 %v1020
    %1090 = vmatprep.subr.bf16.mxu0 0
    %1091 = vmatpush1.bf16.msra.mxu0 %v1021
    %1092 = vmatprep.subr.bf16.mxu0 0
    %1093 = vmatpush1.bf16.msra.mxu0 %v1022
    %1094 = vmatprep.subr.bf16.mxu0 0
    %1095 = vmatpush1.bf16.msra.mxu0 %v1023
    %1096 = vmatprep.subr.bf16.mxu0 0
    %1097 = vmatpush1.bf16.msra.mxu0 %v1024
    %1098 = vmatprep.subr.bf16.mxu0 0
    %1099 = vmatpush1.bf16.msra.mxu0 %v1025
    %1100 = vmatprep.subr.bf16.mxu0 0
    %1101 = vmatpush1.bf16.msra.mxu0 %v1026
    %1102 = vmatprep.subr.bf16.mxu0 0
    %1103 = vmatpush1.bf16.msra.mxu0 %v1027
    %1104 = vmatprep.subr.bf16.mxu0 0
    %1105 = vmatpush1.bf16.msra.mxu0 %v1028
    %1106 = vmatprep.subr.bf16.mxu0 0
    %1107 = vmatpush1.bf16.msra.mxu0 %v1029
    %1108 = vmatprep.subr.bf16.mxu0 0
    %1109 = vmatpush1.bf16.msra.mxu0 %v1030
    %1110 = vmatprep.subr.bf16.mxu0 0
    %1111 = vmatpush1.bf16.msra.mxu0 %v1031
    %1112 = vmatprep.mubr.bf16.mxu0 %v758
    %1113 = vmatmul.mubr.bf16.gmra.mrb[0].mxu0 %v746
    %v1114 = vpop.f32.mrb[0].mxu0
    %v1115 = vadd.f32 %v664, %v1114
    %v1116 = vpop.f32.mrb[0].mxu0
    %v1117 = vpop.f32.mrb[0].mxu0
    %v1118 = vadd.f32 %v667, %v1117
    %v1119 = vpop.f32.mrb[0].mxu0
    %1120 = vmatprep.mubr.bf16.mxu0 %v786
    %1121 = vmatmul.mubr.bf16.gmra.mrb[0].mxu0 %v778
    %v1122 = vpop.f32.mrb[0].mxu0
    %v1123 = vadd.f32 %v672, %v1122
    %v1124 = vpop.f32.mrb[0].mxu0
    %v1125 = vpop.f32.mrb[0].mxu0
    %v1126 = vadd.f32 %v675, %v1125
    %v1127 = vpop.f32.mrb[0].mxu0
    %1128 = vmatprep.mubr.bf16.mxu0 %v810
    %1129 = vmatmul.mubr.bf16.gmra.mrb[0].mxu0 %v802
    %v1130 = vpop.f32.mrb[0].mxu0
    %v1131 = vadd.f32 %v680, %v1130
    %v1132 = vpop.f32.mrb[0].mxu0
    %v1133 = vpop.f32.mrb[0].mxu0
    %v1134 = vadd.f32 %v683, %v1133
    %v1135 = vpop.f32.mrb[0].mxu0
    %1136 = vmatprep.mubr.bf16.mxu0 %v834
    %1137 = vmatmul.mubr.bf16.gmra.mrb[0].mxu0 %v826
    %v1138 = vpop.f32.mrb[0].mxu0
    %v1139 = vadd.f32 %v688, %v1138
    %v1140 = vpop.f32.mrb[0].mxu0
    %v1141 = vpop.f32.mrb[0].mxu0
    %v1142 = vadd.f32 %v691, %v1141
    %v1143 = vpop.f32.mrb[0].mxu0
    %1144 = vmatprep.mubr.bf16.mxu0 %v858
    %1145 = vmatmul.mubr.bf16.gmra.mrb[0].mxu0 %v850
    %v1146 = vpop.f32.mrb[0].mxu0
    %v1147 = vadd.f32 %v696, %v1146
    %v1148 = vpop.f32.mrb[0].mxu0
    %v1149 = vpop.f32.mrb[0].mxu0
    %v1150 = vadd.f32 %v699, %v1149
    %v1151 = vpop.f32.mrb[0].mxu0
    %1152 = vmatprep.mubr.bf16.mxu0 %v882
    %1153 = vmatmul.mubr.bf16.gmra.mrb[0].mxu0 %v874
    %v1154 = vpop.f32.mrb[0].mxu0
    %v1155 = vadd.f32 %v704, %v1154
    %v1156 = vpop.f32.mrb[0].mxu0
    %v1157 = vpop.f32.mrb[0].mxu0
    %v1158 = vadd.f32 %v707, %v1157
    %v1159 = vpop.f32.mrb[0].mxu0
    %1160 = vmatprep.mubr.bf16.mxu0 %v906
    %1161 = vmatmul.mubr.bf16.gmra.mrb[0].mxu0 %v898
    %v1162 = vpop.f32.mrb[0].mxu0
    %v1163 = vadd.f32 %v712, %v1162
    %v1164 = vpop.f32.mrb[0].mxu0
    %v1165 = vpop.f32.mrb[0].mxu0
    %v1166 = vadd.f32 %v715, %v1165
    %v1167 = vpop.f32.mrb[0].mxu0
    %1168 = vmatprep.mubr.bf16.mxu0 %v920
    %1169 = vmatmul.mubr.bf16.gmra.mrb[0].mxu0 %v917
    %v1170 = vpop.f32.mrb[0].mxu0
    %v1171 = vadd.f32 %v720, %v1170
    %v1172 = vpop.f32.mrb[0].mxu0
    %v1173 = vpop.f32.mrb[0].mxu0
    %v1174 = vadd.f32 %v723, %v1173
    %v1175 = vpop.f32.mrb[0].mxu0
    %1176 = vdwg.mxu0
    %1177 = vmatprep.subr.bf16.mxu0 0
    %1178 = vmatpush1.bf16.msra.mxu0 %v1032
    %1179 = vmatprep.subr.bf16.mxu0 0
    %1180 = vmatpush1.bf16.msra.mxu0 %v1033
    %1181 = vmatprep.subr.bf16.mxu0 0
    %1182 = vmatpush1.bf16.msra.mxu0 %v1078
    %1183 = vmatprep.subr.bf16.mxu0 0
    %1184 = vmatpush1.bf16.msra.mxu0 0
    %1185 = vmatprep.subr.bf16.mxu0 0
    %1186 = vmatpush1.bf16.msra.mxu0 0
    %1187 = vmatprep.subr.bf16.mxu0 0
    %1188 = vmatpush1.bf16.msra.mxu0 0
    %1189 = vmatprep.subr.bf16.mxu0 0
    %1190 = vmatpush1.bf16.msra.mxu0 0
    %1191 = vmatprep.subr.bf16.mxu0 0
    %1192 = vmatpush1.bf16.msra.mxu0 0
    %1193 = vmatprep.subr.bf16.mxu0 0
    %1194 = vmatpush1.bf16.msra.mxu0 0
    %1195 = vmatprep.subr.bf16.mxu0 0
    %1196 = vmatpush1.bf16.msra.mxu0 0
    %1197 = vmatprep.subr.bf16.mxu0 0
    %1198 = vmatpush1.bf16.msra.mxu0 0
    %1199 = vmatprep.subr.bf16.mxu0 0
    %1200 = vmatpush1.bf16.msra.mxu0 0
    %1201 = vmatprep.subr.bf16.mxu0 0
    %1202 = vmatpush1.bf16.msra.mxu0 0
    %1203 = vmatprep.subr.bf16.mxu0 0
    %1204 = vmatpush1.bf16.msra.mxu0 0
    %1205 = vmatprep.subr.bf16.mxu0 0
    %1206 = vmatpush1.bf16.msra.mxu0 0
    %1207 = vmatprep.subr.bf16.mxu0 0
    %1208 = vmatpush1.bf16.msra.mxu0 0
    %1209 = vmatprep.mubr.bf16.mxu0 0
    %1210 = vmatmul.mubr.bf16.gmra.mrb[0].mxu0 %v1054
    %v1211 = vpop.f32.mrb[0].mxu0
    %v1212 = vadd.f32 %v1115, %v1211
    %v1213 = vpop.f32.mrb[0].mxu0
    %v1214 = vpop.f32.mrb[0].mxu0
    %v1215 = vadd.f32 %v1118, %v1214
    %v1216 = vpop.f32.mrb[0].mxu0
    %1217 = vmatprep.mubr.bf16.mxu0 0
    %1218 = vmatmul.mubr.bf16.gmra.mrb[0].mxu0 %v1057
    %v1219 = vpop.f32.mrb[0].mxu0
    %v1220 = vadd.f32 %v1123, %v1219
    %v1221 = vpop.f32.mrb[0].mxu0
    %v1222 = vpop.f32.mrb[0].mxu0
    %v1223 = vadd.f32 %v1126, %v1222
    %v1224 = vpop.f32.mrb[0].mxu0
    %1225 = vmatprep.mubr.bf16.mxu0 0
    %1226 = vmatmul.mubr.bf16.gmra.mrb[0].mxu0 %v1060
    %v1227 = vpop.f32.mrb[0].mxu0
    %v1228 = vadd.f32 %v1131, %v1227
    %v1229 = vpop.f32.mrb[0].mxu0
    %v1230 = vpop.f32.mrb[0].mxu0
    %v1231 = vadd.f32 %v1134, %v1230
    %v1232 = vpop.f32.mrb[0].mxu0
    %1233 = vmatprep.mubr.bf16.mxu0 0
    %1234 = vmatmul.mubr.bf16.gmra.mrb[0].mxu0 %v1063
    %v1235 = vpop.f32.mrb[0].mxu0
    %v1236 = vadd.f32 %v1139, %v1235
    %v1237 = vpop.f32.mrb[0].mxu0
    %v1238 = vpop.f32.mrb[0].mxu0
    %v1239 = vadd.f32 %v1142, %v1238
    %v1240 = vpop.f32.mrb[0].mxu0
    %1241 = vmatprep.mubr.bf16.mxu0 0
    %1242 = vmatmul.mubr.bf16.gmra.mrb[0].mxu0 %v1066
    %v1243 = vpop.f32.mrb[0].mxu0
    %v1244 = vadd.f32 %v1147, %v1243
    %v1245 = vpop.f32.mrb[0].mxu0
    %v1246 = vpop.f32.mrb[0].mxu0
    %v1247 = vadd.f32 %v1150, %v1246
    %v1248 = vpop.f32.mrb[0].mxu0
    %1249 = vmatprep.mubr.bf16.mxu0 0
    %1250 = vmatmul.mubr.bf16.gmra.mrb[0].mxu0 %v1069
    %v1251 = vpop.f32.mrb[0].mxu0
    %v1252 = vadd.f32 %v1155, %v1251
    %v1253 = vpop.f32.mrb[0].mxu0
    %v1254 = vpop.f32.mrb[0].mxu0
    %v1255 = vadd.f32 %v1158, %v1254
    %v1256 = vpop.f32.mrb[0].mxu0
    %1257 = vmatprep.mubr.bf16.mxu0 0
    %1258 = vmatmul.mubr.bf16.gmra.mrb[0].mxu0 %v1072
    %v1259 = vpop.f32.mrb[0].mxu0
    %v1260 = vadd.f32 %v1163, %v1259
    %v1261 = vpop.f32.mrb[0].mxu0
    %v1262 = vpop.f32.mrb[0].mxu0
    %v1263 = vadd.f32 %v1166, %v1262
    %v1264 = vpop.f32.mrb[0].mxu0
    %1265 = vmatprep.mubr.bf16.mxu0 0
    %1266 = vmatmul.mubr.bf16.gmra.mrb[0].mxu0 %v1075
    %v1267 = vpop.f32.mrb[0].mxu0
    %v1268 = vadd.f32 %v1171, %v1267
    %v1269 = vpop.f32.mrb[0].mxu0
    %v1270 = vpop.f32.mrb[0].mxu0
    %v1271 = vadd.f32 %v1174, %v1270
    %v1272 = vpop.f32.mrb[0].mxu0
    %1273 = vdwg.mxu0
    %v1274 = vld [vmem:[%s0 + $0xb4] sm:$0xff]
    %v1275 = vld [vmem:[%s0 + $0xbc] sm:$0xf]
    %s1276 = scalar_lea.vmem [#allocation3], 304
    %v1277 = vld [vmem:[%s1276] sm:$0xf]
    %v1278 = vld [vmem:[%s1276 + $0x4] sm:$0xf]
    %v1279 = vld [vmem:[%s1276 + $0x8] sm:$0xf]
    %v1280 = vld [vmem:[%s1276 + $0xc] sm:$0xf]
    %v1281 = vld [vmem:[%s1276 + $0x10] sm:$0xf]
    %v1282 = vld [vmem:[%s1276 + $0x14] sm:$0xf]
    %v1283 = vld [vmem:[%s1276 + $0x18] sm:$0xf]
    %v1284 = vld [vmem:[%s1276 + $0x1c] sm:$0xf]
    %v1285 = vld [vmem:[%s1276 + $0x20] sm:$0xf]
    %v1286 = vld [vmem:[%s1276 + $0x24] sm:$0xf]
    %v1287 = vld [vmem:[%s1276 + $0x28] sm:$0xf]
    %v1288 = vld [vmem:[%s1276 + $0x2c] sm:$0xf]
    %v1289 = vld [vmem:[%s1276 + $0x30] sm:$0xf]
    %v1290 = vld [vmem:[%s1276 + $0x34] sm:$0xf]
    %v1291 = vld [vmem:[%s1276 + $0x38] sm:$0xf]
    %v1292 = vld [vmem:[%s1276 + $0x3c] sm:$0xf]
    %v1293 = vld [vmem:[%s1276 + $0x40] sm:$0xf]
    %v1294 = vld [vmem:[%s1276 + $0x44] sm:$0xf]
    %v1295 = vld [vmem:[%s1276 + $0x48] sm:$0xf]
    %v1296 = vld [vmem:[%s1276 + $0x4c] sm:$0xf]
    %v1297 = vld [vmem:[%s1276 + $0x50] sm:$0xf]
    %v1298 = vld [vmem:[%s1276 + $0x54] sm:$0xf]
    %v1299 = vld [vmem:[%s1276 + $0x58] sm:$0xf]
    %v1300 = vld [vmem:[%s1276 + $0x5c] sm:$0xf]
    %v1301 = vld [vmem:[%s1276 + $0x60] sm:$0xf]
    %v1302 = vld [vmem:[%s1276 + $0x64] sm:$0xf]
    %v1303 = vld [vmem:[%s1276 + $0x68] sm:$0xf]
    %v1304 = vld [vmem:[%s1276 + $0x6c] sm:$0xf]
    %v1305 = vld [vmem:[%s1276 + $0x70] sm:$0xf]
    %v1306 = vld [vmem:[%s1276 + $0x74] sm:$0xf]
    %v1307 = vld [vmem:[%s1276 + $0x78] sm:$0xf]
    %v1308 = vld [vmem:[%s1276 + $0x7c] sm:$0xf]
    %v1309 = vld [vmem:[%s1276 + $0x80] sm:$0xf]
    %v1310 = vld [vmem:[%s1276 + $0x84] sm:$0xf]
    %v1311 = vld [vmem:[%s1276 + $0x88] sm:$0xf]
    %v1312 = vld [vmem:[%s1276 + $0x8c] sm:$0xf]
    %v1313 = vld [vmem:[%s1276 + $0x90] sm:$0xf]
    %v1314 = vld [vmem:[%s1276 + $0x94] sm:$0x3]
    %v1317 = vunpack.c.l.b16 %v1274
    %v1318 = vunpack.c.h.b16 %v1274
    %v1319 = vunpack.c.l.b16 %v1275
    %v1320 = vpack.c.b16 %v1317, %v298
    %v1321 = vpack.c.b16 %v1318, %v299
    %v1322 = vpack.c.b16 %v1319, %v300
    %vm1323 = vsmask.f32 6400
    %v1325 = vshrl.u32 %v304, 16
    %v1327 = vrot.slane %v1325, 1
    %v1328 = vshll.u32 %v304, 16
    %v1330 = vrot.slane %v1328, 2
    %v1331 = vor.u32 %v1327, %v1330
    %v1332 = vrot.slane %v771, 1
    %v1333 = vrot.slane %v743, 2
    %v1334 = vor.u32 %v1332, %v1333
    %v1335 = vsel %vm1323, %v1331, %v1334
    %v1337 = vshrl.u32 %v305, 16
    %v1339 = vrot.slane %v1337, 1
    %v1340 = vshll.u32 %v305, 16
    %v1342 = vrot.slane %v1340, 2
    %v1343 = vor.u32 %v1339, %v1342
    %v1344 = vrot.slane %v779, 1
    %v1345 = vrot.slane %v755, 2
    %v1346 = vor.u32 %v1344, %v1345
    %v1347 = vsel %vm1323, %v1343, %v1346
    %v1349 = vshrl.u32 %v306, 16
    %v1351 = vrot.slane %v1349, 1
    %v1352 = vshll.u32 %v306, 16
    %v1354 = vrot.slane %v1352, 2
    %v1355 = vor.u32 %v1351, %v1354
    %v1356 = vrot.slane %v787, 1
    %v1357 = vrot.slane %v767, 2
    %v1358 = vor.u32 %v1356, %v1357
    %v1359 = vsel %vm1323, %v1355, %v1358
    %v1360 = vrot.slane %v795, 1
    %v1361 = vrot.slane %v775, 2
    %v1362 = vor.u32 %v1360, %v1361
    %v1363 = vsel %vm1323, %v1334, %v1362
    %v1364 = vrot.slane %v803, 1
    %v1365 = vrot.slane %v783, 2
    %v1366 = vor.u32 %v1364, %v1365
    %v1367 = vsel %vm1323, %v1346, %v1366
    %v1368 = vrot.slane %v811, 1
    %v1369 = vrot.slane %v791, 2
    %v1370 = vor.u32 %v1368, %v1369
    %v1371 = vsel %vm1323, %v1358, %v1370
    %v1372 = vrot.slane %v819, 1
    %v1373 = vrot.slane %v799, 2
    %v1374 = vor.u32 %v1372, %v1373
    %v1375 = vsel %vm1323, %v1362, %v1374
    %v1376 = vrot.slane %v827, 1
    %v1377 = vrot.slane %v807, 2
    %v1378 = vor.u32 %v1376, %v1377
    %v1379 = vsel %vm1323, %v1366, %v1378
    %v1380 = vrot.slane %v835, 1
    %v1381 = vrot.slane %v815, 2
    %v1382 = vor.u32 %v1380, %v1381
    %v1383 = vsel %vm1323, %v1370, %v1382
    %v1384 = vrot.slane %v843, 1
    %v1385 = vrot.slane %v823, 2
    %v1386 = vor.u32 %v1384, %v1385
    %v1387 = vsel %vm1323, %v1374, %v1386
    %v1388 = vrot.slane %v851, 1
    %v1389 = vrot.slane %v831, 2
    %v1390 = vor.u32 %v1388, %v1389
    %v1391 = vsel %vm1323, %v1378, %v1390
    %v1392 = vrot.slane %v859, 1
    %v1393 = vrot.slane %v839, 2
    %v1394 = vor.u32 %v1392, %v1393
    %v1395 = vsel %vm1323, %v1382, %v1394
    %v1396 = vrot.slane %v867, 1
    %v1397 = vrot.slane %v847, 2
    %v1398 = vor.u32 %v1396, %v1397
    %v1399 = vsel %vm1323, %v1386, %v1398
    %v1400 = vrot.slane %v875, 1
    %v1401 = vrot.slane %v855, 2
    %v1402 = vor.u32 %v1400, %v1401
    %v1403 = vsel %vm1323, %v1390, %v1402
    %v1404 = vrot.slane %v883, 1
    %v1405 = vrot.slane %v863, 2
    %v1406 = vor.u32 %v1404, %v1405
    %v1407 = vsel %vm1323, %v1394, %v1406
    %v1408 = vrot.slane %v891, 1
    %v1409 = vrot.slane %v871, 2
    %v1410 = vor.u32 %v1408, %v1409
    %v1411 = vsel %vm1323, %v1398, %v1410
    %v1412 = vrot.slane %v899, 1
    %v1413 = vrot.slane %v879, 2
    %v1414 = vor.u32 %v1412, %v1413
    %v1415 = vsel %vm1323, %v1402, %v1414
    %v1416 = vrot.slane %v907, 1
    %v1417 = vrot.slane %v887, 2
    %v1418 = vor.u32 %v1416, %v1417
    %v1419 = vsel %vm1323, %v1406, %v1418
    %v1421 = vshrl.u32 %v1320, 16
    %v1423 = vrot.slane %v1421, 1
    %v1424 = vshll.u32 %v1320, 16
    %v1426 = vrot.slane %v1424, 2
    %v1427 = vor.u32 %v1423, %v1426
    %v1428 = vsel %vm1323, %v1410, %v1427
    %v1430 = vshrl.u32 %v1321, 16
    %v1432 = vrot.slane %v1430, 1
    %v1433 = vshll.u32 %v1321, 16
    %v1435 = vrot.slane %v1433, 2
    %v1436 = vor.u32 %v1432, %v1435
    %v1437 = vsel %vm1323, %v1414, %v1436
    %v1439 = vshrl.u32 %v1322, 16
    %v1441 = vrot.slane %v1439, 1
    %v1442 = vshll.u32 %v1322, 16
    %v1444 = vrot.slane %v1442, 2
    %v1445 = vor.u32 %v1441, %v1444
    %v1446 = vsel %vm1323, %v1418, %v1445
    %v1501 = vunpack.c.l.b16 %v1277
    %v1502 = vunpack.c.l.b16 %v1278
    %v1503 = vunpack.c.l.b16 %v1279
    %v1504 = vunpack.c.l.b16 %v1280
    %v1505 = vunpack.c.l.b16 %v1281
    %v1506 = vunpack.c.l.b16 %v1282
    %v1507 = vunpack.c.l.b16 %v1283
    %v1508 = vunpack.c.l.b16 %v1284
    %v1509 = vunpack.c.l.b16 %v1285
    %v1510 = vunpack.c.l.b16 %v1286
    %v1511 = vunpack.c.l.b16 %v1287
    %v1512 = vunpack.c.l.b16 %v1288
    %v1513 = vunpack.c.l.b16 %v1289
    %v1514 = vunpack.c.l.b16 %v1290
    %v1515 = vunpack.c.l.b16 %v1291
    %v1516 = vunpack.c.l.b16 %v1292
    %v1517 = vunpack.c.l.b16 %v1293
    %v1518 = vunpack.c.l.b16 %v1294
    %v1519 = vunpack.c.l.b16 %v1295
    %v1520 = vunpack.c.l.b16 %v1296
    %v1521 = vunpack.c.l.b16 %v1297
    %v1522 = vunpack.c.l.b16 %v1298
    %v1523 = vunpack.c.l.b16 %v1299
    %v1524 = vunpack.c.l.b16 %v1300
    %v1525 = vunpack.c.l.b16 %v1301
    %v1526 = vunpack.c.l.b16 %v1302
    %v1527 = vunpack.c.l.b16 %v1303
    %v1528 = vunpack.c.l.b16 %v1304
    %v1529 = vunpack.c.l.b16 %v1305
    %v1530 = vunpack.c.l.b16 %v1306
    %v1531 = vunpack.c.l.b16 %v1307
    %v1532 = vunpack.c.l.b16 %v1308
    %v1533 = vunpack.c.l.b16 %v1309
    %v1534 = vunpack.c.l.b16 %v1310
    %v1535 = vunpack.c.l.b16 %v1311
    %v1536 = vunpack.c.l.b16 %v1312
    %v1537 = vunpack.c.l.b16 %v1313
    %v1538 = vunpack.c.l.b16 %v1314
    %v1539 = vpack.c.b16 %v1502, %v1501
    %v1540 = vpack.c.b16 %v1504, %v1503
    %v1541 = vpack.c.b16 %v1506, %v1505
    %v1542 = vpack.c.b16 %v1508, %v1507
    %v1543 = vpack.c.b16 %v1510, %v1509
    %v1544 = vpack.c.b16 %v1512, %v1511
    %v1545 = vpack.c.b16 %v1514, %v1513
    %v1546 = vpack.c.b16 %v1516, %v1515
    %v1547 = vpack.c.b16 %v1518, %v1517
    %v1548 = vpack.c.b16 %v1520, %v1519
    %v1549 = vpack.c.b16 %v1522, %v1521
    %v1550 = vpack.c.b16 %v1524, %v1523
    %v1551 = vpack.c.b16 %v1526, %v1525
    %v1552 = vpack.c.b16 %v1528, %v1527
    %v1553 = vpack.c.b16 %v1530, %v1529
    %v1554 = vpack.c.b16 %v1532, %v1531
    %v1555 = vpack.c.b16 %v1534, %v1533
    %v1556 = vpack.c.b16 %v1536, %v1535
    %v1557 = vpack.c.b16 %v1538, %v1537
    %v1577 = vsel %vm503, %v1359, 0
    %v1580 = vsel %vm503, %v1371, 0
    %v1583 = vsel %vm503, %v1383, 0
    %v1586 = vsel %vm503, %v1395, 0
    %v1589 = vsel %vm503, %v1407, 0
    %v1592 = vsel %vm503, %v1419, 0
    %v1595 = vsel %vm503, %v1446, 0
    %v1598 = vsel %vm503, %v1445, 0
    %v1601 = vsel %vm528, %v1557, 0
    %1603 = vmatprep.subr.bf16.mxu0 0
    %1604 = vmatpush1.bf16.msra.mxu0 %v1539
    %1605 = vmatprep.subr.bf16.mxu0 0
    %1606 = vmatpush1.bf16.msra.mxu0 %v1540
    %1607 = vmatprep.subr.bf16.mxu0 0
    %1608 = vmatpush1.bf16.msra.mxu0 %v1541
    %1609 = vmatprep.subr.bf16.mxu0 0
    %1610 = vmatpush1.bf16.msra.mxu0 %v1542
    %1611 = vmatprep.subr.bf16.mxu0 0
    %1612 = vmatpush1.bf16.msra.mxu0 %v1543
    %1613 = vmatprep.subr.bf16.mxu0 0
    %1614 = vmatpush1.bf16.msra.mxu0 %v1544
    %1615 = vmatprep.subr.bf16.mxu0 0
    %1616 = vmatpush1.bf16.msra.mxu0 %v1545
    %1617 = vmatprep.subr.bf16.mxu0 0
    %1618 = vmatpush1.bf16.msra.mxu0 %v1546
    %1619 = vmatprep.subr.bf16.mxu0 0
    %1620 = vmatpush1.bf16.msra.mxu0 %v1547
    %1621 = vmatprep.subr.bf16.mxu0 0
    %1622 = vmatpush1.bf16.msra.mxu0 %v1548
    %1623 = vmatprep.subr.bf16.mxu0 0
    %1624 = vmatpush1.bf16.msra.mxu0 %v1549
    %1625 = vmatprep.subr.bf16.mxu0 0
    %1626 = vmatpush1.bf16.msra.mxu0 %v1550
    %1627 = vmatprep.subr.bf16.mxu0 0
    %1628 = vmatpush1.bf16.msra.mxu0 %v1551
    %1629 = vmatprep.subr.bf16.mxu0 0
    %1630 = vmatpush1.bf16.msra.mxu0 %v1552
    %1631 = vmatprep.subr.bf16.mxu0 0
    %1632 = vmatpush1.bf16.msra.mxu0 %v1553
    %1633 = vmatprep.subr.bf16.mxu0 0
    %1634 = vmatpush1.bf16.msra.mxu0 %v1554
    %1635 = vmatprep.mubr.bf16.mxu0 %v1347
    %1636 = vmatmul.mubr.bf16.gmra.mrb[0].mxu0 %v1335
    %v1637 = vpop.f32.mrb[0].mxu0
    %v1638 = vadd.f32 0.0, %v1637
    %v1639 = vpop.f32.mrb[0].mxu0
    %v1640 = vpop.f32.mrb[0].mxu0
    %v1641 = vadd.f32 0.0, %v1640
    %v1642 = vpop.f32.mrb[0].mxu0
    %1643 = vmatprep.mubr.bf16.mxu0 %v1367
    %1644 = vmatmul.mubr.bf16.gmra.mrb[0].mxu0 %v1363
    %v1645 = vpop.f32.mrb[0].mxu0
    %v1646 = vadd.f32 0.0, %v1645
    %v1647 = vpop.f32.mrb[0].mxu0
    %v1648 = vpop.f32.mrb[0].mxu0
    %v1649 = vadd.f32 0.0, %v1648
    %v1650 = vpop.f32.mrb[0].mxu0
    %1651 = vmatprep.mubr.bf16.mxu0 %v1379
    %1652 = vmatmul.mubr.bf16.gmra.mrb[0].mxu0 %v1375
    %v1653 = vpop.f32.mrb[0].mxu0
    %v1654 = vadd.f32 0.0, %v1653
    %v1655 = vpop.f32.mrb[0].mxu0
    %v1656 = vpop.f32.mrb[0].mxu0
    %v1657 = vadd.f32 0.0, %v1656
    %v1658 = vpop.f32.mrb[0].mxu0
    %1659 = vmatprep.mubr.bf16.mxu0 %v1391
    %1660 = vmatmul.mubr.bf16.gmra.mrb[0].mxu0 %v1387
    %v1661 = vpop.f32.mrb[0].mxu0
    %v1662 = vadd.f32 0.0, %v1661
    %v1663 = vpop.f32.mrb[0].mxu0
    %v1664 = vpop.f32.mrb[0].mxu0
    %v1665 = vadd.f32 0.0, %v1664
    %v1666 = vpop.f32.mrb[0].mxu0
    %1667 = vmatprep.mubr.bf16.mxu0 %v1403
    %1668 = vmatmul.mubr.bf16.gmra.mrb[0].mxu0 %v1399
    %v1669 = vpop.f32.mrb[0].mxu0
    %v1670 = vadd.f32 0.0, %v1669
    %v1671 = vpop.f32.mrb[0].mxu0
    %v1672 = vpop.f32.mrb[0].mxu0
    %v1673 = vadd.f32 0.0, %v1672
    %v1674 = vpop.f32.mrb[0].mxu0
    %1675 = vmatprep.mubr.bf16.mxu0 %v1415
    %1676 = vmatmul.mubr.bf16.gmra.mrb[0].mxu0 %v1411
    %v1677 = vpop.f32.mrb[0].mxu0
    %v1678 = vadd.f32 0.0, %v1677
    %v1679 = vpop.f32.mrb[0].mxu0
    %v1680 = vpop.f32.mrb[0].mxu0
    %v1681 = vadd.f32 0.0, %v1680
    %v1682 = vpop.f32.mrb[0].mxu0
    %1683 = vmatprep.mubr.bf16.mxu0 %v1437
    %1684 = vmatmul.mubr.bf16.gmra.mrb[0].mxu0 %v1428
    %v1685 = vpop.f32.mrb[0].mxu0
    %v1686 = vadd.f32 0.0, %v1685
    %v1687 = vpop.f32.mrb[0].mxu0
    %v1688 = vpop.f32.mrb[0].mxu0
    %v1689 = vadd.f32 0.0, %v1688
    %v1690 = vpop.f32.mrb[0].mxu0
    %1691 = vmatprep.mubr.bf16.mxu0 %v1436
    %1692 = vmatmul.mubr.bf16.gmra.mrb[0].mxu0 %v1427
    %v1693 = vpop.f32.mrb[0].mxu0
    %v1694 = vadd.f32 0.0, %v1693
    %v1695 = vpop.f32.mrb[0].mxu0
    %v1696 = vpop.f32.mrb[0].mxu0
    %v1697 = vadd.f32 0.0, %v1696
    %v1698 = vpop.f32.mrb[0].mxu0
    %1699 = vdwg.mxu0
    %1700 = vmatprep.subr.bf16.mxu0 0
    %1701 = vmatpush1.bf16.msra.mxu0 %v1555
    %1702 = vmatprep.subr.bf16.mxu0 0
    %1703 = vmatpush1.bf16.msra.mxu0 %v1556
    %1704 = vmatprep.subr.bf16.mxu0 0
    %1705 = vmatpush1.bf16.msra.mxu0 %v1601
    %1706 = vmatprep.subr.bf16.mxu0 0
    %1707 = vmatpush1.bf16.msra.mxu0 0
    %1708 = vmatprep.subr.bf16.mxu0 0
    %1709 = vmatpush1.bf16.msra.mxu0 0
    %1710 = vmatprep.subr.bf16.mxu0 0
    %1711 = vmatpush1.bf16.msra.mxu0 0
    %1712 = vmatprep.subr.bf16.mxu0 0
    %1713 = vmatpush1.bf16.msra.mxu0 0
    %1714 = vmatprep.subr.bf16.mxu0 0
    %1715 = vmatpush1.bf16.msra.mxu0 0
    %1716 = vmatprep.subr.bf16.mxu0 0
    %1717 = vmatpush1.bf16.msra.mxu0 0
    %1718 = vmatprep.subr.bf16.mxu0 0
    %1719 = vmatpush1.bf16.msra.mxu0 0
    %1720 = vmatprep.subr.bf16.mxu0 0
    %1721 = vmatpush1.bf16.msra.mxu0 0
    %1722 = vmatprep.subr.bf16.mxu0 0
    %1723 = vmatpush1.bf16.msra.mxu0 0
    %1724 = vmatprep.subr.bf16.mxu0 0
    %1725 = vmatpush1.bf16.msra.mxu0 0
    %1726 = vmatprep.subr.bf16.mxu0 0
    %1727 = vmatpush1.bf16.msra.mxu0 0
    %1728 = vmatprep.subr.bf16.mxu0 0
    %1729 = vmatpush1.bf16.msra.mxu0 0
    %1730 = vmatprep.subr.bf16.mxu0 0
    %1731 = vmatpush1.bf16.msra.mxu0 0
    %1732 = vmatprep.mubr.bf16.mxu0 0
    %1733 = vmatmul.mubr.bf16.gmra.mrb[0].mxu0 %v1577
    %v1734 = vpop.f32.mrb[0].mxu0
    %v1735 = vadd.f32 %v1638, %v1734
    %v1736 = vpop.f32.mrb[0].mxu0
    %v1737 = vpop.f32.mrb[0].mxu0
    %v1738 = vadd.f32 %v1641, %v1737
    %v1739 = vpop.f32.mrb[0].mxu0
    %1740 = vmatprep.mubr.bf16.mxu0 0
    %1741 = vmatmul.mubr.bf16.gmra.mrb[0].mxu0 %v1580
    %v1742 = vpop.f32.mrb[0].mxu0
    %v1743 = vadd.f32 %v1646, %v1742
    %v1744 = vpop.f32.mrb[0].mxu0
    %v1745 = vpop.f32.mrb[0].mxu0
    %v1746 = vadd.f32 %v1649, %v1745
    %v1747 = vpop.f32.mrb[0].mxu0
    %1748 = vmatprep.mubr.bf16.mxu0 0
    %1749 = vmatmul.mubr.bf16.gmra.mrb[0].mxu0 %v1583
    %v1750 = vpop.f32.mrb[0].mxu0
    %v1751 = vadd.f32 %v1654, %v1750
    %v1752 = vpop.f32.mrb[0].mxu0
    %v1753 = vpop.f32.mrb[0].mxu0
    %v1754 = vadd.f32 %v1657, %v1753
    %v1755 = vpop.f32.mrb[0].mxu0
    %1756 = vmatprep.mubr.bf16.mxu0 0
    %1757 = vmatmul.mubr.bf16.gmra.mrb[0].mxu0 %v1586
    %v1758 = vpop.f32.mrb[0].mxu0
    %v1759 = vadd.f32 %v1662, %v1758
    %v1760 = vpop.f32.mrb[0].mxu0
    %v1761 = vpop.f32.mrb[0].mxu0
    %v1762 = vadd.f32 %v1665, %v1761
    %v1763 = vpop.f32.mrb[0].mxu0
    %1764 = vmatprep.mubr.bf16.mxu0 0
    %1765 = vmatmul.mubr.bf16.gmra.mrb[0].mxu0 %v1589
    %v1766 = vpop.f32.mrb[0].mxu0
    %v1767 = vadd.f32 %v1670, %v1766
    %v1768 = vpop.f32.mrb[0].mxu0
    %v1769 = vpop.f32.mrb[0].mxu0
    %v1770 = vadd.f32 %v1673, %v1769
    %v1771 = vpop.f32.mrb[0].mxu0
    %1772 = vmatprep.mubr.bf16.mxu0 0
    %1773 = vmatmul.mubr.bf16.gmra.mrb[0].mxu0 %v1592
    %v1774 = vpop.f32.mrb[0].mxu0
    %v1775 = vadd.f32 %v1678, %v1774
    %v1776 = vpop.f32.mrb[0].mxu0
    %v1777 = vpop.f32.mrb[0].mxu0
    %v1778 = vadd.f32 %v1681, %v1777
    %v1779 = vpop.f32.mrb[0].mxu0
    %1780 = vmatprep.mubr.bf16.mxu0 0
    %1781 = vmatmul.mubr.bf16.gmra.mrb[0].mxu0 %v1595
    %v1782 = vpop.f32.mrb[0].mxu0
    %v1783 = vadd.f32 %v1686, %v1782
    %v1784 = vpop.f32.mrb[0].mxu0
    %v1785 = vpop.f32.mrb[0].mxu0
    %v1786 = vadd.f32 %v1689, %v1785
    %v1787 = vpop.f32.mrb[0].mxu0
    %1788 = vmatprep.mubr.bf16.mxu0 0
    %1789 = vmatmul.mubr.bf16.gmra.mrb[0].mxu0 %v1598
    %v1790 = vpop.f32.mrb[0].mxu0
    %v1791 = vadd.f32 %v1694, %v1790
    %v1792 = vpop.f32.mrb[0].mxu0
    %v1793 = vpop.f32.mrb[0].mxu0
    %v1794 = vadd.f32 %v1697, %v1793
    %v1795 = vpop.f32.mrb[0].mxu0
    %1796 = vdwg.mxu0
    %v1797 = vadd.f32 %v1212, %v1735
    %v1798 = vadd.f32 %v1215, %v1738
    %v1799 = vadd.f32 %v1220, %v1743
    %v1800 = vadd.f32 %v1223, %v1746
    %v1801 = vadd.f32 %v1228, %v1751
    %v1802 = vadd.f32 %v1231, %v1754
    %v1803 = vadd.f32 %v1236, %v1759
    %v1804 = vadd.f32 %v1239, %v1762
    %v1805 = vadd.f32 %v1244, %v1767
    %v1806 = vadd.f32 %v1247, %v1770
    %v1807 = vadd.f32 %v1252, %v1775
    %v1808 = vadd.f32 %v1255, %v1778
    %v1809 = vadd.f32 %v1260, %v1783
    %v1810 = vadd.f32 %v1263, %v1786
    %v1811 = vadd.f32 %v1268, %v1791
    %v1812 = vadd.f32 %v1271, %v1794
    %v1813 = vld [vmem:[%s2] sm:$0x1]
    %v1815 = vlaneseq
    %v1816 = vshrl.u32 %v1815, 7
    %v1817 = vsub.s32 0, %v1816
    %v1818 = vrot.slane %v1813, %v1817
    %v1820 = vadd.f32 %v1797, %v1818
    %v1821 = vadd.f32 %v1798, %v1818
    %v1822 = vadd.f32 %v1799, %v1818
    %v1823 = vadd.f32 %v1800, %v1818
    %v1824 = vadd.f32 %v1801, %v1818
    %v1825 = vadd.f32 %v1802, %v1818
    %v1826 = vadd.f32 %v1803, %v1818
    %v1827 = vadd.f32 %v1804, %v1818
    %v1828 = vadd.f32 %v1805, %v1818
    %v1829 = vadd.f32 %v1806, %v1818
    %v1830 = vadd.f32 %v1807, %v1818
    %v1831 = vadd.f32 %v1808, %v1818
    %v1832 = vadd.f32 %v1809, %v1818
    %v1833 = vadd.f32 %v1810, %v1818
    %v1834 = vadd.f32 %v1811, %v1818
    %v1835 = vadd.f32 %v1812, %v1818
    %v1836 = vmax.f32 %v1820, 0.0
    %v1837 = vmax.f32 %v1821, 0.0
    %v1838 = vmax.f32 %v1822, 0.0
    %v1839 = vmax.f32 %v1823, 0.0
    %v1840 = vmax.f32 %v1824, 0.0
    %v1841 = vmax.f32 %v1825, 0.0
    %v1842 = vmax.f32 %v1826, 0.0
    %v1843 = vmax.f32 %v1827, 0.0
    %v1844 = vmax.f32 %v1828, 0.0
    %v1845 = vmax.f32 %v1829, 0.0
    %v1846 = vmax.f32 %v1830, 0.0
    %v1847 = vmax.f32 %v1831, 0.0
    %v1848 = vmax.f32 %v1832, 0.0
    %v1849 = vmax.f32 %v1833, 0.0
    %v1850 = vmax.f32 %v1834, 0.0
    %v1851 = vmax.f32 %v1835, 0.0
    %vm1852 = vcmask 523264
    %1853 = vst.msk [vmem:[#allocation2] sm:$0xff] %vm1852, 0.0
    %1854 = vst.msk [vmem:[#allocation2 + $0x8] sm:$0xff] %vm1852, 0.0
    %1855 = vst.msk [vmem:[#allocation2 + $0x10] sm:$0xff] %vm1852, 0.0
    %1856 = vst.msk [vmem:[#allocation2 + $0x18] sm:$0xff] %vm1852, 0.0
    %1857 = vst.msk [vmem:[#allocation2 + $0x20] sm:$0xff] %vm1852, 0.0
    %1858 = vst.msk [vmem:[#allocation2 + $0x28] sm:$0xff] %vm1852, 0.0
    %vm1859 = vcmask 517120
    %v1860 = vsel %vm1859, %v1836, -inf
    %v1861 = vrot.slane %v1860, 4
    %v1862 = vmax.f32 %v1860, %v1861
    %v1863 = vrot.slane %v1862, 2
    %v1864 = vmax.f32 %v1862, %v1863
    %v1865 = vrot.slane %v1864, 1
    %v1866 = vmax.f32 %v1864, %v1865
    %vm1867 = vcmask 516096
    %1868 = vst.msk [vmem:[#allocation2 + $0x1] sm:$0x1] %vm1867, %v1866
    %vm1869 = vcmask 520194
    %v1870 = vsel %vm1869, %v1836, -inf
    %v1871 = vrot.slane %v1870, 4
    %v1872 = vmax.f32 %v1870, %v1871
    %v1873 = vrot.slane %v1872, 2
    %v1874 = vmax.f32 %v1872, %v1873
    %v1875 = vrot.slane %v1874, 1
    %v1876 = vmax.f32 %v1874, %v1875
    %1877 = vst.msk [vmem:[#allocation2 + $0x2] sm:$0x1] %vm1867, %v1876
    %vm1878 = vcmask 523269
    %v1879 = vsel %vm1878, %v1836, -inf
    %v1880 = vrot.slane %v1879, 4
    %v1881 = vmax.f32 %v1879, %v1880
    %v1882 = vrot.slane %v1881, 2
    %v1883 = vmax.f32 %v1881, %v1882
    %v1884 = vrot.slane %v1883, 1
    %v1885 = vmax.f32 %v1883, %v1884
    %1886 = vst.msk [vmem:[#allocation2 + $0x3] sm:$0x1] %vm1867, %v1885
    %vm1887 = vcmask 518144
    %v1888 = vsel %vm1887, %v1837, -inf
    %v1889 = vrot.slane %v1888, 4
    %v1890 = vmax.f32 %v1888, %v1889
    %v1891 = vrot.slane %v1890, 2
    %v1892 = vmax.f32 %v1890, %v1891
    %v1893 = vrot.slane %v1892, 1
    %v1894 = vmax.f32 %v1892, %v1893
    %1895 = vst.msk [vmem:[#allocation2 + $0x4] sm:$0x1] %vm1867, %v1894
    %v1896 = vsel %vm1859, %v1838, -inf
    %v1897 = vrot.slane %v1896, 4
    %v1898 = vmax.f32 %v1896, %v1897
    %v1899 = vrot.slane %v1898, 2
    %v1900 = vmax.f32 %v1898, %v1899
    %v1901 = vrot.slane %v1900, 1
    %v1902 = vmax.f32 %v1900, %v1901
    %1903 = vst.msk [vmem:[#allocation2 + $0x7] sm:$0x1] %vm1867, %v1902
    %v1904 = vsel %vm1869, %v1838, -inf
    %v1905 = vrot.slane %v1904, 4
    %v1906 = vmax.f32 %v1904, %v1905
    %v1907 = vrot.slane %v1906, 2
    %v1908 = vmax.f32 %v1906, %v1907
    %v1909 = vrot.slane %v1908, 1
    %v1910 = vmax.f32 %v1908, %v1909
    %1911 = vst.msk [vmem:[#allocation2 + $0x8] sm:$0x1] %vm1867, %v1910
    %v1912 = vsel %vm1878, %v1838, -inf
    %v1913 = vrot.slane %v1912, 4
    %v1914 = vmax.f32 %v1912, %v1913
    %v1915 = vrot.slane %v1914, 2
    %v1916 = vmax.f32 %v1914, %v1915
    %v1917 = vrot.slane %v1916, 1
    %v1918 = vmax.f32 %v1916, %v1917
    %1919 = vst.msk [vmem:[#allocation2 + $0x9] sm:$0x1] %vm1867, %v1918
    %v1920 = vsel %vm1887, %v1839, -inf
    %v1921 = vrot.slane %v1920, 4
    %v1922 = vmax.f32 %v1920, %v1921
    %v1923 = vrot.slane %v1922, 2
    %v1924 = vmax.f32 %v1922, %v1923
    %v1925 = vrot.slane %v1924, 1
    %v1926 = vmax.f32 %v1924, %v1925
    %1927 = vst.msk [vmem:[#allocation2 + $0xa] sm:$0x1] %vm1867, %v1926
    %v1928 = vsel %vm1859, %v1840, -inf
    %v1929 = vrot.slane %v1928, 4
    %v1930 = vmax.f32 %v1928, %v1929
    %v1931 = vrot.slane %v1930, 2
    %v1932 = vmax.f32 %v1930, %v1931
    %v1933 = vrot.slane %v1932, 1
    %v1934 = vmax.f32 %v1932, %v1933
    %1935 = vst.msk [vmem:[#allocation2 + $0xd] sm:$0x1] %vm1867, %v1934
    %v1936 = vsel %vm1869, %v1840, -inf
    %v1937 = vrot.slane %v1936, 4
    %v1938 = vmax.f32 %v1936, %v1937
    %v1939 = vrot.slane %v1938, 2
    %v1940 = vmax.f32 %v1938, %v1939
    %v1941 = vrot.slane %v1940, 1
    %v1942 = vmax.f32 %v1940, %v1941
    %1943 = vst.msk [vmem:[#allocation2 + $0xe] sm:$0x1] %vm1867, %v1942
    %v1944 = vsel %vm1878, %v1840, -inf
    %v1945 = vrot.slane %v1944, 4
    %v1946 = vmax.f32 %v1944, %v1945
    %v1947 = vrot.slane %v1946, 2
    %v1948 = vmax.f32 %v1946, %v1947
    %v1949 = vrot.slane %v1948, 1
    %v1950 = vmax.f32 %v1948, %v1949
    %1951 = vst.msk [vmem:[#allocation2 + $0xf] sm:$0x1] %vm1867, %v1950
    %v1952 = vsel %vm1887, %v1841, -inf
    %v1953 = vrot.slane %v1952, 4
    %v1954 = vmax.f32 %v1952, %v1953
    %v1955 = vrot.slane %v1954, 2
    %v1956 = vmax.f32 %v1954, %v1955
    %v1957 = vrot.slane %v1956, 1
    %v1958 = vmax.f32 %v1956, %v1957
    %1959 = vst.msk [vmem:[#allocation2 + $0x10] sm:$0x1] %vm1867, %v1958
    %v1960 = vsel %vm1859, %v1842, -inf
    %v1961 = vrot.slane %v1960, 4
    %v1962 = vmax.f32 %v1960, %v1961
    %v1963 = vrot.slane %v1962, 2
    %v1964 = vmax.f32 %v1962, %v1963
    %v1965 = vrot.slane %v1964, 1
    %v1966 = vmax.f32 %v1964, %v1965
    %1967 = vst.msk [vmem:[#allocation2 + $0x13] sm:$0x1] %vm1867, %v1966
    %v1968 = vsel %vm1869, %v1842, -inf
    %v1969 = vrot.slane %v1968, 4
    %v1970 = vmax.f32 %v1968, %v1969
    %v1971 = vrot.slane %v1970, 2
    %v1972 = vmax.f32 %v1970, %v1971
    %v1973 = vrot.slane %v1972, 1
    %v1974 = vmax.f32 %v1972, %v1973
    %1975 = vst.msk [vmem:[#allocation2 + $0x14] sm:$0x1] %vm1867, %v1974
    %v1976 = vsel %vm1878, %v1842, -inf
    %v1977 = vrot.slane %v1976, 4
    %v1978 = vmax.f32 %v1976, %v1977
    %v1979 = vrot.slane %v1978, 2
    %v1980 = vmax.f32 %v1978, %v1979
    %v1981 = vrot.slane %v1980, 1
    %v1982 = vmax.f32 %v1980, %v1981
    %1983 = vst.msk [vmem:[#allocation2 + $0x15] sm:$0x1] %vm1867, %v1982
    %v1984 = vsel %vm1887, %v1843, -inf
    %v1985 = vrot.slane %v1984, 4
    %v1986 = vmax.f32 %v1984, %v1985
    %v1987 = vrot.slane %v1986, 2
    %v1988 = vmax.f32 %v1986, %v1987
    %v1989 = vrot.slane %v1988, 1
    %v1990 = vmax.f32 %v1988, %v1989
    %1991 = vst.msk [vmem:[#allocation2 + $0x16] sm:$0x1] %vm1867, %v1990
    %v1992 = vsel %vm1859, %v1844, -inf
    %v1993 = vrot.slane %v1992, 4
    %v1994 = vmax.f32 %v1992, %v1993
    %v1995 = vrot.slane %v1994, 2
    %v1996 = vmax.f32 %v1994, %v1995
    %v1997 = vrot.slane %v1996, 1
    %v1998 = vmax.f32 %v1996, %v1997
    %1999 = vst.msk [vmem:[#allocation2 + $0x19] sm:$0x1] %vm1867, %v1998
    %v2000 = vsel %vm1869, %v1844, -inf
    %v2001 = vrot.slane %v2000, 4
    %v2002 = vmax.f32 %v2000, %v2001
    %v2003 = vrot.slane %v2002, 2
    %v2004 = vmax.f32 %v2002, %v2003
    %v2005 = vrot.slane %v2004, 1
    %v2006 = vmax.f32 %v2004, %v2005
    %2007 = vst.msk [vmem:[#allocation2 + $0x1a] sm:$0x1] %vm1867, %v2006
    %v2008 = vsel %vm1878, %v1844, -inf
    %v2009 = vrot.slane %v2008, 4
    %v2010 = vmax.f32 %v2008, %v2009
    %v2011 = vrot.slane %v2010, 2
    %v2012 = vmax.f32 %v2010, %v2011
    %v2013 = vrot.slane %v2012, 1
    %v2014 = vmax.f32 %v2012, %v2013
    %2015 = vst.msk [vmem:[#allocation2 + $0x1b] sm:$0x1] %vm1867, %v2014
    %v2016 = vsel %vm1887, %v1845, -inf
    %v2017 = vrot.slane %v2016, 4
    %v2018 = vmax.f32 %v2016, %v2017
    %v2019 = vrot.slane %v2018, 2
    %v2020 = vmax.f32 %v2018, %v2019
    %v2021 = vrot.slane %v2020, 1
    %v2022 = vmax.f32 %v2020, %v2021
    %2023 = vst.msk [vmem:[#allocation2 + $0x1c] sm:$0x1] %vm1867, %v2022
    %v2024 = vsel %vm1859, %v1846, -inf
    %v2025 = vrot.slane %v2024, 4
    %v2026 = vmax.f32 %v2024, %v2025
    %v2027 = vrot.slane %v2026, 2
    %v2028 = vmax.f32 %v2026, %v2027
    %v2029 = vrot.slane %v2028, 1
    %v2030 = vmax.f32 %v2028, %v2029
    %2031 = vst.msk [vmem:[#allocation2 + $0x1f] sm:$0x1] %vm1867, %v2030
    %v2032 = vsel %vm1869, %v1846, -inf
    %v2033 = vrot.slane %v2032, 4
    %v2034 = vmax.f32 %v2032, %v2033
    %v2035 = vrot.slane %v2034, 2
    %v2036 = vmax.f32 %v2034, %v2035
    %v2037 = vrot.slane %v2036, 1
    %v2038 = vmax.f32 %v2036, %v2037
    %2039 = vst.msk [vmem:[#allocation2 + $0x20] sm:$0x1] %vm1867, %v2038
    %v2040 = vsel %vm1878, %v1846, -inf
    %v2041 = vrot.slane %v2040, 4
    %v2042 = vmax.f32 %v2040, %v2041
    %v2043 = vrot.slane %v2042, 2
    %v2044 = vmax.f32 %v2042, %v2043
    %v2045 = vrot.slane %v2044, 1
    %v2046 = vmax.f32 %v2044, %v2045
    %2047 = vst.msk [vmem:[#allocation2 + $0x21] sm:$0x1] %vm1867, %v2046
    %v2048 = vsel %vm1887, %v1847, -inf
    %v2049 = vrot.slane %v2048, 4
    %v2050 = vmax.f32 %v2048, %v2049
    %v2051 = vrot.slane %v2050, 2
    %v2052 = vmax.f32 %v2050, %v2051
    %v2053 = vrot.slane %v2052, 1
    %v2054 = vmax.f32 %v2052, %v2053
    %2055 = vst.msk [vmem:[#allocation2 + $0x22] sm:$0x1] %vm1867, %v2054
    %v2056 = vsel %vm1859, %v1848, -inf
    %v2057 = vrot.slane %v2056, 4
    %v2058 = vmax.f32 %v2056, %v2057
    %v2059 = vrot.slane %v2058, 2
    %v2060 = vmax.f32 %v2058, %v2059
    %v2061 = vrot.slane %v2060, 1
    %v2062 = vmax.f32 %v2060, %v2061
    %2063 = vst.msk [vmem:[#allocation2 + $0x25] sm:$0x1] %vm1867, %v2062
    %v2064 = vsel %vm1869, %v1848, -inf
    %v2065 = vrot.slane %v2064, 4
    %v2066 = vmax.f32 %v2064, %v2065
    %v2067 = vrot.slane %v2066, 2
    %v2068 = vmax.f32 %v2066, %v2067
    %v2069 = vrot.slane %v2068, 1
    %v2070 = vmax.f32 %v2068, %v2069
    %2071 = vst.msk [vmem:[#allocation2 + $0x26] sm:$0x1] %vm1867, %v2070
    %v2072 = vsel %vm1878, %v1848, -inf
    %v2073 = vrot.slane %v2072, 4
    %v2074 = vmax.f32 %v2072, %v2073
    %v2075 = vrot.slane %v2074, 2
    %v2076 = vmax.f32 %v2074, %v2075
    %v2077 = vrot.slane %v2076, 1
    %v2078 = vmax.f32 %v2076, %v2077
    %2079 = vst.msk [vmem:[#allocation2 + $0x27] sm:$0x1] %vm1867, %v2078
    %v2080 = vsel %vm1887, %v1849, -inf
    %v2081 = vrot.slane %v2080, 4
    %v2082 = vmax.f32 %v2080, %v2081
    %v2083 = vrot.slane %v2082, 2
    %v2084 = vmax.f32 %v2082, %v2083
    %v2085 = vrot.slane %v2084, 1
    %v2086 = vmax.f32 %v2084, %v2085
    %2087 = vst.msk [vmem:[#allocation2 + $0x28] sm:$0x1] %vm1867, %v2086
    %v2088 = vsel %vm1859, %v1850, -inf
    %v2089 = vrot.slane %v2088, 4
    %v2090 = vmax.f32 %v2088, %v2089
    %v2091 = vrot.slane %v2090, 2
    %v2092 = vmax.f32 %v2090, %v2091
    %v2093 = vrot.slane %v2092, 1
    %v2094 = vmax.f32 %v2092, %v2093
    %2095 = vst.msk [vmem:[#allocation2 + $0x2b] sm:$0x1] %vm1867, %v2094
    %v2096 = vsel %vm1869, %v1850, -inf
    %v2097 = vrot.slane %v2096, 4
    %v2098 = vmax.f32 %v2096, %v2097
    %v2099 = vrot.slane %v2098, 2
    %v2100 = vmax.f32 %v2098, %v2099
    %v2101 = vrot.slane %v2100, 1
    %v2102 = vmax.f32 %v2100, %v2101
    %2103 = vst.msk [vmem:[#allocation2 + $0x2c] sm:$0x1] %vm1867, %v2102
    %v2104 = vsel %vm1878, %v1850, -inf
    %v2105 = vrot.slane %v2104, 4
    %v2106 = vmax.f32 %v2104, %v2105
    %v2107 = vrot.slane %v2106, 2
    %v2108 = vmax.f32 %v2106, %v2107
    %v2109 = vrot.slane %v2108, 1
    %v2110 = vmax.f32 %v2108, %v2109
    %2111 = vst.msk [vmem:[#allocation2 + $0x2d] sm:$0x1] %vm1867, %v2110
    %v2112 = vsel %vm1887, %v1851, -inf
    %v2113 = vrot.slane %v2112, 4
    %v2114 = vmax.f32 %v2112, %v2113
    %v2115 = vrot.slane %v2114, 2
    %v2116 = vmax.f32 %v2114, %v2115
    %v2117 = vrot.slane %v2116, 1
    %v2118 = vmax.f32 %v2116, %v2117
    %2119 = vst.msk [vmem:[#allocation2 + $0x2e] sm:$0x1] %vm1867, %v2118
    %v2120 = vld [vmem:[#allocation2] sm:$0xff]
    %v2121 = vld [vmem:[#allocation2 + $0x8] sm:$0xff]
    %v2122 = vld [vmem:[#allocation2 + $0x10] sm:$0xff]
    %v2123 = vld [vmem:[#allocation2 + $0x18] sm:$0xff]
    %v2124 = vld [vmem:[#allocation2 + $0x20] sm:$0xff]
    %v2125 = vld [vmem:[#allocation2 + $0x28] sm:$0x3f]
    %v2126 = vld [vmem:[#allocation7] sm:$0xff]
    %v2127 = vld [vmem:[#allocation7 + $0x8] sm:$0xff]
    %v2128 = vld [vmem:[#allocation7 + $0x10] sm:$0xff]
    %v2129 = vld [vmem:[#allocation7 + $0x18] sm:$0xff]
    %v2130 = vld [vmem:[#allocation7 + $0x20] sm:$0xff]
    %v2131 = vld [vmem:[#allocation7 + $0x28] sm:$0xff]
    %v2132 = vld [vmem:[#allocation7 + $0x30] sm:$0xff]
    %v2133 = vld [vmem:[#allocation7 + $0x38] sm:$0xff]
    %v2134 = vld [vmem:[#allocation2 + $0x1] sm:$0xff]
    %v2135 = vld [vmem:[#allocation2 + $0x9] sm:$0xff]
    %v2136 = vld [vmem:[#allocation2 + $0x11] sm:$0xff]
    %v2137 = vld [vmem:[#allocation2 + $0x19] sm:$0xff]
    %v2138 = vld [vmem:[#allocation2 + $0x21] sm:$0xff]
    %v2139 = vld [vmem:[#allocation2 + $0x29] sm:$0x3f]
    %s2140 = scalar_lea.vmem [#allocation7], 64
    %v2141 = vld [vmem:[%s2140] sm:$0xff]
    %v2142 = vld [vmem:[%s2140 + $0x8] sm:$0xff]
    %v2143 = vld [vmem:[%s2140 + $0x10] sm:$0xff]
    %v2144 = vld [vmem:[%s2140 + $0x18] sm:$0xff]
    %v2145 = vld [vmem:[%s2140 + $0x20] sm:$0xff]
    %v2146 = vld [vmem:[%s2140 + $0x28] sm:$0xff]
    %v2147 = vld [vmem:[%s2140 + $0x30] sm:$0xff]
    %v2148 = vld [vmem:[%s2140 + $0x38] sm:$0xff]
    %v2150 = vsel %vm1852, %v2134, 0
    %v2153 = vsel %vm1852, %v2135, 0
    %v2156 = vsel %vm1852, %v2136, 0
    %v2159 = vsel %vm1852, %v2137, 0
    %v2162 = vsel %vm1852, %v2138, 0
    %v2165 = vsel %vm1852, %v2139, 0
    %2167 = vmatprep.subr.mxu0 0.0
    %2168 = vmatpush1.msra.mxu0 %v2141
    %2169 = vmatprep.subr.mxu0 0.0
    %2170 = vmatpush1.msra.mxu0 %v2142
    %2171 = vmatprep.subr.mxu0 0.0
    %2172 = vmatpush1.msra.mxu0 %v2143
    %2173 = vmatprep.subr.mxu0 0.0
    %2174 = vmatpush1.msra.mxu0 %v2144
    %2175 = vmatprep.subr.mxu0 0.0
    %2176 = vmatpush1.msra.mxu0 %v2145
    %2177 = vmatprep.subr.mxu0 0.0
    %2178 = vmatpush1.msra.mxu0 %v2146
    %2179 = vmatprep.subr.mxu0 0.0
    %2180 = vmatpush1.msra.mxu0 %v2147
    %2181 = vmatprep.subr.mxu0 0.0
    %2182 = vmatpush1.msra.mxu0 %v2148
    %2183 = vmatprep.subr.mxu0 0.0
    %2184 = vmatpush1.msra.mxu0 0.0
    %2185 = vmatprep.subr.mxu0 0.0
    %2186 = vmatpush1.msra.mxu0 0.0
    %2187 = vmatprep.subr.mxu0 0.0
    %2188 = vmatpush1.msra.mxu0 0.0
    %2189 = vmatprep.subr.mxu0 0.0
    %2190 = vmatpush1.msra.mxu0 0.0
    %2191 = vmatprep.subr.mxu0 0.0
    %2192 = vmatpush1.msra.mxu0 0.0
    %2193 = vmatprep.subr.mxu0 0.0
    %2194 = vmatpush1.msra.mxu0 0.0
    %2195 = vmatprep.subr.mxu0 0.0
    %2196 = vmatpush1.msra.mxu0 0.0
    %2197 = vmatprep.subr.mxu0 0.0
    %2198 = vmatpush1.msra.mxu0 0.0
    %2199 = vmatprep.subr.mxu0 0.0
    %2200 = vmatpush1.msra.mxu0 0.0
    %2201 = vmatprep.subr.mxu0 0.0
    %2202 = vmatpush1.msra.mxu0 0.0
    %2203 = vmatprep.subr.mxu0 0.0
    %2204 = vmatpush1.msra.mxu0 0.0
    %2205 = vmatprep.subr.mxu0 0.0
    %2206 = vmatpush1.msra.mxu0 0.0
    %2207 = vmatprep.subr.mxu0 0.0
    %2208 = vmatpush1.msra.mxu0 0.0
    %2209 = vmatprep.subr.mxu0 0.0
    %2210 = vmatpush1.msra.mxu0 0.0
    %2211 = vmatprep.subr.mxu0 0.0
    %2212 = vmatpush1.msra.mxu0 0.0
    %2213 = vmatprep.subr.mxu0 0.0
    %2214 = vmatpush1.msra.mxu0 0.0
    %2215 = vmatprep.subr.mxu0 0.0
    %2216 = vmatpush1.msra.mxu0 0.0
    %2217 = vmatprep.subr.mxu0 0.0
    %2218 = vmatpush1.msra.mxu0 0.0
    %2219 = vmatprep.subr.mxu0 0.0
    %2220 = vmatpush1.msra.mxu0 0.0
    %2221 = vmatprep.subr.mxu0 0.0
    %2222 = vmatpush1.msra.mxu0 0.0
    %2223 = vmatprep.subr.mxu0 0.0
    %2224 = vmatpush1.msra.mxu0 0.0
    %2225 = vmatprep.subr.mxu0 0.0
    %2226 = vmatpush1.msra.mxu0 0.0
    %2227 = vmatprep.subr.mxu0 0.0
    %2228 = vmatpush1.msra.mxu0 0.0
    %2229 = vmatprep.subr.mxu0 0.0
    %2230 = vmatpush1.msra.mxu0 0.0
    %2231 = vmatprep.mubr.f32.mxu0 0.0
    %2232 = vmatmul.mubr.f32.gmra.mrb[0].mxu0 %v2150
    %v2233 = vpop.f32.mrb[0].mxu0
    %v2234 = vadd.f32 0.0, %v2233
    %v2235 = vpop.f32.mrb[0].mxu0
    %2236 = vmatprep.mubr.f32.mxu0 0.0
    %2237 = vmatmul.mubr.f32.gmra.mrb[0].mxu0 %v2153
    %v2238 = vpop.f32.mrb[0].mxu0
    %v2239 = vadd.f32 0.0, %v2238
    %v2240 = vpop.f32.mrb[0].mxu0
    %2241 = vmatprep.mubr.f32.mxu0 0.0
    %2242 = vmatmul.mubr.f32.gmra.mrb[0].mxu0 %v2156
    %v2243 = vpop.f32.mrb[0].mxu0
    %v2244 = vadd.f32 0.0, %v2243
    %v2245 = vpop.f32.mrb[0].mxu0
    %2246 = vmatprep.mubr.f32.mxu0 0.0
    %2247 = vmatmul.mubr.f32.gmra.mrb[0].mxu0 %v2159
    %v2248 = vpop.f32.mrb[0].mxu0
    %v2249 = vadd.f32 0.0, %v2248
    %v2250 = vpop.f32.mrb[0].mxu0
    %2251 = vmatprep.mubr.f32.mxu0 0.0
    %2252 = vmatmul.mubr.f32.gmra.mrb[0].mxu0 %v2162
    %v2253 = vpop.f32.mrb[0].mxu0
    %v2254 = vadd.f32 0.0, %v2253
    %v2255 = vpop.f32.mrb[0].mxu0
    %2256 = vmatprep.mubr.f32.mxu0 0.0
    %2257 = vmatmul.mubr.f32.gmra.mrb[0].mxu0 %v2165
    %v2258 = vpop.f32.mrb[0].mxu0
    %v2259 = vadd.f32 0.0, %v2258
    %v2260 = vpop.f32.mrb[0].mxu0
    %2261 = vdwg.mxu0
    %v2263 = vsel %vm1852, %v2120, 0
    %v2266 = vsel %vm1852, %v2121, 0
    %v2269 = vsel %vm1852, %v2122, 0
    %v2272 = vsel %vm1852, %v2123, 0
    %v2275 = vsel %vm1852, %v2124, 0
    %v2278 = vsel %vm1852, %v2125, 0
    %2280 = vmatprep.subr.mxu0 0.0
    %2281 = vmatpush1.msra.mxu0 %v2126
    %2282 = vmatprep.subr.mxu0 0.0
    %2283 = vmatpush1.msra.mxu0 %v2127
    %2284 = vmatprep.subr.mxu0 0.0
    %2285 = vmatpush1.msra.mxu0 %v2128
    %2286 = vmatprep.subr.mxu0 0.0
    %2287 = vmatpush1.msra.mxu0 %v2129
    %2288 = vmatprep.subr.mxu0 0.0
    %2289 = vmatpush1.msra.mxu0 %v2130
    %2290 = vmatprep.subr.mxu0 0.0
    %2291 = vmatpush1.msra.mxu0 %v2131
    %2292 = vmatprep.subr.mxu0 0.0
    %2293 = vmatpush1.msra.mxu0 %v2132
    %2294 = vmatprep.subr.mxu0 0.0
    %2295 = vmatpush1.msra.mxu0 %v2133
    %2296 = vmatprep.subr.mxu0 0.0
    %2297 = vmatpush1.msra.mxu0 0.0
    %2298 = vmatprep.subr.mxu0 0.0
    %2299 = vmatpush1.msra.mxu0 0.0
    %2300 = vmatprep.subr.mxu0 0.0
    %2301 = vmatpush1.msra.mxu0 0.0
    %2302 = vmatprep.subr.mxu0 0.0
    %2303 = vmatpush1.msra.mxu0 0.0
    %2304 = vmatprep.subr.mxu0 0.0
    %2305 = vmatpush1.msra.mxu0 0.0
    %2306 = vmatprep.subr.mxu0 0.0
    %2307 = vmatpush1.msra.mxu0 0.0
    %2308 = vmatprep.subr.mxu0 0.0
    %2309 = vmatpush1.msra.mxu0 0.0
    %2310 = vmatprep.subr.mxu0 0.0
    %2311 = vmatpush1.msra.mxu0 0.0
    %2312 = vmatprep.subr.mxu0 0.0
    %2313 = vmatpush1.msra.mxu0 0.0
    %2314 = vmatprep.subr.mxu0 0.0
    %2315 = vmatpush1.msra.mxu0 0.0
    %2316 = vmatprep.subr.mxu0 0.0
    %2317 = vmatpush1.msra.mxu0 0.0
    %2318 = vmatprep.subr.mxu0 0.0
    %2319 = vmatpush1.msra.mxu0 0.0
    %2320 = vmatprep.subr.mxu0 0.0
    %2321 = vmatpush1.msra.mxu0 0.0
    %2322 = vmatprep.subr.mxu0 0.0
    %2323 = vmatpush1.msra.mxu0 0.0
    %2324 = vmatprep.subr.mxu0 0.0
    %2325 = vmatpush1.msra.mxu0 0.0
    %2326 = vmatprep.subr.mxu0 0.0
    %2327 = vmatpush1.msra.mxu0 0.0
    %2328 = vmatprep.subr.mxu0 0.0
    %2329 = vmatpush1.msra.mxu0 0.0
    %2330 = vmatprep.subr.mxu0 0.0
    %2331 = vmatpush1.msra.mxu0 0.0
    %2332 = vmatprep.subr.mxu0 0.0
    %2333 = vmatpush1.msra.mxu0 0.0
    %2334 = vmatprep.subr.mxu0 0.0
    %2335 = vmatpush1.msra.mxu0 0.0
    %2336 = vmatprep.subr.mxu0 0.0
    %2337 = vmatpush1.msra.mxu0 0.0
    %2338 = vmatprep.subr.mxu0 0.0
    %2339 = vmatpush1.msra.mxu0 0.0
    %2340 = vmatprep.subr.mxu0 0.0
    %2341 = vmatpush1.msra.mxu0 0.0
    %2342 = vmatprep.subr.mxu0 0.0
    %2343 = vmatpush1.msra.mxu0 0.0
    %2344 = vmatprep.mubr.f32.mxu0 0.0
    %2345 = vmatmul.mubr.f32.gmra.mrb[0].mxu0 %v2263
    %v2346 = vpop.f32.mrb[0].mxu0
    %v2347 = vadd.f32 %v2234, %v2346
    %v2348 = vpop.f32.mrb[0].mxu0
    %2349 = vmatprep.mubr.f32.mxu0 0.0
    %2350 = vmatmul.mubr.f32.gmra.mrb[0].mxu0 %v2266
    %v2351 = vpop.f32.mrb[0].mxu0
    %v2352 = vadd.f32 %v2239, %v2351
    %v2353 = vpop.f32.mrb[0].mxu0
    %2354 = vmatprep.mubr.f32.mxu0 0.0
    %2355 = vmatmul.mubr.f32.gmra.mrb[0].mxu0 %v2269
    %v2356 = vpop.f32.mrb[0].mxu0
    %v2357 = vadd.f32 %v2244, %v2356
    %v2358 = vpop.f32.mrb[0].mxu0
    %2359 = vmatprep.mubr.f32.mxu0 0.0
    %2360 = vmatmul.mubr.f32.gmra.mrb[0].mxu0 %v2272
    %v2361 = vpop.f32.mrb[0].mxu0
    %v2362 = vadd.f32 %v2249, %v2361
    %v2363 = vpop.f32.mrb[0].mxu0
    %2364 = vmatprep.mubr.f32.mxu0 0.0
    %2365 = vmatmul.mubr.f32.gmra.mrb[0].mxu0 %v2275
    %v2366 = vpop.f32.mrb[0].mxu0
    %v2367 = vadd.f32 %v2254, %v2366
    %v2368 = vpop.f32.mrb[0].mxu0
    %2369 = vmatprep.mubr.f32.mxu0 0.0
    %2370 = vmatmul.mubr.f32.gmra.mrb[0].mxu0 %v2278
    %v2371 = vpop.f32.mrb[0].mxu0
    %v2372 = vadd.f32 %v2259, %v2371
    %v2373 = vpop.f32.mrb[0].mxu0
    %2374 = vdwg.mxu0
    %v2375 = vld [vmem:[#allocation2 + $0x2] sm:$0xff]
    %v2376 = vld [vmem:[#allocation2 + $0xa] sm:$0xff]
    %v2377 = vld [vmem:[#allocation2 + $0x12] sm:$0xff]
    %v2378 = vld [vmem:[#allocation2 + $0x1a] sm:$0xff]
    %v2379 = vld [vmem:[#allocation2 + $0x22] sm:$0xff]
    %v2380 = vld [vmem:[#allocation2 + $0x2a] sm:$0x3f]
    %s2381 = scalar_lea.vmem [#allocation7], 128
    %v2382 = vld [vmem:[%s2381] sm:$0xff]
    %v2383 = vld [vmem:[%s2381 + $0x8] sm:$0xff]
    %v2384 = vld [vmem:[%s2381 + $0x10] sm:$0xff]
    %v2385 = vld [vmem:[%s2381 + $0x18] sm:$0xff]
    %v2386 = vld [vmem:[%s2381 + $0x20] sm:$0xff]
    %v2387 = vld [vmem:[%s2381 + $0x28] sm:$0xff]
    %v2388 = vld [vmem:[%s2381 + $0x30] sm:$0xff]
    %v2389 = vld [vmem:[%s2381 + $0x38] sm:$0xff]
    %v2391 = vsel %vm1852, %v2375, 0
    %v2394 = vsel %vm1852, %v2376, 0
    %v2397 = vsel %vm1852, %v2377, 0
    %v2400 = vsel %vm1852, %v2378, 0
    %v2403 = vsel %vm1852, %v2379, 0
    %v2406 = vsel %vm1852, %v2380, 0
    %2408 = vmatprep.subr.mxu0 0.0
    %2409 = vmatpush1.msra.mxu0 %v2382
    %2410 = vmatprep.subr.mxu0 0.0
    %2411 = vmatpush1.msra.mxu0 %v2383
    %2412 = vmatprep.subr.mxu0 0.0
    %2413 = vmatpush1.msra.mxu0 %v2384
    %2414 = vmatprep.subr.mxu0 0.0
    %2415 = vmatpush1.msra.mxu0 %v2385
    %2416 = vmatprep.subr.mxu0 0.0
    %2417 = vmatpush1.msra.mxu0 %v2386
    %2418 = vmatprep.subr.mxu0 0.0
    %2419 = vmatpush1.msra.mxu0 %v2387
    %2420 = vmatprep.subr.mxu0 0.0
    %2421 = vmatpush1.msra.mxu0 %v2388
    %2422 = vmatprep.subr.mxu0 0.0
    %2423 = vmatpush1.msra.mxu0 %v2389
    %2424 = vmatprep.subr.mxu0 0.0
    %2425 = vmatpush1.msra.mxu0 0.0
    %2426 = vmatprep.subr.mxu0 0.0
    %2427 = vmatpush1.msra.mxu0 0.0
    %2428 = vmatprep.subr.mxu0 0.0
    %2429 = vmatpush1.msra.mxu0 0.0
    %2430 = vmatprep.subr.mxu0 0.0
    %2431 = vmatpush1.msra.mxu0 0.0
    %2432 = vmatprep.subr.mxu0 0.0
    %2433 = vmatpush1.msra.mxu0 0.0
    %2434 = vmatprep.subr.mxu0 0.0
    %2435 = vmatpush1.msra.mxu0 0.0
    %2436 = vmatprep.subr.mxu0 0.0
    %2437 = vmatpush1.msra.mxu0 0.0
    %2438 = vmatprep.subr.mxu0 0.0
    %2439 = vmatpush1.msra.mxu0 0.0
    %2440 = vmatprep.subr.mxu0 0.0
    %2441 = vmatpush1.msra.mxu0 0.0
    %2442 = vmatprep.subr.mxu0 0.0
    %2443 = vmatpush1.msra.mxu0 0.0
    %2444 = vmatprep.subr.mxu0 0.0
    %2445 = vmatpush1.msra.mxu0 0.0
    %2446 = vmatprep.subr.mxu0 0.0
    %2447 = vmatpush1.msra.mxu0 0.0
    %2448 = vmatprep.subr.mxu0 0.0
    %2449 = vmatpush1.msra.mxu0 0.0
    %2450 = vmatprep.subr.mxu0 0.0
    %2451 = vmatpush1.msra.mxu0 0.0
    %2452 = vmatprep.subr.mxu0 0.0
    %2453 = vmatpush1.msra.mxu0 0.0
    %2454 = vmatprep.subr.mxu0 0.0
    %2455 = vmatpush1.msra.mxu0 0.0
    %2456 = vmatprep.subr.mxu0 0.0
    %2457 = vmatpush1.msra.mxu0 0.0
    %2458 = vmatprep.subr.mxu0 0.0
    %2459 = vmatpush1.msra.mxu0 0.0
    %2460 = vmatprep.subr.mxu0 0.0
    %2461 = vmatpush1.msra.mxu0 0.0
    %2462 = vmatprep.subr.mxu0 0.0
    %2463 = vmatpush1.msra.mxu0 0.0
    %2464 = vmatprep.subr.mxu0 0.0
    %2465 = vmatpush1.msra.mxu0 0.0
    %2466 = vmatprep.subr.mxu0 0.0
    %2467 = vmatpush1.msra.mxu0 0.0
    %2468 = vmatprep.subr.mxu0 0.0
    %2469 = vmatpush1.msra.mxu0 0.0
    %2470 = vmatprep.subr.mxu0 0.0
    %2471 = vmatpush1.msra.mxu0 0.0
    %2472 = vmatprep.mubr.f32.mxu0 0.0
    %2473 = vmatmul.mubr.f32.gmra.mrb[0].mxu0 %v2391
    %v2474 = vpop.f32.mrb[0].mxu0
    %v2475 = vadd.f32 0.0, %v2474
    %v2476 = vpop.f32.mrb[0].mxu0
    %2477 = vmatprep.mubr.f32.mxu0 0.0
    %2478 = vmatmul.mubr.f32.gmra.mrb[0].mxu0 %v2394
    %v2479 = vpop.f32.mrb[0].mxu0
    %v2480 = vadd.f32 0.0, %v2479
    %v2481 = vpop.f32.mrb[0].mxu0
    %2482 = vmatprep.mubr.f32.mxu0 0.0
    %2483 = vmatmul.mubr.f32.gmra.mrb[0].mxu0 %v2397
    %v2484 = vpop.f32.mrb[0].mxu0
    %v2485 = vadd.f32 0.0, %v2484
    %v2486 = vpop.f32.mrb[0].mxu0
    %2487 = vmatprep.mubr.f32.mxu0 0.0
    %2488 = vmatmul.mubr.f32.gmra.mrb[0].mxu0 %v2400
    %v2489 = vpop.f32.mrb[0].mxu0
    %v2490 = vadd.f32 0.0, %v2489
    %v2491 = vpop.f32.mrb[0].mxu0
    %2492 = vmatprep.mubr.f32.mxu0 0.0
    %2493 = vmatmul.mubr.f32.gmra.mrb[0].mxu0 %v2403
    %v2494 = vpop.f32.mrb[0].mxu0
    %v2495 = vadd.f32 0.0, %v2494
    %v2496 = vpop.f32.mrb[0].mxu0
    %2497 = vmatprep.mubr.f32.mxu0 0.0
    %2498 = vmatmul.mubr.f32.gmra.mrb[0].mxu0 %v2406
    %v2499 = vpop.f32.mrb[0].mxu0
    %v2500 = vadd.f32 0.0, %v2499
    %v2501 = vpop.f32.mrb[0].mxu0
    %2502 = vdwg.mxu0
    %v2503 = vadd.f32 %v2347, %v2475
    %v2504 = vadd.f32 %v2352, %v2480
    %v2505 = vadd.f32 %v2357, %v2485
    %v2506 = vadd.f32 %v2362, %v2490
    %v2507 = vadd.f32 %v2367, %v2495
    %v2508 = vadd.f32 %v2372, %v2500
    %v2509 = vld [vmem:[%s8] sm:$0x1]
    %v2511 = vlaneseq
    %v2512 = vshrl.u32 %v2511, 7
    %v2513 = vsub.s32 0, %v2512
    %v2514 = vrot.slane %v2509, %v2513
    %v2516 = vadd.f32 %v2503, %v2514
    %v2517 = vadd.f32 %v2504, %v2514
    %v2518 = vadd.f32 %v2505, %v2514
    %v2519 = vadd.f32 %v2506, %v2514
    %v2520 = vadd.f32 %v2507, %v2514
    %v2521 = vadd.f32 %v2508, %v2514
    %v2522 = vmax.f32 %v2516, 0.0
    %v2523 = vmax.f32 %v2517, 0.0
    %v2524 = vmax.f32 %v2518, 0.0
    %v2525 = vmax.f32 %v2519, 0.0
    %v2526 = vmax.f32 %v2520, 0.0
    %v2527 = vmax.f32 %v2521, 0.0
    %vm2528 = vcmask 1043456
    %v2529 = vsel %vm2528, %v2522, -inf
    %v2530 = vrot.slane %v2529, 4
    %v2531 = vmax.f32 %v2529, %v2530
    %v2532 = vrot.slane %v2531, 2
    %v2533 = vmax.f32 %v2531, %v2532
    %v2534 = vrot.slane %v2533, 1
    %v2535 = vmax.f32 %v2533, %v2534
    %2536 = vst [vmem:[%s13] sm:$0x1] %v2535
    %vm2537 = vcmask 1047558
    %v2538 = vsel %vm2537, %v2522, -inf
    %vm2539 = vcmask 1041408
    %v2540 = vsel %vm2539, %v2523, -inf
    %v2541 = vmax.f32 %v2538, %v2540
    %v2542 = vrot.slane %v2541, 4
    %v2543 = vmax.f32 %v2541, %v2542
    %v2544 = vrot.slane %v2543, 2
    %v2545 = vmax.f32 %v2543, %v2544
    %v2546 = vrot.slane %v2545, 1
    %v2547 = vmax.f32 %v2545, %v2546
    %2548 = vst [vmem:[%s13 + $0x1] sm:$0x1] %v2547
    %vm2549 = vcmask 1047556
    %v2550 = vsel %vm2549, %v2523, -inf
    %v2551 = vrot.slane %v2550, 4
    %v2552 = vmax.f32 %v2550, %v2551
    %v2553 = vrot.slane %v2552, 2
    %v2554 = vmax.f32 %v2552, %v2553
    %v2555 = vrot.slane %v2554, 1
    %v2556 = vmax.f32 %v2554, %v2555
    %2557 = vst [vmem:[%s13 + $0x2] sm:$0x1] %v2556
    %vm2558 = vcmask 1045506
    %v2559 = vsel %vm2558, %v2524, -inf
    %v2560 = vrot.slane %v2559, 4
    %v2561 = vmax.f32 %v2559, %v2560
    %v2562 = vrot.slane %v2561, 2
    %v2563 = vmax.f32 %v2561, %v2562
    %v2564 = vrot.slane %v2563, 1
    %v2565 = vmax.f32 %v2563, %v2564
    %2566 = vst [vmem:[%s13 + $0x3] sm:$0x1] %v2565
    %v2567 = vsel %vm2528, %v2525, -inf
    %v2568 = vrot.slane %v2567, 4
    %v2569 = vmax.f32 %v2567, %v2568
    %v2570 = vrot.slane %v2569, 2
    %v2571 = vmax.f32 %v2569, %v2570
    %v2572 = vrot.slane %v2571, 1
    %v2573 = vmax.f32 %v2571, %v2572
    %2574 = vst [vmem:[%s13 + $0x4] sm:$0x1] %v2573
    %v2575 = vsel %vm2537, %v2525, -inf
    %v2576 = vsel %vm2539, %v2526, -inf
    %v2577 = vmax.f32 %v2575, %v2576
    %v2578 = vrot.slane %v2577, 4
    %v2579 = vmax.f32 %v2577, %v2578
    %v2580 = vrot.slane %v2579, 2
    %v2581 = vmax.f32 %v2579, %v2580
    %v2582 = vrot.slane %v2581, 1
    %v2583 = vmax.f32 %v2581, %v2582
    %2584 = vst [vmem:[%s13 + $0x5] sm:$0x1] %v2583
    %v2585 = vsel %vm2549, %v2526, -inf
    %v2586 = vrot.slane %v2585, 4
    %v2587 = vmax.f32 %v2585, %v2586
    %v2588 = vrot.slane %v2587, 2
    %v2589 = vmax.f32 %v2587, %v2588
    %v2590 = vrot.slane %v2589, 1
    %v2591 = vmax.f32 %v2589, %v2590
    %2592 = vst [vmem:[%s13 + $0x6] sm:$0x1] %v2591
    %v2593 = vsel %vm2558, %v2527, -inf
    %v2594 = vrot.slane %v2593, 4
    %v2595 = vmax.f32 %v2593, %v2594
    %v2596 = vrot.slane %v2595, 2
    %v2597 = vmax.f32 %v2595, %v2596
    %v2598 = vrot.slane %v2597, 1
    %v2599 = vmax.f32 %v2597, %v2598
    %2600 = vst [vmem:[%s13 + $0x7] sm:$0x1] %v2599
    %v2601 = vld [vmem:[%s0] sm:$0xff]
    %v2602 = vld [vmem:[%s0 + $0x8] sm:$0xf]
    %v2603 = vld [vmem:[%s0 + $0xc] sm:$0xff]
    %v2604 = vld [vmem:[%s0 + $0x14] sm:$0xf]
    %v2605 = vld [vmem:[%s0 + $0x18] sm:$0xff]
    %v2606 = vld [vmem:[%s0 + $0x20] sm:$0xf]
    %v2607 = vld [vmem:[%s0 + $0x24] sm:$0xff]
    %v2608 = vld [vmem:[%s0 + $0x2c] sm:$0xf]
    %v2609 = vld [vmem:[%s0 + $0x30] sm:$0xff]
    %v2610 = vld [vmem:[%s0 + $0x38] sm:$0xf]
    %v2611 = vld [vmem:[%s0 + $0x3c] sm:$0xff]
    %v2612 = vld [vmem:[%s0 + $0x44] sm:$0xf]
    %v2613 = vld [vmem:[%s0 + $0x48] sm:$0xff]
    %v2614 = vld [vmem:[%s0 + $0x50] sm:$0xf]
    %v2615 = vld [vmem:[%s0 + $0x54] sm:$0xff]
    %v2616 = vld [vmem:[%s0 + $0x5c] sm:$0xf]
    %v2617 = vld [vmem:[%s0 + $0x60] sm:$0xff]
    %v2618 = vld [vmem:[%s0 + $0x68] sm:$0xf]
    %v2619 = vld [vmem:[%s0 + $0x6c] sm:$0xff]
    %v2620 = vld [vmem:[%s0 + $0x74] sm:$0xf]
    %v2621 = vld [vmem:[%s0 + $0x78] sm:$0xff]
    %v2622 = vld [vmem:[%s0 + $0x80] sm:$0xf]
    %v2623 = vld [vmem:[%s0 + $0x84] sm:$0xff]
    %v2624 = vld [vmem:[%s0 + $0x8c] sm:$0xf]
    %v2625 = vld [vmem:[%s0 + $0x90] sm:$0xff]
    %v2626 = vld [vmem:[%s0 + $0x98] sm:$0xf]
    %v2627 = vld [vmem:[%s0 + $0x9c] sm:$0xff]
    %v2628 = vld [vmem:[%s0 + $0xa4] sm:$0xf]
    %v2629 = vld [vmem:[%s0 + $0xa8] sm:$0xff]
    %v2630 = vld [vmem:[%s0 + $0xb0] sm:$0xf]
    %v2631 = vld [vmem:[%s0 + $0xb4] sm:$0x77]
    %v2632 = vld [vmem:[%s0 + $0xbc] sm:$0x7]
    %v2633 = vld [vmem:[#allocation5] sm:$0xf]
    %v2634 = vld [vmem:[#allocation5 + $0x4] sm:$0xf]
    %v2635 = vld [vmem:[#allocation5 + $0x8] sm:$0xf]
    %v2636 = vld [vmem:[#allocation5 + $0xc] sm:$0xf]
    %v2637 = vld [vmem:[#allocation5 + $0x10] sm:$0xf]
    %v2638 = vld [vmem:[#allocation5 + $0x14] sm:$0xf]
    %v2639 = vld [vmem:[#allocation5 + $0x18] sm:$0xf]
    %v2640 = vld [vmem:[#allocation5 + $0x1c] sm:$0xf]
    %v2641 = vld [vmem:[#allocation5 + $0x20] sm:$0xf]
    %v2642 = vld [vmem:[#allocation5 + $0x24] sm:$0xf]
    %v2643 = vld [vmem:[#allocation5 + $0x28] sm:$0xf]
    %v2644 = vld [vmem:[#allocation5 + $0x2c] sm:$0xf]
    %v2645 = vld [vmem:[#allocation5 + $0x30] sm:$0xf]
    %v2646 = vld [vmem:[#allocation5 + $0x34] sm:$0xf]
    %v2647 = vld [vmem:[#allocation5 + $0x38] sm:$0xf]
    %v2648 = vld [vmem:[#allocation5 + $0x3c] sm:$0xf]
    %v2649 = vld [vmem:[#allocation5 + $0x40] sm:$0xf]
    %v2650 = vld [vmem:[#allocation5 + $0x44] sm:$0xf]
    %v2651 = vld [vmem:[#allocation5 + $0x48] sm:$0xf]
    %v2652 = vld [vmem:[#allocation5 + $0x4c] sm:$0xf]
    %v2653 = vld [vmem:[#allocation5 + $0x50] sm:$0xf]
    %v2654 = vld [vmem:[#allocation5 + $0x54] sm:$0xf]
    %v2655 = vld [vmem:[#allocation5 + $0x58] sm:$0xf]
    %v2656 = vld [vmem:[#allocation5 + $0x5c] sm:$0xf]
    %v2657 = vld [vmem:[#allocation5 + $0x60] sm:$0xf]
    %v2658 = vld [vmem:[#allocation5 + $0x64] sm:$0xf]
    %v2659 = vld [vmem:[#allocation5 + $0x68] sm:$0xf]
    %v2660 = vld [vmem:[#allocation5 + $0x6c] sm:$0xf]
    %v2661 = vld [vmem:[#allocation5 + $0x70] sm:$0xf]
    %v2662 = vld [vmem:[#allocation5 + $0x74] sm:$0xf]
    %v2663 = vld [vmem:[#allocation5 + $0x78] sm:$0xf]
    %v2664 = vld [vmem:[#allocation5 + $0x7c] sm:$0xf]
    %v2665 = vld [vmem:[#allocation5 + $0x80] sm:$0xf]
    %v2666 = vld [vmem:[#allocation5 + $0x84] sm:$0xf]
    %v2667 = vld [vmem:[#allocation5 + $0x88] sm:$0xf]
    %v2668 = vld [vmem:[#allocation5 + $0x8c] sm:$0xf]
    %v2669 = vld [vmem:[#allocation5 + $0x90] sm:$0xf]
    %v2670 = vld [vmem:[#allocation5 + $0x94] sm:$0x3]
    %s2671 = scalar_lea.vmem [#allocation5], 152
    %v2672 = vld [vmem:[%s2671] sm:$0xf]
    %v2673 = vld [vmem:[%s2671 + $0x4] sm:$0xf]
    %v2674 = vld [vmem:[%s2671 + $0x8] sm:$0xf]
    %v2675 = vld [vmem:[%s2671 + $0xc] sm:$0xf]
    %v2676 = vld [vmem:[%s2671 + $0x10] sm:$0xf]
    %v2677 = vld [vmem:[%s2671 + $0x14] sm:$0xf]
    %v2678 = vld [vmem:[%s2671 + $0x18] sm:$0xf]
    %v2679 = vld [vmem:[%s2671 + $0x1c] sm:$0xf]
    %v2680 = vld [vmem:[%s2671 + $0x20] sm:$0xf]
    %v2681 = vld [vmem:[%s2671 + $0x24] sm:$0xf]
    %v2682 = vld [vmem:[%s2671 + $0x28] sm:$0xf]
    %v2683 = vld [vmem:[%s2671 + $0x2c] sm:$0xf]
    %v2684 = vld [vmem:[%s2671 + $0x30] sm:$0xf]
    %v2685 = vld [vmem:[%s2671 + $0x34] sm:$0xf]
    %v2686 = vld [vmem:[%s2671 + $0x38] sm:$0xf]
    %v2687 = vld [vmem:[%s2671 + $0x3c] sm:$0xf]
    %v2688 = vld [vmem:[%s2671 + $0x40] sm:$0xf]
    %v2689 = vld [vmem:[%s2671 + $0x44] sm:$0xf]
    %v2690 = vld [vmem:[%s2671 + $0x48] sm:$0xf]
    %v2691 = vld [vmem:[%s2671 + $0x4c] sm:$0xf]
    %v2692 = vld [vmem:[%s2671 + $0x50] sm:$0xf]
    %v2693 = vld [vmem:[%s2671 + $0x54] sm:$0xf]
    %v2694 = vld [vmem:[%s2671 + $0x58] sm:$0xf]
    %v2695 = vld [vmem:[%s2671 + $0x5c] sm:$0xf]
    %v2696 = vld [vmem:[%s2671 + $0x60] sm:$0xf]
    %v2697 = vld [vmem:[%s2671 + $0x64] sm:$0xf]
    %v2698 = vld [vmem:[%s2671 + $0x68] sm:$0xf]
    %v2699 = vld [vmem:[%s2671 + $0x6c] sm:$0xf]
    %v2700 = vld [vmem:[%s2671 + $0x70] sm:$0xf]
    %v2701 = vld [vmem:[%s2671 + $0x74] sm:$0xf]
    %v2702 = vld [vmem:[%s2671 + $0x78] sm:$0xf]
    %v2703 = vld [vmem:[%s2671 + $0x7c] sm:$0xf]
    %v2704 = vld [vmem:[%s2671 + $0x80] sm:$0xf]
    %v2705 = vld [vmem:[%s2671 + $0x84] sm:$0xf]
    %v2706 = vld [vmem:[%s2671 + $0x88] sm:$0xf]
    %v2707 = vld [vmem:[%s2671 + $0x8c] sm:$0xf]
    %v2708 = vld [vmem:[%s2671 + $0x90] sm:$0xf]
    %v2709 = vld [vmem:[%s2671 + $0x94] sm:$0x3]
    %v2742 = vunpack.c.l.b16 %v2601
    %v2743 = vunpack.c.h.b16 %v2601
    %v2744 = vunpack.c.l.b16 %v2602
    %v2745 = vunpack.c.l.b16 %v2603
    %v2746 = vunpack.c.h.b16 %v2603
    %v2747 = vunpack.c.l.b16 %v2604
    %v2748 = vunpack.c.l.b16 %v2605
    %v2749 = vunpack.c.h.b16 %v2605
    %v2750 = vunpack.c.l.b16 %v2606
    %v2751 = vunpack.c.l.b16 %v2607
    %v2752 = vunpack.c.h.b16 %v2607
    %v2753 = vunpack.c.l.b16 %v2608
    %v2754 = vunpack.c.l.b16 %v2609
    %v2755 = vunpack.c.h.b16 %v2609
    %v2756 = vunpack.c.l.b16 %v2610
    %v2757 = vunpack.c.l.b16 %v2611
    %v2758 = vunpack.c.h.b16 %v2611
    %v2759 = vunpack.c.l.b16 %v2612
    %v2760 = vunpack.c.l.b16 %v2613
    %v2761 = vunpack.c.h.b16 %v2613
    %v2762 = vunpack.c.l.b16 %v2614
    %v2763 = vunpack.c.l.b16 %v2615
    %v2764 = vunpack.c.h.b16 %v2615
    %v2765 = vunpack.c.l.b16 %v2616
    %v2766 = vunpack.c.l.b16 %v2617
    %v2767 = vunpack.c.h.b16 %v2617
    %v2768 = vunpack.c.l.b16 %v2618
    %v2769 = vunpack.c.l.b16 %v2619
    %v2770 = vunpack.c.h.b16 %v2619
    %v2771 = vunpack.c.l.b16 %v2620
    %v2772 = vunpack.c.l.b16 %v2621
    %v2773 = vunpack.c.h.b16 %v2621
    %v2774 = vunpack.c.l.b16 %v2622
    %v2775 = vunpack.c.l.b16 %v2623
    %v2776 = vunpack.c.h.b16 %v2623
    %v2777 = vunpack.c.l.b16 %v2624
    %v2778 = vunpack.c.l.b16 %v2625
    %v2779 = vunpack.c.h.b16 %v2625
    %v2780 = vunpack.c.l.b16 %v2626
    %v2781 = vunpack.c.l.b16 %v2627
    %v2782 = vunpack.c.h.b16 %v2627
    %v2783 = vunpack.c.l.b16 %v2628
    %v2784 = vunpack.c.l.b16 %v2629
    %v2785 = vunpack.c.h.b16 %v2629
    %v2786 = vunpack.c.l.b16 %v2630
    %v2787 = vunpack.c.l.b16 %v2631
    %v2788 = vunpack.c.h.b16 %v2631
    %v2789 = vunpack.c.l.b16 %v2632
    %v2790 = vpack.c.b16 %v2745, %v2742
    %v2791 = vpack.c.b16 %v2746, %v2743
    %v2792 = vpack.c.b16 %v2747, %v2744
    %v2793 = vpack.c.b16 %v2751, %v2748
    %v2794 = vpack.c.b16 %v2752, %v2749
    %v2795 = vpack.c.b16 %v2753, %v2750
    %v2796 = vpack.c.b16 %v2757, %v2754
    %v2797 = vpack.c.b16 %v2758, %v2755
    %v2798 = vpack.c.b16 %v2759, %v2756
    %v2799 = vpack.c.b16 %v2763, %v2760
    %v2800 = vpack.c.b16 %v2764, %v2761
    %v2801 = vpack.c.b16 %v2765, %v2762
    %v2802 = vpack.c.b16 %v2769, %v2766
    %v2803 = vpack.c.b16 %v2770, %v2767
    %v2804 = vpack.c.b16 %v2771, %v2768
    %v2805 = vpack.c.b16 %v2775, %v2772
    %v2806 = vpack.c.b16 %v2776, %v2773
    %v2807 = vpack.c.b16 %v2777, %v2774
    %v2808 = vpack.c.b16 %v2781, %v2778
    %v2809 = vpack.c.b16 %v2782, %v2779
    %v2810 = vpack.c.b16 %v2783, %v2780
    %v2811 = vpack.c.b16 %v2787, %v2784
    %v2812 = vpack.c.b16 %v2788, %v2785
    %v2813 = vpack.c.b16 %v2789, %v2786
    %v2815 = vshrl.u32 %v2790, 16
    %v2817 = vshll.u32 %v2790, 16
    %v2819 = vrot.slane %v2817, 1
    %v2820 = vor.u32 %v2815, %v2819
    %v2822 = vshll.u32 %v2793, 16
    %v2824 = vrot.slane %v2822, 1
    %v2825 = vsel %vm734, %v2820, %v2824
    %v2827 = vshrl.u32 %v2791, 16
    %v2829 = vshll.u32 %v2791, 16
    %v2831 = vrot.slane %v2829, 1
    %v2832 = vor.u32 %v2827, %v2831
    %v2834 = vshll.u32 %v2794, 16
    %v2836 = vrot.slane %v2834, 1
    %v2837 = vsel %vm734, %v2832, %v2836
    %v2839 = vshrl.u32 %v2792, 16
    %v2841 = vshll.u32 %v2792, 16
    %v2843 = vrot.slane %v2841, 1
    %v2844 = vor.u32 %v2839, %v2843
    %v2846 = vshll.u32 %v2795, 16
    %v2848 = vrot.slane %v2846, 1
    %v2849 = vsel %vm734, %v2844, %v2848
    %v2850 = vshrl.u32 %v2793, 16
    %v2852 = vor.u32 %v2850, %v2824
    %v2854 = vshll.u32 %v2796, 16
    %v2856 = vrot.slane %v2854, 1
    %v2857 = vsel %vm734, %v2852, %v2856
    %v2858 = vshrl.u32 %v2794, 16
    %v2860 = vor.u32 %v2858, %v2836
    %v2862 = vshll.u32 %v2797, 16
    %v2864 = vrot.slane %v2862, 1
    %v2865 = vsel %vm734, %v2860, %v2864
    %v2866 = vshrl.u32 %v2795, 16
    %v2868 = vor.u32 %v2866, %v2848
    %v2870 = vshll.u32 %v2798, 16
    %v2872 = vrot.slane %v2870, 1
    %v2873 = vsel %vm734, %v2868, %v2872
    %v2874 = vshrl.u32 %v2796, 16
    %v2876 = vor.u32 %v2874, %v2856
    %v2878 = vshll.u32 %v2799, 16
    %v2880 = vrot.slane %v2878, 1
    %v2881 = vsel %vm734, %v2876, %v2880
    %v2882 = vshrl.u32 %v2797, 16
    %v2884 = vor.u32 %v2882, %v2864
    %v2886 = vshll.u32 %v2800, 16
    %v2888 = vrot.slane %v2886, 1
    %v2889 = vsel %vm734, %v2884, %v2888
    %v2890 = vshrl.u32 %v2798, 16
    %v2892 = vor.u32 %v2890, %v2872
    %v2894 = vshll.u32 %v2801, 16
    %v2896 = vrot.slane %v2894, 1
    %v2897 = vsel %vm734, %v2892, %v2896
    %v2898 = vshrl.u32 %v2799, 16
    %v2900 = vor.u32 %v2898, %v2880
    %v2902 = vshll.u32 %v2802, 16
    %v2904 = vrot.slane %v2902, 1
    %v2905 = vsel %vm734, %v2900, %v2904
    %v2906 = vshrl.u32 %v2800, 16
    %v2908 = vor.u32 %v2906, %v2888
    %v2910 = vshll.u32 %v2803, 16
    %v2912 = vrot.slane %v2910, 1
    %v2913 = vsel %vm734, %v2908, %v2912
    %v2914 = vshrl.u32 %v2801, 16
    %v2916 = vor.u32 %v2914, %v2896
    %v2918 = vshll.u32 %v2804, 16
    %v2920 = vrot.slane %v2918, 1
    %v2921 = vsel %vm734, %v2916, %v2920
    %v2922 = vshrl.u32 %v2802, 16
    %v2924 = vor.u32 %v2922, %v2904
    %v2926 = vshll.u32 %v2805, 16
    %v2928 = vrot.slane %v2926, 1
    %v2929 = vsel %vm734, %v2924, %v2928
    %v2930 = vshrl.u32 %v2803, 16
    %v2932 = vor.u32 %v2930, %v2912
    %v2934 = vshll.u32 %v2806, 16
    %v2936 = vrot.slane %v2934, 1
    %v2937 = vsel %vm734, %v2932, %v2936
    %v2938 = vshrl.u32 %v2804, 16
    %v2940 = vor.u32 %v2938, %v2920
    %v2942 = vshll.u32 %v2807, 16
    %v2944 = vrot.slane %v2942, 1
    %v2945 = vsel %vm734, %v2940, %v2944
    %v2946 = vshrl.u32 %v2805, 16
    %v2948 = vor.u32 %v2946, %v2928
    %v2950 = vshll.u32 %v2808, 16
    %v2952 = vrot.slane %v2950, 1
    %v2953 = vsel %vm734, %v2948, %v2952
    %v2954 = vshrl.u32 %v2806, 16
    %v2956 = vor.u32 %v2954, %v2936
    %v2958 = vshll.u32 %v2809, 16
    %v2960 = vrot.slane %v2958, 1
    %v2961 = vsel %vm734, %v2956, %v2960
    %v2962 = vshrl.u32 %v2807, 16
    %v2964 = vor.u32 %v2962, %v2944
    %v2966 = vshll.u32 %v2810, 16
    %v2968 = vrot.slane %v2966, 1
    %v2969 = vsel %vm734, %v2964, %v2968
    %v2970 = vshrl.u32 %v2808, 16
    %v2972 = vor.u32 %v2970, %v2952
    %v2974 = vshll.u32 %v2811, 16
    %v2976 = vrot.slane %v2974, 1
    %v2977 = vsel %vm734, %v2972, %v2976
    %v2978 = vshrl.u32 %v2809, 16
    %v2980 = vor.u32 %v2978, %v2960
    %v2982 = vshll.u32 %v2812, 16
    %v2984 = vrot.slane %v2982, 1
    %v2985 = vsel %vm734, %v2980, %v2984
    %v2986 = vshrl.u32 %v2810, 16
    %v2988 = vor.u32 %v2986, %v2968
    %v2990 = vshll.u32 %v2813, 16
    %v2992 = vrot.slane %v2990, 1
    %v2993 = vsel %vm734, %v2988, %v2992
    %v2994 = vshrl.u32 %v2811, 16
    %v2996 = vor.u32 %v2994, %v2976
    %v2997 = vshrl.u32 %v2812, 16
    %v2999 = vor.u32 %v2997, %v2984
    %v3000 = vshrl.u32 %v2813, 16
    %v3002 = vor.u32 %v3000, %v2992
    %v3057 = vunpack.c.l.b16 %v2672
    %v3058 = vunpack.c.l.b16 %v2673
    %v3059 = vunpack.c.l.b16 %v2674
    %v3060 = vunpack.c.l.b16 %v2675
    %v3061 = vunpack.c.l.b16 %v2676
    %v3062 = vunpack.c.l.b16 %v2677
    %v3063 = vunpack.c.l.b16 %v2678
    %v3064 = vunpack.c.l.b16 %v2679
    %v3065 = vunpack.c.l.b16 %v2680
    %v3066 = vunpack.c.l.b16 %v2681
    %v3067 = vunpack.c.l.b16 %v2682
    %v3068 = vunpack.c.l.b16 %v2683
    %v3069 = vunpack.c.l.b16 %v2684
    %v3070 = vunpack.c.l.b16 %v2685
    %v3071 = vunpack.c.l.b16 %v2686
    %v3072 = vunpack.c.l.b16 %v2687
    %v3073 = vunpack.c.l.b16 %v2688
    %v3074 = vunpack.c.l.b16 %v2689
    %v3075 = vunpack.c.l.b16 %v2690
    %v3076 = vunpack.c.l.b16 %v2691
    %v3077 = vunpack.c.l.b16 %v2692
    %v3078 = vunpack.c.l.b16 %v2693
    %v3079 = vunpack.c.l.b16 %v2694
    %v3080 = vunpack.c.l.b16 %v2695
    %v3081 = vunpack.c.l.b16 %v2696
    %v3082 = vunpack.c.l.b16 %v2697
    %v3083 = vunpack.c.l.b16 %v2698
    %v3084 = vunpack.c.l.b16 %v2699
    %v3085 = vunpack.c.l.b16 %v2700
    %v3086 = vunpack.c.l.b16 %v2701
    %v3087 = vunpack.c.l.b16 %v2702
    %v3088 = vunpack.c.l.b16 %v2703
    %v3089 = vunpack.c.l.b16 %v2704
    %v3090 = vunpack.c.l.b16 %v2705
    %v3091 = vunpack.c.l.b16 %v2706
    %v3092 = vunpack.c.l.b16 %v2707
    %v3093 = vunpack.c.l.b16 %v2708
    %v3094 = vunpack.c.l.b16 %v2709
    %v3095 = vpack.c.b16 %v3058, %v3057
    %v3096 = vpack.c.b16 %v3060, %v3059
    %v3097 = vpack.c.b16 %v3062, %v3061
    %v3098 = vpack.c.b16 %v3064, %v3063
    %v3099 = vpack.c.b16 %v3066, %v3065
    %v3100 = vpack.c.b16 %v3068, %v3067
    %v3101 = vpack.c.b16 %v3070, %v3069
    %v3102 = vpack.c.b16 %v3072, %v3071
    %v3103 = vpack.c.b16 %v3074, %v3073
    %v3104 = vpack.c.b16 %v3076, %v3075
    %v3105 = vpack.c.b16 %v3078, %v3077
    %v3106 = vpack.c.b16 %v3080, %v3079
    %v3107 = vpack.c.b16 %v3082, %v3081
    %v3108 = vpack.c.b16 %v3084, %v3083
    %v3109 = vpack.c.b16 %v3086, %v3085
    %v3110 = vpack.c.b16 %v3088, %v3087
    %v3111 = vpack.c.b16 %v3090, %v3089
    %v3112 = vpack.c.b16 %v3092, %v3091
    %v3113 = vpack.c.b16 %v3094, %v3093
    %v3133 = vsel %vm503, %v2849, 0
    %v3136 = vsel %vm503, %v2873, 0
    %v3139 = vsel %vm503, %v2897, 0
    %v3142 = vsel %vm503, %v2921, 0
    %v3145 = vsel %vm503, %v2945, 0
    %v3148 = vsel %vm503, %v2969, 0
    %v3151 = vsel %vm503, %v2993, 0
    %v3154 = vsel %vm503, %v3002, 0
    %v3157 = vsel %vm528, %v3113, 0
    %3159 = vmatprep.subr.bf16.mxu0 0
    %3160 = vmatpush1.bf16.msra.mxu0 %v3095
    %3161 = vmatprep.subr.bf16.mxu0 0
    %3162 = vmatpush1.bf16.msra.mxu0 %v3096
    %3163 = vmatprep.subr.bf16.mxu0 0
    %3164 = vmatpush1.bf16.msra.mxu0 %v3097
    %3165 = vmatprep.subr.bf16.mxu0 0
    %3166 = vmatpush1.bf16.msra.mxu0 %v3098
    %3167 = vmatprep.subr.bf16.mxu0 0
    %3168 = vmatpush1.bf16.msra.mxu0 %v3099
    %3169 = vmatprep.subr.bf16.mxu0 0
    %3170 = vmatpush1.bf16.msra.mxu0 %v3100
    %3171 = vmatprep.subr.bf16.mxu0 0
    %3172 = vmatpush1.bf16.msra.mxu0 %v3101
    %3173 = vmatprep.subr.bf16.mxu0 0
    %3174 = vmatpush1.bf16.msra.mxu0 %v3102
    %3175 = vmatprep.subr.bf16.mxu0 0
    %3176 = vmatpush1.bf16.msra.mxu0 %v3103
    %3177 = vmatprep.subr.bf16.mxu0 0
    %3178 = vmatpush1.bf16.msra.mxu0 %v3104
    %3179 = vmatprep.subr.bf16.mxu0 0
    %3180 = vmatpush1.bf16.msra.mxu0 %v3105
    %3181 = vmatprep.subr.bf16.mxu0 0
    %3182 = vmatpush1.bf16.msra.mxu0 %v3106
    %3183 = vmatprep.subr.bf16.mxu0 0
    %3184 = vmatpush1.bf16.msra.mxu0 %v3107
    %3185 = vmatprep.subr.bf16.mxu0 0
    %3186 = vmatpush1.bf16.msra.mxu0 %v3108
    %3187 = vmatprep.subr.bf16.mxu0 0
    %3188 = vmatpush1.bf16.msra.mxu0 %v3109
    %3189 = vmatprep.subr.bf16.mxu0 0
    %3190 = vmatpush1.bf16.msra.mxu0 %v3110
    %3191 = vmatprep.mubr.bf16.mxu0 %v2837
    %3192 = vmatmul.mubr.bf16.gmra.mrb[0].mxu0 %v2825
    %v3193 = vpop.f32.mrb[0].mxu0
    %v3194 = vadd.f32 0.0, %v3193
    %v3195 = vpop.f32.mrb[0].mxu0
    %v3196 = vpop.f32.mrb[0].mxu0
    %v3197 = vadd.f32 0.0, %v3196
    %v3198 = vpop.f32.mrb[0].mxu0
    %3199 = vmatprep.mubr.bf16.mxu0 %v2865
    %3200 = vmatmul.mubr.bf16.gmra.mrb[0].mxu0 %v2857
    %v3201 = vpop.f32.mrb[0].mxu0
    %v3202 = vadd.f32 0.0, %v3201
    %v3203 = vpop.f32.mrb[0].mxu0
    %v3204 = vpop.f32.mrb[0].mxu0
    %v3205 = vadd.f32 0.0, %v3204
    %v3206 = vpop.f32.mrb[0].mxu0
    %3207 = vmatprep.mubr.bf16.mxu0 %v2889
    %3208 = vmatmul.mubr.bf16.gmra.mrb[0].mxu0 %v2881
    %v3209 = vpop.f32.mrb[0].mxu0
    %v3210 = vadd.f32 0.0, %v3209
    %v3211 = vpop.f32.mrb[0].mxu0
    %v3212 = vpop.f32.mrb[0].mxu0
    %v3213 = vadd.f32 0.0, %v3212
    %v3214 = vpop.f32.mrb[0].mxu0
    %3215 = vmatprep.mubr.bf16.mxu0 %v2913
    %3216 = vmatmul.mubr.bf16.gmra.mrb[0].mxu0 %v2905
    %v3217 = vpop.f32.mrb[0].mxu0
    %v3218 = vadd.f32 0.0, %v3217
    %v3219 = vpop.f32.mrb[0].mxu0
    %v3220 = vpop.f32.mrb[0].mxu0
    %v3221 = vadd.f32 0.0, %v3220
    %v3222 = vpop.f32.mrb[0].mxu0
    %3223 = vmatprep.mubr.bf16.mxu0 %v2937
    %3224 = vmatmul.mubr.bf16.gmra.mrb[0].mxu0 %v2929
    %v3225 = vpop.f32.mrb[0].mxu0
    %v3226 = vadd.f32 0.0, %v3225
    %v3227 = vpop.f32.mrb[0].mxu0
    %v3228 = vpop.f32.mrb[0].mxu0
    %v3229 = vadd.f32 0.0, %v3228
    %v3230 = vpop.f32.mrb[0].mxu0
    %3231 = vmatprep.mubr.bf16.mxu0 %v2961
    %3232 = vmatmul.mubr.bf16.gmra.mrb[0].mxu0 %v2953
    %v3233 = vpop.f32.mrb[0].mxu0
    %v3234 = vadd.f32 0.0, %v3233
    %v3235 = vpop.f32.mrb[0].mxu0
    %v3236 = vpop.f32.mrb[0].mxu0
    %v3237 = vadd.f32 0.0, %v3236
    %v3238 = vpop.f32.mrb[0].mxu0
    %3239 = vmatprep.mubr.bf16.mxu0 %v2985
    %3240 = vmatmul.mubr.bf16.gmra.mrb[0].mxu0 %v2977
    %v3241 = vpop.f32.mrb[0].mxu0
    %v3242 = vadd.f32 0.0, %v3241
    %v3243 = vpop.f32.mrb[0].mxu0
    %v3244 = vpop.f32.mrb[0].mxu0
    %v3245 = vadd.f32 0.0, %v3244
    %v3246 = vpop.f32.mrb[0].mxu0
    %3247 = vmatprep.mubr.bf16.mxu0 %v2999
    %3248 = vmatmul.mubr.bf16.gmra.mrb[0].mxu0 %v2996
    %v3249 = vpop.f32.mrb[0].mxu0
    %v3250 = vadd.f32 0.0, %v3249
    %v3251 = vpop.f32.mrb[0].mxu0
    %v3252 = vpop.f32.mrb[0].mxu0
    %v3253 = vadd.f32 0.0, %v3252
    %v3254 = vpop.f32.mrb[0].mxu0
    %3255 = vdwg.mxu0
    %3256 = vmatprep.subr.bf16.mxu0 0
    %3257 = vmatpush1.bf16.msra.mxu0 %v3111
    %3258 = vmatprep.subr.bf16.mxu0 0
    %3259 = vmatpush1.bf16.msra.mxu0 %v3112
    %3260 = vmatprep.subr.bf16.mxu0 0
    %3261 = vmatpush1.bf16.msra.mxu0 %v3157
    %3262 = vmatprep.subr.bf16.mxu0 0
    %3263 = vmatpush1.bf16.msra.mxu0 0
    %3264 = vmatprep.subr.bf16.mxu0 0
    %3265 = vmatpush1.bf16.msra.mxu0 0
    %3266 = vmatprep.subr.bf16.mxu0 0
    %3267 = vmatpush1.bf16.msra.mxu0 0
    %3268 = vmatprep.subr.bf16.mxu0 0
    %3269 = vmatpush1.bf16.msra.mxu0 0
    %3270 = vmatprep.subr.bf16.mxu0 0
    %3271 = vmatpush1.bf16.msra.mxu0 0
    %3272 = vmatprep.subr.bf16.mxu0 0
    %3273 = vmatpush1.bf16.msra.mxu0 0
    %3274 = vmatprep.subr.bf16.mxu0 0
    %3275 = vmatpush1.bf16.msra.mxu0 0
    %3276 = vmatprep.subr.bf16.mxu0 0
    %3277 = vmatpush1.bf16.msra.mxu0 0
    %3278 = vmatprep.subr.bf16.mxu0 0
    %3279 = vmatpush1.bf16.msra.mxu0 0
    %3280 = vmatprep.subr.bf16.mxu0 0
    %3281 = vmatpush1.bf16.msra.mxu0 0
    %3282 = vmatprep.subr.bf16.mxu0 0
    %3283 = vmatpush1.bf16.msra.mxu0 0
    %3284 = vmatprep.subr.bf16.mxu0 0
    %3285 = vmatpush1.bf16.msra.mxu0 0
    %3286 = vmatprep.subr.bf16.mxu0 0
    %3287 = vmatpush1.bf16.msra.mxu0 0
    %3288 = vmatprep.mubr.bf16.mxu0 0
    %3289 = vmatmul.mubr.bf16.gmra.mrb[0].mxu0 %v3133
    %v3290 = vpop.f32.mrb[0].mxu0
    %v3291 = vadd.f32 %v3194, %v3290
    %v3292 = vpop.f32.mrb[0].mxu0
    %v3293 = vpop.f32.mrb[0].mxu0
    %v3294 = vadd.f32 %v3197, %v3293
    %v3295 = vpop.f32.mrb[0].mxu0
    %3296 = vmatprep.mubr.bf16.mxu0 0
    %3297 = vmatmul.mubr.bf16.gmra.mrb[0].mxu0 %v3136
    %v3298 = vpop.f32.mrb[0].mxu0
    %v3299 = vadd.f32 %v3202, %v3298
    %v3300 = vpop.f32.mrb[0].mxu0
    %v3301 = vpop.f32.mrb[0].mxu0
    %v3302 = vadd.f32 %v3205, %v3301
    %v3303 = vpop.f32.mrb[0].mxu0
    %3304 = vmatprep.mubr.bf16.mxu0 0
    %3305 = vmatmul.mubr.bf16.gmra.mrb[0].mxu0 %v3139
    %v3306 = vpop.f32.mrb[0].mxu0
    %v3307 = vadd.f32 %v3210, %v3306
    %v3308 = vpop.f32.mrb[0].mxu0
    %v3309 = vpop.f32.mrb[0].mxu0
    %v3310 = vadd.f32 %v3213, %v3309
    %v3311 = vpop.f32.mrb[0].mxu0
    %3312 = vmatprep.mubr.bf16.mxu0 0
    %3313 = vmatmul.mubr.bf16.gmra.mrb[0].mxu0 %v3142
    %v3314 = vpop.f32.mrb[0].mxu0
    %v3315 = vadd.f32 %v3218, %v3314
    %v3316 = vpop.f32.mrb[0].mxu0
    %v3317 = vpop.f32.mrb[0].mxu0
    %v3318 = vadd.f32 %v3221, %v3317
    %v3319 = vpop.f32.mrb[0].mxu0
    %3320 = vmatprep.mubr.bf16.mxu0 0
    %3321 = vmatmul.mubr.bf16.gmra.mrb[0].mxu0 %v3145
    %v3322 = vpop.f32.mrb[0].mxu0
    %v3323 = vadd.f32 %v3226, %v3322
    %v3324 = vpop.f32.mrb[0].mxu0
    %v3325 = vpop.f32.mrb[0].mxu0
    %v3326 = vadd.f32 %v3229, %v3325
    %v3327 = vpop.f32.mrb[0].mxu0
    %3328 = vmatprep.mubr.bf16.mxu0 0
    %3329 = vmatmul.mubr.bf16.gmra.mrb[0].mxu0 %v3148
    %v3330 = vpop.f32.mrb[0].mxu0
    %v3331 = vadd.f32 %v3234, %v3330
    %v3332 = vpop.f32.mrb[0].mxu0
    %v3333 = vpop.f32.mrb[0].mxu0
    %v3334 = vadd.f32 %v3237, %v3333
    %v3335 = vpop.f32.mrb[0].mxu0
    %3336 = vmatprep.mubr.bf16.mxu0 0
    %3337 = vmatmul.mubr.bf16.gmra.mrb[0].mxu0 %v3151
    %v3338 = vpop.f32.mrb[0].mxu0
    %v3339 = vadd.f32 %v3242, %v3338
    %v3340 = vpop.f32.mrb[0].mxu0
    %v3341 = vpop.f32.mrb[0].mxu0
    %v3342 = vadd.f32 %v3245, %v3341
    %v3343 = vpop.f32.mrb[0].mxu0
    %3344 = vmatprep.mubr.bf16.mxu0 0
    %3345 = vmatmul.mubr.bf16.gmra.mrb[0].mxu0 %v3154
    %v3346 = vpop.f32.mrb[0].mxu0
    %v3347 = vadd.f32 %v3250, %v3346
    %v3348 = vpop.f32.mrb[0].mxu0
    %v3349 = vpop.f32.mrb[0].mxu0
    %v3350 = vadd.f32 %v3253, %v3349
    %v3351 = vpop.f32.mrb[0].mxu0
    %3352 = vdwg.mxu0
    %v3407 = vunpack.c.l.b16 %v2633
    %v3408 = vunpack.c.l.b16 %v2634
    %v3409 = vunpack.c.l.b16 %v2635
    %v3410 = vunpack.c.l.b16 %v2636
    %v3411 = vunpack.c.l.b16 %v2637
    %v3412 = vunpack.c.l.b16 %v2638
    %v3413 = vunpack.c.l.b16 %v2639
    %v3414 = vunpack.c.l.b16 %v2640
    %v3415 = vunpack.c.l.b16 %v2641
    %v3416 = vunpack.c.l.b16 %v2642
    %v3417 = vunpack.c.l.b16 %v2643
    %v3418 = vunpack.c.l.b16 %v2644
    %v3419 = vunpack.c.l.b16 %v2645
    %v3420 = vunpack.c.l.b16 %v2646
    %v3421 = vunpack.c.l.b16 %v2647
    %v3422 = vunpack.c.l.b16 %v2648
    %v3423 = vunpack.c.l.b16 %v2649
    %v3424 = vunpack.c.l.b16 %v2650
    %v3425 = vunpack.c.l.b16 %v2651
    %v3426 = vunpack.c.l.b16 %v2652
    %v3427 = vunpack.c.l.b16 %v2653
    %v3428 = vunpack.c.l.b16 %v2654
    %v3429 = vunpack.c.l.b16 %v2655
    %v3430 = vunpack.c.l.b16 %v2656
    %v3431 = vunpack.c.l.b16 %v2657
    %v3432 = vunpack.c.l.b16 %v2658
    %v3433 = vunpack.c.l.b16 %v2659
    %v3434 = vunpack.c.l.b16 %v2660
    %v3435 = vunpack.c.l.b16 %v2661
    %v3436 = vunpack.c.l.b16 %v2662
    %v3437 = vunpack.c.l.b16 %v2663
    %v3438 = vunpack.c.l.b16 %v2664
    %v3439 = vunpack.c.l.b16 %v2665
    %v3440 = vunpack.c.l.b16 %v2666
    %v3441 = vunpack.c.l.b16 %v2667
    %v3442 = vunpack.c.l.b16 %v2668
    %v3443 = vunpack.c.l.b16 %v2669
    %v3444 = vunpack.c.l.b16 %v2670
    %v3445 = vpack.c.b16 %v3408, %v3407
    %v3446 = vpack.c.b16 %v3410, %v3409
    %v3447 = vpack.c.b16 %v3412, %v3411
    %v3448 = vpack.c.b16 %v3414, %v3413
    %v3449 = vpack.c.b16 %v3416, %v3415
    %v3450 = vpack.c.b16 %v3418, %v3417
    %v3451 = vpack.c.b16 %v3420, %v3419
    %v3452 = vpack.c.b16 %v3422, %v3421
    %v3453 = vpack.c.b16 %v3424, %v3423
    %v3454 = vpack.c.b16 %v3426, %v3425
    %v3455 = vpack.c.b16 %v3428, %v3427
    %v3456 = vpack.c.b16 %v3430, %v3429
    %v3457 = vpack.c.b16 %v3432, %v3431
    %v3458 = vpack.c.b16 %v3434, %v3433
    %v3459 = vpack.c.b16 %v3436, %v3435
    %v3460 = vpack.c.b16 %v3438, %v3437
    %v3461 = vpack.c.b16 %v3440, %v3439
    %v3462 = vpack.c.b16 %v3442, %v3441
    %v3463 = vpack.c.b16 %v3444, %v3443
    %v3482 = vsel %vm503, %v2792, 0
    %v3484 = vsel %vm503, %v2795, 0
    %v3486 = vsel %vm503, %v2798, 0
    %v3488 = vsel %vm503, %v2801, 0
    %v3490 = vsel %vm503, %v2804, 0
    %v3492 = vsel %vm503, %v2807, 0
    %v3494 = vsel %vm503, %v2810, 0
    %v3496 = vsel %vm503, %v2813, 0
    %v3499 = vsel %vm528, %v3463, 0
    %3501 = vmatprep.subr.bf16.mxu0 0
    %3502 = vmatpush1.bf16.msra.mxu0 %v3445
    %3503 = vmatprep.subr.bf16.mxu0 0
    %3504 = vmatpush1.bf16.msra.mxu0 %v3446
    %3505 = vmatprep.subr.bf16.mxu0 0
    %3506 = vmatpush1.bf16.msra.mxu0 %v3447
    %3507 = vmatprep.subr.bf16.mxu0 0
    %3508 = vmatpush1.bf16.msra.mxu0 %v3448
    %3509 = vmatprep.subr.bf16.mxu0 0
    %3510 = vmatpush1.bf16.msra.mxu0 %v3449
    %3511 = vmatprep.subr.bf16.mxu0 0
    %3512 = vmatpush1.bf16.msra.mxu0 %v3450
    %3513 = vmatprep.subr.bf16.mxu0 0
    %3514 = vmatpush1.bf16.msra.mxu0 %v3451
    %3515 = vmatprep.subr.bf16.mxu0 0
    %3516 = vmatpush1.bf16.msra.mxu0 %v3452
    %3517 = vmatprep.subr.bf16.mxu0 0
    %3518 = vmatpush1.bf16.msra.mxu0 %v3453
    %3519 = vmatprep.subr.bf16.mxu0 0
    %3520 = vmatpush1.bf16.msra.mxu0 %v3454
    %3521 = vmatprep.subr.bf16.mxu0 0
    %3522 = vmatpush1.bf16.msra.mxu0 %v3455
    %3523 = vmatprep.subr.bf16.mxu0 0
    %3524 = vmatpush1.bf16.msra.mxu0 %v3456
    %3525 = vmatprep.subr.bf16.mxu0 0
    %3526 = vmatpush1.bf16.msra.mxu0 %v3457
    %3527 = vmatprep.subr.bf16.mxu0 0
    %3528 = vmatpush1.bf16.msra.mxu0 %v3458
    %3529 = vmatprep.subr.bf16.mxu0 0
    %3530 = vmatpush1.bf16.msra.mxu0 %v3459
    %3531 = vmatprep.subr.bf16.mxu0 0
    %3532 = vmatpush1.bf16.msra.mxu0 %v3460
    %3533 = vmatprep.mubr.bf16.mxu0 %v2791
    %3534 = vmatmul.mubr.bf16.gmra.mrb[0].mxu0 %v2790
    %v3535 = vpop.f32.mrb[0].mxu0
    %v3536 = vadd.f32 %v3291, %v3535
    %v3537 = vpop.f32.mrb[0].mxu0
    %v3538 = vpop.f32.mrb[0].mxu0
    %v3539 = vadd.f32 %v3294, %v3538
    %v3540 = vpop.f32.mrb[0].mxu0
    %3541 = vmatprep.mubr.bf16.mxu0 %v2794
    %3542 = vmatmul.mubr.bf16.gmra.mrb[0].mxu0 %v2793
    %v3543 = vpop.f32.mrb[0].mxu0
    %v3544 = vadd.f32 %v3299, %v3543
    %v3545 = vpop.f32.mrb[0].mxu0
    %v3546 = vpop.f32.mrb[0].mxu0
    %v3547 = vadd.f32 %v3302, %v3546
    %v3548 = vpop.f32.mrb[0].mxu0
    %3549 = vmatprep.mubr.bf16.mxu0 %v2797
    %3550 = vmatmul.mubr.bf16.gmra.mrb[0].mxu0 %v2796
    %v3551 = vpop.f32.mrb[0].mxu0
    %v3552 = vadd.f32 %v3307, %v3551
    %v3553 = vpop.f32.mrb[0].mxu0
    %v3554 = vpop.f32.mrb[0].mxu0
    %v3555 = vadd.f32 %v3310, %v3554
    %v3556 = vpop.f32.mrb[0].mxu0
    %3557 = vmatprep.mubr.bf16.mxu0 %v2800
    %3558 = vmatmul.mubr.bf16.gmra.mrb[0].mxu0 %v2799
    %v3559 = vpop.f32.mrb[0].mxu0
    %v3560 = vadd.f32 %v3315, %v3559
    %v3561 = vpop.f32.mrb[0].mxu0
    %v3562 = vpop.f32.mrb[0].mxu0
    %v3563 = vadd.f32 %v3318, %v3562
    %v3564 = vpop.f32.mrb[0].mxu0
    %3565 = vmatprep.mubr.bf16.mxu0 %v2803
    %3566 = vmatmul.mubr.bf16.gmra.mrb[0].mxu0 %v2802
    %v3567 = vpop.f32.mrb[0].mxu0
    %v3568 = vadd.f32 %v3323, %v3567
    %v3569 = vpop.f32.mrb[0].mxu0
    %v3570 = vpop.f32.mrb[0].mxu0
    %v3571 = vadd.f32 %v3326, %v3570
    %v3572 = vpop.f32.mrb[0].mxu0
    %3573 = vmatprep.mubr.bf16.mxu0 %v2806
    %3574 = vmatmul.mubr.bf16.gmra.mrb[0].mxu0 %v2805
    %v3575 = vpop.f32.mrb[0].mxu0
    %v3576 = vadd.f32 %v3331, %v3575
    %v3577 = vpop.f32.mrb[0].mxu0
    %v3578 = vpop.f32.mrb[0].mxu0
    %v3579 = vadd.f32 %v3334, %v3578
    %v3580 = vpop.f32.mrb[0].mxu0
    %3581 = vmatprep.mubr.bf16.mxu0 %v2809
    %3582 = vmatmul.mubr.bf16.gmra.mrb[0].mxu0 %v2808
    %v3583 = vpop.f32.mrb[0].mxu0
    %v3584 = vadd.f32 %v3339, %v3583
    %v3585 = vpop.f32.mrb[0].mxu0
    %v3586 = vpop.f32.mrb[0].mxu0
    %v3587 = vadd.f32 %v3342, %v3586
    %v3588 = vpop.f32.mrb[0].mxu0
    %3589 = vmatprep.mubr.bf16.mxu0 %v2812
    %3590 = vmatmul.mubr.bf16.gmra.mrb[0].mxu0 %v2811
    %v3591 = vpop.f32.mrb[0].mxu0
    %v3592 = vadd.f32 %v3347, %v3591
    %v3593 = vpop.f32.mrb[0].mxu0
    %v3594 = vpop.f32.mrb[0].mxu0
    %v3595 = vadd.f32 %v3350, %v3594
    %v3596 = vpop.f32.mrb[0].mxu0
    %3597 = vdwg.mxu0
    %3598 = vmatprep.subr.bf16.mxu0 0
    %3599 = vmatpush1.bf16.msra.mxu0 %v3461
    %3600 = vmatprep.subr.bf16.mxu0 0
    %3601 = vmatpush1.bf16.msra.mxu0 %v3462
    %3602 = vmatprep.subr.bf16.mxu0 0
    %3603 = vmatpush1.bf16.msra.mxu0 %v3499
    %3604 = vmatprep.subr.bf16.mxu0 0
    %3605 = vmatpush1.bf16.msra.mxu0 0
    %3606 = vmatprep.subr.bf16.mxu0 0
    %3607 = vmatpush1.bf16.msra.mxu0 0
    %3608 = vmatprep.subr.bf16.mxu0 0
    %3609 = vmatpush1.bf16.msra.mxu0 0
    %3610 = vmatprep.subr.bf16.mxu0 0
    %3611 = vmatpush1.bf16.msra.mxu0 0
    %3612 = vmatprep.subr.bf16.mxu0 0
    %3613 = vmatpush1.bf16.msra.mxu0 0
    %3614 = vmatprep.subr.bf16.mxu0 0
    %3615 = vmatpush1.bf16.msra.mxu0 0
    %3616 = vmatprep.subr.bf16.mxu0 0
    %3617 = vmatpush1.bf16.msra.mxu0 0
    %3618 = vmatprep.subr.bf16.mxu0 0
    %3619 = vmatpush1.bf16.msra.mxu0 0
    %3620 = vmatprep.subr.bf16.mxu0 0
    %3621 = vmatpush1.bf16.msra.mxu0 0
    %3622 = vmatprep.subr.bf16.mxu0 0
    %3623 = vmatpush1.bf16.msra.mxu0 0
    %3624 = vmatprep.subr.bf16.mxu0 0
    %3625 = vmatpush1.bf16.msra.mxu0 0
    %3626 = vmatprep.subr.bf16.mxu0 0
    %3627 = vmatpush1.bf16.msra.mxu0 0
    %3628 = vmatprep.subr.bf16.mxu0 0
    %3629 = vmatpush1.bf16.msra.mxu0 0
    %3630 = vmatprep.mubr.bf16.mxu0 0
    %3631 = vmatmul.mubr.bf16.gmra.mrb[0].mxu0 %v3482
    %v3632 = vpop.f32.mrb[0].mxu0
    %v3633 = vadd.f32 %v3536, %v3632
    %v3634 = vpop.f32.mrb[0].mxu0
    %v3635 = vpop.f32.mrb[0].mxu0
    %v3636 = vadd.f32 %v3539, %v3635
    %v3637 = vpop.f32.mrb[0].mxu0
    %3638 = vmatprep.mubr.bf16.mxu0 0
    %3639 = vmatmul.mubr.bf16.gmra.mrb[0].mxu0 %v3484
    %v3640 = vpop.f32.mrb[0].mxu0
    %v3641 = vadd.f32 %v3544, %v3640
    %v3642 = vpop.f32.mrb[0].mxu0
    %v3643 = vpop.f32.mrb[0].mxu0
    %v3644 = vadd.f32 %v3547, %v3643
    %v3645 = vpop.f32.mrb[0].mxu0
    %3646 = vmatprep.mubr.bf16.mxu0 0
    %3647 = vmatmul.mubr.bf16.gmra.mrb[0].mxu0 %v3486
    %v3648 = vpop.f32.mrb[0].mxu0
    %v3649 = vadd.f32 %v3552, %v3648
    %v3650 = vpop.f32.mrb[0].mxu0
    %v3651 = vpop.f32.mrb[0].mxu0
    %v3652 = vadd.f32 %v3555, %v3651
    %v3653 = vpop.f32.mrb[0].mxu0
    %3654 = vmatprep.mubr.bf16.mxu0 0
    %3655 = vmatmul.mubr.bf16.gmra.mrb[0].mxu0 %v3488
    %v3656 = vpop.f32.mrb[0].mxu0
    %v3657 = vadd.f32 %v3560, %v3656
    %v3658 = vpop.f32.mrb[0].mxu0
    %v3659 = vpop.f32.mrb[0].mxu0
    %v3660 = vadd.f32 %v3563, %v3659
    %v3661 = vpop.f32.mrb[0].mxu0
    %3662 = vmatprep.mubr.bf16.mxu0 0
    %3663 = vmatmul.mubr.bf16.gmra.mrb[0].mxu0 %v3490
    %v3664 = vpop.f32.mrb[0].mxu0
    %v3665 = vadd.f32 %v3568, %v3664
    %v3666 = vpop.f32.mrb[0].mxu0
    %v3667 = vpop.f32.mrb[0].mxu0
    %v3668 = vadd.f32 %v3571, %v3667
    %v3669 = vpop.f32.mrb[0].mxu0
    %3670 = vmatprep.mubr.bf16.mxu0 0
    %3671 = vmatmul.mubr.bf16.gmra.mrb[0].mxu0 %v3492
    %v3672 = vpop.f32.mrb[0].mxu0
    %v3673 = vadd.f32 %v3576, %v3672
    %v3674 = vpop.f32.mrb[0].mxu0
    %v3675 = vpop.f32.mrb[0].mxu0
    %v3676 = vadd.f32 %v3579, %v3675
    %v3677 = vpop.f32.mrb[0].mxu0
    %3678 = vmatprep.mubr.bf16.mxu0 0
    %3679 = vmatmul.mubr.bf16.gmra.mrb[0].mxu0 %v3494
    %v3680 = vpop.f32.mrb[0].mxu0
    %v3681 = vadd.f32 %v3584, %v3680
    %v3682 = vpop.f32.mrb[0].mxu0
    %v3683 = vpop.f32.mrb[0].mxu0
    %v3684 = vadd.f32 %v3587, %v3683
    %v3685 = vpop.f32.mrb[0].mxu0
    %3686 = vmatprep.mubr.bf16.mxu0 0
    %3687 = vmatmul.mubr.bf16.gmra.mrb[0].mxu0 %v3496
    %v3688 = vpop.f32.mrb[0].mxu0
    %v3689 = vadd.f32 %v3592, %v3688
    %v3690 = vpop.f32.mrb[0].mxu0
    %v3691 = vpop.f32.mrb[0].mxu0
    %v3692 = vadd.f32 %v3595, %v3691
    %v3693 = vpop.f32.mrb[0].mxu0
    %3694 = vdwg.mxu0
    %v3695 = vld [vmem:[%s0] sm:$0xee]
    %v3696 = vld [vmem:[%s0 + $0x8] sm:$0xe]
    %v3697 = vld [vmem:[%s0 + $0xb4] sm:$0xff]
    %v3698 = vld [vmem:[%s0 + $0xbc] sm:$0xf]
    %s3699 = scalar_lea.vmem [#allocation5], 304
    %v3700 = vld [vmem:[%s3699] sm:$0xf]
    %v3701 = vld [vmem:[%s3699 + $0x4] sm:$0xf]
    %v3702 = vld [vmem:[%s3699 + $0x8] sm:$0xf]
    %v3703 = vld [vmem:[%s3699 + $0xc] sm:$0xf]
    %v3704 = vld [vmem:[%s3699 + $0x10] sm:$0xf]
    %v3705 = vld [vmem:[%s3699 + $0x14] sm:$0xf]
    %v3706 = vld [vmem:[%s3699 + $0x18] sm:$0xf]
    %v3707 = vld [vmem:[%s3699 + $0x1c] sm:$0xf]
    %v3708 = vld [vmem:[%s3699 + $0x20] sm:$0xf]
    %v3709 = vld [vmem:[%s3699 + $0x24] sm:$0xf]
    %v3710 = vld [vmem:[%s3699 + $0x28] sm:$0xf]
    %v3711 = vld [vmem:[%s3699 + $0x2c] sm:$0xf]
    %v3712 = vld [vmem:[%s3699 + $0x30] sm:$0xf]
    %v3713 = vld [vmem:[%s3699 + $0x34] sm:$0xf]
    %v3714 = vld [vmem:[%s3699 + $0x38] sm:$0xf]
    %v3715 = vld [vmem:[%s3699 + $0x3c] sm:$0xf]
    %v3716 = vld [vmem:[%s3699 + $0x40] sm:$0xf]
    %v3717 = vld [vmem:[%s3699 + $0x44] sm:$0xf]
    %v3718 = vld [vmem:[%s3699 + $0x48] sm:$0xf]
    %v3719 = vld [vmem:[%s3699 + $0x4c] sm:$0xf]
    %v3720 = vld [vmem:[%s3699 + $0x50] sm:$0xf]
    %v3721 = vld [vmem:[%s3699 + $0x54] sm:$0xf]
    %v3722 = vld [vmem:[%s3699 + $0x58] sm:$0xf]
    %v3723 = vld [vmem:[%s3699 + $0x5c] sm:$0xf]
    %v3724 = vld [vmem:[%s3699 + $0x60] sm:$0xf]
    %v3725 = vld [vmem:[%s3699 + $0x64] sm:$0xf]
    %v3726 = vld [vmem:[%s3699 + $0x68] sm:$0xf]
    %v3727 = vld [vmem:[%s3699 + $0x6c] sm:$0xf]
    %v3728 = vld [vmem:[%s3699 + $0x70] sm:$0xf]
    %v3729 = vld [vmem:[%s3699 + $0x74] sm:$0xf]
    %v3730 = vld [vmem:[%s3699 + $0x78] sm:$0xf]
    %v3731 = vld [vmem:[%s3699 + $0x7c] sm:$0xf]
    %v3732 = vld [vmem:[%s3699 + $0x80] sm:$0xf]
    %v3733 = vld [vmem:[%s3699 + $0x84] sm:$0xf]
    %v3734 = vld [vmem:[%s3699 + $0x88] sm:$0xf]
    %v3735 = vld [vmem:[%s3699 + $0x8c] sm:$0xf]
    %v3736 = vld [vmem:[%s3699 + $0x90] sm:$0xf]
    %v3737 = vld [vmem:[%s3699 + $0x94] sm:$0x3]
    %v3742 = vunpack.c.l.b16 %v3695
    %v3743 = vunpack.c.h.b16 %v3695
    %v3744 = vunpack.c.l.b16 %v3696
    %v3745 = vunpack.c.l.b16 %v3697
    %v3746 = vunpack.c.h.b16 %v3697
    %v3747 = vunpack.c.l.b16 %v3698
    %v3748 = vpack.c.b16 %v2745, %v3742
    %v3749 = vpack.c.b16 %v2746, %v3743
    %v3750 = vpack.c.b16 %v2747, %v3744
    %v3751 = vpack.c.b16 %v3745, %v2784
    %v3752 = vpack.c.b16 %v3746, %v2785
    %v3753 = vpack.c.b16 %v3747, %v2786
    %v3754 = vrot.slane %v3748, 1
    %v3755 = vrot.slane %v2793, 1
    %v3756 = vsel %vm328, %v3754, %v3755
    %v3757 = vrot.slane %v3749, 1
    %v3758 = vrot.slane %v2794, 1
    %v3759 = vsel %vm328, %v3757, %v3758
    %v3760 = vrot.slane %v3750, 1
    %v3761 = vrot.slane %v2795, 1
    %v3762 = vsel %vm328, %v3760, %v3761
    %v3763 = vrot.slane %v2796, 1
    %v3764 = vsel %vm328, %v3755, %v3763
    %v3765 = vrot.slane %v2797, 1
    %v3766 = vsel %vm328, %v3758, %v3765
    %v3767 = vrot.slane %v2798, 1
    %v3768 = vsel %vm328, %v3761, %v3767
    %v3769 = vrot.slane %v2799, 1
    %v3770 = vsel %vm328, %v3763, %v3769
    %v3771 = vrot.slane %v2800, 1
    %v3772 = vsel %vm328, %v3765, %v3771
    %v3773 = vrot.slane %v2801, 1
    %v3774 = vsel %vm328, %v3767, %v3773
    %v3775 = vrot.slane %v2802, 1
    %v3776 = vsel %vm328, %v3769, %v3775
    %v3777 = vrot.slane %v2803, 1
    %v3778 = vsel %vm328, %v3771, %v3777
    %v3779 = vrot.slane %v2804, 1
    %v3780 = vsel %vm328, %v3773, %v3779
    %v3781 = vrot.slane %v2805, 1
    %v3782 = vsel %vm328, %v3775, %v3781
    %v3783 = vrot.slane %v2806, 1
    %v3784 = vsel %vm328, %v3777, %v3783
    %v3785 = vrot.slane %v2807, 1
    %v3786 = vsel %vm328, %v3779, %v3785
    %v3787 = vrot.slane %v2808, 1
    %v3788 = vsel %vm328, %v3781, %v3787
    %v3789 = vrot.slane %v2809, 1
    %v3790 = vsel %vm328, %v3783, %v3789
    %v3791 = vrot.slane %v2810, 1
    %v3792 = vsel %vm328, %v3785, %v3791
    %v3793 = vrot.slane %v3751, 1
    %v3794 = vsel %vm328, %v3787, %v3793
    %v3795 = vrot.slane %v3752, 1
    %v3796 = vsel %vm328, %v3789, %v3795
    %v3797 = vrot.slane %v3753, 1
    %v3798 = vsel %vm328, %v3791, %v3797
    %v3853 = vunpack.c.l.b16 %v3700
    %v3854 = vunpack.c.l.b16 %v3701
    %v3855 = vunpack.c.l.b16 %v3702
    %v3856 = vunpack.c.l.b16 %v3703
    %v3857 = vunpack.c.l.b16 %v3704
    %v3858 = vunpack.c.l.b16 %v3705
    %v3859 = vunpack.c.l.b16 %v3706
    %v3860 = vunpack.c.l.b16 %v3707
    %v3861 = vunpack.c.l.b16 %v3708
    %v3862 = vunpack.c.l.b16 %v3709
    %v3863 = vunpack.c.l.b16 %v3710
    %v3864 = vunpack.c.l.b16 %v3711
    %v3865 = vunpack.c.l.b16 %v3712
    %v3866 = vunpack.c.l.b16 %v3713
    %v3867 = vunpack.c.l.b16 %v3714
    %v3868 = vunpack.c.l.b16 %v3715
    %v3869 = vunpack.c.l.b16 %v3716
    %v3870 = vunpack.c.l.b16 %v3717
    %v3871 = vunpack.c.l.b16 %v3718
    %v3872 = vunpack.c.l.b16 %v3719
    %v3873 = vunpack.c.l.b16 %v3720
    %v3874 = vunpack.c.l.b16 %v3721
    %v3875 = vunpack.c.l.b16 %v3722
    %v3876 = vunpack.c.l.b16 %v3723
    %v3877 = vunpack.c.l.b16 %v3724
    %v3878 = vunpack.c.l.b16 %v3725
    %v3879 = vunpack.c.l.b16 %v3726
    %v3880 = vunpack.c.l.b16 %v3727
    %v3881 = vunpack.c.l.b16 %v3728
    %v3882 = vunpack.c.l.b16 %v3729
    %v3883 = vunpack.c.l.b16 %v3730
    %v3884 = vunpack.c.l.b16 %v3731
    %v3885 = vunpack.c.l.b16 %v3732
    %v3886 = vunpack.c.l.b16 %v3733
    %v3887 = vunpack.c.l.b16 %v3734
    %v3888 = vunpack.c.l.b16 %v3735
    %v3889 = vunpack.c.l.b16 %v3736
    %v3890 = vunpack.c.l.b16 %v3737
    %v3891 = vpack.c.b16 %v3854, %v3853
    %v3892 = vpack.c.b16 %v3856, %v3855
    %v3893 = vpack.c.b16 %v3858, %v3857
    %v3894 = vpack.c.b16 %v3860, %v3859
    %v3895 = vpack.c.b16 %v3862, %v3861
    %v3896 = vpack.c.b16 %v3864, %v3863
    %v3897 = vpack.c.b16 %v3866, %v3865
    %v3898 = vpack.c.b16 %v3868, %v3867
    %v3899 = vpack.c.b16 %v3870, %v3869
    %v3900 = vpack.c.b16 %v3872, %v3871
    %v3901 = vpack.c.b16 %v3874, %v3873
    %v3902 = vpack.c.b16 %v3876, %v3875
    %v3903 = vpack.c.b16 %v3878, %v3877
    %v3904 = vpack.c.b16 %v3880, %v3879
    %v3905 = vpack.c.b16 %v3882, %v3881
    %v3906 = vpack.c.b16 %v3884, %v3883
    %v3907 = vpack.c.b16 %v3886, %v3885
    %v3908 = vpack.c.b16 %v3888, %v3887
    %v3909 = vpack.c.b16 %v3890, %v3889
    %v3929 = vsel %vm503, %v3762, 0
    %v3932 = vsel %vm503, %v3768, 0
    %v3935 = vsel %vm503, %v3774, 0
    %v3938 = vsel %vm503, %v3780, 0
    %v3941 = vsel %vm503, %v3786, 0
    %v3944 = vsel %vm503, %v3792, 0
    %v3947 = vsel %vm503, %v3798, 0
    %v3950 = vsel %vm503, %v3797, 0
    %v3953 = vsel %vm528, %v3909, 0
    %3955 = vmatprep.subr.bf16.mxu0 0
    %3956 = vmatpush1.bf16.msra.mxu0 %v3891
    %3957 = vmatprep.subr.bf16.mxu0 0
    %3958 = vmatpush1.bf16.msra.mxu0 %v3892
    %3959 = vmatprep.subr.bf16.mxu0 0
    %3960 = vmatpush1.bf16.msra.mxu0 %v3893
    %3961 = vmatprep.subr.bf16.mxu0 0
    %3962 = vmatpush1.bf16.msra.mxu0 %v3894
    %3963 = vmatprep.subr.bf16.mxu0 0
    %3964 = vmatpush1.bf16.msra.mxu0 %v3895
    %3965 = vmatprep.subr.bf16.mxu0 0
    %3966 = vmatpush1.bf16.msra.mxu0 %v3896
    %3967 = vmatprep.subr.bf16.mxu0 0
    %3968 = vmatpush1.bf16.msra.mxu0 %v3897
    %3969 = vmatprep.subr.bf16.mxu0 0
    %3970 = vmatpush1.bf16.msra.mxu0 %v3898
    %3971 = vmatprep.subr.bf16.mxu0 0
    %3972 = vmatpush1.bf16.msra.mxu0 %v3899
    %3973 = vmatprep.subr.bf16.mxu0 0
    %3974 = vmatpush1.bf16.msra.mxu0 %v3900
    %3975 = vmatprep.subr.bf16.mxu0 0
    %3976 = vmatpush1.bf16.msra.mxu0 %v3901
    %3977 = vmatprep.subr.bf16.mxu0 0
    %3978 = vmatpush1.bf16.msra.mxu0 %v3902
    %3979 = vmatprep.subr.bf16.mxu0 0
    %3980 = vmatpush1.bf16.msra.mxu0 %v3903
    %3981 = vmatprep.subr.bf16.mxu0 0
    %3982 = vmatpush1.bf16.msra.mxu0 %v3904
    %3983 = vmatprep.subr.bf16.mxu0 0
    %3984 = vmatpush1.bf16.msra.mxu0 %v3905
    %3985 = vmatprep.subr.bf16.mxu0 0
    %3986 = vmatpush1.bf16.msra.mxu0 %v3906
    %3987 = vmatprep.mubr.bf16.mxu0 %v3759
    %3988 = vmatmul.mubr.bf16.gmra.mrb[0].mxu0 %v3756
    %v3989 = vpop.f32.mrb[0].mxu0
    %v3990 = vadd.f32 0.0, %v3989
    %v3991 = vpop.f32.mrb[0].mxu0
    %v3992 = vpop.f32.mrb[0].mxu0
    %v3993 = vadd.f32 0.0, %v3992
    %v3994 = vpop.f32.mrb[0].mxu0
    %3995 = vmatprep.mubr.bf16.mxu0 %v3766
    %3996 = vmatmul.mubr.bf16.gmra.mrb[0].mxu0 %v3764
    %v3997 = vpop.f32.mrb[0].mxu0
    %v3998 = vadd.f32 0.0, %v3997
    %v3999 = vpop.f32.mrb[0].mxu0
    %v4000 = vpop.f32.mrb[0].mxu0
    %v4001 = vadd.f32 0.0, %v4000
    %v4002 = vpop.f32.mrb[0].mxu0
    %4003 = vmatprep.mubr.bf16.mxu0 %v3772
    %4004 = vmatmul.mubr.bf16.gmra.mrb[0].mxu0 %v3770
    %v4005 = vpop.f32.mrb[0].mxu0
    %v4006 = vadd.f32 0.0, %v4005
    %v4007 = vpop.f32.mrb[0].mxu0
    %v4008 = vpop.f32.mrb[0].mxu0
    %v4009 = vadd.f32 0.0, %v4008
    %v4010 = vpop.f32.mrb[0].mxu0
    %4011 = vmatprep.mubr.bf16.mxu0 %v3778
    %4012 = vmatmul.mubr.bf16.gmra.mrb[0].mxu0 %v3776
    %v4013 = vpop.f32.mrb[0].mxu0
    %v4014 = vadd.f32 0.0, %v4013
    %v4015 = vpop.f32.mrb[0].mxu0
    %v4016 = vpop.f32.mrb[0].mxu0
    %v4017 = vadd.f32 0.0, %v4016
    %v4018 = vpop.f32.mrb[0].mxu0
    %4019 = vmatprep.mubr.bf16.mxu0 %v3784
    %4020 = vmatmul.mubr.bf16.gmra.mrb[0].mxu0 %v3782
    %v4021 = vpop.f32.mrb[0].mxu0
    %v4022 = vadd.f32 0.0, %v4021
    %v4023 = vpop.f32.mrb[0].mxu0
    %v4024 = vpop.f32.mrb[0].mxu0
    %v4025 = vadd.f32 0.0, %v4024
    %v4026 = vpop.f32.mrb[0].mxu0
    %4027 = vmatprep.mubr.bf16.mxu0 %v3790
    %4028 = vmatmul.mubr.bf16.gmra.mrb[0].mxu0 %v3788
    %v4029 = vpop.f32.mrb[0].mxu0
    %v4030 = vadd.f32 0.0, %v4029
    %v4031 = vpop.f32.mrb[0].mxu0
    %v4032 = vpop.f32.mrb[0].mxu0
    %v4033 = vadd.f32 0.0, %v4032
    %v4034 = vpop.f32.mrb[0].mxu0
    %4035 = vmatprep.mubr.bf16.mxu0 %v3796
    %4036 = vmatmul.mubr.bf16.gmra.mrb[0].mxu0 %v3794
    %v4037 = vpop.f32.mrb[0].mxu0
    %v4038 = vadd.f32 0.0, %v4037
    %v4039 = vpop.f32.mrb[0].mxu0
    %v4040 = vpop.f32.mrb[0].mxu0
    %v4041 = vadd.f32 0.0, %v4040
    %v4042 = vpop.f32.mrb[0].mxu0
    %4043 = vmatprep.mubr.bf16.mxu0 %v3795
    %4044 = vmatmul.mubr.bf16.gmra.mrb[0].mxu0 %v3793
    %v4045 = vpop.f32.mrb[0].mxu0
    %v4046 = vadd.f32 0.0, %v4045
    %v4047 = vpop.f32.mrb[0].mxu0
    %v4048 = vpop.f32.mrb[0].mxu0
    %v4049 = vadd.f32 0.0, %v4048
    %v4050 = vpop.f32.mrb[0].mxu0
    %4051 = vdwg.mxu0
    %4052 = vmatprep.subr.bf16.mxu0 0
    %4053 = vmatpush1.bf16.msra.mxu0 %v3907
    %4054 = vmatprep.subr.bf16.mxu0 0
    %4055 = vmatpush1.bf16.msra.mxu0 %v3908
    %4056 = vmatprep.subr.bf16.mxu0 0
    %4057 = vmatpush1.bf16.msra.mxu0 %v3953
    %4058 = vmatprep.subr.bf16.mxu0 0
    %4059 = vmatpush1.bf16.msra.mxu0 0
    %4060 = vmatprep.subr.bf16.mxu0 0
    %4061 = vmatpush1.bf16.msra.mxu0 0
    %4062 = vmatprep.subr.bf16.mxu0 0
    %4063 = vmatpush1.bf16.msra.mxu0 0
    %4064 = vmatprep.subr.bf16.mxu0 0
    %4065 = vmatpush1.bf16.msra.mxu0 0
    %4066 = vmatprep.subr.bf16.mxu0 0
    %4067 = vmatpush1.bf16.msra.mxu0 0
    %4068 = vmatprep.subr.bf16.mxu0 0
    %4069 = vmatpush1.bf16.msra.mxu0 0
    %4070 = vmatprep.subr.bf16.mxu0 0
    %4071 = vmatpush1.bf16.msra.mxu0 0
    %4072 = vmatprep.subr.bf16.mxu0 0
    %4073 = vmatpush1.bf16.msra.mxu0 0
    %4074 = vmatprep.subr.bf16.mxu0 0
    %4075 = vmatpush1.bf16.msra.mxu0 0
    %4076 = vmatprep.subr.bf16.mxu0 0
    %4077 = vmatpush1.bf16.msra.mxu0 0
    %4078 = vmatprep.subr.bf16.mxu0 0
    %4079 = vmatpush1.bf16.msra.mxu0 0
    %4080 = vmatprep.subr.bf16.mxu0 0
    %4081 = vmatpush1.bf16.msra.mxu0 0
    %4082 = vmatprep.subr.bf16.mxu0 0
    %4083 = vmatpush1.bf16.msra.mxu0 0
    %4084 = vmatprep.mubr.bf16.mxu0 0
    %4085 = vmatmul.mubr.bf16.gmra.mrb[0].mxu0 %v3929
    %v4086 = vpop.f32.mrb[0].mxu0
    %v4087 = vadd.f32 %v3990, %v4086
    %v4088 = vpop.f32.mrb[0].mxu0
    %v4089 = vpop.f32.mrb[0].mxu0
    %v4090 = vadd.f32 %v3993, %v4089
    %v4091 = vpop.f32.mrb[0].mxu0
    %4092 = vmatprep.mubr.bf16.mxu0 0
    %4093 = vmatmul.mubr.bf16.gmra.mrb[0].mxu0 %v3932
    %v4094 = vpop.f32.mrb[0].mxu0
    %v4095 = vadd.f32 %v3998, %v4094
    %v4096 = vpop.f32.mrb[0].mxu0
    %v4097 = vpop.f32.mrb[0].mxu0
    %v4098 = vadd.f32 %v4001, %v4097
    %v4099 = vpop.f32.mrb[0].mxu0
    %4100 = vmatprep.mubr.bf16.mxu0 0
    %4101 = vmatmul.mubr.bf16.gmra.mrb[0].mxu0 %v3935
    %v4102 = vpop.f32.mrb[0].mxu0
    %v4103 = vadd.f32 %v4006, %v4102
    %v4104 = vpop.f32.mrb[0].mxu0
    %v4105 = vpop.f32.mrb[0].mxu0
    %v4106 = vadd.f32 %v4009, %v4105
    %v4107 = vpop.f32.mrb[0].mxu0
    %4108 = vmatprep.mubr.bf16.mxu0 0
    %4109 = vmatmul.mubr.bf16.gmra.mrb[0].mxu0 %v3938
    %v4110 = vpop.f32.mrb[0].mxu0
    %v4111 = vadd.f32 %v4014, %v4110
    %v4112 = vpop.f32.mrb[0].mxu0
    %v4113 = vpop.f32.mrb[0].mxu0
    %v4114 = vadd.f32 %v4017, %v4113
    %v4115 = vpop.f32.mrb[0].mxu0
    %4116 = vmatprep.mubr.bf16.mxu0 0
    %4117 = vmatmul.mubr.bf16.gmra.mrb[0].mxu0 %v3941
    %v4118 = vpop.f32.mrb[0].mxu0
    %v4119 = vadd.f32 %v4022, %v4118
    %v4120 = vpop.f32.mrb[0].mxu0
    %v4121 = vpop.f32.mrb[0].mxu0
    %v4122 = vadd.f32 %v4025, %v4121
    %v4123 = vpop.f32.mrb[0].mxu0
    %4124 = vmatprep.mubr.bf16.mxu0 0
    %4125 = vmatmul.mubr.bf16.gmra.mrb[0].mxu0 %v3944
    %v4126 = vpop.f32.mrb[0].mxu0
    %v4127 = vadd.f32 %v4030, %v4126
    %v4128 = vpop.f32.mrb[0].mxu0
    %v4129 = vpop.f32.mrb[0].mxu0
    %v4130 = vadd.f32 %v4033, %v4129
    %v4131 = vpop.f32.mrb[0].mxu0
    %4132 = vmatprep.mubr.bf16.mxu0 0
    %4133 = vmatmul.mubr.bf16.gmra.mrb[0].mxu0 %v3947
    %v4134 = vpop.f32.mrb[0].mxu0
    %v4135 = vadd.f32 %v4038, %v4134
    %v4136 = vpop.f32.mrb[0].mxu0
    %v4137 = vpop.f32.mrb[0].mxu0
    %v4138 = vadd.f32 %v4041, %v4137
    %v4139 = vpop.f32.mrb[0].mxu0
    %4140 = vmatprep.mubr.bf16.mxu0 0
    %4141 = vmatmul.mubr.bf16.gmra.mrb[0].mxu0 %v3950
    %v4142 = vpop.f32.mrb[0].mxu0
    %v4143 = vadd.f32 %v4046, %v4142
    %v4144 = vpop.f32.mrb[0].mxu0
    %v4145 = vpop.f32.mrb[0].mxu0
    %v4146 = vadd.f32 %v4049, %v4145
    %v4147 = vpop.f32.mrb[0].mxu0
    %4148 = vdwg.mxu0
    %v4149 = vadd.f32 %v3633, %v4087
    %v4150 = vadd.f32 %v3636, %v4090
    %v4151 = vadd.f32 %v3641, %v4095
    %v4152 = vadd.f32 %v3644, %v4098
    %v4153 = vadd.f32 %v3649, %v4103
    %v4154 = vadd.f32 %v3652, %v4106
    %v4155 = vadd.f32 %v3657, %v4111
    %v4156 = vadd.f32 %v3660, %v4114
    %v4157 = vadd.f32 %v3665, %v4119
    %v4158 = vadd.f32 %v3668, %v4122
    %v4159 = vadd.f32 %v3673, %v4127
    %v4160 = vadd.f32 %v3676, %v4130
    %v4161 = vadd.f32 %v3681, %v4135
    %v4162 = vadd.f32 %v3684, %v4138
    %v4163 = vadd.f32 %v3689, %v4143
    %v4164 = vadd.f32 %v3692, %v4146
    %s4165 = scalar_lea.vmem [#allocation5], 456
    %v4166 = vld [vmem:[%s4165] sm:$0xf]
    %v4167 = vld [vmem:[%s4165 + $0x4] sm:$0xf]
    %v4168 = vld [vmem:[%s4165 + $0x8] sm:$0xf]
    %v4169 = vld [vmem:[%s4165 + $0xc] sm:$0xf]
    %v4170 = vld [vmem:[%s4165 + $0x10] sm:$0xf]
    %v4171 = vld [vmem:[%s4165 + $0x14] sm:$0xf]
    %v4172 = vld [vmem:[%s4165 + $0x18] sm:$0xf]
    %v4173 = vld [vmem:[%s4165 + $0x1c] sm:$0xf]
    %v4174 = vld [vmem:[%s4165 + $0x20] sm:$0xf]
    %v4175 = vld [vmem:[%s4165 + $0x24] sm:$0xf]
    %v4176 = vld [vmem:[%s4165 + $0x28] sm:$0xf]
    %v4177 = vld [vmem:[%s4165 + $0x2c] sm:$0xf]
    %v4178 = vld [vmem:[%s4165 + $0x30] sm:$0xf]
    %v4179 = vld [vmem:[%s4165 + $0x34] sm:$0xf]
    %v4180 = vld [vmem:[%s4165 + $0x38] sm:$0xf]
    %v4181 = vld [vmem:[%s4165 + $0x3c] sm:$0xf]
    %v4182 = vld [vmem:[%s4165 + $0x40] sm:$0xf]
    %v4183 = vld [vmem:[%s4165 + $0x44] sm:$0xf]
    %v4184 = vld [vmem:[%s4165 + $0x48] sm:$0xf]
    %v4185 = vld [vmem:[%s4165 + $0x4c] sm:$0xf]
    %v4186 = vld [vmem:[%s4165 + $0x50] sm:$0xf]
    %v4187 = vld [vmem:[%s4165 + $0x54] sm:$0xf]
    %v4188 = vld [vmem:[%s4165 + $0x58] sm:$0xf]
    %v4189 = vld [vmem:[%s4165 + $0x5c] sm:$0xf]
    %v4190 = vld [vmem:[%s4165 + $0x60] sm:$0xf]
    %v4191 = vld [vmem:[%s4165 + $0x64] sm:$0xf]
    %v4192 = vld [vmem:[%s4165 + $0x68] sm:$0xf]
    %v4193 = vld [vmem:[%s4165 + $0x6c] sm:$0xf]
    %v4194 = vld [vmem:[%s4165 + $0x70] sm:$0xf]
    %v4195 = vld [vmem:[%s4165 + $0x74] sm:$0xf]
    %v4196 = vld [vmem:[%s4165 + $0x78] sm:$0xf]
    %v4197 = vld [vmem:[%s4165 + $0x7c] sm:$0xf]
    %v4198 = vld [vmem:[%s4165 + $0x80] sm:$0xf]
    %v4199 = vld [vmem:[%s4165 + $0x84] sm:$0xf]
    %v4200 = vld [vmem:[%s4165 + $0x88] sm:$0xf]
    %v4201 = vld [vmem:[%s4165 + $0x8c] sm:$0xf]
    %v4202 = vld [vmem:[%s4165 + $0x90] sm:$0xf]
    %v4203 = vld [vmem:[%s4165 + $0x94] sm:$0x3]
    %v4205 = vshrl.u32 %v3748, 16
    %v4207 = vrot.slane %v4205, 1
    %v4208 = vshll.u32 %v3748, 16
    %v4210 = vrot.slane %v4208, 2
    %v4211 = vor.u32 %v4207, %v4210
    %v4212 = vrot.slane %v2850, 1
    %v4213 = vrot.slane %v2822, 2
    %v4214 = vor.u32 %v4212, %v4213
    %v4215 = vsel %vm1323, %v4211, %v4214
    %v4217 = vshrl.u32 %v3749, 16
    %v4219 = vrot.slane %v4217, 1
    %v4220 = vshll.u32 %v3749, 16
    %v4222 = vrot.slane %v4220, 2
    %v4223 = vor.u32 %v4219, %v4222
    %v4224 = vrot.slane %v2858, 1
    %v4225 = vrot.slane %v2834, 2
    %v4226 = vor.u32 %v4224, %v4225
    %v4227 = vsel %vm1323, %v4223, %v4226
    %v4229 = vshrl.u32 %v3750, 16
    %v4231 = vrot.slane %v4229, 1
    %v4232 = vshll.u32 %v3750, 16
    %v4234 = vrot.slane %v4232, 2
    %v4235 = vor.u32 %v4231, %v4234
    %v4236 = vrot.slane %v2866, 1
    %v4237 = vrot.slane %v2846, 2
    %v4238 = vor.u32 %v4236, %v4237
    %v4239 = vsel %vm1323, %v4235, %v4238
    %v4240 = vrot.slane %v2874, 1
    %v4241 = vrot.slane %v2854, 2
    %v4242 = vor.u32 %v4240, %v4241
    %v4243 = vsel %vm1323, %v4214, %v4242
    %v4244 = vrot.slane %v2882, 1
    %v4245 = vrot.slane %v2862, 2
    %v4246 = vor.u32 %v4244, %v4245
    %v4247 = vsel %vm1323, %v4226, %v4246
    %v4248 = vrot.slane %v2890, 1
    %v4249 = vrot.slane %v2870, 2
    %v4250 = vor.u32 %v4248, %v4249
    %v4251 = vsel %vm1323, %v4238, %v4250
    %v4252 = vrot.slane %v2898, 1
    %v4253 = vrot.slane %v2878, 2
    %v4254 = vor.u32 %v4252, %v4253
    %v4255 = vsel %vm1323, %v4242, %v4254
    %v4256 = vrot.slane %v2906, 1
    %v4257 = vrot.slane %v2886, 2
    %v4258 = vor.u32 %v4256, %v4257
    %v4259 = vsel %vm1323, %v4246, %v4258
    %v4260 = vrot.slane %v2914, 1
    %v4261 = vrot.slane %v2894, 2
    %v4262 = vor.u32 %v4260, %v4261
    %v4263 = vsel %vm1323, %v4250, %v4262
    %v4264 = vrot.slane %v2922, 1
    %v4265 = vrot.slane %v2902, 2
    %v4266 = vor.u32 %v4264, %v4265
    %v4267 = vsel %vm1323, %v4254, %v4266
    %v4268 = vrot.slane %v2930, 1
    %v4269 = vrot.slane %v2910, 2
    %v4270 = vor.u32 %v4268, %v4269
    %v4271 = vsel %vm1323, %v4258, %v4270
    %v4272 = vrot.slane %v2938, 1
    %v4273 = vrot.slane %v2918, 2
    %v4274 = vor.u32 %v4272, %v4273
    %v4275 = vsel %vm1323, %v4262, %v4274
    %v4276 = vrot.slane %v2946, 1
    %v4277 = vrot.slane %v2926, 2
    %v4278 = vor.u32 %v4276, %v4277
    %v4279 = vsel %vm1323, %v4266, %v4278
    %v4280 = vrot.slane %v2954, 1
    %v4281 = vrot.slane %v2934, 2
    %v4282 = vor.u32 %v4280, %v4281
    %v4283 = vsel %vm1323, %v4270, %v4282
    %v4284 = vrot.slane %v2962, 1
    %v4285 = vrot.slane %v2942, 2
    %v4286 = vor.u32 %v4284, %v4285
    %v4287 = vsel %vm1323, %v4274, %v4286
    %v4288 = vrot.slane %v2970, 1
    %v4289 = vrot.slane %v2950, 2
    %v4290 = vor.u32 %v4288, %v4289
    %v4291 = vsel %vm1323, %v4278, %v4290
    %v4292 = vrot.slane %v2978, 1
    %v4293 = vrot.slane %v2958, 2
    %v4294 = vor.u32 %v4292, %v4293
    %v4295 = vsel %vm1323, %v4282, %v4294
    %v4296 = vrot.slane %v2986, 1
    %v4297 = vrot.slane %v2966, 2
    %v4298 = vor.u32 %v4296, %v4297
    %v4299 = vsel %vm1323, %v4286, %v4298
    %v4301 = vshrl.u32 %v3751, 16
    %v4303 = vrot.slane %v4301, 1
    %v4304 = vshll.u32 %v3751, 16
    %v4306 = vrot.slane %v4304, 2
    %v4307 = vor.u32 %v4303, %v4306
    %v4308 = vsel %vm1323, %v4290, %v4307
    %v4310 = vshrl.u32 %v3752, 16
    %v4312 = vrot.slane %v4310, 1
    %v4313 = vshll.u32 %v3752, 16
    %v4315 = vrot.slane %v4313, 2
    %v4316 = vor.u32 %v4312, %v4315
    %v4317 = vsel %vm1323, %v4294, %v4316
    %v4319 = vshrl.u32 %v3753, 16
    %v4321 = vrot.slane %v4319, 1
    %v4322 = vshll.u32 %v3753, 16
    %v4324 = vrot.slane %v4322, 2
    %v4325 = vor.u32 %v4321, %v4324
    %v4326 = vsel %vm1323, %v4298, %v4325
    %v4381 = vunpack.c.l.b16 %v4166
    %v4382 = vunpack.c.l.b16 %v4167
    %v4383 = vunpack.c.l.b16 %v4168
    %v4384 = vunpack.c.l.b16 %v4169
    %v4385 = vunpack.c.l.b16 %v4170
    %v4386 = vunpack.c.l.b16 %v4171
    %v4387 = vunpack.c.l.b16 %v4172
    %v4388 = vunpack.c.l.b16 %v4173
    %v4389 = vunpack.c.l.b16 %v4174
    %v4390 = vunpack.c.l.b16 %v4175
    %v4391 = vunpack.c.l.b16 %v4176
    %v4392 = vunpack.c.l.b16 %v4177
    %v4393 = vunpack.c.l.b16 %v4178
    %v4394 = vunpack.c.l.b16 %v4179
    %v4395 = vunpack.c.l.b16 %v4180
    %v4396 = vunpack.c.l.b16 %v4181
    %v4397 = vunpack.c.l.b16 %v4182
    %v4398 = vunpack.c.l.b16 %v4183
    %v4399 = vunpack.c.l.b16 %v4184
    %v4400 = vunpack.c.l.b16 %v4185
    %v4401 = vunpack.c.l.b16 %v4186
    %v4402 = vunpack.c.l.b16 %v4187
    %v4403 = vunpack.c.l.b16 %v4188
    %v4404 = vunpack.c.l.b16 %v4189
    %v4405 = vunpack.c.l.b16 %v4190
    %v4406 = vunpack.c.l.b16 %v4191
    %v4407 = vunpack.c.l.b16 %v4192
    %v4408 = vunpack.c.l.b16 %v4193
    %v4409 = vunpack.c.l.b16 %v4194
    %v4410 = vunpack.c.l.b16 %v4195
    %v4411 = vunpack.c.l.b16 %v4196
    %v4412 = vunpack.c.l.b16 %v4197
    %v4413 = vunpack.c.l.b16 %v4198
    %v4414 = vunpack.c.l.b16 %v4199
    %v4415 = vunpack.c.l.b16 %v4200
    %v4416 = vunpack.c.l.b16 %v4201
    %v4417 = vunpack.c.l.b16 %v4202
    %v4418 = vunpack.c.l.b16 %v4203
    %v4419 = vpack.c.b16 %v4382, %v4381
    %v4420 = vpack.c.b16 %v4384, %v4383
    %v4421 = vpack.c.b16 %v4386, %v4385
    %v4422 = vpack.c.b16 %v4388, %v4387
    %v4423 = vpack.c.b16 %v4390, %v4389
    %v4424 = vpack.c.b16 %v4392, %v4391
    %v4425 = vpack.c.b16 %v4394, %v4393
    %v4426 = vpack.c.b16 %v4396, %v4395
    %v4427 = vpack.c.b16 %v4398, %v4397
    %v4428 = vpack.c.b16 %v4400, %v4399
    %v4429 = vpack.c.b16 %v4402, %v4401
    %v4430 = vpack.c.b16 %v4404, %v4403
    %v4431 = vpack.c.b16 %v4406, %v4405
    %v4432 = vpack.c.b16 %v4408, %v4407
    %v4433 = vpack.c.b16 %v4410, %v4409
    %v4434 = vpack.c.b16 %v4412, %v4411
    %v4435 = vpack.c.b16 %v4414, %v4413
    %v4436 = vpack.c.b16 %v4416, %v4415
    %v4437 = vpack.c.b16 %v4418, %v4417
    %v4457 = vsel %vm503, %v4239, 0
    %v4460 = vsel %vm503, %v4251, 0
    %v4463 = vsel %vm503, %v4263, 0
    %v4466 = vsel %vm503, %v4275, 0
    %v4469 = vsel %vm503, %v4287, 0
    %v4472 = vsel %vm503, %v4299, 0
    %v4475 = vsel %vm503, %v4326, 0
    %v4478 = vsel %vm503, %v4325, 0
    %v4481 = vsel %vm528, %v4437, 0
    %4483 = vmatprep.subr.bf16.mxu0 0
    %4484 = vmatpush1.bf16.msra.mxu0 %v4419
    %4485 = vmatprep.subr.bf16.mxu0 0
    %4486 = vmatpush1.bf16.msra.mxu0 %v4420
    %4487 = vmatprep.subr.bf16.mxu0 0
    %4488 = vmatpush1.bf16.msra.mxu0 %v4421
    %4489 = vmatprep.subr.bf16.mxu0 0
    %4490 = vmatpush1.bf16.msra.mxu0 %v4422
    %4491 = vmatprep.subr.bf16.mxu0 0
    %4492 = vmatpush1.bf16.msra.mxu0 %v4423
    %4493 = vmatprep.subr.bf16.mxu0 0
    %4494 = vmatpush1.bf16.msra.mxu0 %v4424
    %4495 = vmatprep.subr.bf16.mxu0 0
    %4496 = vmatpush1.bf16.msra.mxu0 %v4425
    %4497 = vmatprep.subr.bf16.mxu0 0
    %4498 = vmatpush1.bf16.msra.mxu0 %v4426
    %4499 = vmatprep.subr.bf16.mxu0 0
    %4500 = vmatpush1.bf16.msra.mxu0 %v4427
    %4501 = vmatprep.subr.bf16.mxu0 0
    %4502 = vmatpush1.bf16.msra.mxu0 %v4428
    %4503 = vmatprep.subr.bf16.mxu0 0
    %4504 = vmatpush1.bf16.msra.mxu0 %v4429
    %4505 = vmatprep.subr.bf16.mxu0 0
    %4506 = vmatpush1.bf16.msra.mxu0 %v4430
    %4507 = vmatprep.subr.bf16.mxu0 0
    %4508 = vmatpush1.bf16.msra.mxu0 %v4431
    %4509 = vmatprep.subr.bf16.mxu0 0
    %4510 = vmatpush1.bf16.msra.mxu0 %v4432
    %4511 = vmatprep.subr.bf16.mxu0 0
    %4512 = vmatpush1.bf16.msra.mxu0 %v4433
    %4513 = vmatprep.subr.bf16.mxu0 0
    %4514 = vmatpush1.bf16.msra.mxu0 %v4434
    %4515 = vmatprep.mubr.bf16.mxu0 %v4227
    %4516 = vmatmul.mubr.bf16.gmra.mrb[0].mxu0 %v4215
    %v4517 = vpop.f32.mrb[0].mxu0
    %v4518 = vadd.f32 0.0, %v4517
    %v4519 = vpop.f32.mrb[0].mxu0
    %v4520 = vpop.f32.mrb[0].mxu0
    %v4521 = vadd.f32 0.0, %v4520
    %v4522 = vpop.f32.mrb[0].mxu0
    %4523 = vmatprep.mubr.bf16.mxu0 %v4247
    %4524 = vmatmul.mubr.bf16.gmra.mrb[0].mxu0 %v4243
    %v4525 = vpop.f32.mrb[0].mxu0
    %v4526 = vadd.f32 0.0, %v4525
    %v4527 = vpop.f32.mrb[0].mxu0
    %v4528 = vpop.f32.mrb[0].mxu0
    %v4529 = vadd.f32 0.0, %v4528
    %v4530 = vpop.f32.mrb[0].mxu0
    %4531 = vmatprep.mubr.bf16.mxu0 %v4259
    %4532 = vmatmul.mubr.bf16.gmra.mrb[0].mxu0 %v4255
    %v4533 = vpop.f32.mrb[0].mxu0
    %v4534 = vadd.f32 0.0, %v4533
    %v4535 = vpop.f32.mrb[0].mxu0
    %v4536 = vpop.f32.mrb[0].mxu0
    %v4537 = vadd.f32 0.0, %v4536
    %v4538 = vpop.f32.mrb[0].mxu0
    %4539 = vmatprep.mubr.bf16.mxu0 %v4271
    %4540 = vmatmul.mubr.bf16.gmra.mrb[0].mxu0 %v4267
    %v4541 = vpop.f32.mrb[0].mxu0
    %v4542 = vadd.f32 0.0, %v4541
    %v4543 = vpop.f32.mrb[0].mxu0
    %v4544 = vpop.f32.mrb[0].mxu0
    %v4545 = vadd.f32 0.0, %v4544
    %v4546 = vpop.f32.mrb[0].mxu0
    %4547 = vmatprep.mubr.bf16.mxu0 %v4283
    %4548 = vmatmul.mubr.bf16.gmra.mrb[0].mxu0 %v4279
    %v4549 = vpop.f32.mrb[0].mxu0
    %v4550 = vadd.f32 0.0, %v4549
    %v4551 = vpop.f32.mrb[0].mxu0
    %v4552 = vpop.f32.mrb[0].mxu0
    %v4553 = vadd.f32 0.0, %v4552
    %v4554 = vpop.f32.mrb[0].mxu0
    %4555 = vmatprep.mubr.bf16.mxu0 %v4295
    %4556 = vmatmul.mubr.bf16.gmra.mrb[0].mxu0 %v4291
    %v4557 = vpop.f32.mrb[0].mxu0
    %v4558 = vadd.f32 0.0, %v4557
    %v4559 = vpop.f32.mrb[0].mxu0
    %v4560 = vpop.f32.mrb[0].mxu0
    %v4561 = vadd.f32 0.0, %v4560
    %v4562 = vpop.f32.mrb[0].mxu0
    %4563 = vmatprep.mubr.bf16.mxu0 %v4317
    %4564 = vmatmul.mubr.bf16.gmra.mrb[0].mxu0 %v4308
    %v4565 = vpop.f32.mrb[0].mxu0
    %v4566 = vadd.f32 0.0, %v4565
    %v4567 = vpop.f32.mrb[0].mxu0
    %v4568 = vpop.f32.mrb[0].mxu0
    %v4569 = vadd.f32 0.0, %v4568
    %v4570 = vpop.f32.mrb[0].mxu0
    %4571 = vmatprep.mubr.bf16.mxu0 %v4316
    %4572 = vmatmul.mubr.bf16.gmra.mrb[0].mxu0 %v4307
    %v4573 = vpop.f32.mrb[0].mxu0
    %v4574 = vadd.f32 0.0, %v4573
    %v4575 = vpop.f32.mrb[0].mxu0
    %v4576 = vpop.f32.mrb[0].mxu0
    %v4577 = vadd.f32 0.0, %v4576
    %v4578 = vpop.f32.mrb[0].mxu0
    %4579 = vdwg.mxu0
    %4580 = vmatprep.subr.bf16.mxu0 0
    %4581 = vmatpush1.bf16.msra.mxu0 %v4435
    %4582 = vmatprep.subr.bf16.mxu0 0
    %4583 = vmatpush1.bf16.msra.mxu0 %v4436
    %4584 = vmatprep.subr.bf16.mxu0 0
    %4585 = vmatpush1.bf16.msra.mxu0 %v4481
    %4586 = vmatprep.subr.bf16.mxu0 0
    %4587 = vmatpush1.bf16.msra.mxu0 0
    %4588 = vmatprep.subr.bf16.mxu0 0
    %4589 = vmatpush1.bf16.msra.mxu0 0
    %4590 = vmatprep.subr.bf16.mxu0 0
    %4591 = vmatpush1.bf16.msra.mxu0 0
    %4592 = vmatprep.subr.bf16.mxu0 0
    %4593 = vmatpush1.bf16.msra.mxu0 0
    %4594 = vmatprep.subr.bf16.mxu0 0
    %4595 = vmatpush1.bf16.msra.mxu0 0
    %4596 = vmatprep.subr.bf16.mxu0 0
    %4597 = vmatpush1.bf16.msra.mxu0 0
    %4598 = vmatprep.subr.bf16.mxu0 0
    %4599 = vmatpush1.bf16.msra.mxu0 0
    %4600 = vmatprep.subr.bf16.mxu0 0
    %4601 = vmatpush1.bf16.msra.mxu0 0
    %4602 = vmatprep.subr.bf16.mxu0 0
    %4603 = vmatpush1.bf16.msra.mxu0 0
    %4604 = vmatprep.subr.bf16.mxu0 0
    %4605 = vmatpush1.bf16.msra.mxu0 0
    %4606 = vmatprep.subr.bf16.mxu0 0
    %4607 = vmatpush1.bf16.msra.mxu0 0
    %4608 = vmatprep.subr.bf16.mxu0 0
    %4609 = vmatpush1.bf16.msra.mxu0 0
    %4610 = vmatprep.subr.bf16.mxu0 0
    %4611 = vmatpush1.bf16.msra.mxu0 0
    %4612 = vmatprep.mubr.bf16.mxu0 0
    %4613 = vmatmul.mubr.bf16.gmra.mrb[0].mxu0 %v4457
    %v4614 = vpop.f32.mrb[0].mxu0
    %v4615 = vadd.f32 %v4518, %v4614
    %v4616 = vpop.f32.mrb[0].mxu0
    %v4617 = vpop.f32.mrb[0].mxu0
    %v4618 = vadd.f32 %v4521, %v4617
    %v4619 = vpop.f32.mrb[0].mxu0
    %4620 = vmatprep.mubr.bf16.mxu0 0
    %4621 = vmatmul.mubr.bf16.gmra.mrb[0].mxu0 %v4460
    %v4622 = vpop.f32.mrb[0].mxu0
    %v4623 = vadd.f32 %v4526, %v4622
    %v4624 = vpop.f32.mrb[0].mxu0
    %v4625 = vpop.f32.mrb[0].mxu0
    %v4626 = vadd.f32 %v4529, %v4625
    %v4627 = vpop.f32.mrb[0].mxu0
    %4628 = vmatprep.mubr.bf16.mxu0 0
    %4629 = vmatmul.mubr.bf16.gmra.mrb[0].mxu0 %v4463
    %v4630 = vpop.f32.mrb[0].mxu0
    %v4631 = vadd.f32 %v4534, %v4630
    %v4632 = vpop.f32.mrb[0].mxu0
    %v4633 = vpop.f32.mrb[0].mxu0
    %v4634 = vadd.f32 %v4537, %v4633
    %v4635 = vpop.f32.mrb[0].mxu0
    %4636 = vmatprep.mubr.bf16.mxu0 0
    %4637 = vmatmul.mubr.bf16.gmra.mrb[0].mxu0 %v4466
    %v4638 = vpop.f32.mrb[0].mxu0
    %v4639 = vadd.f32 %v4542, %v4638
    %v4640 = vpop.f32.mrb[0].mxu0
    %v4641 = vpop.f32.mrb[0].mxu0
    %v4642 = vadd.f32 %v4545, %v4641
    %v4643 = vpop.f32.mrb[0].mxu0
    %4644 = vmatprep.mubr.bf16.mxu0 0
    %4645 = vmatmul.mubr.bf16.gmra.mrb[0].mxu0 %v4469
    %v4646 = vpop.f32.mrb[0].mxu0
    %v4647 = vadd.f32 %v4550, %v4646
    %v4648 = vpop.f32.mrb[0].mxu0
    %v4649 = vpop.f32.mrb[0].mxu0
    %v4650 = vadd.f32 %v4553, %v4649
    %v4651 = vpop.f32.mrb[0].mxu0
    %4652 = vmatprep.mubr.bf16.mxu0 0
    %4653 = vmatmul.mubr.bf16.gmra.mrb[0].mxu0 %v4472
    %v4654 = vpop.f32.mrb[0].mxu0
    %v4655 = vadd.f32 %v4558, %v4654
    %v4656 = vpop.f32.mrb[0].mxu0
    %v4657 = vpop.f32.mrb[0].mxu0
    %v4658 = vadd.f32 %v4561, %v4657
    %v4659 = vpop.f32.mrb[0].mxu0
    %4660 = vmatprep.mubr.bf16.mxu0 0
    %4661 = vmatmul.mubr.bf16.gmra.mrb[0].mxu0 %v4475
    %v4662 = vpop.f32.mrb[0].mxu0
    %v4663 = vadd.f32 %v4566, %v4662
    %v4664 = vpop.f32.mrb[0].mxu0
    %v4665 = vpop.f32.mrb[0].mxu0
    %v4666 = vadd.f32 %v4569, %v4665
    %v4667 = vpop.f32.mrb[0].mxu0
    %4668 = vmatprep.mubr.bf16.mxu0 0
    %4669 = vmatmul.mubr.bf16.gmra.mrb[0].mxu0 %v4478
    %v4670 = vpop.f32.mrb[0].mxu0
    %v4671 = vadd.f32 %v4574, %v4670
    %v4672 = vpop.f32.mrb[0].mxu0
    %v4673 = vpop.f32.mrb[0].mxu0
    %v4674 = vadd.f32 %v4577, %v4673
    %v4675 = vpop.f32.mrb[0].mxu0
    %4676 = vdwg.mxu0
    %v4677 = vadd.f32 %v4149, %v4615
    %v4678 = vadd.f32 %v4150, %v4618
    %v4679 = vadd.f32 %v4151, %v4623
    %v4680 = vadd.f32 %v4152, %v4626
    %v4681 = vadd.f32 %v4153, %v4631
    %v4682 = vadd.f32 %v4154, %v4634
    %v4683 = vadd.f32 %v4155, %v4639
    %v4684 = vadd.f32 %v4156, %v4642
    %v4685 = vadd.f32 %v4157, %v4647
    %v4686 = vadd.f32 %v4158, %v4650
    %v4687 = vadd.f32 %v4159, %v4655
    %v4688 = vadd.f32 %v4160, %v4658
    %v4689 = vadd.f32 %v4161, %v4663
    %v4690 = vadd.f32 %v4162, %v4666
    %v4691 = vadd.f32 %v4163, %v4671
    %v4692 = vadd.f32 %v4164, %v4674
    %v4693 = vld [vmem:[%s4] sm:$0x1]
    %v4695 = vlaneseq
    %v4696 = vshrl.u32 %v4695, 7
    %v4697 = vsub.s32 0, %v4696
    %v4698 = vrot.slane %v4693, %v4697
    %v4700 = vadd.f32 %v4677, %v4698
    %v4701 = vadd.f32 %v4678, %v4698
    %v4702 = vadd.f32 %v4679, %v4698
    %v4703 = vadd.f32 %v4680, %v4698
    %v4704 = vadd.f32 %v4681, %v4698
    %v4705 = vadd.f32 %v4682, %v4698
    %v4706 = vadd.f32 %v4683, %v4698
    %v4707 = vadd.f32 %v4684, %v4698
    %v4708 = vadd.f32 %v4685, %v4698
    %v4709 = vadd.f32 %v4686, %v4698
    %v4710 = vadd.f32 %v4687, %v4698
    %v4711 = vadd.f32 %v4688, %v4698
    %v4712 = vadd.f32 %v4689, %v4698
    %v4713 = vadd.f32 %v4690, %v4698
    %v4714 = vadd.f32 %v4691, %v4698
    %v4715 = vadd.f32 %v4692, %v4698
    %v4716 = vmax.f32 %v4700, 0.0
    %v4717 = vmax.f32 %v4701, 0.0
    %v4718 = vmax.f32 %v4702, 0.0
    %v4719 = vmax.f32 %v4703, 0.0
    %v4720 = vmax.f32 %v4704, 0.0
    %v4721 = vmax.f32 %v4705, 0.0
    %v4722 = vmax.f32 %v4706, 0.0
    %v4723 = vmax.f32 %v4707, 0.0
    %v4724 = vmax.f32 %v4708, 0.0
    %v4725 = vmax.f32 %v4709, 0.0
    %v4726 = vmax.f32 %v4710, 0.0
    %v4727 = vmax.f32 %v4711, 0.0
    %v4728 = vmax.f32 %v4712, 0.0
    %v4729 = vmax.f32 %v4713, 0.0
    %v4730 = vmax.f32 %v4714, 0.0
    %v4731 = vmax.f32 %v4715, 0.0
    %4732 = vst.msk [vmem:[#allocation2] sm:$0xff] %vm1852, 0.0
    %4733 = vst.msk [vmem:[#allocation2 + $0x8] sm:$0xff] %vm1852, 0.0
    %4734 = vst.msk [vmem:[#allocation2 + $0x10] sm:$0xff] %vm1852, 0.0
    %4735 = vst.msk [vmem:[#allocation2 + $0x18] sm:$0xff] %vm1852, 0.0
    %4736 = vst.msk [vmem:[#allocation2 + $0x20] sm:$0xff] %vm1852, 0.0
    %4737 = vst.msk [vmem:[#allocation2 + $0x28] sm:$0xff] %vm1852, 0.0
    %4738 = vst.msk [vmem:[#allocation2 + $0x30] sm:$0xff] %vm1852, 0.0
    %v4739 = vsel %vm1859, %v4716, -inf
    %v4740 = vrot.slane %v4739, 4
    %v4741 = vmax.f32 %v4739, %v4740
    %v4742 = vrot.slane %v4741, 2
    %v4743 = vmax.f32 %v4741, %v4742
    %v4744 = vrot.slane %v4743, 1
    %v4745 = vmax.f32 %v4743, %v4744
    %4746 = vst.msk [vmem:[#allocation2 + $0x1] sm:$0x1] %vm1867, %v4745
    %v4747 = vsel %vm1869, %v4716, -inf
    %v4748 = vrot.slane %v4747, 4
    %v4749 = vmax.f32 %v4747, %v4748
    %v4750 = vrot.slane %v4749, 2
    %v4751 = vmax.f32 %v4749, %v4750
    %v4752 = vrot.slane %v4751, 1
    %v4753 = vmax.f32 %v4751, %v4752
    %4754 = vst.msk [vmem:[#allocation2 + $0x2] sm:$0x1] %vm1867, %v4753
    %v4755 = vsel %vm1878, %v4716, -inf
    %v4756 = vrot.slane %v4755, 4
    %v4757 = vmax.f32 %v4755, %v4756
    %v4758 = vrot.slane %v4757, 2
    %v4759 = vmax.f32 %v4757, %v4758
    %v4760 = vrot.slane %v4759, 1
    %v4761 = vmax.f32 %v4759, %v4760
    %4762 = vst.msk [vmem:[#allocation2 + $0x3] sm:$0x1] %vm1867, %v4761
    %v4763 = vsel %vm1887, %v4717, -inf
    %v4764 = vrot.slane %v4763, 4
    %v4765 = vmax.f32 %v4763, %v4764
    %v4766 = vrot.slane %v4765, 2
    %v4767 = vmax.f32 %v4765, %v4766
    %v4768 = vrot.slane %v4767, 1
    %v4769 = vmax.f32 %v4767, %v4768
    %4770 = vst.msk [vmem:[#allocation2 + $0x4] sm:$0x1] %vm1867, %v4769
    %vm4771 = vcmask 520195
    %v4772 = vsel %vm4771, %v4717, -inf
    %v4773 = vrot.slane %v4772, 4
    %v4774 = vmax.f32 %v4772, %v4773
    %v4775 = vrot.slane %v4774, 2
    %v4776 = vmax.f32 %v4774, %v4775
    %v4777 = vrot.slane %v4776, 1
    %v4778 = vmax.f32 %v4776, %v4777
    %4779 = vst.msk [vmem:[#allocation2 + $0x5] sm:$0x1] %vm1867, %v4778
    %v4780 = vsel %vm1859, %v4718, -inf
    %v4781 = vrot.slane %v4780, 4
    %v4782 = vmax.f32 %v4780, %v4781
    %v4783 = vrot.slane %v4782, 2
    %v4784 = vmax.f32 %v4782, %v4783
    %v4785 = vrot.slane %v4784, 1
    %v4786 = vmax.f32 %v4784, %v4785
    %4787 = vst.msk [vmem:[#allocation2 + $0x8] sm:$0x1] %vm1867, %v4786
    %v4788 = vsel %vm1869, %v4718, -inf
    %v4789 = vrot.slane %v4788, 4
    %v4790 = vmax.f32 %v4788, %v4789
    %v4791 = vrot.slane %v4790, 2
    %v4792 = vmax.f32 %v4790, %v4791
    %v4793 = vrot.slane %v4792, 1
    %v4794 = vmax.f32 %v4792, %v4793
    %4795 = vst.msk [vmem:[#allocation2 + $0x9] sm:$0x1] %vm1867, %v4794
    %v4796 = vsel %vm1878, %v4718, -inf
    %v4797 = vrot.slane %v4796, 4
    %v4798 = vmax.f32 %v4796, %v4797
    %v4799 = vrot.slane %v4798, 2
    %v4800 = vmax.f32 %v4798, %v4799
    %v4801 = vrot.slane %v4800, 1
    %v4802 = vmax.f32 %v4800, %v4801
    %4803 = vst.msk [vmem:[#allocation2 + $0xa] sm:$0x1] %vm1867, %v4802
    %v4804 = vsel %vm1887, %v4719, -inf
    %v4805 = vrot.slane %v4804, 4
    %v4806 = vmax.f32 %v4804, %v4805
    %v4807 = vrot.slane %v4806, 2
    %v4808 = vmax.f32 %v4806, %v4807
    %v4809 = vrot.slane %v4808, 1
    %v4810 = vmax.f32 %v4808, %v4809
    %4811 = vst.msk [vmem:[#allocation2 + $0xb] sm:$0x1] %vm1867, %v4810
    %v4812 = vsel %vm4771, %v4719, -inf
    %v4813 = vrot.slane %v4812, 4
    %v4814 = vmax.f32 %v4812, %v4813
    %v4815 = vrot.slane %v4814, 2
    %v4816 = vmax.f32 %v4814, %v4815
    %v4817 = vrot.slane %v4816, 1
    %v4818 = vmax.f32 %v4816, %v4817
    %4819 = vst.msk [vmem:[#allocation2 + $0xc] sm:$0x1] %vm1867, %v4818
    %v4820 = vsel %vm1859, %v4720, -inf
    %v4821 = vrot.slane %v4820, 4
    %v4822 = vmax.f32 %v4820, %v4821
    %v4823 = vrot.slane %v4822, 2
    %v4824 = vmax.f32 %v4822, %v4823
    %v4825 = vrot.slane %v4824, 1
    %v4826 = vmax.f32 %v4824, %v4825
    %4827 = vst.msk [vmem:[#allocation2 + $0xf] sm:$0x1] %vm1867, %v4826
    %v4828 = vsel %vm1869, %v4720, -inf
    %v4829 = vrot.slane %v4828, 4
    %v4830 = vmax.f32 %v4828, %v4829
    %v4831 = vrot.slane %v4830, 2
    %v4832 = vmax.f32 %v4830, %v4831
    %v4833 = vrot.slane %v4832, 1
    %v4834 = vmax.f32 %v4832, %v4833
    %4835 = vst.msk [vmem:[#allocation2 + $0x10] sm:$0x1] %vm1867, %v4834
    %v4836 = vsel %vm1878, %v4720, -inf
    %v4837 = vrot.slane %v4836, 4
    %v4838 = vmax.f32 %v4836, %v4837
    %v4839 = vrot.slane %v4838, 2
    %v4840 = vmax.f32 %v4838, %v4839
    %v4841 = vrot.slane %v4840, 1
    %v4842 = vmax.f32 %v4840, %v4841
    %4843 = vst.msk [vmem:[#allocation2 + $0x11] sm:$0x1] %vm1867, %v4842
    %v4844 = vsel %vm1887, %v4721, -inf
    %v4845 = vrot.slane %v4844, 4
    %v4846 = vmax.f32 %v4844, %v4845
    %v4847 = vrot.slane %v4846, 2
    %v4848 = vmax.f32 %v4846, %v4847
    %v4849 = vrot.slane %v4848, 1
    %v4850 = vmax.f32 %v4848, %v4849
    %4851 = vst.msk [vmem:[#allocation2 + $0x12] sm:$0x1] %vm1867, %v4850
    %v4852 = vsel %vm4771, %v4721, -inf
    %v4853 = vrot.slane %v4852, 4
    %v4854 = vmax.f32 %v4852, %v4853
    %v4855 = vrot.slane %v4854, 2
    %v4856 = vmax.f32 %v4854, %v4855
    %v4857 = vrot.slane %v4856, 1
    %v4858 = vmax.f32 %v4856, %v4857
    %4859 = vst.msk [vmem:[#allocation2 + $0x13] sm:$0x1] %vm1867, %v4858
    %v4860 = vsel %vm1859, %v4722, -inf
    %v4861 = vrot.slane %v4860, 4
    %v4862 = vmax.f32 %v4860, %v4861
    %v4863 = vrot.slane %v4862, 2
    %v4864 = vmax.f32 %v4862, %v4863
    %v4865 = vrot.slane %v4864, 1
    %v4866 = vmax.f32 %v4864, %v4865
    %4867 = vst.msk [vmem:[#allocation2 + $0x16] sm:$0x1] %vm1867, %v4866
    %v4868 = vsel %vm1869, %v4722, -inf
    %v4869 = vrot.slane %v4868, 4
    %v4870 = vmax.f32 %v4868, %v4869
    %v4871 = vrot.slane %v4870, 2
    %v4872 = vmax.f32 %v4870, %v4871
    %v4873 = vrot.slane %v4872, 1
    %v4874 = vmax.f32 %v4872, %v4873
    %4875 = vst.msk [vmem:[#allocation2 + $0x17] sm:$0x1] %vm1867, %v4874
    %v4876 = vsel %vm1878, %v4722, -inf
    %v4877 = vrot.slane %v4876, 4
    %v4878 = vmax.f32 %v4876, %v4877
    %v4879 = vrot.slane %v4878, 2
    %v4880 = vmax.f32 %v4878, %v4879
    %v4881 = vrot.slane %v4880, 1
    %v4882 = vmax.f32 %v4880, %v4881
    %4883 = vst.msk [vmem:[#allocation2 + $0x18] sm:$0x1] %vm1867, %v4882
    %v4884 = vsel %vm1887, %v4723, -inf
    %v4885 = vrot.slane %v4884, 4
    %v4886 = vmax.f32 %v4884, %v4885
    %v4887 = vrot.slane %v4886, 2
    %v4888 = vmax.f32 %v4886, %v4887
    %v4889 = vrot.slane %v4888, 1
    %v4890 = vmax.f32 %v4888, %v4889
    %4891 = vst.msk [vmem:[#allocation2 + $0x19] sm:$0x1] %vm1867, %v4890
    %v4892 = vsel %vm4771, %v4723, -inf
    %v4893 = vrot.slane %v4892, 4
    %v4894 = vmax.f32 %v4892, %v4893
    %v4895 = vrot.slane %v4894, 2
    %v4896 = vmax.f32 %v4894, %v4895
    %v4897 = vrot.slane %v4896, 1
    %v4898 = vmax.f32 %v4896, %v4897
    %4899 = vst.msk [vmem:[#allocation2 + $0x1a] sm:$0x1] %vm1867, %v4898
    %v4900 = vsel %vm1859, %v4724, -inf
    %v4901 = vrot.slane %v4900, 4
    %v4902 = vmax.f32 %v4900, %v4901
    %v4903 = vrot.slane %v4902, 2
    %v4904 = vmax.f32 %v4902, %v4903
    %v4905 = vrot.slane %v4904, 1
    %v4906 = vmax.f32 %v4904, %v4905
    %4907 = vst.msk [vmem:[#allocation2 + $0x1d] sm:$0x1] %vm1867, %v4906
    %v4908 = vsel %vm1869, %v4724, -inf
    %v4909 = vrot.slane %v4908, 4
    %v4910 = vmax.f32 %v4908, %v4909
    %v4911 = vrot.slane %v4910, 2
    %v4912 = vmax.f32 %v4910, %v4911
    %v4913 = vrot.slane %v4912, 1
    %v4914 = vmax.f32 %v4912, %v4913
    %4915 = vst.msk [vmem:[#allocation2 + $0x1e] sm:$0x1] %vm1867, %v4914
    %v4916 = vsel %vm1878, %v4724, -inf
    %v4917 = vrot.slane %v4916, 4
    %v4918 = vmax.f32 %v4916, %v4917
    %v4919 = vrot.slane %v4918, 2
    %v4920 = vmax.f32 %v4918, %v4919
    %v4921 = vrot.slane %v4920, 1
    %v4922 = vmax.f32 %v4920, %v4921
    %4923 = vst.msk [vmem:[#allocation2 + $0x1f] sm:$0x1] %vm1867, %v4922
    %v4924 = vsel %vm1887, %v4725, -inf
    %v4925 = vrot.slane %v4924, 4
    %v4926 = vmax.f32 %v4924, %v4925
    %v4927 = vrot.slane %v4926, 2
    %v4928 = vmax.f32 %v4926, %v4927
    %v4929 = vrot.slane %v4928, 1
    %v4930 = vmax.f32 %v4928, %v4929
    %4931 = vst.msk [vmem:[#allocation2 + $0x20] sm:$0x1] %vm1867, %v4930
    %v4932 = vsel %vm4771, %v4725, -inf
    %v4933 = vrot.slane %v4932, 4
    %v4934 = vmax.f32 %v4932, %v4933
    %v4935 = vrot.slane %v4934, 2
    %v4936 = vmax.f32 %v4934, %v4935
    %v4937 = vrot.slane %v4936, 1
    %v4938 = vmax.f32 %v4936, %v4937
    %4939 = vst.msk [vmem:[#allocation2 + $0x21] sm:$0x1] %vm1867, %v4938
    %v4940 = vsel %vm1859, %v4726, -inf
    %v4941 = vrot.slane %v4940, 4
    %v4942 = vmax.f32 %v4940, %v4941
    %v4943 = vrot.slane %v4942, 2
    %v4944 = vmax.f32 %v4942, %v4943
    %v4945 = vrot.slane %v4944, 1
    %v4946 = vmax.f32 %v4944, %v4945
    %4947 = vst.msk [vmem:[#allocation2 + $0x24] sm:$0x1] %vm1867, %v4946
    %v4948 = vsel %vm1869, %v4726, -inf
    %v4949 = vrot.slane %v4948, 4
    %v4950 = vmax.f32 %v4948, %v4949
    %v4951 = vrot.slane %v4950, 2
    %v4952 = vmax.f32 %v4950, %v4951
    %v4953 = vrot.slane %v4952, 1
    %v4954 = vmax.f32 %v4952, %v4953
    %4955 = vst.msk [vmem:[#allocation2 + $0x25] sm:$0x1] %vm1867, %v4954
    %v4956 = vsel %vm1878, %v4726, -inf
    %v4957 = vrot.slane %v4956, 4
    %v4958 = vmax.f32 %v4956, %v4957
    %v4959 = vrot.slane %v4958, 2
    %v4960 = vmax.f32 %v4958, %v4959
    %v4961 = vrot.slane %v4960, 1
    %v4962 = vmax.f32 %v4960, %v4961
    %4963 = vst.msk [vmem:[#allocation2 + $0x26] sm:$0x1] %vm1867, %v4962
    %v4964 = vsel %vm1887, %v4727, -inf
    %v4965 = vrot.slane %v4964, 4
    %v4966 = vmax.f32 %v4964, %v4965
    %v4967 = vrot.slane %v4966, 2
    %v4968 = vmax.f32 %v4966, %v4967
    %v4969 = vrot.slane %v4968, 1
    %v4970 = vmax.f32 %v4968, %v4969
    %4971 = vst.msk [vmem:[#allocation2 + $0x27] sm:$0x1] %vm1867, %v4970
    %v4972 = vsel %vm4771, %v4727, -inf
    %v4973 = vrot.slane %v4972, 4
    %v4974 = vmax.f32 %v4972, %v4973
    %v4975 = vrot.slane %v4974, 2
    %v4976 = vmax.f32 %v4974, %v4975
    %v4977 = vrot.slane %v4976, 1
    %v4978 = vmax.f32 %v4976, %v4977
    %4979 = vst.msk [vmem:[#allocation2 + $0x28] sm:$0x1] %vm1867, %v4978
    %v4980 = vsel %vm1859, %v4728, -inf
    %v4981 = vrot.slane %v4980, 4
    %v4982 = vmax.f32 %v4980, %v4981
    %v4983 = vrot.slane %v4982, 2
    %v4984 = vmax.f32 %v4982, %v4983
    %v4985 = vrot.slane %v4984, 1
    %v4986 = vmax.f32 %v4984, %v4985
    %4987 = vst.msk [vmem:[#allocation2 + $0x2b] sm:$0x1] %vm1867, %v4986
    %v4988 = vsel %vm1869, %v4728, -inf
    %v4989 = vrot.slane %v4988, 4
    %v4990 = vmax.f32 %v4988, %v4989
    %v4991 = vrot.slane %v4990, 2
    %v4992 = vmax.f32 %v4990, %v4991
    %v4993 = vrot.slane %v4992, 1
    %v4994 = vmax.f32 %v4992, %v4993
    %4995 = vst.msk [vmem:[#allocation2 + $0x2c] sm:$0x1] %vm1867, %v4994
    %v4996 = vsel %vm1878, %v4728, -inf
    %v4997 = vrot.slane %v4996, 4
    %v4998 = vmax.f32 %v4996, %v4997
    %v4999 = vrot.slane %v4998, 2
    %v5000 = vmax.f32 %v4998, %v4999
    %v5001 = vrot.slane %v5000, 1
    %v5002 = vmax.f32 %v5000, %v5001
    %5003 = vst.msk [vmem:[#allocation2 + $0x2d] sm:$0x1] %vm1867, %v5002
    %v5004 = vsel %vm1887, %v4729, -inf
    %v5005 = vrot.slane %v5004, 4
    %v5006 = vmax.f32 %v5004, %v5005
    %v5007 = vrot.slane %v5006, 2
    %v5008 = vmax.f32 %v5006, %v5007
    %v5009 = vrot.slane %v5008, 1
    %v5010 = vmax.f32 %v5008, %v5009
    %5011 = vst.msk [vmem:[#allocation2 + $0x2e] sm:$0x1] %vm1867, %v5010
    %v5012 = vsel %vm4771, %v4729, -inf
    %v5013 = vrot.slane %v5012, 4
    %v5014 = vmax.f32 %v5012, %v5013
    %v5015 = vrot.slane %v5014, 2
    %v5016 = vmax.f32 %v5014, %v5015
    %v5017 = vrot.slane %v5016, 1
    %v5018 = vmax.f32 %v5016, %v5017
    %5019 = vst.msk [vmem:[#allocation2 + $0x2f] sm:$0x1] %vm1867, %v5018
    %v5020 = vsel %vm1859, %v4730, -inf
    %v5021 = vrot.slane %v5020, 4
    %v5022 = vmax.f32 %v5020, %v5021
    %v5023 = vrot.slane %v5022, 2
    %v5024 = vmax.f32 %v5022, %v5023
    %v5025 = vrot.slane %v5024, 1
    %v5026 = vmax.f32 %v5024, %v5025
    %5027 = vst.msk [vmem:[#allocation2 + $0x32] sm:$0x1] %vm1867, %v5026
    %v5028 = vsel %vm1869, %v4730, -inf
    %v5029 = vrot.slane %v5028, 4
    %v5030 = vmax.f32 %v5028, %v5029
    %v5031 = vrot.slane %v5030, 2
    %v5032 = vmax.f32 %v5030, %v5031
    %v5033 = vrot.slane %v5032, 1
    %v5034 = vmax.f32 %v5032, %v5033
    %5035 = vst.msk [vmem:[#allocation2 + $0x33] sm:$0x1] %vm1867, %v5034
    %v5036 = vsel %vm1878, %v4730, -inf
    %v5037 = vrot.slane %v5036, 4
    %v5038 = vmax.f32 %v5036, %v5037
    %v5039 = vrot.slane %v5038, 2
    %v5040 = vmax.f32 %v5038, %v5039
    %v5041 = vrot.slane %v5040, 1
    %v5042 = vmax.f32 %v5040, %v5041
    %5043 = vst.msk [vmem:[#allocation2 + $0x34] sm:$0x1] %vm1867, %v5042
    %v5044 = vsel %vm1887, %v4731, -inf
    %v5045 = vrot.slane %v5044, 4
    %v5046 = vmax.f32 %v5044, %v5045
    %v5047 = vrot.slane %v5046, 2
    %v5048 = vmax.f32 %v5046, %v5047
    %v5049 = vrot.slane %v5048, 1
    %v5050 = vmax.f32 %v5048, %v5049
    %5051 = vst.msk [vmem:[#allocation2 + $0x35] sm:$0x1] %vm1867, %v5050
    %v5052 = vsel %vm4771, %v4731, -inf
    %v5053 = vrot.slane %v5052, 4
    %v5054 = vmax.f32 %v5052, %v5053
    %v5055 = vrot.slane %v5054, 2
    %v5056 = vmax.f32 %v5054, %v5055
    %v5057 = vrot.slane %v5056, 1
    %v5058 = vmax.f32 %v5056, %v5057
    %5059 = vst.msk [vmem:[#allocation2 + $0x36] sm:$0x1] %vm1867, %v5058
    %v5060 = vld [vmem:[#allocation2] sm:$0xff]
    %v5061 = vld [vmem:[#allocation2 + $0x8] sm:$0xff]
    %v5062 = vld [vmem:[#allocation2 + $0x10] sm:$0xff]
    %v5063 = vld [vmem:[#allocation2 + $0x18] sm:$0xff]
    %v5064 = vld [vmem:[#allocation2 + $0x20] sm:$0xff]
    %v5065 = vld [vmem:[#allocation2 + $0x28] sm:$0xff]
    %v5066 = vld [vmem:[#allocation2 + $0x30] sm:$0x3f]
    %v5067 = vld [vmem:[#allocation8] sm:$0xff]
    %v5068 = vld [vmem:[#allocation8 + $0x8] sm:$0xff]
    %v5069 = vld [vmem:[#allocation8 + $0x10] sm:$0xff]
    %v5070 = vld [vmem:[#allocation8 + $0x18] sm:$0xff]
    %v5071 = vld [vmem:[#allocation8 + $0x20] sm:$0xff]
    %v5072 = vld [vmem:[#allocation8 + $0x28] sm:$0xff]
    %v5073 = vld [vmem:[#allocation8 + $0x30] sm:$0xff]
    %v5074 = vld [vmem:[#allocation8 + $0x38] sm:$0xff]
    %v5075 = vld [vmem:[#allocation2 + $0x1] sm:$0xff]
    %v5076 = vld [vmem:[#allocation2 + $0x9] sm:$0xff]
    %v5077 = vld [vmem:[#allocation2 + $0x11] sm:$0xff]
    %v5078 = vld [vmem:[#allocation2 + $0x19] sm:$0xff]
    %v5079 = vld [vmem:[#allocation2 + $0x21] sm:$0xff]
    %v5080 = vld [vmem:[#allocation2 + $0x29] sm:$0xff]
    %v5081 = vld [vmem:[#allocation2 + $0x31] sm:$0x3f]
    %s5082 = scalar_lea.vmem [#allocation8], 64
    %v5083 = vld [vmem:[%s5082] sm:$0xff]
    %v5084 = vld [vmem:[%s5082 + $0x8] sm:$0xff]
    %v5085 = vld [vmem:[%s5082 + $0x10] sm:$0xff]
    %v5086 = vld [vmem:[%s5082 + $0x18] sm:$0xff]
    %v5087 = vld [vmem:[%s5082 + $0x20] sm:$0xff]
    %v5088 = vld [vmem:[%s5082 + $0x28] sm:$0xff]
    %v5089 = vld [vmem:[%s5082 + $0x30] sm:$0xff]
    %v5090 = vld [vmem:[%s5082 + $0x38] sm:$0xff]
    %v5092 = vsel %vm1852, %v5075, 0
    %v5095 = vsel %vm1852, %v5076, 0
    %v5098 = vsel %vm1852, %v5077, 0
    %v5101 = vsel %vm1852, %v5078, 0
    %v5104 = vsel %vm1852, %v5079, 0
    %v5107 = vsel %vm1852, %v5080, 0
    %v5110 = vsel %vm1852, %v5081, 0
    %5112 = vmatprep.subr.mxu0 0.0
    %5113 = vmatpush1.msra.mxu0 %v5083
    %5114 = vmatprep.subr.mxu0 0.0
    %5115 = vmatpush1.msra.mxu0 %v5084
    %5116 = vmatprep.subr.mxu0 0.0
    %5117 = vmatpush1.msra.mxu0 %v5085
    %5118 = vmatprep.subr.mxu0 0.0
    %5119 = vmatpush1.msra.mxu0 %v5086
    %5120 = vmatprep.subr.mxu0 0.0
    %5121 = vmatpush1.msra.mxu0 %v5087
    %5122 = vmatprep.subr.mxu0 0.0
    %5123 = vmatpush1.msra.mxu0 %v5088
    %5124 = vmatprep.subr.mxu0 0.0
    %5125 = vmatpush1.msra.mxu0 %v5089
    %5126 = vmatprep.subr.mxu0 0.0
    %5127 = vmatpush1.msra.mxu0 %v5090
    %5128 = vmatprep.subr.mxu0 0.0
    %5129 = vmatpush1.msra.mxu0 0.0
    %5130 = vmatprep.subr.mxu0 0.0
    %5131 = vmatpush1.msra.mxu0 0.0
    %5132 = vmatprep.subr.mxu0 0.0
    %5133 = vmatpush1.msra.mxu0 0.0
    %5134 = vmatprep.subr.mxu0 0.0
    %5135 = vmatpush1.msra.mxu0 0.0
    %5136 = vmatprep.subr.mxu0 0.0
    %5137 = vmatpush1.msra.mxu0 0.0
    %5138 = vmatprep.subr.mxu0 0.0
    %5139 = vmatpush1.msra.mxu0 0.0
    %5140 = vmatprep.subr.mxu0 0.0
    %5141 = vmatpush1.msra.mxu0 0.0
    %5142 = vmatprep.subr.mxu0 0.0
    %5143 = vmatpush1.msra.mxu0 0.0
    %5144 = vmatprep.subr.mxu0 0.0
    %5145 = vmatpush1.msra.mxu0 0.0
    %5146 = vmatprep.subr.mxu0 0.0
    %5147 = vmatpush1.msra.mxu0 0.0
    %5148 = vmatprep.subr.mxu0 0.0
    %5149 = vmatpush1.msra.mxu0 0.0
    %5150 = vmatprep.subr.mxu0 0.0
    %5151 = vmatpush1.msra.mxu0 0.0
    %5152 = vmatprep.subr.mxu0 0.0
    %5153 = vmatpush1.msra.mxu0 0.0
    %5154 = vmatprep.subr.mxu0 0.0
    %5155 = vmatpush1.msra.mxu0 0.0
    %5156 = vmatprep.subr.mxu0 0.0
    %5157 = vmatpush1.msra.mxu0 0.0
    %5158 = vmatprep.subr.mxu0 0.0
    %5159 = vmatpush1.msra.mxu0 0.0
    %5160 = vmatprep.subr.mxu0 0.0
    %5161 = vmatpush1.msra.mxu0 0.0
    %5162 = vmatprep.subr.mxu0 0.0
    %5163 = vmatpush1.msra.mxu0 0.0
    %5164 = vmatprep.subr.mxu0 0.0
    %5165 = vmatpush1.msra.mxu0 0.0
    %5166 = vmatprep.subr.mxu0 0.0
    %5167 = vmatpush1.msra.mxu0 0.0
    %5168 = vmatprep.subr.mxu0 0.0
    %5169 = vmatpush1.msra.mxu0 0.0
    %5170 = vmatprep.subr.mxu0 0.0
    %5171 = vmatpush1.msra.mxu0 0.0
    %5172 = vmatprep.subr.mxu0 0.0
    %5173 = vmatpush1.msra.mxu0 0.0
    %5174 = vmatprep.subr.mxu0 0.0
    %5175 = vmatpush1.msra.mxu0 0.0
    %5176 = vmatprep.mubr.f32.mxu0 0.0
    %5177 = vmatmul.mubr.f32.gmra.mrb[0].mxu0 %v5092
    %v5178 = vpop.f32.mrb[0].mxu0
    %v5179 = vadd.f32 0.0, %v5178
    %v5180 = vpop.f32.mrb[0].mxu0
    %5181 = vmatprep.mubr.f32.mxu0 0.0
    %5182 = vmatmul.mubr.f32.gmra.mrb[0].mxu0 %v5095
    %v5183 = vpop.f32.mrb[0].mxu0
    %v5184 = vadd.f32 0.0, %v5183
    %v5185 = vpop.f32.mrb[0].mxu0
    %5186 = vmatprep.mubr.f32.mxu0 0.0
    %5187 = vmatmul.mubr.f32.gmra.mrb[0].mxu0 %v5098
    %v5188 = vpop.f32.mrb[0].mxu0
    %v5189 = vadd.f32 0.0, %v5188
    %v5190 = vpop.f32.mrb[0].mxu0
    %5191 = vmatprep.mubr.f32.mxu0 0.0
    %5192 = vmatmul.mubr.f32.gmra.mrb[0].mxu0 %v5101
    %v5193 = vpop.f32.mrb[0].mxu0
    %v5194 = vadd.f32 0.0, %v5193
    %v5195 = vpop.f32.mrb[0].mxu0
    %5196 = vmatprep.mubr.f32.mxu0 0.0
    %5197 = vmatmul.mubr.f32.gmra.mrb[0].mxu0 %v5104
    %v5198 = vpop.f32.mrb[0].mxu0
    %v5199 = vadd.f32 0.0, %v5198
    %v5200 = vpop.f32.mrb[0].mxu0
    %5201 = vmatprep.mubr.f32.mxu0 0.0
    %5202 = vmatmul.mubr.f32.gmra.mrb[0].mxu0 %v5107
    %v5203 = vpop.f32.mrb[0].mxu0
    %v5204 = vadd.f32 0.0, %v5203
    %v5205 = vpop.f32.mrb[0].mxu0
    %5206 = vmatprep.mubr.f32.mxu0 0.0
    %5207 = vmatmul.mubr.f32.gmra.mrb[0].mxu0 %v5110
    %v5208 = vpop.f32.mrb[0].mxu0
    %v5209 = vadd.f32 0.0, %v5208
    %v5210 = vpop.f32.mrb[0].mxu0
    %5211 = vdwg.mxu0
    %v5213 = vsel %vm1852, %v5060, 0
    %v5216 = vsel %vm1852, %v5061, 0
    %v5219 = vsel %vm1852, %v5062, 0
    %v5222 = vsel %vm1852, %v5063, 0
    %v5225 = vsel %vm1852, %v5064, 0
    %v5228 = vsel %vm1852, %v5065, 0
    %v5231 = vsel %vm1852, %v5066, 0
    %5233 = vmatprep.subr.mxu0 0.0
    %5234 = vmatpush1.msra.mxu0 %v5067
    %5235 = vmatprep.subr.mxu0 0.0
    %5236 = vmatpush1.msra.mxu0 %v5068
    %5237 = vmatprep.subr.mxu0 0.0
    %5238 = vmatpush1.msra.mxu0 %v5069
    %5239 = vmatprep.subr.mxu0 0.0
    %5240 = vmatpush1.msra.mxu0 %v5070
    %5241 = vmatprep.subr.mxu0 0.0
    %5242 = vmatpush1.msra.mxu0 %v5071
    %5243 = vmatprep.subr.mxu0 0.0
    %5244 = vmatpush1.msra.mxu0 %v5072
    %5245 = vmatprep.subr.mxu0 0.0
    %5246 = vmatpush1.msra.mxu0 %v5073
    %5247 = vmatprep.subr.mxu0 0.0
    %5248 = vmatpush1.msra.mxu0 %v5074
    %5249 = vmatprep.subr.mxu0 0.0
    %5250 = vmatpush1.msra.mxu0 0.0
    %5251 = vmatprep.subr.mxu0 0.0
    %5252 = vmatpush1.msra.mxu0 0.0
    %5253 = vmatprep.subr.mxu0 0.0
    %5254 = vmatpush1.msra.mxu0 0.0
    %5255 = vmatprep.subr.mxu0 0.0
    %5256 = vmatpush1.msra.mxu0 0.0
    %5257 = vmatprep.subr.mxu0 0.0
    %5258 = vmatpush1.msra.mxu0 0.0
    %5259 = vmatprep.subr.mxu0 0.0
    %5260 = vmatpush1.msra.mxu0 0.0
    %5261 = vmatprep.subr.mxu0 0.0
    %5262 = vmatpush1.msra.mxu0 0.0
    %5263 = vmatprep.subr.mxu0 0.0
    %5264 = vmatpush1.msra.mxu0 0.0
    %5265 = vmatprep.subr.mxu0 0.0
    %5266 = vmatpush1.msra.mxu0 0.0
    %5267 = vmatprep.subr.mxu0 0.0
    %5268 = vmatpush1.msra.mxu0 0.0
    %5269 = vmatprep.subr.mxu0 0.0
    %5270 = vmatpush1.msra.mxu0 0.0
    %5271 = vmatprep.subr.mxu0 0.0
    %5272 = vmatpush1.msra.mxu0 0.0
    %5273 = vmatprep.subr.mxu0 0.0
    %5274 = vmatpush1.msra.mxu0 0.0
    %5275 = vmatprep.subr.mxu0 0.0
    %5276 = vmatpush1.msra.mxu0 0.0
    %5277 = vmatprep.subr.mxu0 0.0
    %5278 = vmatpush1.msra.mxu0 0.0
    %5279 = vmatprep.subr.mxu0 0.0
    %5280 = vmatpush1.msra.mxu0 0.0
    %5281 = vmatprep.subr.mxu0 0.0
    %5282 = vmatpush1.msra.mxu0 0.0
    %5283 = vmatprep.subr.mxu0 0.0
    %5284 = vmatpush1.msra.mxu0 0.0
    %5285 = vmatprep.subr.mxu0 0.0
    %5286 = vmatpush1.msra.mxu0 0.0
    %5287 = vmatprep.subr.mxu0 0.0
    %5288 = vmatpush1.msra.mxu0 0.0
    %5289 = vmatprep.subr.mxu0 0.0
    %5290 = vmatpush1.msra.mxu0 0.0
    %5291 = vmatprep.subr.mxu0 0.0
    %5292 = vmatpush1.msra.mxu0 0.0
    %5293 = vmatprep.subr.mxu0 0.0
    %5294 = vmatpush1.msra.mxu0 0.0
    %5295 = vmatprep.subr.mxu0 0.0
    %5296 = vmatpush1.msra.mxu0 0.0
    %5297 = vmatprep.mubr.f32.mxu0 0.0
    %5298 = vmatmul.mubr.f32.gmra.mrb[0].mxu0 %v5213
    %v5299 = vpop.f32.mrb[0].mxu0
    %v5300 = vadd.f32 %v5179, %v5299
    %v5301 = vpop.f32.mrb[0].mxu0
    %5302 = vmatprep.mubr.f32.mxu0 0.0
    %5303 = vmatmul.mubr.f32.gmra.mrb[0].mxu0 %v5216
    %v5304 = vpop.f32.mrb[0].mxu0
    %v5305 = vadd.f32 %v5184, %v5304
    %v5306 = vpop.f32.mrb[0].mxu0
    %5307 = vmatprep.mubr.f32.mxu0 0.0
    %5308 = vmatmul.mubr.f32.gmra.mrb[0].mxu0 %v5219
    %v5309 = vpop.f32.mrb[0].mxu0
    %v5310 = vadd.f32 %v5189, %v5309
    %v5311 = vpop.f32.mrb[0].mxu0
    %5312 = vmatprep.mubr.f32.mxu0 0.0
    %5313 = vmatmul.mubr.f32.gmra.mrb[0].mxu0 %v5222
    %v5314 = vpop.f32.mrb[0].mxu0
    %v5315 = vadd.f32 %v5194, %v5314
    %v5316 = vpop.f32.mrb[0].mxu0
    %5317 = vmatprep.mubr.f32.mxu0 0.0
    %5318 = vmatmul.mubr.f32.gmra.mrb[0].mxu0 %v5225
    %v5319 = vpop.f32.mrb[0].mxu0
    %v5320 = vadd.f32 %v5199, %v5319
    %v5321 = vpop.f32.mrb[0].mxu0
    %5322 = vmatprep.mubr.f32.mxu0 0.0
    %5323 = vmatmul.mubr.f32.gmra.mrb[0].mxu0 %v5228
    %v5324 = vpop.f32.mrb[0].mxu0
    %v5325 = vadd.f32 %v5204, %v5324
    %v5326 = vpop.f32.mrb[0].mxu0
    %5327 = vmatprep.mubr.f32.mxu0 0.0
    %5328 = vmatmul.mubr.f32.gmra.mrb[0].mxu0 %v5231
    %v5329 = vpop.f32.mrb[0].mxu0
    %v5330 = vadd.f32 %v5209, %v5329
    %v5331 = vpop.f32.mrb[0].mxu0
    %5332 = vdwg.mxu0
    %v5333 = vld [vmem:[#allocation2 + $0x2] sm:$0xff]
    %v5334 = vld [vmem:[#allocation2 + $0xa] sm:$0xff]
    %v5335 = vld [vmem:[#allocation2 + $0x12] sm:$0xff]
    %v5336 = vld [vmem:[#allocation2 + $0x1a] sm:$0xff]
    %v5337 = vld [vmem:[#allocation2 + $0x22] sm:$0xff]
    %v5338 = vld [vmem:[#allocation2 + $0x2a] sm:$0xff]
    %v5339 = vld [vmem:[#allocation2 + $0x32] sm:$0x3f]
    %s5340 = scalar_lea.vmem [#allocation8], 128
    %v5341 = vld [vmem:[%s5340] sm:$0xff]
    %v5342 = vld [vmem:[%s5340 + $0x8] sm:$0xff]
    %v5343 = vld [vmem:[%s5340 + $0x10] sm:$0xff]
    %v5344 = vld [vmem:[%s5340 + $0x18] sm:$0xff]
    %v5345 = vld [vmem:[%s5340 + $0x20] sm:$0xff]
    %v5346 = vld [vmem:[%s5340 + $0x28] sm:$0xff]
    %v5347 = vld [vmem:[%s5340 + $0x30] sm:$0xff]
    %v5348 = vld [vmem:[%s5340 + $0x38] sm:$0xff]
    %v5350 = vsel %vm1852, %v5333, 0
    %v5353 = vsel %vm1852, %v5334, 0
    %v5356 = vsel %vm1852, %v5335, 0
    %v5359 = vsel %vm1852, %v5336, 0
    %v5362 = vsel %vm1852, %v5337, 0
    %v5365 = vsel %vm1852, %v5338, 0
    %v5368 = vsel %vm1852, %v5339, 0
    %5370 = vmatprep.subr.mxu0 0.0
    %5371 = vmatpush1.msra.mxu0 %v5341
    %5372 = vmatprep.subr.mxu0 0.0
    %5373 = vmatpush1.msra.mxu0 %v5342
    %5374 = vmatprep.subr.mxu0 0.0
    %5375 = vmatpush1.msra.mxu0 %v5343
    %5376 = vmatprep.subr.mxu0 0.0
    %5377 = vmatpush1.msra.mxu0 %v5344
    %5378 = vmatprep.subr.mxu0 0.0
    %5379 = vmatpush1.msra.mxu0 %v5345
    %5380 = vmatprep.subr.mxu0 0.0
    %5381 = vmatpush1.msra.mxu0 %v5346
    %5382 = vmatprep.subr.mxu0 0.0
    %5383 = vmatpush1.msra.mxu0 %v5347
    %5384 = vmatprep.subr.mxu0 0.0
    %5385 = vmatpush1.msra.mxu0 %v5348
    %5386 = vmatprep.subr.mxu0 0.0
    %5387 = vmatpush1.msra.mxu0 0.0
    %5388 = vmatprep.subr.mxu0 0.0
    %5389 = vmatpush1.msra.mxu0 0.0
    %5390 = vmatprep.subr.mxu0 0.0
    %5391 = vmatpush1.msra.mxu0 0.0
    %5392 = vmatprep.subr.mxu0 0.0
    %5393 = vmatpush1.msra.mxu0 0.0
    %5394 = vmatprep.subr.mxu0 0.0
    %5395 = vmatpush1.msra.mxu0 0.0
    %5396 = vmatprep.subr.mxu0 0.0
    %5397 = vmatpush1.msra.mxu0 0.0
    %5398 = vmatprep.subr.mxu0 0.0
    %5399 = vmatpush1.msra.mxu0 0.0
    %5400 = vmatprep.subr.mxu0 0.0
    %5401 = vmatpush1.msra.mxu0 0.0
    %5402 = vmatprep.subr.mxu0 0.0
    %5403 = vmatpush1.msra.mxu0 0.0
    %5404 = vmatprep.subr.mxu0 0.0
    %5405 = vmatpush1.msra.mxu0 0.0
    %5406 = vmatprep.subr.mxu0 0.0
    %5407 = vmatpush1.msra.mxu0 0.0
    %5408 = vmatprep.subr.mxu0 0.0
    %5409 = vmatpush1.msra.mxu0 0.0
    %5410 = vmatprep.subr.mxu0 0.0
    %5411 = vmatpush1.msra.mxu0 0.0
    %5412 = vmatprep.subr.mxu0 0.0
    %5413 = vmatpush1.msra.mxu0 0.0
    %5414 = vmatprep.subr.mxu0 0.0
    %5415 = vmatpush1.msra.mxu0 0.0
    %5416 = vmatprep.subr.mxu0 0.0
    %5417 = vmatpush1.msra.mxu0 0.0
    %5418 = vmatprep.subr.mxu0 0.0
    %5419 = vmatpush1.msra.mxu0 0.0
    %5420 = vmatprep.subr.mxu0 0.0
    %5421 = vmatpush1.msra.mxu0 0.0
    %5422 = vmatprep.subr.mxu0 0.0
    %5423 = vmatpush1.msra.mxu0 0.0
    %5424 = vmatprep.subr.mxu0 0.0
    %5425 = vmatpush1.msra.mxu0 0.0
    %5426 = vmatprep.subr.mxu0 0.0
    %5427 = vmatpush1.msra.mxu0 0.0
    %5428 = vmatprep.subr.mxu0 0.0
    %5429 = vmatpush1.msra.mxu0 0.0
    %5430 = vmatprep.subr.mxu0 0.0
    %5431 = vmatpush1.msra.mxu0 0.0
    %5432 = vmatprep.subr.mxu0 0.0
    %5433 = vmatpush1.msra.mxu0 0.0
    %5434 = vmatprep.mubr.f32.mxu0 0.0
    %5435 = vmatmul.mubr.f32.gmra.mrb[0].mxu0 %v5350
    %v5436 = vpop.f32.mrb[0].mxu0
    %v5437 = vadd.f32 0.0, %v5436
    %v5438 = vpop.f32.mrb[0].mxu0
    %5439 = vmatprep.mubr.f32.mxu0 0.0
    %5440 = vmatmul.mubr.f32.gmra.mrb[0].mxu0 %v5353
    %v5441 = vpop.f32.mrb[0].mxu0
    %v5442 = vadd.f32 0.0, %v5441
    %v5443 = vpop.f32.mrb[0].mxu0
    %5444 = vmatprep.mubr.f32.mxu0 0.0
    %5445 = vmatmul.mubr.f32.gmra.mrb[0].mxu0 %v5356
    %v5446 = vpop.f32.mrb[0].mxu0
    %v5447 = vadd.f32 0.0, %v5446
    %v5448 = vpop.f32.mrb[0].mxu0
    %5449 = vmatprep.mubr.f32.mxu0 0.0
    %5450 = vmatmul.mubr.f32.gmra.mrb[0].mxu0 %v5359
    %v5451 = vpop.f32.mrb[0].mxu0
    %v5452 = vadd.f32 0.0, %v5451
    %v5453 = vpop.f32.mrb[0].mxu0
    %5454 = vmatprep.mubr.f32.mxu0 0.0
    %5455 = vmatmul.mubr.f32.gmra.mrb[0].mxu0 %v5362
    %v5456 = vpop.f32.mrb[0].mxu0
    %v5457 = vadd.f32 0.0, %v5456
    %v5458 = vpop.f32.mrb[0].mxu0
    %5459 = vmatprep.mubr.f32.mxu0 0.0
    %5460 = vmatmul.mubr.f32.gmra.mrb[0].mxu0 %v5365
    %v5461 = vpop.f32.mrb[0].mxu0
    %v5462 = vadd.f32 0.0, %v5461
    %v5463 = vpop.f32.mrb[0].mxu0
    %5464 = vmatprep.mubr.f32.mxu0 0.0
    %5465 = vmatmul.mubr.f32.gmra.mrb[0].mxu0 %v5368
    %v5466 = vpop.f32.mrb[0].mxu0
    %v5467 = vadd.f32 0.0, %v5466
    %v5468 = vpop.f32.mrb[0].mxu0
    %5469 = vdwg.mxu0
    %v5470 = vadd.f32 %v5300, %v5437
    %v5471 = vadd.f32 %v5305, %v5442
    %v5472 = vadd.f32 %v5310, %v5447
    %v5473 = vadd.f32 %v5315, %v5452
    %v5474 = vadd.f32 %v5320, %v5457
    %v5475 = vadd.f32 %v5325, %v5462
    %v5476 = vadd.f32 %v5330, %v5467
    %v5477 = vld [vmem:[%s10] sm:$0x1]
    %v5479 = vlaneseq
    %v5480 = vshrl.u32 %v5479, 7
    %v5481 = vsub.s32 0, %v5480
    %v5482 = vrot.slane %v5477, %v5481
    %v5484 = vadd.f32 %v5470, %v5482
    %v5485 = vadd.f32 %v5471, %v5482
    %v5486 = vadd.f32 %v5472, %v5482
    %v5487 = vadd.f32 %v5473, %v5482
    %v5488 = vadd.f32 %v5474, %v5482
    %v5489 = vadd.f32 %v5475, %v5482
    %v5490 = vadd.f32 %v5476, %v5482
    %v5491 = vmax.f32 %v5484, 0.0
    %v5492 = vmax.f32 %v5485, 0.0
    %v5493 = vmax.f32 %v5486, 0.0
    %v5494 = vmax.f32 %v5487, 0.0
    %v5495 = vmax.f32 %v5488, 0.0
    %v5496 = vmax.f32 %v5489, 0.0
    %v5497 = vmax.f32 %v5490, 0.0
    %vm5498 = vcmask 1044480
    %v5499 = vsel %vm5498, %v5491, -inf
    %v5500 = vrot.slane %v5499, 4
    %v5501 = vmax.f32 %v5499, %v5500
    %v5502 = vrot.slane %v5501, 2
    %v5503 = vmax.f32 %v5501, %v5502
    %v5504 = vrot.slane %v5503, 1
    %v5505 = vmax.f32 %v5503, %v5504
    %5506 = vst [vmem:[%s13 + $0x8] sm:$0x1] %v5505
    %vm5507 = vcmask 1047559
    %v5508 = vsel %vm5507, %v5491, -inf
    %v5509 = vsel %vm2528, %v5492, -inf
    %v5510 = vmax.f32 %v5508, %v5509
    %v5511 = vrot.slane %v5510, 4
    %v5512 = vmax.f32 %v5510, %v5511
    %v5513 = vrot.slane %v5512, 2
    %v5514 = vmax.f32 %v5512, %v5513
    %v5515 = vrot.slane %v5514, 1
    %v5516 = vmax.f32 %v5514, %v5515
    %5517 = vst [vmem:[%s13 + $0x9] sm:$0x1] %v5516
    %v5518 = vsel %vm2537, %v5492, -inf
    %vm5519 = vcmask 1042432
    %v5520 = vsel %vm5519, %v5493, -inf
    %v5521 = vmax.f32 %v5518, %v5520
    %v5522 = vrot.slane %v5521, 4
    %v5523 = vmax.f32 %v5521, %v5522
    %v5524 = vrot.slane %v5523, 2
    %v5525 = vmax.f32 %v5523, %v5524
    %v5526 = vrot.slane %v5525, 1
    %v5527 = vmax.f32 %v5525, %v5526
    %5528 = vst [vmem:[%s13 + $0xa] sm:$0x1] %v5527
    %vm5529 = vcmask 1047557
    %v5530 = vsel %vm5529, %v5493, -inf
    %v5531 = vsel %vm2539, %v5494, -inf
    %v5532 = vmax.f32 %v5530, %v5531
    %v5533 = vrot.slane %v5532, 4
    %v5534 = vmax.f32 %v5532, %v5533
    %v5535 = vrot.slane %v5534, 2
    %v5536 = vmax.f32 %v5534, %v5535
    %v5537 = vrot.slane %v5536, 1
    %v5538 = vmax.f32 %v5536, %v5537
    %5539 = vst [vmem:[%s13 + $0xb] sm:$0x1] %v5538
    %v5540 = vsel %vm2549, %v5494, -inf
    %vm5541 = vcmask 1040384
    %v5542 = vsel %vm5541, %v5495, -inf
    %v5543 = vmax.f32 %v5540, %v5542
    %v5544 = vrot.slane %v5543, 4
    %v5545 = vmax.f32 %v5543, %v5544
    %v5546 = vrot.slane %v5545, 2
    %v5547 = vmax.f32 %v5545, %v5546
    %v5548 = vrot.slane %v5547, 1
    %v5549 = vmax.f32 %v5547, %v5548
    %5550 = vst [vmem:[%s13 + $0xc] sm:$0x1] %v5549
    %vm5551 = vcmask 1047555
    %v5552 = vsel %vm5551, %v5495, -inf
    %v5553 = vrot.slane %v5552, 4
    %v5554 = vmax.f32 %v5552, %v5553
    %v5555 = vrot.slane %v5554, 2
    %v5556 = vmax.f32 %v5554, %v5555
    %v5557 = vrot.slane %v5556, 1
    %v5558 = vmax.f32 %v5556, %v5557
    %5559 = vst [vmem:[%s13 + $0xd] sm:$0x1] %v5558
    %vm5560 = vcmask 1046530
    %v5561 = vsel %vm5560, %v5496, -inf
    %v5562 = vrot.slane %v5561, 4
    %v5563 = vmax.f32 %v5561, %v5562
    %v5564 = vrot.slane %v5563, 2
    %v5565 = vmax.f32 %v5563, %v5564
    %v5566 = vrot.slane %v5565, 1
    %v5567 = vmax.f32 %v5565, %v5566
    %5568 = vst [vmem:[%s13 + $0xe] sm:$0x1] %v5567
    %vm5569 = vcmask 1045505
    %v5570 = vsel %vm5569, %v5497, -inf
    %v5571 = vrot.slane %v5570, 4
    %v5572 = vmax.f32 %v5570, %v5571
    %v5573 = vrot.slane %v5572, 2
    %v5574 = vmax.f32 %v5572, %v5573
    %v5575 = vrot.slane %v5574, 1
    %v5576 = vmax.f32 %v5574, %v5575
    %5577 = vst [vmem:[%s13 + $0xf] sm:$0x1] %v5576
    %v5578 = vld [vmem:[%s0] sm:$0xff]
    %v5579 = vld [vmem:[%s0 + $0x8] sm:$0xf]
    %v5580 = vld [vmem:[%s0 + $0xc] sm:$0xff]
    %v5581 = vld [vmem:[%s0 + $0x14] sm:$0xf]
    %v5582 = vld [vmem:[%s0 + $0x18] sm:$0xff]
    %v5583 = vld [vmem:[%s0 + $0x20] sm:$0xf]
    %v5584 = vld [vmem:[%s0 + $0x24] sm:$0xff]
    %v5585 = vld [vmem:[%s0 + $0x2c] sm:$0xf]
    %v5586 = vld [vmem:[%s0 + $0x30] sm:$0xff]
    %v5587 = vld [vmem:[%s0 + $0x38] sm:$0xf]
    %v5588 = vld [vmem:[%s0 + $0x3c] sm:$0xff]
    %v5589 = vld [vmem:[%s0 + $0x44] sm:$0xf]
    %v5590 = vld [vmem:[%s0 + $0x48] sm:$0xff]
    %v5591 = vld [vmem:[%s0 + $0x50] sm:$0xf]
    %v5592 = vld [vmem:[%s0 + $0x54] sm:$0xff]
    %v5593 = vld [vmem:[%s0 + $0x5c] sm:$0xf]
    %v5594 = vld [vmem:[%s0 + $0x60] sm:$0xff]
    %v5595 = vld [vmem:[%s0 + $0x68] sm:$0xf]
    %v5596 = vld [vmem:[%s0 + $0x6c] sm:$0xff]
    %v5597 = vld [vmem:[%s0 + $0x74] sm:$0xf]
    %v5598 = vld [vmem:[%s0 + $0x78] sm:$0xff]
    %v5599 = vld [vmem:[%s0 + $0x80] sm:$0xf]
    %v5600 = vld [vmem:[%s0 + $0x84] sm:$0xff]
    %v5601 = vld [vmem:[%s0 + $0x8c] sm:$0xf]
    %v5602 = vld [vmem:[%s0 + $0x90] sm:$0xff]
    %v5603 = vld [vmem:[%s0 + $0x98] sm:$0xf]
    %v5604 = vld [vmem:[%s0 + $0x9c] sm:$0xff]
    %v5605 = vld [vmem:[%s0 + $0xa4] sm:$0xf]
    %v5606 = vld [vmem:[%s0 + $0xa8] sm:$0xff]
    %v5607 = vld [vmem:[%s0 + $0xb0] sm:$0xf]
    %v5608 = vld [vmem:[%s0 + $0xb4] sm:$0x33]
    %v5609 = vld [vmem:[%s0 + $0xbc] sm:$0x3]
    %v5610 = vld [vmem:[%s5] sm:$0xf]
    %v5611 = vld [vmem:[%s5 + $0x4] sm:$0xf]
    %v5612 = vld [vmem:[%s5 + $0x8] sm:$0xf]
    %v5613 = vld [vmem:[%s5 + $0xc] sm:$0xf]
    %v5614 = vld [vmem:[%s5 + $0x10] sm:$0xf]
    %v5615 = vld [vmem:[%s5 + $0x14] sm:$0xf]
    %v5616 = vld [vmem:[%s5 + $0x18] sm:$0xf]
    %v5617 = vld [vmem:[%s5 + $0x1c] sm:$0xf]
    %v5618 = vld [vmem:[%s5 + $0x20] sm:$0xf]
    %v5619 = vld [vmem:[%s5 + $0x24] sm:$0xf]
    %v5620 = vld [vmem:[%s5 + $0x28] sm:$0xf]
    %v5621 = vld [vmem:[%s5 + $0x2c] sm:$0xf]
    %v5622 = vld [vmem:[%s5 + $0x30] sm:$0xf]
    %v5623 = vld [vmem:[%s5 + $0x34] sm:$0xf]
    %v5624 = vld [vmem:[%s5 + $0x38] sm:$0xf]
    %v5625 = vld [vmem:[%s5 + $0x3c] sm:$0xf]
    %v5626 = vld [vmem:[%s5 + $0x40] sm:$0xf]
    %v5627 = vld [vmem:[%s5 + $0x44] sm:$0xf]
    %v5628 = vld [vmem:[%s5 + $0x48] sm:$0xf]
    %v5629 = vld [vmem:[%s5 + $0x4c] sm:$0xf]
    %v5630 = vld [vmem:[%s5 + $0x50] sm:$0xf]
    %v5631 = vld [vmem:[%s5 + $0x54] sm:$0xf]
    %v5632 = vld [vmem:[%s5 + $0x58] sm:$0xf]
    %v5633 = vld [vmem:[%s5 + $0x5c] sm:$0xf]
    %v5634 = vld [vmem:[%s5 + $0x60] sm:$0xf]
    %v5635 = vld [vmem:[%s5 + $0x64] sm:$0xf]
    %v5636 = vld [vmem:[%s5 + $0x68] sm:$0xf]
    %v5637 = vld [vmem:[%s5 + $0x6c] sm:$0xf]
    %v5638 = vld [vmem:[%s5 + $0x70] sm:$0xf]
    %v5639 = vld [vmem:[%s5 + $0x74] sm:$0xf]
    %v5640 = vld [vmem:[%s5 + $0x78] sm:$0xf]
    %v5641 = vld [vmem:[%s5 + $0x7c] sm:$0xf]
    %v5642 = vld [vmem:[%s5 + $0x80] sm:$0xf]
    %v5643 = vld [vmem:[%s5 + $0x84] sm:$0xf]
    %v5644 = vld [vmem:[%s5 + $0x88] sm:$0xf]
    %v5645 = vld [vmem:[%s5 + $0x8c] sm:$0xf]
    %v5646 = vld [vmem:[%s5 + $0x90] sm:$0xf]
    %v5647 = vld [vmem:[%s5 + $0x94] sm:$0x3]
    %v5648 = vld [vmem:[%s0 + $0xb4] sm:$0x77]
    %v5649 = vld [vmem:[%s0 + $0xbc] sm:$0x7]
    %s5650 = scalar_lea.vmem %s5, 152
    %v5651 = vld [vmem:[%s5650] sm:$0xf]
    %v5652 = vld [vmem:[%s5650 + $0x4] sm:$0xf]
    %v5653 = vld [vmem:[%s5650 + $0x8] sm:$0xf]
    %v5654 = vld [vmem:[%s5650 + $0xc] sm:$0xf]
    %v5655 = vld [vmem:[%s5650 + $0x10] sm:$0xf]
    %v5656 = vld [vmem:[%s5650 + $0x14] sm:$0xf]
    %v5657 = vld [vmem:[%s5650 + $0x18] sm:$0xf]
    %v5658 = vld [vmem:[%s5650 + $0x1c] sm:$0xf]
    %v5659 = vld [vmem:[%s5650 + $0x20] sm:$0xf]
    %v5660 = vld [vmem:[%s5650 + $0x24] sm:$0xf]
    %v5661 = vld [vmem:[%s5650 + $0x28] sm:$0xf]
    %v5662 = vld [vmem:[%s5650 + $0x2c] sm:$0xf]
    %v5663 = vld [vmem:[%s5650 + $0x30] sm:$0xf]
    %v5664 = vld [vmem:[%s5650 + $0x34] sm:$0xf]
    %v5665 = vld [vmem:[%s5650 + $0x38] sm:$0xf]
    %v5666 = vld [vmem:[%s5650 + $0x3c] sm:$0xf]
    %v5667 = vld [vmem:[%s5650 + $0x40] sm:$0xf]
    %v5668 = vld [vmem:[%s5650 + $0x44] sm:$0xf]
    %v5669 = vld [vmem:[%s5650 + $0x48] sm:$0xf]
    %v5670 = vld [vmem:[%s5650 + $0x4c] sm:$0xf]
    %v5671 = vld [vmem:[%s5650 + $0x50] sm:$0xf]
    %v5672 = vld [vmem:[%s5650 + $0x54] sm:$0xf]
    %v5673 = vld [vmem:[%s5650 + $0x58] sm:$0xf]
    %v5674 = vld [vmem:[%s5650 + $0x5c] sm:$0xf]
    %v5675 = vld [vmem:[%s5650 + $0x60] sm:$0xf]
    %v5676 = vld [vmem:[%s5650 + $0x64] sm:$0xf]
    %v5677 = vld [vmem:[%s5650 + $0x68] sm:$0xf]
    %v5678 = vld [vmem:[%s5650 + $0x6c] sm:$0xf]
    %v5679 = vld [vmem:[%s5650 + $0x70] sm:$0xf]
    %v5680 = vld [vmem:[%s5650 + $0x74] sm:$0xf]
    %v5681 = vld [vmem:[%s5650 + $0x78] sm:$0xf]
    %v5682 = vld [vmem:[%s5650 + $0x7c] sm:$0xf]
    %v5683 = vld [vmem:[%s5650 + $0x80] sm:$0xf]
    %v5684 = vld [vmem:[%s5650 + $0x84] sm:$0xf]
    %v5685 = vld [vmem:[%s5650 + $0x88] sm:$0xf]
    %v5686 = vld [vmem:[%s5650 + $0x8c] sm:$0xf]
    %v5687 = vld [vmem:[%s5650 + $0x90] sm:$0xf]
    %v5688 = vld [vmem:[%s5650 + $0x94] sm:$0x3]
    %v5721 = vunpack.c.l.b16 %v5578
    %v5722 = vunpack.c.h.b16 %v5578
    %v5723 = vunpack.c.l.b16 %v5579
    %v5724 = vunpack.c.l.b16 %v5580
    %v5725 = vunpack.c.h.b16 %v5580
    %v5726 = vunpack.c.l.b16 %v5581
    %v5727 = vunpack.c.l.b16 %v5582
    %v5728 = vunpack.c.h.b16 %v5582
    %v5729 = vunpack.c.l.b16 %v5583
    %v5730 = vunpack.c.l.b16 %v5584
    %v5731 = vunpack.c.h.b16 %v5584
    %v5732 = vunpack.c.l.b16 %v5585
    %v5733 = vunpack.c.l.b16 %v5586
    %v5734 = vunpack.c.h.b16 %v5586
    %v5735 = vunpack.c.l.b16 %v5587
    %v5736 = vunpack.c.l.b16 %v5588
    %v5737 = vunpack.c.h.b16 %v5588
    %v5738 = vunpack.c.l.b16 %v5589
    %v5739 = vunpack.c.l.b16 %v5590
    %v5740 = vunpack.c.h.b16 %v5590
    %v5741 = vunpack.c.l.b16 %v5591
    %v5742 = vunpack.c.l.b16 %v5592
    %v5743 = vunpack.c.h.b16 %v5592
    %v5744 = vunpack.c.l.b16 %v5593
    %v5745 = vunpack.c.l.b16 %v5594
    %v5746 = vunpack.c.h.b16 %v5594
    %v5747 = vunpack.c.l.b16 %v5595
    %v5748 = vunpack.c.l.b16 %v5596
    %v5749 = vunpack.c.h.b16 %v5596
    %v5750 = vunpack.c.l.b16 %v5597
    %v5751 = vunpack.c.l.b16 %v5598
    %v5752 = vunpack.c.h.b16 %v5598
    %v5753 = vunpack.c.l.b16 %v5599
    %v5754 = vunpack.c.l.b16 %v5600
    %v5755 = vunpack.c.h.b16 %v5600
    %v5756 = vunpack.c.l.b16 %v5601
    %v5757 = vunpack.c.l.b16 %v5602
    %v5758 = vunpack.c.h.b16 %v5602
    %v5759 = vunpack.c.l.b16 %v5603
    %v5760 = vunpack.c.l.b16 %v5604
    %v5761 = vunpack.c.h.b16 %v5604
    %v5762 = vunpack.c.l.b16 %v5605
    %v5763 = vunpack.c.l.b16 %v5606
    %v5764 = vunpack.c.h.b16 %v5606
    %v5765 = vunpack.c.l.b16 %v5607
    %v5766 = vunpack.c.l.b16 %v5648
    %v5767 = vunpack.c.h.b16 %v5648
    %v5768 = vunpack.c.l.b16 %v5649
    %v5769 = vpack.c.b16 %v5724, %v5721
    %v5770 = vpack.c.b16 %v5725, %v5722
    %v5771 = vpack.c.b16 %v5726, %v5723
    %v5772 = vpack.c.b16 %v5730, %v5727
    %v5773 = vpack.c.b16 %v5731, %v5728
    %v5774 = vpack.c.b16 %v5732, %v5729
    %v5775 = vpack.c.b16 %v5736, %v5733
    %v5776 = vpack.c.b16 %v5737, %v5734
    %v5777 = vpack.c.b16 %v5738, %v5735
    %v5778 = vpack.c.b16 %v5742, %v5739
    %v5779 = vpack.c.b16 %v5743, %v5740
    %v5780 = vpack.c.b16 %v5744, %v5741
    %v5781 = vpack.c.b16 %v5748, %v5745
    %v5782 = vpack.c.b16 %v5749, %v5746
    %v5783 = vpack.c.b16 %v5750, %v5747
    %v5784 = vpack.c.b16 %v5754, %v5751
    %v5785 = vpack.c.b16 %v5755, %v5752
    %v5786 = vpack.c.b16 %v5756, %v5753
    %v5787 = vpack.c.b16 %v5760, %v5757
    %v5788 = vpack.c.b16 %v5761, %v5758
    %v5789 = vpack.c.b16 %v5762, %v5759
    %v5790 = vpack.c.b16 %v5766, %v5763
    %v5791 = vpack.c.b16 %v5767, %v5764
    %v5792 = vpack.c.b16 %v5768, %v5765
    %v5794 = vshrl.u32 %v5769, 16
    %v5796 = vshll.u32 %v5769, 16
    %v5798 = vrot.slane %v5796, 1
    %v5799 = vor.u32 %v5794, %v5798
    %v5801 = vshll.u32 %v5772, 16
    %v5803 = vrot.slane %v5801, 1
    %v5804 = vsel %vm734, %v5799, %v5803
    %v5806 = vshrl.u32 %v5770, 16
    %v5808 = vshll.u32 %v5770, 16
    %v5810 = vrot.slane %v5808, 1
    %v5811 = vor.u32 %v5806, %v5810
    %v5813 = vshll.u32 %v5773, 16
    %v5815 = vrot.slane %v5813, 1
    %v5816 = vsel %vm734, %v5811, %v5815
    %v5818 = vshrl.u32 %v5771, 16
    %v5820 = vshll.u32 %v5771, 16
    %v5822 = vrot.slane %v5820, 1
    %v5823 = vor.u32 %v5818, %v5822
    %v5825 = vshll.u32 %v5774, 16
    %v5827 = vrot.slane %v5825, 1
    %v5828 = vsel %vm734, %v5823, %v5827
    %v5829 = vshrl.u32 %v5772, 16
    %v5831 = vor.u32 %v5829, %v5803
    %v5833 = vshll.u32 %v5775, 16
    %v5835 = vrot.slane %v5833, 1
    %v5836 = vsel %vm734, %v5831, %v5835
    %v5837 = vshrl.u32 %v5773, 16
    %v5839 = vor.u32 %v5837, %v5815
    %v5841 = vshll.u32 %v5776, 16
    %v5843 = vrot.slane %v5841, 1
    %v5844 = vsel %vm734, %v5839, %v5843
    %v5845 = vshrl.u32 %v5774, 16
    %v5847 = vor.u32 %v5845, %v5827
    %v5849 = vshll.u32 %v5777, 16
    %v5851 = vrot.slane %v5849, 1
    %v5852 = vsel %vm734, %v5847, %v5851
    %v5853 = vshrl.u32 %v5775, 16
    %v5855 = vor.u32 %v5853, %v5835
    %v5857 = vshll.u32 %v5778, 16
    %v5859 = vrot.slane %v5857, 1
    %v5860 = vsel %vm734, %v5855, %v5859
    %v5861 = vshrl.u32 %v5776, 16
    %v5863 = vor.u32 %v5861, %v5843
    %v5865 = vshll.u32 %v5779, 16
    %v5867 = vrot.slane %v5865, 1
    %v5868 = vsel %vm734, %v5863, %v5867
    %v5869 = vshrl.u32 %v5777, 16
    %v5871 = vor.u32 %v5869, %v5851
    %v5873 = vshll.u32 %v5780, 16
    %v5875 = vrot.slane %v5873, 1
    %v5876 = vsel %vm734, %v5871, %v5875
    %v5877 = vshrl.u32 %v5778, 16
    %v5879 = vor.u32 %v5877, %v5859
    %v5881 = vshll.u32 %v5781, 16
    %v5883 = vrot.slane %v5881, 1
    %v5884 = vsel %vm734, %v5879, %v5883
    %v5885 = vshrl.u32 %v5779, 16
    %v5887 = vor.u32 %v5885, %v5867
    %v5889 = vshll.u32 %v5782, 16
    %v5891 = vrot.slane %v5889, 1
    %v5892 = vsel %vm734, %v5887, %v5891
    %v5893 = vshrl.u32 %v5780, 16
    %v5895 = vor.u32 %v5893, %v5875
    %v5897 = vshll.u32 %v5783, 16
    %v5899 = vrot.slane %v5897, 1
    %v5900 = vsel %vm734, %v5895, %v5899
    %v5901 = vshrl.u32 %v5781, 16
    %v5903 = vor.u32 %v5901, %v5883
    %v5905 = vshll.u32 %v5784, 16
    %v5907 = vrot.slane %v5905, 1
    %v5908 = vsel %vm734, %v5903, %v5907
    %v5909 = vshrl.u32 %v5782, 16
    %v5911 = vor.u32 %v5909, %v5891
    %v5913 = vshll.u32 %v5785, 16
    %v5915 = vrot.slane %v5913, 1
    %v5916 = vsel %vm734, %v5911, %v5915
    %v5917 = vshrl.u32 %v5783, 16
    %v5919 = vor.u32 %v5917, %v5899
    %v5921 = vshll.u32 %v5786, 16
    %v5923 = vrot.slane %v5921, 1
    %v5924 = vsel %vm734, %v5919, %v5923
    %v5925 = vshrl.u32 %v5784, 16
    %v5927 = vor.u32 %v5925, %v5907
    %v5929 = vshll.u32 %v5787, 16
    %v5931 = vrot.slane %v5929, 1
    %v5932 = vsel %vm734, %v5927, %v5931
    %v5933 = vshrl.u32 %v5785, 16
    %v5935 = vor.u32 %v5933, %v5915
    %v5937 = vshll.u32 %v5788, 16
    %v5939 = vrot.slane %v5937, 1
    %v5940 = vsel %vm734, %v5935, %v5939
    %v5941 = vshrl.u32 %v5786, 16
    %v5943 = vor.u32 %v5941, %v5923
    %v5945 = vshll.u32 %v5789, 16
    %v5947 = vrot.slane %v5945, 1
    %v5948 = vsel %vm734, %v5943, %v5947
    %v5949 = vshrl.u32 %v5787, 16
    %v5951 = vor.u32 %v5949, %v5931
    %v5953 = vshll.u32 %v5790, 16
    %v5955 = vrot.slane %v5953, 1
    %v5956 = vsel %vm734, %v5951, %v5955
    %v5957 = vshrl.u32 %v5788, 16
    %v5959 = vor.u32 %v5957, %v5939
    %v5961 = vshll.u32 %v5791, 16
    %v5963 = vrot.slane %v5961, 1
    %v5964 = vsel %vm734, %v5959, %v5963
    %v5965 = vshrl.u32 %v5789, 16
    %v5967 = vor.u32 %v5965, %v5947
    %v5969 = vshll.u32 %v5792, 16
    %v5971 = vrot.slane %v5969, 1
    %v5972 = vsel %vm734, %v5967, %v5971
    %v5973 = vshrl.u32 %v5790, 16
    %v5975 = vor.u32 %v5973, %v5955
    %v5976 = vshrl.u32 %v5791, 16
    %v5978 = vor.u32 %v5976, %v5963
    %v5979 = vshrl.u32 %v5792, 16
    %v5981 = vor.u32 %v5979, %v5971
    %v6036 = vunpack.c.l.b16 %v5651
    %v6037 = vunpack.c.l.b16 %v5652
    %v6038 = vunpack.c.l.b16 %v5653
    %v6039 = vunpack.c.l.b16 %v5654
    %v6040 = vunpack.c.l.b16 %v5655
    %v6041 = vunpack.c.l.b16 %v5656
    %v6042 = vunpack.c.l.b16 %v5657
    %v6043 = vunpack.c.l.b16 %v5658
    %v6044 = vunpack.c.l.b16 %v5659
    %v6045 = vunpack.c.l.b16 %v5660
    %v6046 = vunpack.c.l.b16 %v5661
    %v6047 = vunpack.c.l.b16 %v5662
    %v6048 = vunpack.c.l.b16 %v5663
    %v6049 = vunpack.c.l.b16 %v5664
    %v6050 = vunpack.c.l.b16 %v5665
    %v6051 = vunpack.c.l.b16 %v5666
    %v6052 = vunpack.c.l.b16 %v5667
    %v6053 = vunpack.c.l.b16 %v5668
    %v6054 = vunpack.c.l.b16 %v5669
    %v6055 = vunpack.c.l.b16 %v5670
    %v6056 = vunpack.c.l.b16 %v5671
    %v6057 = vunpack.c.l.b16 %v5672
    %v6058 = vunpack.c.l.b16 %v5673
    %v6059 = vunpack.c.l.b16 %v5674
    %v6060 = vunpack.c.l.b16 %v5675
    %v6061 = vunpack.c.l.b16 %v5676
    %v6062 = vunpack.c.l.b16 %v5677
    %v6063 = vunpack.c.l.b16 %v5678
    %v6064 = vunpack.c.l.b16 %v5679
    %v6065 = vunpack.c.l.b16 %v5680
    %v6066 = vunpack.c.l.b16 %v5681
    %v6067 = vunpack.c.l.b16 %v5682
    %v6068 = vunpack.c.l.b16 %v5683
    %v6069 = vunpack.c.l.b16 %v5684
    %v6070 = vunpack.c.l.b16 %v5685
    %v6071 = vunpack.c.l.b16 %v5686
    %v6072 = vunpack.c.l.b16 %v5687
    %v6073 = vunpack.c.l.b16 %v5688
    %v6074 = vpack.c.b16 %v6037, %v6036
    %v6075 = vpack.c.b16 %v6039, %v6038
    %v6076 = vpack.c.b16 %v6041, %v6040
    %v6077 = vpack.c.b16 %v6043, %v6042
    %v6078 = vpack.c.b16 %v6045, %v6044
    %v6079 = vpack.c.b16 %v6047, %v6046
    %v6080 = vpack.c.b16 %v6049, %v6048
    %v6081 = vpack.c.b16 %v6051, %v6050
    %v6082 = vpack.c.b16 %v6053, %v6052
    %v6083 = vpack.c.b16 %v6055, %v6054
    %v6084 = vpack.c.b16 %v6057, %v6056
    %v6085 = vpack.c.b16 %v6059, %v6058
    %v6086 = vpack.c.b16 %v6061, %v6060
    %v6087 = vpack.c.b16 %v6063, %v6062
    %v6088 = vpack.c.b16 %v6065, %v6064
    %v6089 = vpack.c.b16 %v6067, %v6066
    %v6090 = vpack.c.b16 %v6069, %v6068
    %v6091 = vpack.c.b16 %v6071, %v6070
    %v6092 = vpack.c.b16 %v6073, %v6072
    %v6112 = vsel %vm503, %v5828, 0
    %v6115 = vsel %vm503, %v5852, 0
    %v6118 = vsel %vm503, %v5876, 0
    %v6121 = vsel %vm503, %v5900, 0
    %v6124 = vsel %vm503, %v5924, 0
    %v6127 = vsel %vm503, %v5948, 0
    %v6130 = vsel %vm503, %v5972, 0
    %v6133 = vsel %vm503, %v5981, 0
    %v6136 = vsel %vm528, %v6092, 0
    %6138 = vmatprep.subr.bf16.mxu0 0
    %6139 = vmatpush1.bf16.msra.mxu0 %v6074
    %6140 = vmatprep.subr.bf16.mxu0 0
    %6141 = vmatpush1.bf16.msra.mxu0 %v6075
    %6142 = vmatprep.subr.bf16.mxu0 0
    %6143 = vmatpush1.bf16.msra.mxu0 %v6076
    %6144 = vmatprep.subr.bf16.mxu0 0
    %6145 = vmatpush1.bf16.msra.mxu0 %v6077
    %6146 = vmatprep.subr.bf16.mxu0 0
    %6147 = vmatpush1.bf16.msra.mxu0 %v6078
    %6148 = vmatprep.subr.bf16.mxu0 0
    %6149 = vmatpush1.bf16.msra.mxu0 %v6079
    %6150 = vmatprep.subr.bf16.mxu0 0
    %6151 = vmatpush1.bf16.msra.mxu0 %v6080
    %6152 = vmatprep.subr.bf16.mxu0 0
    %6153 = vmatpush1.bf16.msra.mxu0 %v6081
    %6154 = vmatprep.subr.bf16.mxu0 0
    %6155 = vmatpush1.bf16.msra.mxu0 %v6082
    %6156 = vmatprep.subr.bf16.mxu0 0
    %6157 = vmatpush1.bf16.msra.mxu0 %v6083
    %6158 = vmatprep.subr.bf16.mxu0 0
    %6159 = vmatpush1.bf16.msra.mxu0 %v6084
    %6160 = vmatprep.subr.bf16.mxu0 0
    %6161 = vmatpush1.bf16.msra.mxu0 %v6085
    %6162 = vmatprep.subr.bf16.mxu0 0
    %6163 = vmatpush1.bf16.msra.mxu0 %v6086
    %6164 = vmatprep.subr.bf16.mxu0 0
    %6165 = vmatpush1.bf16.msra.mxu0 %v6087
    %6166 = vmatprep.subr.bf16.mxu0 0
    %6167 = vmatpush1.bf16.msra.mxu0 %v6088
    %6168 = vmatprep.subr.bf16.mxu0 0
    %6169 = vmatpush1.bf16.msra.mxu0 %v6089
    %6170 = vmatprep.mubr.bf16.mxu0 %v5816
    %6171 = vmatmul.mubr.bf16.gmra.mrb[0].mxu0 %v5804
    %v6172 = vpop.f32.mrb[0].mxu0
    %v6173 = vadd.f32 0.0, %v6172
    %v6174 = vpop.f32.mrb[0].mxu0
    %v6175 = vpop.f32.mrb[0].mxu0
    %v6176 = vadd.f32 0.0, %v6175
    %v6177 = vpop.f32.mrb[0].mxu0
    %6178 = vmatprep.mubr.bf16.mxu0 %v5844
    %6179 = vmatmul.mubr.bf16.gmra.mrb[0].mxu0 %v5836
    %v6180 = vpop.f32.mrb[0].mxu0
    %v6181 = vadd.f32 0.0, %v6180
    %v6182 = vpop.f32.mrb[0].mxu0
    %v6183 = vpop.f32.mrb[0].mxu0
    %v6184 = vadd.f32 0.0, %v6183
    %v6185 = vpop.f32.mrb[0].mxu0
    %6186 = vmatprep.mubr.bf16.mxu0 %v5868
    %6187 = vmatmul.mubr.bf16.gmra.mrb[0].mxu0 %v5860
    %v6188 = vpop.f32.mrb[0].mxu0
    %v6189 = vadd.f32 0.0, %v6188
    %v6190 = vpop.f32.mrb[0].mxu0
    %v6191 = vpop.f32.mrb[0].mxu0
    %v6192 = vadd.f32 0.0, %v6191
    %v6193 = vpop.f32.mrb[0].mxu0
    %6194 = vmatprep.mubr.bf16.mxu0 %v5892
    %6195 = vmatmul.mubr.bf16.gmra.mrb[0].mxu0 %v5884
    %v6196 = vpop.f32.mrb[0].mxu0
    %v6197 = vadd.f32 0.0, %v6196
    %v6198 = vpop.f32.mrb[0].mxu0
    %v6199 = vpop.f32.mrb[0].mxu0
    %v6200 = vadd.f32 0.0, %v6199
    %v6201 = vpop.f32.mrb[0].mxu0
    %6202 = vmatprep.mubr.bf16.mxu0 %v5916
    %6203 = vmatmul.mubr.bf16.gmra.mrb[0].mxu0 %v5908
    %v6204 = vpop.f32.mrb[0].mxu0
    %v6205 = vadd.f32 0.0, %v6204
    %v6206 = vpop.f32.mrb[0].mxu0
    %v6207 = vpop.f32.mrb[0].mxu0
    %v6208 = vadd.f32 0.0, %v6207
    %v6209 = vpop.f32.mrb[0].mxu0
    %6210 = vmatprep.mubr.bf16.mxu0 %v5940
    %6211 = vmatmul.mubr.bf16.gmra.mrb[0].mxu0 %v5932
    %v6212 = vpop.f32.mrb[0].mxu0
    %v6213 = vadd.f32 0.0, %v6212
    %v6214 = vpop.f32.mrb[0].mxu0
    %v6215 = vpop.f32.mrb[0].mxu0
    %v6216 = vadd.f32 0.0, %v6215
    %v6217 = vpop.f32.mrb[0].mxu0
    %6218 = vmatprep.mubr.bf16.mxu0 %v5964
    %6219 = vmatmul.mubr.bf16.gmra.mrb[0].mxu0 %v5956
    %v6220 = vpop.f32.mrb[0].mxu0
    %v6221 = vadd.f32 0.0, %v6220
    %v6222 = vpop.f32.mrb[0].mxu0
    %v6223 = vpop.f32.mrb[0].mxu0
    %v6224 = vadd.f32 0.0, %v6223
    %v6225 = vpop.f32.mrb[0].mxu0
    %6226 = vmatprep.mubr.bf16.mxu0 %v5978
    %6227 = vmatmul.mubr.bf16.gmra.mrb[0].mxu0 %v5975
    %v6228 = vpop.f32.mrb[0].mxu0
    %v6229 = vadd.f32 0.0, %v6228
    %v6230 = vpop.f32.mrb[0].mxu0
    %v6231 = vpop.f32.mrb[0].mxu0
    %v6232 = vadd.f32 0.0, %v6231
    %v6233 = vpop.f32.mrb[0].mxu0
    %6234 = vdwg.mxu0
    %6235 = vmatprep.subr.bf16.mxu0 0
    %6236 = vmatpush1.bf16.msra.mxu0 %v6090
    %6237 = vmatprep.subr.bf16.mxu0 0
    %6238 = vmatpush1.bf16.msra.mxu0 %v6091
    %6239 = vmatprep.subr.bf16.mxu0 0
    %6240 = vmatpush1.bf16.msra.mxu0 %v6136
    %6241 = vmatprep.subr.bf16.mxu0 0
    %6242 = vmatpush1.bf16.msra.mxu0 0
    %6243 = vmatprep.subr.bf16.mxu0 0
    %6244 = vmatpush1.bf16.msra.mxu0 0
    %6245 = vmatprep.subr.bf16.mxu0 0
    %6246 = vmatpush1.bf16.msra.mxu0 0
    %6247 = vmatprep.subr.bf16.mxu0 0
    %6248 = vmatpush1.bf16.msra.mxu0 0
    %6249 = vmatprep.subr.bf16.mxu0 0
    %6250 = vmatpush1.bf16.msra.mxu0 0
    %6251 = vmatprep.subr.bf16.mxu0 0
    %6252 = vmatpush1.bf16.msra.mxu0 0
    %6253 = vmatprep.subr.bf16.mxu0 0
    %6254 = vmatpush1.bf16.msra.mxu0 0
    %6255 = vmatprep.subr.bf16.mxu0 0
    %6256 = vmatpush1.bf16.msra.mxu0 0
    %6257 = vmatprep.subr.bf16.mxu0 0
    %6258 = vmatpush1.bf16.msra.mxu0 0
    %6259 = vmatprep.subr.bf16.mxu0 0
    %6260 = vmatpush1.bf16.msra.mxu0 0
    %6261 = vmatprep.subr.bf16.mxu0 0
    %6262 = vmatpush1.bf16.msra.mxu0 0
    %6263 = vmatprep.subr.bf16.mxu0 0
    %6264 = vmatpush1.bf16.msra.mxu0 0
    %6265 = vmatprep.subr.bf16.mxu0 0
    %6266 = vmatpush1.bf16.msra.mxu0 0
    %6267 = vmatprep.mubr.bf16.mxu0 0
    %6268 = vmatmul.mubr.bf16.gmra.mrb[0].mxu0 %v6112
    %v6269 = vpop.f32.mrb[0].mxu0
    %v6270 = vadd.f32 %v6173, %v6269
    %v6271 = vpop.f32.mrb[0].mxu0
    %v6272 = vpop.f32.mrb[0].mxu0
    %v6273 = vadd.f32 %v6176, %v6272
    %v6274 = vpop.f32.mrb[0].mxu0
    %6275 = vmatprep.mubr.bf16.mxu0 0
    %6276 = vmatmul.mubr.bf16.gmra.mrb[0].mxu0 %v6115
    %v6277 = vpop.f32.mrb[0].mxu0
    %v6278 = vadd.f32 %v6181, %v6277
    %v6279 = vpop.f32.mrb[0].mxu0
    %v6280 = vpop.f32.mrb[0].mxu0
    %v6281 = vadd.f32 %v6184, %v6280
    %v6282 = vpop.f32.mrb[0].mxu0
    %6283 = vmatprep.mubr.bf16.mxu0 0
    %6284 = vmatmul.mubr.bf16.gmra.mrb[0].mxu0 %v6118
    %v6285 = vpop.f32.mrb[0].mxu0
    %v6286 = vadd.f32 %v6189, %v6285
    %v6287 = vpop.f32.mrb[0].mxu0
    %v6288 = vpop.f32.mrb[0].mxu0
    %v6289 = vadd.f32 %v6192, %v6288
    %v6290 = vpop.f32.mrb[0].mxu0
    %6291 = vmatprep.mubr.bf16.mxu0 0
    %6292 = vmatmul.mubr.bf16.gmra.mrb[0].mxu0 %v6121
    %v6293 = vpop.f32.mrb[0].mxu0
    %v6294 = vadd.f32 %v6197, %v6293
    %v6295 = vpop.f32.mrb[0].mxu0
    %v6296 = vpop.f32.mrb[0].mxu0
    %v6297 = vadd.f32 %v6200, %v6296
    %v6298 = vpop.f32.mrb[0].mxu0
    %6299 = vmatprep.mubr.bf16.mxu0 0
    %6300 = vmatmul.mubr.bf16.gmra.mrb[0].mxu0 %v6124
    %v6301 = vpop.f32.mrb[0].mxu0
    %v6302 = vadd.f32 %v6205, %v6301
    %v6303 = vpop.f32.mrb[0].mxu0
    %v6304 = vpop.f32.mrb[0].mxu0
    %v6305 = vadd.f32 %v6208, %v6304
    %v6306 = vpop.f32.mrb[0].mxu0
    %6307 = vmatprep.mubr.bf16.mxu0 0
    %6308 = vmatmul.mubr.bf16.gmra.mrb[0].mxu0 %v6127
    %v6309 = vpop.f32.mrb[0].mxu0
    %v6310 = vadd.f32 %v6213, %v6309
    %v6311 = vpop.f32.mrb[0].mxu0
    %v6312 = vpop.f32.mrb[0].mxu0
    %v6313 = vadd.f32 %v6216, %v6312
    %v6314 = vpop.f32.mrb[0].mxu0
    %6315 = vmatprep.mubr.bf16.mxu0 0
    %6316 = vmatmul.mubr.bf16.gmra.mrb[0].mxu0 %v6130
    %v6317 = vpop.f32.mrb[0].mxu0
    %v6318 = vadd.f32 %v6221, %v6317
    %v6319 = vpop.f32.mrb[0].mxu0
    %v6320 = vpop.f32.mrb[0].mxu0
    %v6321 = vadd.f32 %v6224, %v6320
    %v6322 = vpop.f32.mrb[0].mxu0
    %6323 = vmatprep.mubr.bf16.mxu0 0
    %6324 = vmatmul.mubr.bf16.gmra.mrb[0].mxu0 %v6133
    %v6325 = vpop.f32.mrb[0].mxu0
    %v6326 = vadd.f32 %v6229, %v6325
    %v6327 = vpop.f32.mrb[0].mxu0
    %v6328 = vpop.f32.mrb[0].mxu0
    %v6329 = vadd.f32 %v6232, %v6328
    %v6330 = vpop.f32.mrb[0].mxu0
    %6331 = vdwg.mxu0
    %v6334 = vunpack.c.l.b16 %v5608
    %v6335 = vunpack.c.h.b16 %v5608
    %v6336 = vunpack.c.l.b16 %v5609
    %v6337 = vpack.c.b16 %v6334, %v5763
    %v6338 = vpack.c.b16 %v6335, %v5764
    %v6339 = vpack.c.b16 %v6336, %v5765
    %v6394 = vunpack.c.l.b16 %v5610
    %v6395 = vunpack.c.l.b16 %v5611
    %v6396 = vunpack.c.l.b16 %v5612
    %v6397 = vunpack.c.l.b16 %v5613
    %v6398 = vunpack.c.l.b16 %v5614
    %v6399 = vunpack.c.l.b16 %v5615
    %v6400 = vunpack.c.l.b16 %v5616
    %v6401 = vunpack.c.l.b16 %v5617
    %v6402 = vunpack.c.l.b16 %v5618
    %v6403 = vunpack.c.l.b16 %v5619
    %v6404 = vunpack.c.l.b16 %v5620
    %v6405 = vunpack.c.l.b16 %v5621
    %v6406 = vunpack.c.l.b16 %v5622
    %v6407 = vunpack.c.l.b16 %v5623
    %v6408 = vunpack.c.l.b16 %v5624
    %v6409 = vunpack.c.l.b16 %v5625
    %v6410 = vunpack.c.l.b16 %v5626
    %v6411 = vunpack.c.l.b16 %v5627
    %v6412 = vunpack.c.l.b16 %v5628
    %v6413 = vunpack.c.l.b16 %v5629
    %v6414 = vunpack.c.l.b16 %v5630
    %v6415 = vunpack.c.l.b16 %v5631
    %v6416 = vunpack.c.l.b16 %v5632
    %v6417 = vunpack.c.l.b16 %v5633
    %v6418 = vunpack.c.l.b16 %v5634
    %v6419 = vunpack.c.l.b16 %v5635
    %v6420 = vunpack.c.l.b16 %v5636
    %v6421 = vunpack.c.l.b16 %v5637
    %v6422 = vunpack.c.l.b16 %v5638
    %v6423 = vunpack.c.l.b16 %v5639
    %v6424 = vunpack.c.l.b16 %v5640
    %v6425 = vunpack.c.l.b16 %v5641
    %v6426 = vunpack.c.l.b16 %v5642
    %v6427 = vunpack.c.l.b16 %v5643
    %v6428 = vunpack.c.l.b16 %v5644
    %v6429 = vunpack.c.l.b16 %v5645
    %v6430 = vunpack.c.l.b16 %v5646
    %v6431 = vunpack.c.l.b16 %v5647
    %v6432 = vpack.c.b16 %v6395, %v6394
    %v6433 = vpack.c.b16 %v6397, %v6396
    %v6434 = vpack.c.b16 %v6399, %v6398
    %v6435 = vpack.c.b16 %v6401, %v6400
    %v6436 = vpack.c.b16 %v6403, %v6402
    %v6437 = vpack.c.b16 %v6405, %v6404
    %v6438 = vpack.c.b16 %v6407, %v6406
    %v6439 = vpack.c.b16 %v6409, %v6408
    %v6440 = vpack.c.b16 %v6411, %v6410
    %v6441 = vpack.c.b16 %v6413, %v6412
    %v6442 = vpack.c.b16 %v6415, %v6414
    %v6443 = vpack.c.b16 %v6417, %v6416
    %v6444 = vpack.c.b16 %v6419, %v6418
    %v6445 = vpack.c.b16 %v6421, %v6420
    %v6446 = vpack.c.b16 %v6423, %v6422
    %v6447 = vpack.c.b16 %v6425, %v6424
    %v6448 = vpack.c.b16 %v6427, %v6426
    %v6449 = vpack.c.b16 %v6429, %v6428
    %v6450 = vpack.c.b16 %v6431, %v6430
    %v6469 = vsel %vm503, %v5771, 0
    %v6471 = vsel %vm503, %v5774, 0
    %v6473 = vsel %vm503, %v5777, 0
    %v6475 = vsel %vm503, %v5780, 0
    %v6477 = vsel %vm503, %v5783, 0
    %v6479 = vsel %vm503, %v5786, 0
    %v6481 = vsel %vm503, %v5789, 0
    %v6484 = vsel %vm503, %v6339, 0
    %v6487 = vsel %vm528, %v6450, 0
    %6489 = vmatprep.subr.bf16.mxu0 0
    %6490 = vmatpush1.bf16.msra.mxu0 %v6432
    %6491 = vmatprep.subr.bf16.mxu0 0
    %6492 = vmatpush1.bf16.msra.mxu0 %v6433
    %6493 = vmatprep.subr.bf16.mxu0 0
    %6494 = vmatpush1.bf16.msra.mxu0 %v6434
    %6495 = vmatprep.subr.bf16.mxu0 0
    %6496 = vmatpush1.bf16.msra.mxu0 %v6435
    %6497 = vmatprep.subr.bf16.mxu0 0
    %6498 = vmatpush1.bf16.msra.mxu0 %v6436
    %6499 = vmatprep.subr.bf16.mxu0 0
    %6500 = vmatpush1.bf16.msra.mxu0 %v6437
    %6501 = vmatprep.subr.bf16.mxu0 0
    %6502 = vmatpush1.bf16.msra.mxu0 %v6438
    %6503 = vmatprep.subr.bf16.mxu0 0
    %6504 = vmatpush1.bf16.msra.mxu0 %v6439
    %6505 = vmatprep.subr.bf16.mxu0 0
    %6506 = vmatpush1.bf16.msra.mxu0 %v6440
    %6507 = vmatprep.subr.bf16.mxu0 0
    %6508 = vmatpush1.bf16.msra.mxu0 %v6441
    %6509 = vmatprep.subr.bf16.mxu0 0
    %6510 = vmatpush1.bf16.msra.mxu0 %v6442
    %6511 = vmatprep.subr.bf16.mxu0 0
    %6512 = vmatpush1.bf16.msra.mxu0 %v6443
    %6513 = vmatprep.subr.bf16.mxu0 0
    %6514 = vmatpush1.bf16.msra.mxu0 %v6444
    %6515 = vmatprep.subr.bf16.mxu0 0
    %6516 = vmatpush1.bf16.msra.mxu0 %v6445
    %6517 = vmatprep.subr.bf16.mxu0 0
    %6518 = vmatpush1.bf16.msra.mxu0 %v6446
    %6519 = vmatprep.subr.bf16.mxu0 0
    %6520 = vmatpush1.bf16.msra.mxu0 %v6447
    %6521 = vmatprep.mubr.bf16.mxu0 %v5770
    %6522 = vmatmul.mubr.bf16.gmra.mrb[0].mxu0 %v5769
    %v6523 = vpop.f32.mrb[0].mxu0
    %v6524 = vadd.f32 %v6270, %v6523
    %v6525 = vpop.f32.mrb[0].mxu0
    %v6526 = vpop.f32.mrb[0].mxu0
    %v6527 = vadd.f32 %v6273, %v6526
    %v6528 = vpop.f32.mrb[0].mxu0
    %6529 = vmatprep.mubr.bf16.mxu0 %v5773
    %6530 = vmatmul.mubr.bf16.gmra.mrb[0].mxu0 %v5772
    %v6531 = vpop.f32.mrb[0].mxu0
    %v6532 = vadd.f32 %v6278, %v6531
    %v6533 = vpop.f32.mrb[0].mxu0
    %v6534 = vpop.f32.mrb[0].mxu0
    %v6535 = vadd.f32 %v6281, %v6534
    %v6536 = vpop.f32.mrb[0].mxu0
    %6537 = vmatprep.mubr.bf16.mxu0 %v5776
    %6538 = vmatmul.mubr.bf16.gmra.mrb[0].mxu0 %v5775
    %v6539 = vpop.f32.mrb[0].mxu0
    %v6540 = vadd.f32 %v6286, %v6539
    %v6541 = vpop.f32.mrb[0].mxu0
    %v6542 = vpop.f32.mrb[0].mxu0
    %v6543 = vadd.f32 %v6289, %v6542
    %v6544 = vpop.f32.mrb[0].mxu0
    %6545 = vmatprep.mubr.bf16.mxu0 %v5779
    %6546 = vmatmul.mubr.bf16.gmra.mrb[0].mxu0 %v5778
    %v6547 = vpop.f32.mrb[0].mxu0
    %v6548 = vadd.f32 %v6294, %v6547
    %v6549 = vpop.f32.mrb[0].mxu0
    %v6550 = vpop.f32.mrb[0].mxu0
    %v6551 = vadd.f32 %v6297, %v6550
    %v6552 = vpop.f32.mrb[0].mxu0
    %6553 = vmatprep.mubr.bf16.mxu0 %v5782
    %6554 = vmatmul.mubr.bf16.gmra.mrb[0].mxu0 %v5781
    %v6555 = vpop.f32.mrb[0].mxu0
    %v6556 = vadd.f32 %v6302, %v6555
    %v6557 = vpop.f32.mrb[0].mxu0
    %v6558 = vpop.f32.mrb[0].mxu0
    %v6559 = vadd.f32 %v6305, %v6558
    %v6560 = vpop.f32.mrb[0].mxu0
    %6561 = vmatprep.mubr.bf16.mxu0 %v5785
    %6562 = vmatmul.mubr.bf16.gmra.mrb[0].mxu0 %v5784
    %v6563 = vpop.f32.mrb[0].mxu0
    %v6564 = vadd.f32 %v6310, %v6563
    %v6565 = vpop.f32.mrb[0].mxu0
    %v6566 = vpop.f32.mrb[0].mxu0
    %v6567 = vadd.f32 %v6313, %v6566
    %v6568 = vpop.f32.mrb[0].mxu0
    %6569 = vmatprep.mubr.bf16.mxu0 %v5788
    %6570 = vmatmul.mubr.bf16.gmra.mrb[0].mxu0 %v5787
    %v6571 = vpop.f32.mrb[0].mxu0
    %v6572 = vadd.f32 %v6318, %v6571
    %v6573 = vpop.f32.mrb[0].mxu0
    %v6574 = vpop.f32.mrb[0].mxu0
    %v6575 = vadd.f32 %v6321, %v6574
    %v6576 = vpop.f32.mrb[0].mxu0
    %6577 = vmatprep.mubr.bf16.mxu0 %v6338
    %6578 = vmatmul.mubr.bf16.gmra.mrb[0].mxu0 %v6337
    %v6579 = vpop.f32.mrb[0].mxu0
    %v6580 = vadd.f32 %v6326, %v6579
    %v6581 = vpop.f32.mrb[0].mxu0
    %v6582 = vpop.f32.mrb[0].mxu0
    %v6583 = vadd.f32 %v6329, %v6582
    %v6584 = vpop.f32.mrb[0].mxu0
    %6585 = vdwg.mxu0
    %6586 = vmatprep.subr.bf16.mxu0 0
    %6587 = vmatpush1.bf16.msra.mxu0 %v6448
    %6588 = vmatprep.subr.bf16.mxu0 0
    %6589 = vmatpush1.bf16.msra.mxu0 %v6449
    %6590 = vmatprep.subr.bf16.mxu0 0
    %6591 = vmatpush1.bf16.msra.mxu0 %v6487
    %6592 = vmatprep.subr.bf16.mxu0 0
    %6593 = vmatpush1.bf16.msra.mxu0 0
    %6594 = vmatprep.subr.bf16.mxu0 0
    %6595 = vmatpush1.bf16.msra.mxu0 0
    %6596 = vmatprep.subr.bf16.mxu0 0
    %6597 = vmatpush1.bf16.msra.mxu0 0
    %6598 = vmatprep.subr.bf16.mxu0 0
    %6599 = vmatpush1.bf16.msra.mxu0 0
    %6600 = vmatprep.subr.bf16.mxu0 0
    %6601 = vmatpush1.bf16.msra.mxu0 0
    %6602 = vmatprep.subr.bf16.mxu0 0
    %6603 = vmatpush1.bf16.msra.mxu0 0
    %6604 = vmatprep.subr.bf16.mxu0 0
    %6605 = vmatpush1.bf16.msra.mxu0 0
    %6606 = vmatprep.subr.bf16.mxu0 0
    %6607 = vmatpush1.bf16.msra.mxu0 0
    %6608 = vmatprep.subr.bf16.mxu0 0
    %6609 = vmatpush1.bf16.msra.mxu0 0
    %6610 = vmatprep.subr.bf16.mxu0 0
    %6611 = vmatpush1.bf16.msra.mxu0 0
    %6612 = vmatprep.subr.bf16.mxu0 0
    %6613 = vmatpush1.bf16.msra.mxu0 0
    %6614 = vmatprep.subr.bf16.mxu0 0
    %6615 = vmatpush1.bf16.msra.mxu0 0
    %6616 = vmatprep.subr.bf16.mxu0 0
    %6617 = vmatpush1.bf16.msra.mxu0 0
    %6618 = vmatprep.mubr.bf16.mxu0 0
    %6619 = vmatmul.mubr.bf16.gmra.mrb[0].mxu0 %v6469
    %v6620 = vpop.f32.mrb[0].mxu0
    %v6621 = vadd.f32 %v6524, %v6620
    %v6622 = vpop.f32.mrb[0].mxu0
    %v6623 = vpop.f32.mrb[0].mxu0
    %v6624 = vadd.f32 %v6527, %v6623
    %v6625 = vpop.f32.mrb[0].mxu0
    %6626 = vmatprep.mubr.bf16.mxu0 0
    %6627 = vmatmul.mubr.bf16.gmra.mrb[0].mxu0 %v6471
    %v6628 = vpop.f32.mrb[0].mxu0
    %v6629 = vadd.f32 %v6532, %v6628
    %v6630 = vpop.f32.mrb[0].mxu0
    %v6631 = vpop.f32.mrb[0].mxu0
    %v6632 = vadd.f32 %v6535, %v6631
    %v6633 = vpop.f32.mrb[0].mxu0
    %6634 = vmatprep.mubr.bf16.mxu0 0
    %6635 = vmatmul.mubr.bf16.gmra.mrb[0].mxu0 %v6473
    %v6636 = vpop.f32.mrb[0].mxu0
    %v6637 = vadd.f32 %v6540, %v6636
    %v6638 = vpop.f32.mrb[0].mxu0
    %v6639 = vpop.f32.mrb[0].mxu0
    %v6640 = vadd.f32 %v6543, %v6639
    %v6641 = vpop.f32.mrb[0].mxu0
    %6642 = vmatprep.mubr.bf16.mxu0 0
    %6643 = vmatmul.mubr.bf16.gmra.mrb[0].mxu0 %v6475
    %v6644 = vpop.f32.mrb[0].mxu0
    %v6645 = vadd.f32 %v6548, %v6644
    %v6646 = vpop.f32.mrb[0].mxu0
    %v6647 = vpop.f32.mrb[0].mxu0
    %v6648 = vadd.f32 %v6551, %v6647
    %v6649 = vpop.f32.mrb[0].mxu0
    %6650 = vmatprep.mubr.bf16.mxu0 0
    %6651 = vmatmul.mubr.bf16.gmra.mrb[0].mxu0 %v6477
    %v6652 = vpop.f32.mrb[0].mxu0
    %v6653 = vadd.f32 %v6556, %v6652
    %v6654 = vpop.f32.mrb[0].mxu0
    %v6655 = vpop.f32.mrb[0].mxu0
    %v6656 = vadd.f32 %v6559, %v6655
    %v6657 = vpop.f32.mrb[0].mxu0
    %6658 = vmatprep.mubr.bf16.mxu0 0
    %6659 = vmatmul.mubr.bf16.gmra.mrb[0].mxu0 %v6479
    %v6660 = vpop.f32.mrb[0].mxu0
    %v6661 = vadd.f32 %v6564, %v6660
    %v6662 = vpop.f32.mrb[0].mxu0
    %v6663 = vpop.f32.mrb[0].mxu0
    %v6664 = vadd.f32 %v6567, %v6663
    %v6665 = vpop.f32.mrb[0].mxu0
    %6666 = vmatprep.mubr.bf16.mxu0 0
    %6667 = vmatmul.mubr.bf16.gmra.mrb[0].mxu0 %v6481
    %v6668 = vpop.f32.mrb[0].mxu0
    %v6669 = vadd.f32 %v6572, %v6668
    %v6670 = vpop.f32.mrb[0].mxu0
    %v6671 = vpop.f32.mrb[0].mxu0
    %v6672 = vadd.f32 %v6575, %v6671
    %v6673 = vpop.f32.mrb[0].mxu0
    %6674 = vmatprep.mubr.bf16.mxu0 0
    %6675 = vmatmul.mubr.bf16.gmra.mrb[0].mxu0 %v6484
    %v6676 = vpop.f32.mrb[0].mxu0
    %v6677 = vadd.f32 %v6580, %v6676
    %v6678 = vpop.f32.mrb[0].mxu0
    %v6679 = vpop.f32.mrb[0].mxu0
    %v6680 = vadd.f32 %v6583, %v6679
    %v6681 = vpop.f32.mrb[0].mxu0
    %6682 = vdwg.mxu0
    %v6683 = vld [vmem:[%s0] sm:$0xee]
    %v6684 = vld [vmem:[%s0 + $0x8] sm:$0xe]
    %s6685 = scalar_lea.vmem %s5, 304
    %v6686 = vld [vmem:[%s6685] sm:$0xf]
    %v6687 = vld [vmem:[%s6685 + $0x4] sm:$0xf]
    %v6688 = vld [vmem:[%s6685 + $0x8] sm:$0xf]
    %v6689 = vld [vmem:[%s6685 + $0xc] sm:$0xf]
    %v6690 = vld [vmem:[%s6685 + $0x10] sm:$0xf]
    %v6691 = vld [vmem:[%s6685 + $0x14] sm:$0xf]
    %v6692 = vld [vmem:[%s6685 + $0x18] sm:$0xf]
    %v6693 = vld [vmem:[%s6685 + $0x1c] sm:$0xf]
    %v6694 = vld [vmem:[%s6685 + $0x20] sm:$0xf]
    %v6695 = vld [vmem:[%s6685 + $0x24] sm:$0xf]
    %v6696 = vld [vmem:[%s6685 + $0x28] sm:$0xf]
    %v6697 = vld [vmem:[%s6685 + $0x2c] sm:$0xf]
    %v6698 = vld [vmem:[%s6685 + $0x30] sm:$0xf]
    %v6699 = vld [vmem:[%s6685 + $0x34] sm:$0xf]
    %v6700 = vld [vmem:[%s6685 + $0x38] sm:$0xf]
    %v6701 = vld [vmem:[%s6685 + $0x3c] sm:$0xf]
    %v6702 = vld [vmem:[%s6685 + $0x40] sm:$0xf]
    %v6703 = vld [vmem:[%s6685 + $0x44] sm:$0xf]
    %v6704 = vld [vmem:[%s6685 + $0x48] sm:$0xf]
    %v6705 = vld [vmem:[%s6685 + $0x4c] sm:$0xf]
    %v6706 = vld [vmem:[%s6685 + $0x50] sm:$0xf]
    %v6707 = vld [vmem:[%s6685 + $0x54] sm:$0xf]
    %v6708 = vld [vmem:[%s6685 + $0x58] sm:$0xf]
    %v6709 = vld [vmem:[%s6685 + $0x5c] sm:$0xf]
    %v6710 = vld [vmem:[%s6685 + $0x60] sm:$0xf]
    %v6711 = vld [vmem:[%s6685 + $0x64] sm:$0xf]
    %v6712 = vld [vmem:[%s6685 + $0x68] sm:$0xf]
    %v6713 = vld [vmem:[%s6685 + $0x6c] sm:$0xf]
    %v6714 = vld [vmem:[%s6685 + $0x70] sm:$0xf]
    %v6715 = vld [vmem:[%s6685 + $0x74] sm:$0xf]
    %v6716 = vld [vmem:[%s6685 + $0x78] sm:$0xf]
    %v6717 = vld [vmem:[%s6685 + $0x7c] sm:$0xf]
    %v6718 = vld [vmem:[%s6685 + $0x80] sm:$0xf]
    %v6719 = vld [vmem:[%s6685 + $0x84] sm:$0xf]
    %v6720 = vld [vmem:[%s6685 + $0x88] sm:$0xf]
    %v6721 = vld [vmem:[%s6685 + $0x8c] sm:$0xf]
    %v6722 = vld [vmem:[%s6685 + $0x90] sm:$0xf]
    %v6723 = vld [vmem:[%s6685 + $0x94] sm:$0x3]
    %v6726 = vunpack.c.l.b16 %v6683
    %v6727 = vunpack.c.h.b16 %v6683
    %v6728 = vunpack.c.l.b16 %v6684
    %v6729 = vpack.c.b16 %v5724, %v6726
    %v6730 = vpack.c.b16 %v5725, %v6727
    %v6731 = vpack.c.b16 %v5726, %v6728
    %v6732 = vrot.slane %v6729, 1
    %v6733 = vrot.slane %v5772, 1
    %v6734 = vsel %vm328, %v6732, %v6733
    %v6735 = vrot.slane %v6730, 1
    %v6736 = vrot.slane %v5773, 1
    %v6737 = vsel %vm328, %v6735, %v6736
    %v6738 = vrot.slane %v6731, 1
    %v6739 = vrot.slane %v5774, 1
    %v6740 = vsel %vm328, %v6738, %v6739
    %v6741 = vrot.slane %v5775, 1
    %v6742 = vsel %vm328, %v6733, %v6741
    %v6743 = vrot.slane %v5776, 1
    %v6744 = vsel %vm328, %v6736, %v6743
    %v6745 = vrot.slane %v5777, 1
    %v6746 = vsel %vm328, %v6739, %v6745
    %v6747 = vrot.slane %v5778, 1
    %v6748 = vsel %vm328, %v6741, %v6747
    %v6749 = vrot.slane %v5779, 1
    %v6750 = vsel %vm328, %v6743, %v6749
    %v6751 = vrot.slane %v5780, 1
    %v6752 = vsel %vm328, %v6745, %v6751
    %v6753 = vrot.slane %v5781, 1
    %v6754 = vsel %vm328, %v6747, %v6753
    %v6755 = vrot.slane %v5782, 1
    %v6756 = vsel %vm328, %v6749, %v6755
    %v6757 = vrot.slane %v5783, 1
    %v6758 = vsel %vm328, %v6751, %v6757
    %v6759 = vrot.slane %v5784, 1
    %v6760 = vsel %vm328, %v6753, %v6759
    %v6761 = vrot.slane %v5785, 1
    %v6762 = vsel %vm328, %v6755, %v6761
    %v6763 = vrot.slane %v5786, 1
    %v6764 = vsel %vm328, %v6757, %v6763
    %v6765 = vrot.slane %v5787, 1
    %v6766 = vsel %vm328, %v6759, %v6765
    %v6767 = vrot.slane %v5788, 1
    %v6768 = vsel %vm328, %v6761, %v6767
    %v6769 = vrot.slane %v5789, 1
    %v6770 = vsel %vm328, %v6763, %v6769
    %v6771 = vrot.slane %v5790, 1
    %v6772 = vsel %vm328, %v6765, %v6771
    %v6773 = vrot.slane %v5791, 1
    %v6774 = vsel %vm328, %v6767, %v6773
    %v6775 = vrot.slane %v5792, 1
    %v6776 = vsel %vm328, %v6769, %v6775
    %v6831 = vunpack.c.l.b16 %v6686
    %v6832 = vunpack.c.l.b16 %v6687
    %v6833 = vunpack.c.l.b16 %v6688
    %v6834 = vunpack.c.l.b16 %v6689
    %v6835 = vunpack.c.l.b16 %v6690
    %v6836 = vunpack.c.l.b16 %v6691
    %v6837 = vunpack.c.l.b16 %v6692
    %v6838 = vunpack.c.l.b16 %v6693
    %v6839 = vunpack.c.l.b16 %v6694
    %v6840 = vunpack.c.l.b16 %v6695
    %v6841 = vunpack.c.l.b16 %v6696
    %v6842 = vunpack.c.l.b16 %v6697
    %v6843 = vunpack.c.l.b16 %v6698
    %v6844 = vunpack.c.l.b16 %v6699
    %v6845 = vunpack.c.l.b16 %v6700
    %v6846 = vunpack.c.l.b16 %v6701
    %v6847 = vunpack.c.l.b16 %v6702
    %v6848 = vunpack.c.l.b16 %v6703
    %v6849 = vunpack.c.l.b16 %v6704
    %v6850 = vunpack.c.l.b16 %v6705
    %v6851 = vunpack.c.l.b16 %v6706
    %v6852 = vunpack.c.l.b16 %v6707
    %v6853 = vunpack.c.l.b16 %v6708
    %v6854 = vunpack.c.l.b16 %v6709
    %v6855 = vunpack.c.l.b16 %v6710
    %v6856 = vunpack.c.l.b16 %v6711
    %v6857 = vunpack.c.l.b16 %v6712
    %v6858 = vunpack.c.l.b16 %v6713
    %v6859 = vunpack.c.l.b16 %v6714
    %v6860 = vunpack.c.l.b16 %v6715
    %v6861 = vunpack.c.l.b16 %v6716
    %v6862 = vunpack.c.l.b16 %v6717
    %v6863 = vunpack.c.l.b16 %v6718
    %v6864 = vunpack.c.l.b16 %v6719
    %v6865 = vunpack.c.l.b16 %v6720
    %v6866 = vunpack.c.l.b16 %v6721
    %v6867 = vunpack.c.l.b16 %v6722
    %v6868 = vunpack.c.l.b16 %v6723
    %v6869 = vpack.c.b16 %v6832, %v6831
    %v6870 = vpack.c.b16 %v6834, %v6833
    %v6871 = vpack.c.b16 %v6836, %v6835
    %v6872 = vpack.c.b16 %v6838, %v6837
    %v6873 = vpack.c.b16 %v6840, %v6839
    %v6874 = vpack.c.b16 %v6842, %v6841
    %v6875 = vpack.c.b16 %v6844, %v6843
    %v6876 = vpack.c.b16 %v6846, %v6845
    %v6877 = vpack.c.b16 %v6848, %v6847
    %v6878 = vpack.c.b16 %v6850, %v6849
    %v6879 = vpack.c.b16 %v6852, %v6851
    %v6880 = vpack.c.b16 %v6854, %v6853
    %v6881 = vpack.c.b16 %v6856, %v6855
    %v6882 = vpack.c.b16 %v6858, %v6857
    %v6883 = vpack.c.b16 %v6860, %v6859
    %v6884 = vpack.c.b16 %v6862, %v6861
    %v6885 = vpack.c.b16 %v6864, %v6863
    %v6886 = vpack.c.b16 %v6866, %v6865
    %v6887 = vpack.c.b16 %v6868, %v6867
    %v6907 = vsel %vm503, %v6740, 0
    %v6910 = vsel %vm503, %v6746, 0
    %v6913 = vsel %vm503, %v6752, 0
    %v6916 = vsel %vm503, %v6758, 0
    %v6919 = vsel %vm503, %v6764, 0
    %v6922 = vsel %vm503, %v6770, 0
    %v6925 = vsel %vm503, %v6776, 0
    %v6928 = vsel %vm503, %v6775, 0
    %v6931 = vsel %vm528, %v6887, 0
    %6933 = vmatprep.subr.bf16.mxu0 0
    %6934 = vmatpush1.bf16.msra.mxu0 %v6869
    %6935 = vmatprep.subr.bf16.mxu0 0
    %6936 = vmatpush1.bf16.msra.mxu0 %v6870
    %6937 = vmatprep.subr.bf16.mxu0 0
    %6938 = vmatpush1.bf16.msra.mxu0 %v6871
    %6939 = vmatprep.subr.bf16.mxu0 0
    %6940 = vmatpush1.bf16.msra.mxu0 %v6872
    %6941 = vmatprep.subr.bf16.mxu0 0
    %6942 = vmatpush1.bf16.msra.mxu0 %v6873
    %6943 = vmatprep.subr.bf16.mxu0 0
    %6944 = vmatpush1.bf16.msra.mxu0 %v6874
    %6945 = vmatprep.subr.bf16.mxu0 0
    %6946 = vmatpush1.bf16.msra.mxu0 %v6875
    %6947 = vmatprep.subr.bf16.mxu0 0
    %6948 = vmatpush1.bf16.msra.mxu0 %v6876
    %6949 = vmatprep.subr.bf16.mxu0 0
    %6950 = vmatpush1.bf16.msra.mxu0 %v6877
    %6951 = vmatprep.subr.bf16.mxu0 0
    %6952 = vmatpush1.bf16.msra.mxu0 %v6878
    %6953 = vmatprep.subr.bf16.mxu0 0
    %6954 = vmatpush1.bf16.msra.mxu0 %v6879
    %6955 = vmatprep.subr.bf16.mxu0 0
    %6956 = vmatpush1.bf16.msra.mxu0 %v6880
    %6957 = vmatprep.subr.bf16.mxu0 0
    %6958 = vmatpush1.bf16.msra.mxu0 %v6881
    %6959 = vmatprep.subr.bf16.mxu0 0
    %6960 = vmatpush1.bf16.msra.mxu0 %v6882
    %6961 = vmatprep.subr.bf16.mxu0 0
    %6962 = vmatpush1.bf16.msra.mxu0 %v6883
    %6963 = vmatprep.subr.bf16.mxu0 0
    %6964 = vmatpush1.bf16.msra.mxu0 %v6884
    %6965 = vmatprep.mubr.bf16.mxu0 %v6737
    %6966 = vmatmul.mubr.bf16.gmra.mrb[0].mxu0 %v6734
    %v6967 = vpop.f32.mrb[0].mxu0
    %v6968 = vadd.f32 0.0, %v6967
    %v6969 = vpop.f32.mrb[0].mxu0
    %v6970 = vpop.f32.mrb[0].mxu0
    %v6971 = vadd.f32 0.0, %v6970
    %v6972 = vpop.f32.mrb[0].mxu0
    %6973 = vmatprep.mubr.bf16.mxu0 %v6744
    %6974 = vmatmul.mubr.bf16.gmra.mrb[0].mxu0 %v6742
    %v6975 = vpop.f32.mrb[0].mxu0
    %v6976 = vadd.f32 0.0, %v6975
    %v6977 = vpop.f32.mrb[0].mxu0
    %v6978 = vpop.f32.mrb[0].mxu0
    %v6979 = vadd.f32 0.0, %v6978
    %v6980 = vpop.f32.mrb[0].mxu0
    %6981 = vmatprep.mubr.bf16.mxu0 %v6750
    %6982 = vmatmul.mubr.bf16.gmra.mrb[0].mxu0 %v6748
    %v6983 = vpop.f32.mrb[0].mxu0
    %v6984 = vadd.f32 0.0, %v6983
    %v6985 = vpop.f32.mrb[0].mxu0
    %v6986 = vpop.f32.mrb[0].mxu0
    %v6987 = vadd.f32 0.0, %v6986
    %v6988 = vpop.f32.mrb[0].mxu0
    %6989 = vmatprep.mubr.bf16.mxu0 %v6756
    %6990 = vmatmul.mubr.bf16.gmra.mrb[0].mxu0 %v6754
    %v6991 = vpop.f32.mrb[0].mxu0
    %v6992 = vadd.f32 0.0, %v6991
    %v6993 = vpop.f32.mrb[0].mxu0
    %v6994 = vpop.f32.mrb[0].mxu0
    %v6995 = vadd.f32 0.0, %v6994
    %v6996 = vpop.f32.mrb[0].mxu0
    %6997 = vmatprep.mubr.bf16.mxu0 %v6762
    %6998 = vmatmul.mubr.bf16.gmra.mrb[0].mxu0 %v6760
    %v6999 = vpop.f32.mrb[0].mxu0
    %v7000 = vadd.f32 0.0, %v6999
    %v7001 = vpop.f32.mrb[0].mxu0
    %v7002 = vpop.f32.mrb[0].mxu0
    %v7003 = vadd.f32 0.0, %v7002
    %v7004 = vpop.f32.mrb[0].mxu0
    %7005 = vmatprep.mubr.bf16.mxu0 %v6768
    %7006 = vmatmul.mubr.bf16.gmra.mrb[0].mxu0 %v6766
    %v7007 = vpop.f32.mrb[0].mxu0
    %v7008 = vadd.f32 0.0, %v7007
    %v7009 = vpop.f32.mrb[0].mxu0
    %v7010 = vpop.f32.mrb[0].mxu0
    %v7011 = vadd.f32 0.0, %v7010
    %v7012 = vpop.f32.mrb[0].mxu0
    %7013 = vmatprep.mubr.bf16.mxu0 %v6774
    %7014 = vmatmul.mubr.bf16.gmra.mrb[0].mxu0 %v6772
    %v7015 = vpop.f32.mrb[0].mxu0
    %v7016 = vadd.f32 0.0, %v7015
    %v7017 = vpop.f32.mrb[0].mxu0
    %v7018 = vpop.f32.mrb[0].mxu0
    %v7019 = vadd.f32 0.0, %v7018
    %v7020 = vpop.f32.mrb[0].mxu0
    %7021 = vmatprep.mubr.bf16.mxu0 %v6773
    %7022 = vmatmul.mubr.bf16.gmra.mrb[0].mxu0 %v6771
    %v7023 = vpop.f32.mrb[0].mxu0
    %v7024 = vadd.f32 0.0, %v7023
    %v7025 = vpop.f32.mrb[0].mxu0
    %v7026 = vpop.f32.mrb[0].mxu0
    %v7027 = vadd.f32 0.0, %v7026
    %v7028 = vpop.f32.mrb[0].mxu0
    %7029 = vdwg.mxu0
    %7030 = vmatprep.subr.bf16.mxu0 0
    %7031 = vmatpush1.bf16.msra.mxu0 %v6885
    %7032 = vmatprep.subr.bf16.mxu0 0
    %7033 = vmatpush1.bf16.msra.mxu0 %v6886
    %7034 = vmatprep.subr.bf16.mxu0 0
    %7035 = vmatpush1.bf16.msra.mxu0 %v6931
    %7036 = vmatprep.subr.bf16.mxu0 0
    %7037 = vmatpush1.bf16.msra.mxu0 0
    %7038 = vmatprep.subr.bf16.mxu0 0
    %7039 = vmatpush1.bf16.msra.mxu0 0
    %7040 = vmatprep.subr.bf16.mxu0 0
    %7041 = vmatpush1.bf16.msra.mxu0 0
    %7042 = vmatprep.subr.bf16.mxu0 0
    %7043 = vmatpush1.bf16.msra.mxu0 0
    %7044 = vmatprep.subr.bf16.mxu0 0
    %7045 = vmatpush1.bf16.msra.mxu0 0
    %7046 = vmatprep.subr.bf16.mxu0 0
    %7047 = vmatpush1.bf16.msra.mxu0 0
    %7048 = vmatprep.subr.bf16.mxu0 0
    %7049 = vmatpush1.bf16.msra.mxu0 0
    %7050 = vmatprep.subr.bf16.mxu0 0
    %7051 = vmatpush1.bf16.msra.mxu0 0
    %7052 = vmatprep.subr.bf16.mxu0 0
    %7053 = vmatpush1.bf16.msra.mxu0 0
    %7054 = vmatprep.subr.bf16.mxu0 0
    %7055 = vmatpush1.bf16.msra.mxu0 0
    %7056 = vmatprep.subr.bf16.mxu0 0
    %7057 = vmatpush1.bf16.msra.mxu0 0
    %7058 = vmatprep.subr.bf16.mxu0 0
    %7059 = vmatpush1.bf16.msra.mxu0 0
    %7060 = vmatprep.subr.bf16.mxu0 0
    %7061 = vmatpush1.bf16.msra.mxu0 0
    %7062 = vmatprep.mubr.bf16.mxu0 0
    %7063 = vmatmul.mubr.bf16.gmra.mrb[0].mxu0 %v6907
    %v7064 = vpop.f32.mrb[0].mxu0
    %v7065 = vadd.f32 %v6968, %v7064
    %v7066 = vpop.f32.mrb[0].mxu0
    %v7067 = vpop.f32.mrb[0].mxu0
    %v7068 = vadd.f32 %v6971, %v7067
    %v7069 = vpop.f32.mrb[0].mxu0
    %7070 = vmatprep.mubr.bf16.mxu0 0
    %7071 = vmatmul.mubr.bf16.gmra.mrb[0].mxu0 %v6910
    %v7072 = vpop.f32.mrb[0].mxu0
    %v7073 = vadd.f32 %v6976, %v7072
    %v7074 = vpop.f32.mrb[0].mxu0
    %v7075 = vpop.f32.mrb[0].mxu0
    %v7076 = vadd.f32 %v6979, %v7075
    %v7077 = vpop.f32.mrb[0].mxu0
    %7078 = vmatprep.mubr.bf16.mxu0 0
    %7079 = vmatmul.mubr.bf16.gmra.mrb[0].mxu0 %v6913
    %v7080 = vpop.f32.mrb[0].mxu0
    %v7081 = vadd.f32 %v6984, %v7080
    %v7082 = vpop.f32.mrb[0].mxu0
    %v7083 = vpop.f32.mrb[0].mxu0
    %v7084 = vadd.f32 %v6987, %v7083
    %v7085 = vpop.f32.mrb[0].mxu0
    %7086 = vmatprep.mubr.bf16.mxu0 0
    %7087 = vmatmul.mubr.bf16.gmra.mrb[0].mxu0 %v6916
    %v7088 = vpop.f32.mrb[0].mxu0
    %v7089 = vadd.f32 %v6992, %v7088
    %v7090 = vpop.f32.mrb[0].mxu0
    %v7091 = vpop.f32.mrb[0].mxu0
    %v7092 = vadd.f32 %v6995, %v7091
    %v7093 = vpop.f32.mrb[0].mxu0
    %7094 = vmatprep.mubr.bf16.mxu0 0
    %7095 = vmatmul.mubr.bf16.gmra.mrb[0].mxu0 %v6919
    %v7096 = vpop.f32.mrb[0].mxu0
    %v7097 = vadd.f32 %v7000, %v7096
    %v7098 = vpop.f32.mrb[0].mxu0
    %v7099 = vpop.f32.mrb[0].mxu0
    %v7100 = vadd.f32 %v7003, %v7099
    %v7101 = vpop.f32.mrb[0].mxu0
    %7102 = vmatprep.mubr.bf16.mxu0 0
    %7103 = vmatmul.mubr.bf16.gmra.mrb[0].mxu0 %v6922
    %v7104 = vpop.f32.mrb[0].mxu0
    %v7105 = vadd.f32 %v7008, %v7104
    %v7106 = vpop.f32.mrb[0].mxu0
    %v7107 = vpop.f32.mrb[0].mxu0
    %v7108 = vadd.f32 %v7011, %v7107
    %v7109 = vpop.f32.mrb[0].mxu0
    %7110 = vmatprep.mubr.bf16.mxu0 0
    %7111 = vmatmul.mubr.bf16.gmra.mrb[0].mxu0 %v6925
    %v7112 = vpop.f32.mrb[0].mxu0
    %v7113 = vadd.f32 %v7016, %v7112
    %v7114 = vpop.f32.mrb[0].mxu0
    %v7115 = vpop.f32.mrb[0].mxu0
    %v7116 = vadd.f32 %v7019, %v7115
    %v7117 = vpop.f32.mrb[0].mxu0
    %7118 = vmatprep.mubr.bf16.mxu0 0
    %7119 = vmatmul.mubr.bf16.gmra.mrb[0].mxu0 %v6928
    %v7120 = vpop.f32.mrb[0].mxu0
    %v7121 = vadd.f32 %v7024, %v7120
    %v7122 = vpop.f32.mrb[0].mxu0
    %v7123 = vpop.f32.mrb[0].mxu0
    %v7124 = vadd.f32 %v7027, %v7123
    %v7125 = vpop.f32.mrb[0].mxu0
    %7126 = vdwg.mxu0
    %v7127 = vadd.f32 %v6621, %v7065
    %v7128 = vadd.f32 %v6624, %v7068
    %v7129 = vadd.f32 %v6629, %v7073
    %v7130 = vadd.f32 %v6632, %v7076
    %v7131 = vadd.f32 %v6637, %v7081
    %v7132 = vadd.f32 %v6640, %v7084
    %v7133 = vadd.f32 %v6645, %v7089
    %v7134 = vadd.f32 %v6648, %v7092
    %v7135 = vadd.f32 %v6653, %v7097
    %v7136 = vadd.f32 %v6656, %v7100
    %v7137 = vadd.f32 %v6661, %v7105
    %v7138 = vadd.f32 %v6664, %v7108
    %v7139 = vadd.f32 %v6669, %v7113
    %v7140 = vadd.f32 %v6672, %v7116
    %v7141 = vadd.f32 %v6677, %v7121
    %v7142 = vadd.f32 %v6680, %v7124
    %v7143 = vld [vmem:[%s0 + $0xb4] sm:$0xff]
    %v7144 = vld [vmem:[%s0 + $0xbc] sm:$0xf]
    %s7145 = scalar_lea.vmem %s5, 456
    %v7146 = vld [vmem:[%s7145] sm:$0xf]
    %v7147 = vld [vmem:[%s7145 + $0x4] sm:$0xf]
    %v7148 = vld [vmem:[%s7145 + $0x8] sm:$0xf]
    %v7149 = vld [vmem:[%s7145 + $0xc] sm:$0xf]
    %v7150 = vld [vmem:[%s7145 + $0x10] sm:$0xf]
    %v7151 = vld [vmem:[%s7145 + $0x14] sm:$0xf]
    %v7152 = vld [vmem:[%s7145 + $0x18] sm:$0xf]
    %v7153 = vld [vmem:[%s7145 + $0x1c] sm:$0xf]
    %v7154 = vld [vmem:[%s7145 + $0x20] sm:$0xf]
    %v7155 = vld [vmem:[%s7145 + $0x24] sm:$0xf]
    %v7156 = vld [vmem:[%s7145 + $0x28] sm:$0xf]
    %v7157 = vld [vmem:[%s7145 + $0x2c] sm:$0xf]
    %v7158 = vld [vmem:[%s7145 + $0x30] sm:$0xf]
    %v7159 = vld [vmem:[%s7145 + $0x34] sm:$0xf]
    %v7160 = vld [vmem:[%s7145 + $0x38] sm:$0xf]
    %v7161 = vld [vmem:[%s7145 + $0x3c] sm:$0xf]
    %v7162 = vld [vmem:[%s7145 + $0x40] sm:$0xf]
    %v7163 = vld [vmem:[%s7145 + $0x44] sm:$0xf]
    %v7164 = vld [vmem:[%s7145 + $0x48] sm:$0xf]
    %v7165 = vld [vmem:[%s7145 + $0x4c] sm:$0xf]
    %v7166 = vld [vmem:[%s7145 + $0x50] sm:$0xf]
    %v7167 = vld [vmem:[%s7145 + $0x54] sm:$0xf]
    %v7168 = vld [vmem:[%s7145 + $0x58] sm:$0xf]
    %v7169 = vld [vmem:[%s7145 + $0x5c] sm:$0xf]
    %v7170 = vld [vmem:[%s7145 + $0x60] sm:$0xf]
    %v7171 = vld [vmem:[%s7145 + $0x64] sm:$0xf]
    %v7172 = vld [vmem:[%s7145 + $0x68] sm:$0xf]
    %v7173 = vld [vmem:[%s7145 + $0x6c] sm:$0xf]
    %v7174 = vld [vmem:[%s7145 + $0x70] sm:$0xf]
    %v7175 = vld [vmem:[%s7145 + $0x74] sm:$0xf]
    %v7176 = vld [vmem:[%s7145 + $0x78] sm:$0xf]
    %v7177 = vld [vmem:[%s7145 + $0x7c] sm:$0xf]
    %v7178 = vld [vmem:[%s7145 + $0x80] sm:$0xf]
    %v7179 = vld [vmem:[%s7145 + $0x84] sm:$0xf]
    %v7180 = vld [vmem:[%s7145 + $0x88] sm:$0xf]
    %v7181 = vld [vmem:[%s7145 + $0x8c] sm:$0xf]
    %v7182 = vld [vmem:[%s7145 + $0x90] sm:$0xf]
    %v7183 = vld [vmem:[%s7145 + $0x94] sm:$0x3]
    %v7186 = vunpack.c.l.b16 %v7143
    %v7187 = vunpack.c.h.b16 %v7143
    %v7188 = vunpack.c.l.b16 %v7144
    %v7189 = vpack.c.b16 %v7186, %v5763
    %v7190 = vpack.c.b16 %v7187, %v5764
    %v7191 = vpack.c.b16 %v7188, %v5765
    %v7193 = vshrl.u32 %v6729, 16
    %v7195 = vrot.slane %v7193, 1
    %v7196 = vshll.u32 %v6729, 16
    %v7198 = vrot.slane %v7196, 2
    %v7199 = vor.u32 %v7195, %v7198
    %v7200 = vrot.slane %v5829, 1
    %v7201 = vrot.slane %v5801, 2
    %v7202 = vor.u32 %v7200, %v7201
    %v7203 = vsel %vm1323, %v7199, %v7202
    %v7205 = vshrl.u32 %v6730, 16
    %v7207 = vrot.slane %v7205, 1
    %v7208 = vshll.u32 %v6730, 16
    %v7210 = vrot.slane %v7208, 2
    %v7211 = vor.u32 %v7207, %v7210
    %v7212 = vrot.slane %v5837, 1
    %v7213 = vrot.slane %v5813, 2
    %v7214 = vor.u32 %v7212, %v7213
    %v7215 = vsel %vm1323, %v7211, %v7214
    %v7217 = vshrl.u32 %v6731, 16
    %v7219 = vrot.slane %v7217, 1
    %v7220 = vshll.u32 %v6731, 16
    %v7222 = vrot.slane %v7220, 2
    %v7223 = vor.u32 %v7219, %v7222
    %v7224 = vrot.slane %v5845, 1
    %v7225 = vrot.slane %v5825, 2
    %v7226 = vor.u32 %v7224, %v7225
    %v7227 = vsel %vm1323, %v7223, %v7226
    %v7228 = vrot.slane %v5853, 1
    %v7229 = vrot.slane %v5833, 2
    %v7230 = vor.u32 %v7228, %v7229
    %v7231 = vsel %vm1323, %v7202, %v7230
    %v7232 = vrot.slane %v5861, 1
    %v7233 = vrot.slane %v5841, 2
    %v7234 = vor.u32 %v7232, %v7233
    %v7235 = vsel %vm1323, %v7214, %v7234
    %v7236 = vrot.slane %v5869, 1
    %v7237 = vrot.slane %v5849, 2
    %v7238 = vor.u32 %v7236, %v7237
    %v7239 = vsel %vm1323, %v7226, %v7238
    %v7240 = vrot.slane %v5877, 1
    %v7241 = vrot.slane %v5857, 2
    %v7242 = vor.u32 %v7240, %v7241
    %v7243 = vsel %vm1323, %v7230, %v7242
    %v7244 = vrot.slane %v5885, 1
    %v7245 = vrot.slane %v5865, 2
    %v7246 = vor.u32 %v7244, %v7245
    %v7247 = vsel %vm1323, %v7234, %v7246
    %v7248 = vrot.slane %v5893, 1
    %v7249 = vrot.slane %v5873, 2
    %v7250 = vor.u32 %v7248, %v7249
    %v7251 = vsel %vm1323, %v7238, %v7250
    %v7252 = vrot.slane %v5901, 1
    %v7253 = vrot.slane %v5881, 2
    %v7254 = vor.u32 %v7252, %v7253
    %v7255 = vsel %vm1323, %v7242, %v7254
    %v7256 = vrot.slane %v5909, 1
    %v7257 = vrot.slane %v5889, 2
    %v7258 = vor.u32 %v7256, %v7257
    %v7259 = vsel %vm1323, %v7246, %v7258
    %v7260 = vrot.slane %v5917, 1
    %v7261 = vrot.slane %v5897, 2
    %v7262 = vor.u32 %v7260, %v7261
    %v7263 = vsel %vm1323, %v7250, %v7262
    %v7264 = vrot.slane %v5925, 1
    %v7265 = vrot.slane %v5905, 2
    %v7266 = vor.u32 %v7264, %v7265
    %v7267 = vsel %vm1323, %v7254, %v7266
    %v7268 = vrot.slane %v5933, 1
    %v7269 = vrot.slane %v5913, 2
    %v7270 = vor.u32 %v7268, %v7269
    %v7271 = vsel %vm1323, %v7258, %v7270
    %v7272 = vrot.slane %v5941, 1
    %v7273 = vrot.slane %v5921, 2
    %v7274 = vor.u32 %v7272, %v7273
    %v7275 = vsel %vm1323, %v7262, %v7274
    %v7276 = vrot.slane %v5949, 1
    %v7277 = vrot.slane %v5929, 2
    %v7278 = vor.u32 %v7276, %v7277
    %v7279 = vsel %vm1323, %v7266, %v7278
    %v7280 = vrot.slane %v5957, 1
    %v7281 = vrot.slane %v5937, 2
    %v7282 = vor.u32 %v7280, %v7281
    %v7283 = vsel %vm1323, %v7270, %v7282
    %v7284 = vrot.slane %v5965, 1
    %v7285 = vrot.slane %v5945, 2
    %v7286 = vor.u32 %v7284, %v7285
    %v7287 = vsel %vm1323, %v7274, %v7286
    %v7289 = vshrl.u32 %v7189, 16
    %v7291 = vrot.slane %v7289, 1
    %v7292 = vshll.u32 %v7189, 16
    %v7294 = vrot.slane %v7292, 2
    %v7295 = vor.u32 %v7291, %v7294
    %v7296 = vsel %vm1323, %v7278, %v7295
    %v7298 = vshrl.u32 %v7190, 16
    %v7300 = vrot.slane %v7298, 1
    %v7301 = vshll.u32 %v7190, 16
    %v7303 = vrot.slane %v7301, 2
    %v7304 = vor.u32 %v7300, %v7303
    %v7305 = vsel %vm1323, %v7282, %v7304
    %v7307 = vshrl.u32 %v7191, 16
    %v7309 = vrot.slane %v7307, 1
    %v7310 = vshll.u32 %v7191, 16
    %v7312 = vrot.slane %v7310, 2
    %v7313 = vor.u32 %v7309, %v7312
    %v7314 = vsel %vm1323, %v7286, %v7313
    %v7369 = vunpack.c.l.b16 %v7146
    %v7370 = vunpack.c.l.b16 %v7147
    %v7371 = vunpack.c.l.b16 %v7148
    %v7372 = vunpack.c.l.b16 %v7149
    %v7373 = vunpack.c.l.b16 %v7150
    %v7374 = vunpack.c.l.b16 %v7151
    %v7375 = vunpack.c.l.b16 %v7152
    %v7376 = vunpack.c.l.b16 %v7153
    %v7377 = vunpack.c.l.b16 %v7154
    %v7378 = vunpack.c.l.b16 %v7155
    %v7379 = vunpack.c.l.b16 %v7156
    %v7380 = vunpack.c.l.b16 %v7157
    %v7381 = vunpack.c.l.b16 %v7158
    %v7382 = vunpack.c.l.b16 %v7159
    %v7383 = vunpack.c.l.b16 %v7160
    %v7384 = vunpack.c.l.b16 %v7161
    %v7385 = vunpack.c.l.b16 %v7162
    %v7386 = vunpack.c.l.b16 %v7163
    %v7387 = vunpack.c.l.b16 %v7164
    %v7388 = vunpack.c.l.b16 %v7165
    %v7389 = vunpack.c.l.b16 %v7166
    %v7390 = vunpack.c.l.b16 %v7167
    %v7391 = vunpack.c.l.b16 %v7168
    %v7392 = vunpack.c.l.b16 %v7169
    %v7393 = vunpack.c.l.b16 %v7170
    %v7394 = vunpack.c.l.b16 %v7171
    %v7395 = vunpack.c.l.b16 %v7172
    %v7396 = vunpack.c.l.b16 %v7173
    %v7397 = vunpack.c.l.b16 %v7174
    %v7398 = vunpack.c.l.b16 %v7175
    %v7399 = vunpack.c.l.b16 %v7176
    %v7400 = vunpack.c.l.b16 %v7177
    %v7401 = vunpack.c.l.b16 %v7178
    %v7402 = vunpack.c.l.b16 %v7179
    %v7403 = vunpack.c.l.b16 %v7180
    %v7404 = vunpack.c.l.b16 %v7181
    %v7405 = vunpack.c.l.b16 %v7182
    %v7406 = vunpack.c.l.b16 %v7183
    %v7407 = vpack.c.b16 %v7370, %v7369
    %v7408 = vpack.c.b16 %v7372, %v7371
    %v7409 = vpack.c.b16 %v7374, %v7373
    %v7410 = vpack.c.b16 %v7376, %v7375
    %v7411 = vpack.c.b16 %v7378, %v7377
    %v7412 = vpack.c.b16 %v7380, %v7379
    %v7413 = vpack.c.b16 %v7382, %v7381
    %v7414 = vpack.c.b16 %v7384, %v7383
    %v7415 = vpack.c.b16 %v7386, %v7385
    %v7416 = vpack.c.b16 %v7388, %v7387
    %v7417 = vpack.c.b16 %v7390, %v7389
    %v7418 = vpack.c.b16 %v7392, %v7391
    %v7419 = vpack.c.b16 %v7394, %v7393
    %v7420 = vpack.c.b16 %v7396, %v7395
    %v7421 = vpack.c.b16 %v7398, %v7397
    %v7422 = vpack.c.b16 %v7400, %v7399
    %v7423 = vpack.c.b16 %v7402, %v7401
    %v7424 = vpack.c.b16 %v7404, %v7403
    %v7425 = vpack.c.b16 %v7406, %v7405
    %v7445 = vsel %vm503, %v7227, 0
    %v7448 = vsel %vm503, %v7239, 0
    %v7451 = vsel %vm503, %v7251, 0
    %v7454 = vsel %vm503, %v7263, 0
    %v7457 = vsel %vm503, %v7275, 0
    %v7460 = vsel %vm503, %v7287, 0
    %v7463 = vsel %vm503, %v7314, 0
    %v7466 = vsel %vm503, %v7313, 0
    %v7469 = vsel %vm528, %v7425, 0
    %7471 = vmatprep.subr.bf16.mxu0 0
    %7472 = vmatpush1.bf16.msra.mxu0 %v7407
    %7473 = vmatprep.subr.bf16.mxu0 0
    %7474 = vmatpush1.bf16.msra.mxu0 %v7408
    %7475 = vmatprep.subr.bf16.mxu0 0
    %7476 = vmatpush1.bf16.msra.mxu0 %v7409
    %7477 = vmatprep.subr.bf16.mxu0 0
    %7478 = vmatpush1.bf16.msra.mxu0 %v7410
    %7479 = vmatprep.subr.bf16.mxu0 0
    %7480 = vmatpush1.bf16.msra.mxu0 %v7411
    %7481 = vmatprep.subr.bf16.mxu0 0
    %7482 = vmatpush1.bf16.msra.mxu0 %v7412
    %7483 = vmatprep.subr.bf16.mxu0 0
    %7484 = vmatpush1.bf16.msra.mxu0 %v7413
    %7485 = vmatprep.subr.bf16.mxu0 0
    %7486 = vmatpush1.bf16.msra.mxu0 %v7414
    %7487 = vmatprep.subr.bf16.mxu0 0
    %7488 = vmatpush1.bf16.msra.mxu0 %v7415
    %7489 = vmatprep.subr.bf16.mxu0 0
    %7490 = vmatpush1.bf16.msra.mxu0 %v7416
    %7491 = vmatprep.subr.bf16.mxu0 0
    %7492 = vmatpush1.bf16.msra.mxu0 %v7417
    %7493 = vmatprep.subr.bf16.mxu0 0
    %7494 = vmatpush1.bf16.msra.mxu0 %v7418
    %7495 = vmatprep.subr.bf16.mxu0 0
    %7496 = vmatpush1.bf16.msra.mxu0 %v7419
    %7497 = vmatprep.subr.bf16.mxu0 0
    %7498 = vmatpush1.bf16.msra.mxu0 %v7420
    %7499 = vmatprep.subr.bf16.mxu0 0
    %7500 = vmatpush1.bf16.msra.mxu0 %v7421
    %7501 = vmatprep.subr.bf16.mxu0 0
    %7502 = vmatpush1.bf16.msra.mxu0 %v7422
    %7503 = vmatprep.mubr.bf16.mxu0 %v7215
    %7504 = vmatmul.mubr.bf16.gmra.mrb[0].mxu0 %v7203
    %v7505 = vpop.f32.mrb[0].mxu0
    %v7506 = vadd.f32 0.0, %v7505
    %v7507 = vpop.f32.mrb[0].mxu0
    %v7508 = vpop.f32.mrb[0].mxu0
    %v7509 = vadd.f32 0.0, %v7508
    %v7510 = vpop.f32.mrb[0].mxu0
    %7511 = vmatprep.mubr.bf16.mxu0 %v7235
    %7512 = vmatmul.mubr.bf16.gmra.mrb[0].mxu0 %v7231
    %v7513 = vpop.f32.mrb[0].mxu0
    %v7514 = vadd.f32 0.0, %v7513
    %v7515 = vpop.f32.mrb[0].mxu0
    %v7516 = vpop.f32.mrb[0].mxu0
    %v7517 = vadd.f32 0.0, %v7516
    %v7518 = vpop.f32.mrb[0].mxu0
    %7519 = vmatprep.mubr.bf16.mxu0 %v7247
    %7520 = vmatmul.mubr.bf16.gmra.mrb[0].mxu0 %v7243
    %v7521 = vpop.f32.mrb[0].mxu0
    %v7522 = vadd.f32 0.0, %v7521
    %v7523 = vpop.f32.mrb[0].mxu0
    %v7524 = vpop.f32.mrb[0].mxu0
    %v7525 = vadd.f32 0.0, %v7524
    %v7526 = vpop.f32.mrb[0].mxu0
    %7527 = vmatprep.mubr.bf16.mxu0 %v7259
    %7528 = vmatmul.mubr.bf16.gmra.mrb[0].mxu0 %v7255
    %v7529 = vpop.f32.mrb[0].mxu0
    %v7530 = vadd.f32 0.0, %v7529
    %v7531 = vpop.f32.mrb[0].mxu0
    %v7532 = vpop.f32.mrb[0].mxu0
    %v7533 = vadd.f32 0.0, %v7532
    %v7534 = vpop.f32.mrb[0].mxu0
    %7535 = vmatprep.mubr.bf16.mxu0 %v7271
    %7536 = vmatmul.mubr.bf16.gmra.mrb[0].mxu0 %v7267
    %v7537 = vpop.f32.mrb[0].mxu0
    %v7538 = vadd.f32 0.0, %v7537
    %v7539 = vpop.f32.mrb[0].mxu0
    %v7540 = vpop.f32.mrb[0].mxu0
    %v7541 = vadd.f32 0.0, %v7540
    %v7542 = vpop.f32.mrb[0].mxu0
    %7543 = vmatprep.mubr.bf16.mxu0 %v7283
    %7544 = vmatmul.mubr.bf16.gmra.mrb[0].mxu0 %v7279
    %v7545 = vpop.f32.mrb[0].mxu0
    %v7546 = vadd.f32 0.0, %v7545
    %v7547 = vpop.f32.mrb[0].mxu0
    %v7548 = vpop.f32.mrb[0].mxu0
    %v7549 = vadd.f32 0.0, %v7548
    %v7550 = vpop.f32.mrb[0].mxu0
    %7551 = vmatprep.mubr.bf16.mxu0 %v7305
    %7552 = vmatmul.mubr.bf16.gmra.mrb[0].mxu0 %v7296
    %v7553 = vpop.f32.mrb[0].mxu0
    %v7554 = vadd.f32 0.0, %v7553
    %v7555 = vpop.f32.mrb[0].mxu0
    %v7556 = vpop.f32.mrb[0].mxu0
    %v7557 = vadd.f32 0.0, %v7556
    %v7558 = vpop.f32.mrb[0].mxu0
    %7559 = vmatprep.mubr.bf16.mxu0 %v7304
    %7560 = vmatmul.mubr.bf16.gmra.mrb[0].mxu0 %v7295
    %v7561 = vpop.f32.mrb[0].mxu0
    %v7562 = vadd.f32 0.0, %v7561
    %v7563 = vpop.f32.mrb[0].mxu0
    %v7564 = vpop.f32.mrb[0].mxu0
    %v7565 = vadd.f32 0.0, %v7564
    %v7566 = vpop.f32.mrb[0].mxu0
    %7567 = vdwg.mxu0
    %7568 = vmatprep.subr.bf16.mxu0 0
    %7569 = vmatpush1.bf16.msra.mxu0 %v7423
    %7570 = vmatprep.subr.bf16.mxu0 0
    %7571 = vmatpush1.bf16.msra.mxu0 %v7424
    %7572 = vmatprep.subr.bf16.mxu0 0
    %7573 = vmatpush1.bf16.msra.mxu0 %v7469
    %7574 = vmatprep.subr.bf16.mxu0 0
    %7575 = vmatpush1.bf16.msra.mxu0 0
    %7576 = vmatprep.subr.bf16.mxu0 0
    %7577 = vmatpush1.bf16.msra.mxu0 0
    %7578 = vmatprep.subr.bf16.mxu0 0
    %7579 = vmatpush1.bf16.msra.mxu0 0
    %7580 = vmatprep.subr.bf16.mxu0 0
    %7581 = vmatpush1.bf16.msra.mxu0 0
    %7582 = vmatprep.subr.bf16.mxu0 0
    %7583 = vmatpush1.bf16.msra.mxu0 0
    %7584 = vmatprep.subr.bf16.mxu0 0
    %7585 = vmatpush1.bf16.msra.mxu0 0
    %7586 = vmatprep.subr.bf16.mxu0 0
    %7587 = vmatpush1.bf16.msra.mxu0 0
    %7588 = vmatprep.subr.bf16.mxu0 0
    %7589 = vmatpush1.bf16.msra.mxu0 0
    %7590 = vmatprep.subr.bf16.mxu0 0
    %7591 = vmatpush1.bf16.msra.mxu0 0
    %7592 = vmatprep.subr.bf16.mxu0 0
    %7593 = vmatpush1.bf16.msra.mxu0 0
    %7594 = vmatprep.subr.bf16.mxu0 0
    %7595 = vmatpush1.bf16.msra.mxu0 0
    %7596 = vmatprep.subr.bf16.mxu0 0
    %7597 = vmatpush1.bf16.msra.mxu0 0
    %7598 = vmatprep.subr.bf16.mxu0 0
    %7599 = vmatpush1.bf16.msra.mxu0 0
    %7600 = vmatprep.mubr.bf16.mxu0 0
    %7601 = vmatmul.mubr.bf16.gmra.mrb[0].mxu0 %v7445
    %v7602 = vpop.f32.mrb[0].mxu0
    %v7603 = vadd.f32 %v7506, %v7602
    %v7604 = vpop.f32.mrb[0].mxu0
    %v7605 = vpop.f32.mrb[0].mxu0
    %v7606 = vadd.f32 %v7509, %v7605
    %v7607 = vpop.f32.mrb[0].mxu0
    %7608 = vmatprep.mubr.bf16.mxu0 0
    %7609 = vmatmul.mubr.bf16.gmra.mrb[0].mxu0 %v7448
    %v7610 = vpop.f32.mrb[0].mxu0
    %v7611 = vadd.f32 %v7514, %v7610
    %v7612 = vpop.f32.mrb[0].mxu0
    %v7613 = vpop.f32.mrb[0].mxu0
    %v7614 = vadd.f32 %v7517, %v7613
    %v7615 = vpop.f32.mrb[0].mxu0
    %7616 = vmatprep.mubr.bf16.mxu0 0
    %7617 = vmatmul.mubr.bf16.gmra.mrb[0].mxu0 %v7451
    %v7618 = vpop.f32.mrb[0].mxu0
    %v7619 = vadd.f32 %v7522, %v7618
    %v7620 = vpop.f32.mrb[0].mxu0
    %v7621 = vpop.f32.mrb[0].mxu0
    %v7622 = vadd.f32 %v7525, %v7621
    %v7623 = vpop.f32.mrb[0].mxu0
    %7624 = vmatprep.mubr.bf16.mxu0 0
    %7625 = vmatmul.mubr.bf16.gmra.mrb[0].mxu0 %v7454
    %v7626 = vpop.f32.mrb[0].mxu0
    %v7627 = vadd.f32 %v7530, %v7626
    %v7628 = vpop.f32.mrb[0].mxu0
    %v7629 = vpop.f32.mrb[0].mxu0
    %v7630 = vadd.f32 %v7533, %v7629
    %v7631 = vpop.f32.mrb[0].mxu0
    %7632 = vmatprep.mubr.bf16.mxu0 0
    %7633 = vmatmul.mubr.bf16.gmra.mrb[0].mxu0 %v7457
    %v7634 = vpop.f32.mrb[0].mxu0
    %v7635 = vadd.f32 %v7538, %v7634
    %v7636 = vpop.f32.mrb[0].mxu0
    %v7637 = vpop.f32.mrb[0].mxu0
    %v7638 = vadd.f32 %v7541, %v7637
    %v7639 = vpop.f32.mrb[0].mxu0
    %7640 = vmatprep.mubr.bf16.mxu0 0
    %7641 = vmatmul.mubr.bf16.gmra.mrb[0].mxu0 %v7460
    %v7642 = vpop.f32.mrb[0].mxu0
    %v7643 = vadd.f32 %v7546, %v7642
    %v7644 = vpop.f32.mrb[0].mxu0
    %v7645 = vpop.f32.mrb[0].mxu0
    %v7646 = vadd.f32 %v7549, %v7645
    %v7647 = vpop.f32.mrb[0].mxu0
    %7648 = vmatprep.mubr.bf16.mxu0 0
    %7649 = vmatmul.mubr.bf16.gmra.mrb[0].mxu0 %v7463
    %v7650 = vpop.f32.mrb[0].mxu0
    %v7651 = vadd.f32 %v7554, %v7650
    %v7652 = vpop.f32.mrb[0].mxu0
    %v7653 = vpop.f32.mrb[0].mxu0
    %v7654 = vadd.f32 %v7557, %v7653
    %v7655 = vpop.f32.mrb[0].mxu0
    %7656 = vmatprep.mubr.bf16.mxu0 0
    %7657 = vmatmul.mubr.bf16.gmra.mrb[0].mxu0 %v7466
    %v7658 = vpop.f32.mrb[0].mxu0
    %v7659 = vadd.f32 %v7562, %v7658
    %v7660 = vpop.f32.mrb[0].mxu0
    %v7661 = vpop.f32.mrb[0].mxu0
    %v7662 = vadd.f32 %v7565, %v7661
    %v7663 = vpop.f32.mrb[0].mxu0
    %7664 = vdwg.mxu0
    %v7665 = vadd.f32 %v7127, %v7603
    %v7666 = vadd.f32 %v7128, %v7606
    %v7667 = vadd.f32 %v7129, %v7611
    %v7668 = vadd.f32 %v7130, %v7614
    %v7669 = vadd.f32 %v7131, %v7619
    %v7670 = vadd.f32 %v7132, %v7622
    %v7671 = vadd.f32 %v7133, %v7627
    %v7672 = vadd.f32 %v7134, %v7630
    %v7673 = vadd.f32 %v7135, %v7635
    %v7674 = vadd.f32 %v7136, %v7638
    %v7675 = vadd.f32 %v7137, %v7643
    %v7676 = vadd.f32 %v7138, %v7646
    %v7677 = vadd.f32 %v7139, %v7651
    %v7678 = vadd.f32 %v7140, %v7654
    %v7679 = vadd.f32 %v7141, %v7659
    %v7680 = vadd.f32 %v7142, %v7662
    %v7681 = vld [vmem:[%s0] sm:$0xcc]
    %v7682 = vld [vmem:[%s0 + $0x8] sm:$0xc]
    %s7683 = scalar_lea.vmem %s5, 608
    %v7684 = vld [vmem:[%s7683] sm:$0xf]
    %v7685 = vld [vmem:[%s7683 + $0x4] sm:$0xf]
    %v7686 = vld [vmem:[%s7683 + $0x8] sm:$0xf]
    %v7687 = vld [vmem:[%s7683 + $0xc] sm:$0xf]
    %v7688 = vld [vmem:[%s7683 + $0x10] sm:$0xf]
    %v7689 = vld [vmem:[%s7683 + $0x14] sm:$0xf]
    %v7690 = vld [vmem:[%s7683 + $0x18] sm:$0xf]
    %v7691 = vld [vmem:[%s7683 + $0x1c] sm:$0xf]
    %v7692 = vld [vmem:[%s7683 + $0x20] sm:$0xf]
    %v7693 = vld [vmem:[%s7683 + $0x24] sm:$0xf]
    %v7694 = vld [vmem:[%s7683 + $0x28] sm:$0xf]
    %v7695 = vld [vmem:[%s7683 + $0x2c] sm:$0xf]
    %v7696 = vld [vmem:[%s7683 + $0x30] sm:$0xf]
    %v7697 = vld [vmem:[%s7683 + $0x34] sm:$0xf]
    %v7698 = vld [vmem:[%s7683 + $0x38] sm:$0xf]
    %v7699 = vld [vmem:[%s7683 + $0x3c] sm:$0xf]
    %v7700 = vld [vmem:[%s7683 + $0x40] sm:$0xf]
    %v7701 = vld [vmem:[%s7683 + $0x44] sm:$0xf]
    %v7702 = vld [vmem:[%s7683 + $0x48] sm:$0xf]
    %v7703 = vld [vmem:[%s7683 + $0x4c] sm:$0xf]
    %v7704 = vld [vmem:[%s7683 + $0x50] sm:$0xf]
    %v7705 = vld [vmem:[%s7683 + $0x54] sm:$0xf]
    %v7706 = vld [vmem:[%s7683 + $0x58] sm:$0xf]
    %v7707 = vld [vmem:[%s7683 + $0x5c] sm:$0xf]
    %v7708 = vld [vmem:[%s7683 + $0x60] sm:$0xf]
    %v7709 = vld [vmem:[%s7683 + $0x64] sm:$0xf]
    %v7710 = vld [vmem:[%s7683 + $0x68] sm:$0xf]
    %v7711 = vld [vmem:[%s7683 + $0x6c] sm:$0xf]
    %v7712 = vld [vmem:[%s7683 + $0x70] sm:$0xf]
    %v7713 = vld [vmem:[%s7683 + $0x74] sm:$0xf]
    %v7714 = vld [vmem:[%s7683 + $0x78] sm:$0xf]
    %v7715 = vld [vmem:[%s7683 + $0x7c] sm:$0xf]
    %v7716 = vld [vmem:[%s7683 + $0x80] sm:$0xf]
    %v7717 = vld [vmem:[%s7683 + $0x84] sm:$0xf]
    %v7718 = vld [vmem:[%s7683 + $0x88] sm:$0xf]
    %v7719 = vld [vmem:[%s7683 + $0x8c] sm:$0xf]
    %v7720 = vld [vmem:[%s7683 + $0x90] sm:$0xf]
    %v7721 = vld [vmem:[%s7683 + $0x94] sm:$0x3]
    %v7724 = vunpack.c.l.b16 %v7681
    %v7725 = vunpack.c.h.b16 %v7681
    %v7726 = vunpack.c.l.b16 %v7682
    %v7727 = vpack.c.b16 %v5724, %v7724
    %v7728 = vpack.c.b16 %v5725, %v7725
    %v7729 = vpack.c.b16 %v5726, %v7726
    %vm7730 = vcmask 1045504
    %v7731 = vrot.slane %v7727, 2
    %v7732 = vrot.slane %v5772, 2
    %v7733 = vsel %vm7730, %v7731, %v7732
    %v7734 = vrot.slane %v7728, 2
    %v7735 = vrot.slane %v5773, 2
    %v7736 = vsel %vm7730, %v7734, %v7735
    %v7737 = vrot.slane %v7729, 2
    %v7738 = vrot.slane %v5774, 2
    %v7739 = vsel %vm7730, %v7737, %v7738
    %v7740 = vrot.slane %v5775, 2
    %v7741 = vsel %vm7730, %v7732, %v7740
    %v7742 = vrot.slane %v5776, 2
    %v7743 = vsel %vm7730, %v7735, %v7742
    %v7744 = vrot.slane %v5777, 2
    %v7745 = vsel %vm7730, %v7738, %v7744
    %v7746 = vrot.slane %v5778, 2
    %v7747 = vsel %vm7730, %v7740, %v7746
    %v7748 = vrot.slane %v5779, 2
    %v7749 = vsel %vm7730, %v7742, %v7748
    %v7750 = vrot.slane %v5780, 2
    %v7751 = vsel %vm7730, %v7744, %v7750
    %v7752 = vrot.slane %v5781, 2
    %v7753 = vsel %vm7730, %v7746, %v7752
    %v7754 = vrot.slane %v5782, 2
    %v7755 = vsel %vm7730, %v7748, %v7754
    %v7756 = vrot.slane %v5783, 2
    %v7757 = vsel %vm7730, %v7750, %v7756
    %v7758 = vrot.slane %v5784, 2
    %v7759 = vsel %vm7730, %v7752, %v7758
    %v7760 = vrot.slane %v5785, 2
    %v7761 = vsel %vm7730, %v7754, %v7760
    %v7762 = vrot.slane %v5786, 2
    %v7763 = vsel %vm7730, %v7756, %v7762
    %v7764 = vrot.slane %v5787, 2
    %v7765 = vsel %vm7730, %v7758, %v7764
    %v7766 = vrot.slane %v5788, 2
    %v7767 = vsel %vm7730, %v7760, %v7766
    %v7768 = vrot.slane %v5789, 2
    %v7769 = vsel %vm7730, %v7762, %v7768
    %v7770 = vrot.slane %v7189, 2
    %v7771 = vsel %vm7730, %v7764, %v7770
    %v7772 = vrot.slane %v7190, 2
    %v7773 = vsel %vm7730, %v7766, %v7772
    %v7774 = vrot.slane %v7191, 2
    %v7775 = vsel %vm7730, %v7768, %v7774
    %v7830 = vunpack.c.l.b16 %v7684
    %v7831 = vunpack.c.l.b16 %v7685
    %v7832 = vunpack.c.l.b16 %v7686
    %v7833 = vunpack.c.l.b16 %v7687
    %v7834 = vunpack.c.l.b16 %v7688
    %v7835 = vunpack.c.l.b16 %v7689
    %v7836 = vunpack.c.l.b16 %v7690
    %v7837 = vunpack.c.l.b16 %v7691
    %v7838 = vunpack.c.l.b16 %v7692
    %v7839 = vunpack.c.l.b16 %v7693
    %v7840 = vunpack.c.l.b16 %v7694
    %v7841 = vunpack.c.l.b16 %v7695
    %v7842 = vunpack.c.l.b16 %v7696
    %v7843 = vunpack.c.l.b16 %v7697
    %v7844 = vunpack.c.l.b16 %v7698
    %v7845 = vunpack.c.l.b16 %v7699
    %v7846 = vunpack.c.l.b16 %v7700
    %v7847 = vunpack.c.l.b16 %v7701
    %v7848 = vunpack.c.l.b16 %v7702
    %v7849 = vunpack.c.l.b16 %v7703
    %v7850 = vunpack.c.l.b16 %v7704
    %v7851 = vunpack.c.l.b16 %v7705
    %v7852 = vunpack.c.l.b16 %v7706
    %v7853 = vunpack.c.l.b16 %v7707
    %v7854 = vunpack.c.l.b16 %v7708
    %v7855 = vunpack.c.l.b16 %v7709
    %v7856 = vunpack.c.l.b16 %v7710
    %v7857 = vunpack.c.l.b16 %v7711
    %v7858 = vunpack.c.l.b16 %v7712
    %v7859 = vunpack.c.l.b16 %v7713
    %v7860 = vunpack.c.l.b16 %v7714
    %v7861 = vunpack.c.l.b16 %v7715
    %v7862 = vunpack.c.l.b16 %v7716
    %v7863 = vunpack.c.l.b16 %v7717
    %v7864 = vunpack.c.l.b16 %v7718
    %v7865 = vunpack.c.l.b16 %v7719
    %v7866 = vunpack.c.l.b16 %v7720
    %v7867 = vunpack.c.l.b16 %v7721
    %v7868 = vpack.c.b16 %v7831, %v7830
    %v7869 = vpack.c.b16 %v7833, %v7832
    %v7870 = vpack.c.b16 %v7835, %v7834
    %v7871 = vpack.c.b16 %v7837, %v7836
    %v7872 = vpack.c.b16 %v7839, %v7838
    %v7873 = vpack.c.b16 %v7841, %v7840
    %v7874 = vpack.c.b16 %v7843, %v7842
    %v7875 = vpack.c.b16 %v7845, %v7844
    %v7876 = vpack.c.b16 %v7847, %v7846
    %v7877 = vpack.c.b16 %v7849, %v7848
    %v7878 = vpack.c.b16 %v7851, %v7850
    %v7879 = vpack.c.b16 %v7853, %v7852
    %v7880 = vpack.c.b16 %v7855, %v7854
    %v7881 = vpack.c.b16 %v7857, %v7856
    %v7882 = vpack.c.b16 %v7859, %v7858
    %v7883 = vpack.c.b16 %v7861, %v7860
    %v7884 = vpack.c.b16 %v7863, %v7862
    %v7885 = vpack.c.b16 %v7865, %v7864
    %v7886 = vpack.c.b16 %v7867, %v7866
    %v7906 = vsel %vm503, %v7739, 0
    %v7909 = vsel %vm503, %v7745, 0
    %v7912 = vsel %vm503, %v7751, 0
    %v7915 = vsel %vm503, %v7757, 0
    %v7918 = vsel %vm503, %v7763, 0
    %v7921 = vsel %vm503, %v7769, 0
    %v7924 = vsel %vm503, %v7775, 0
    %v7927 = vsel %vm503, %v7774, 0
    %v7930 = vsel %vm528, %v7886, 0
    %7932 = vmatprep.subr.bf16.mxu0 0
    %7933 = vmatpush1.bf16.msra.mxu0 %v7868
    %7934 = vmatprep.subr.bf16.mxu0 0
    %7935 = vmatpush1.bf16.msra.mxu0 %v7869
    %7936 = vmatprep.subr.bf16.mxu0 0
    %7937 = vmatpush1.bf16.msra.mxu0 %v7870
    %7938 = vmatprep.subr.bf16.mxu0 0
    %7939 = vmatpush1.bf16.msra.mxu0 %v7871
    %7940 = vmatprep.subr.bf16.mxu0 0
    %7941 = vmatpush1.bf16.msra.mxu0 %v7872
    %7942 = vmatprep.subr.bf16.mxu0 0
    %7943 = vmatpush1.bf16.msra.mxu0 %v7873
    %7944 = vmatprep.subr.bf16.mxu0 0
    %7945 = vmatpush1.bf16.msra.mxu0 %v7874
    %7946 = vmatprep.subr.bf16.mxu0 0
    %7947 = vmatpush1.bf16.msra.mxu0 %v7875
    %7948 = vmatprep.subr.bf16.mxu0 0
    %7949 = vmatpush1.bf16.msra.mxu0 %v7876
    %7950 = vmatprep.subr.bf16.mxu0 0
    %7951 = vmatpush1.bf16.msra.mxu0 %v7877
    %7952 = vmatprep.subr.bf16.mxu0 0
    %7953 = vmatpush1.bf16.msra.mxu0 %v7878
    %7954 = vmatprep.subr.bf16.mxu0 0
    %7955 = vmatpush1.bf16.msra.mxu0 %v7879
    %7956 = vmatprep.subr.bf16.mxu0 0
    %7957 = vmatpush1.bf16.msra.mxu0 %v7880
    %7958 = vmatprep.subr.bf16.mxu0 0
    %7959 = vmatpush1.bf16.msra.mxu0 %v7881
    %7960 = vmatprep.subr.bf16.mxu0 0
    %7961 = vmatpush1.bf16.msra.mxu0 %v7882
    %7962 = vmatprep.subr.bf16.mxu0 0
    %7963 = vmatpush1.bf16.msra.mxu0 %v7883
    %7964 = vmatprep.mubr.bf16.mxu0 %v7736
    %7965 = vmatmul.mubr.bf16.gmra.mrb[0].mxu0 %v7733
    %v7966 = vpop.f32.mrb[0].mxu0
    %v7967 = vadd.f32 0.0, %v7966
    %v7968 = vpop.f32.mrb[0].mxu0
    %v7969 = vpop.f32.mrb[0].mxu0
    %v7970 = vadd.f32 0.0, %v7969
    %v7971 = vpop.f32.mrb[0].mxu0
    %7972 = vmatprep.mubr.bf16.mxu0 %v7743
    %7973 = vmatmul.mubr.bf16.gmra.mrb[0].mxu0 %v7741
    %v7974 = vpop.f32.mrb[0].mxu0
    %v7975 = vadd.f32 0.0, %v7974
    %v7976 = vpop.f32.mrb[0].mxu0
    %v7977 = vpop.f32.mrb[0].mxu0
    %v7978 = vadd.f32 0.0, %v7977
    %v7979 = vpop.f32.mrb[0].mxu0
    %7980 = vmatprep.mubr.bf16.mxu0 %v7749
    %7981 = vmatmul.mubr.bf16.gmra.mrb[0].mxu0 %v7747
    %v7982 = vpop.f32.mrb[0].mxu0
    %v7983 = vadd.f32 0.0, %v7982
    %v7984 = vpop.f32.mrb[0].mxu0
    %v7985 = vpop.f32.mrb[0].mxu0
    %v7986 = vadd.f32 0.0, %v7985
    %v7987 = vpop.f32.mrb[0].mxu0
    %7988 = vmatprep.mubr.bf16.mxu0 %v7755
    %7989 = vmatmul.mubr.bf16.gmra.mrb[0].mxu0 %v7753
    %v7990 = vpop.f32.mrb[0].mxu0
    %v7991 = vadd.f32 0.0, %v7990
    %v7992 = vpop.f32.mrb[0].mxu0
    %v7993 = vpop.f32.mrb[0].mxu0
    %v7994 = vadd.f32 0.0, %v7993
    %v7995 = vpop.f32.mrb[0].mxu0
    %7996 = vmatprep.mubr.bf16.mxu0 %v7761
    %7997 = vmatmul.mubr.bf16.gmra.mrb[0].mxu0 %v7759
    %v7998 = vpop.f32.mrb[0].mxu0
    %v7999 = vadd.f32 0.0, %v7998
    %v8000 = vpop.f32.mrb[0].mxu0
    %v8001 = vpop.f32.mrb[0].mxu0
    %v8002 = vadd.f32 0.0, %v8001
    %v8003 = vpop.f32.mrb[0].mxu0
    %8004 = vmatprep.mubr.bf16.mxu0 %v7767
    %8005 = vmatmul.mubr.bf16.gmra.mrb[0].mxu0 %v7765
    %v8006 = vpop.f32.mrb[0].mxu0
    %v8007 = vadd.f32 0.0, %v8006
    %v8008 = vpop.f32.mrb[0].mxu0
    %v8009 = vpop.f32.mrb[0].mxu0
    %v8010 = vadd.f32 0.0, %v8009
    %v8011 = vpop.f32.mrb[0].mxu0
    %8012 = vmatprep.mubr.bf16.mxu0 %v7773
    %8013 = vmatmul.mubr.bf16.gmra.mrb[0].mxu0 %v7771
    %v8014 = vpop.f32.mrb[0].mxu0
    %v8015 = vadd.f32 0.0, %v8014
    %v8016 = vpop.f32.mrb[0].mxu0
    %v8017 = vpop.f32.mrb[0].mxu0
    %v8018 = vadd.f32 0.0, %v8017
    %v8019 = vpop.f32.mrb[0].mxu0
    %8020 = vmatprep.mubr.bf16.mxu0 %v7772
    %8021 = vmatmul.mubr.bf16.gmra.mrb[0].mxu0 %v7770
    %v8022 = vpop.f32.mrb[0].mxu0
    %v8023 = vadd.f32 0.0, %v8022
    %v8024 = vpop.f32.mrb[0].mxu0
    %v8025 = vpop.f32.mrb[0].mxu0
    %v8026 = vadd.f32 0.0, %v8025
    %v8027 = vpop.f32.mrb[0].mxu0
    %8028 = vdwg.mxu0
    %8029 = vmatprep.subr.bf16.mxu0 0
    %8030 = vmatpush1.bf16.msra.mxu0 %v7884
    %8031 = vmatprep.subr.bf16.mxu0 0
    %8032 = vmatpush1.bf16.msra.mxu0 %v7885
    %8033 = vmatprep.subr.bf16.mxu0 0
    %8034 = vmatpush1.bf16.msra.mxu0 %v7930
    %8035 = vmatprep.subr.bf16.mxu0 0
    %8036 = vmatpush1.bf16.msra.mxu0 0
    %8037 = vmatprep.subr.bf16.mxu0 0
    %8038 = vmatpush1.bf16.msra.mxu0 0
    %8039 = vmatprep.subr.bf16.mxu0 0
    %8040 = vmatpush1.bf16.msra.mxu0 0
    %8041 = vmatprep.subr.bf16.mxu0 0
    %8042 = vmatpush1.bf16.msra.mxu0 0
    %8043 = vmatprep.subr.bf16.mxu0 0
    %8044 = vmatpush1.bf16.msra.mxu0 0
    %8045 = vmatprep.subr.bf16.mxu0 0
    %8046 = vmatpush1.bf16.msra.mxu0 0
    %8047 = vmatprep.subr.bf16.mxu0 0
    %8048 = vmatpush1.bf16.msra.mxu0 0
    %8049 = vmatprep.subr.bf16.mxu0 0
    %8050 = vmatpush1.bf16.msra.mxu0 0
    %8051 = vmatprep.subr.bf16.mxu0 0
    %8052 = vmatpush1.bf16.msra.mxu0 0
    %8053 = vmatprep.subr.bf16.mxu0 0
    %8054 = vmatpush1.bf16.msra.mxu0 0
    %8055 = vmatprep.subr.bf16.mxu0 0
    %8056 = vmatpush1.bf16.msra.mxu0 0
    %8057 = vmatprep.subr.bf16.mxu0 0
    %8058 = vmatpush1.bf16.msra.mxu0 0
    %8059 = vmatprep.subr.bf16.mxu0 0
    %8060 = vmatpush1.bf16.msra.mxu0 0
    %8061 = vmatprep.mubr.bf16.mxu0 0
    %8062 = vmatmul.mubr.bf16.gmra.mrb[0].mxu0 %v7906
    %v8063 = vpop.f32.mrb[0].mxu0
    %v8064 = vadd.f32 %v7967, %v8063
    %v8065 = vpop.f32.mrb[0].mxu0
    %v8066 = vpop.f32.mrb[0].mxu0
    %v8067 = vadd.f32 %v7970, %v8066
    %v8068 = vpop.f32.mrb[0].mxu0
    %8069 = vmatprep.mubr.bf16.mxu0 0
    %8070 = vmatmul.mubr.bf16.gmra.mrb[0].mxu0 %v7909
    %v8071 = vpop.f32.mrb[0].mxu0
    %v8072 = vadd.f32 %v7975, %v8071
    %v8073 = vpop.f32.mrb[0].mxu0
    %v8074 = vpop.f32.mrb[0].mxu0
    %v8075 = vadd.f32 %v7978, %v8074
    %v8076 = vpop.f32.mrb[0].mxu0
    %8077 = vmatprep.mubr.bf16.mxu0 0
    %8078 = vmatmul.mubr.bf16.gmra.mrb[0].mxu0 %v7912
    %v8079 = vpop.f32.mrb[0].mxu0
    %v8080 = vadd.f32 %v7983, %v8079
    %v8081 = vpop.f32.mrb[0].mxu0
    %v8082 = vpop.f32.mrb[0].mxu0
    %v8083 = vadd.f32 %v7986, %v8082
    %v8084 = vpop.f32.mrb[0].mxu0
    %8085 = vmatprep.mubr.bf16.mxu0 0
    %8086 = vmatmul.mubr.bf16.gmra.mrb[0].mxu0 %v7915
    %v8087 = vpop.f32.mrb[0].mxu0
    %v8088 = vadd.f32 %v7991, %v8087
    %v8089 = vpop.f32.mrb[0].mxu0
    %v8090 = vpop.f32.mrb[0].mxu0
    %v8091 = vadd.f32 %v7994, %v8090
    %v8092 = vpop.f32.mrb[0].mxu0
    %8093 = vmatprep.mubr.bf16.mxu0 0
    %8094 = vmatmul.mubr.bf16.gmra.mrb[0].mxu0 %v7918
    %v8095 = vpop.f32.mrb[0].mxu0
    %v8096 = vadd.f32 %v7999, %v8095
    %v8097 = vpop.f32.mrb[0].mxu0
    %v8098 = vpop.f32.mrb[0].mxu0
    %v8099 = vadd.f32 %v8002, %v8098
    %v8100 = vpop.f32.mrb[0].mxu0
    %8101 = vmatprep.mubr.bf16.mxu0 0
    %8102 = vmatmul.mubr.bf16.gmra.mrb[0].mxu0 %v7921
    %v8103 = vpop.f32.mrb[0].mxu0
    %v8104 = vadd.f32 %v8007, %v8103
    %v8105 = vpop.f32.mrb[0].mxu0
    %v8106 = vpop.f32.mrb[0].mxu0
    %v8107 = vadd.f32 %v8010, %v8106
    %v8108 = vpop.f32.mrb[0].mxu0
    %8109 = vmatprep.mubr.bf16.mxu0 0
    %8110 = vmatmul.mubr.bf16.gmra.mrb[0].mxu0 %v7924
    %v8111 = vpop.f32.mrb[0].mxu0
    %v8112 = vadd.f32 %v8015, %v8111
    %v8113 = vpop.f32.mrb[0].mxu0
    %v8114 = vpop.f32.mrb[0].mxu0
    %v8115 = vadd.f32 %v8018, %v8114
    %v8116 = vpop.f32.mrb[0].mxu0
    %8117 = vmatprep.mubr.bf16.mxu0 0
    %8118 = vmatmul.mubr.bf16.gmra.mrb[0].mxu0 %v7927
    %v8119 = vpop.f32.mrb[0].mxu0
    %v8120 = vadd.f32 %v8023, %v8119
    %v8121 = vpop.f32.mrb[0].mxu0
    %v8122 = vpop.f32.mrb[0].mxu0
    %v8123 = vadd.f32 %v8026, %v8122
    %v8124 = vpop.f32.mrb[0].mxu0
    %8125 = vdwg.mxu0
    %v8126 = vadd.f32 %v7665, %v8064
    %v8127 = vadd.f32 %v7666, %v8067
    %v8128 = vadd.f32 %v7667, %v8072
    %v8129 = vadd.f32 %v7668, %v8075
    %v8130 = vadd.f32 %v7669, %v8080
    %v8131 = vadd.f32 %v7670, %v8083
    %v8132 = vadd.f32 %v7671, %v8088
    %v8133 = vadd.f32 %v7672, %v8091
    %v8134 = vadd.f32 %v7673, %v8096
    %v8135 = vadd.f32 %v7674, %v8099
    %v8136 = vadd.f32 %v7675, %v8104
    %v8137 = vadd.f32 %v7676, %v8107
    %v8138 = vadd.f32 %v7677, %v8112
    %v8139 = vadd.f32 %v7678, %v8115
    %v8140 = vadd.f32 %v7679, %v8120
    %v8141 = vadd.f32 %v7680, %v8123
    %v8142 = vld [vmem:[%s6] sm:$0x1]
    %v8144 = vlaneseq
    %v8145 = vshrl.u32 %v8144, 7
    %v8146 = vsub.s32 0, %v8145
    %v8147 = vrot.slane %v8142, %v8146
    %v8149 = vadd.f32 %v8126, %v8147
    %v8150 = vadd.f32 %v8127, %v8147
    %v8151 = vadd.f32 %v8128, %v8147
    %v8152 = vadd.f32 %v8129, %v8147
    %v8153 = vadd.f32 %v8130, %v8147
    %v8154 = vadd.f32 %v8131, %v8147
    %v8155 = vadd.f32 %v8132, %v8147
    %v8156 = vadd.f32 %v8133, %v8147
    %v8157 = vadd.f32 %v8134, %v8147
    %v8158 = vadd.f32 %v8135, %v8147
    %v8159 = vadd.f32 %v8136, %v8147
    %v8160 = vadd.f32 %v8137, %v8147
    %v8161 = vadd.f32 %v8138, %v8147
    %v8162 = vadd.f32 %v8139, %v8147
    %v8163 = vadd.f32 %v8140, %v8147
    %v8164 = vadd.f32 %v8141, %v8147
    %v8165 = vmax.f32 %v8149, 0.0
    %v8166 = vmax.f32 %v8150, 0.0
    %v8167 = vmax.f32 %v8151, 0.0
    %v8168 = vmax.f32 %v8152, 0.0
    %v8169 = vmax.f32 %v8153, 0.0
    %v8170 = vmax.f32 %v8154, 0.0
    %v8171 = vmax.f32 %v8155, 0.0
    %v8172 = vmax.f32 %v8156, 0.0
    %v8173 = vmax.f32 %v8157, 0.0
    %v8174 = vmax.f32 %v8158, 0.0
    %v8175 = vmax.f32 %v8159, 0.0
    %v8176 = vmax.f32 %v8160, 0.0
    %v8177 = vmax.f32 %v8161, 0.0
    %v8178 = vmax.f32 %v8162, 0.0
    %v8179 = vmax.f32 %v8163, 0.0
    %v8180 = vmax.f32 %v8164, 0.0
    %8181 = vst.msk [vmem:[#allocation2] sm:$0xff] %vm1852, 0.0
    %8182 = vst.msk [vmem:[#allocation2 + $0x8] sm:$0xff] %vm1852, 0.0
    %8183 = vst.msk [vmem:[#allocation2 + $0x10] sm:$0xff] %vm1852, 0.0
    %8184 = vst.msk [vmem:[#allocation2 + $0x18] sm:$0xff] %vm1852, 0.0
    %8185 = vst.msk [vmem:[#allocation2 + $0x20] sm:$0xff] %vm1852, 0.0
    %8186 = vst.msk [vmem:[#allocation2 + $0x28] sm:$0xff] %vm1852, 0.0
    %v8187 = vsel %vm1859, %v8165, -inf
    %v8188 = vrot.slane %v8187, 4
    %v8189 = vmax.f32 %v8187, %v8188
    %v8190 = vrot.slane %v8189, 2
    %v8191 = vmax.f32 %v8189, %v8190
    %v8192 = vrot.slane %v8191, 1
    %v8193 = vmax.f32 %v8191, %v8192
    %8194 = vst.msk [vmem:[#allocation2 + $0x1] sm:$0x1] %vm1867, %v8193
    %v8195 = vsel %vm1869, %v8165, -inf
    %v8196 = vrot.slane %v8195, 4
    %v8197 = vmax.f32 %v8195, %v8196
    %v8198 = vrot.slane %v8197, 2
    %v8199 = vmax.f32 %v8197, %v8198
    %v8200 = vrot.slane %v8199, 1
    %v8201 = vmax.f32 %v8199, %v8200
    %8202 = vst.msk [vmem:[#allocation2 + $0x2] sm:$0x1] %vm1867, %v8201
    %v8203 = vsel %vm1878, %v8165, -inf
    %v8204 = vrot.slane %v8203, 4
    %v8205 = vmax.f32 %v8203, %v8204
    %v8206 = vrot.slane %v8205, 2
    %v8207 = vmax.f32 %v8205, %v8206
    %v8208 = vrot.slane %v8207, 1
    %v8209 = vmax.f32 %v8207, %v8208
    %8210 = vst.msk [vmem:[#allocation2 + $0x3] sm:$0x1] %vm1867, %v8209
    %v8211 = vsel %vm1887, %v8166, -inf
    %v8212 = vrot.slane %v8211, 4
    %v8213 = vmax.f32 %v8211, %v8212
    %v8214 = vrot.slane %v8213, 2
    %v8215 = vmax.f32 %v8213, %v8214
    %v8216 = vrot.slane %v8215, 1
    %v8217 = vmax.f32 %v8215, %v8216
    %8218 = vst.msk [vmem:[#allocation2 + $0x4] sm:$0x1] %vm1867, %v8217
    %v8219 = vsel %vm1859, %v8167, -inf
    %v8220 = vrot.slane %v8219, 4
    %v8221 = vmax.f32 %v8219, %v8220
    %v8222 = vrot.slane %v8221, 2
    %v8223 = vmax.f32 %v8221, %v8222
    %v8224 = vrot.slane %v8223, 1
    %v8225 = vmax.f32 %v8223, %v8224
    %8226 = vst.msk [vmem:[#allocation2 + $0x7] sm:$0x1] %vm1867, %v8225
    %v8227 = vsel %vm1869, %v8167, -inf
    %v8228 = vrot.slane %v8227, 4
    %v8229 = vmax.f32 %v8227, %v8228
    %v8230 = vrot.slane %v8229, 2
    %v8231 = vmax.f32 %v8229, %v8230
    %v8232 = vrot.slane %v8231, 1
    %v8233 = vmax.f32 %v8231, %v8232
    %8234 = vst.msk [vmem:[#allocation2 + $0x8] sm:$0x1] %vm1867, %v8233
    %v8235 = vsel %vm1878, %v8167, -inf
    %v8236 = vrot.slane %v8235, 4
    %v8237 = vmax.f32 %v8235, %v8236
    %v8238 = vrot.slane %v8237, 2
    %v8239 = vmax.f32 %v8237, %v8238
    %v8240 = vrot.slane %v8239, 1
    %v8241 = vmax.f32 %v8239, %v8240
    %8242 = vst.msk [vmem:[#allocation2 + $0x9] sm:$0x1] %vm1867, %v8241
    %v8243 = vsel %vm1887, %v8168, -inf
    %v8244 = vrot.slane %v8243, 4
    %v8245 = vmax.f32 %v8243, %v8244
    %v8246 = vrot.slane %v8245, 2
    %v8247 = vmax.f32 %v8245, %v8246
    %v8248 = vrot.slane %v8247, 1
    %v8249 = vmax.f32 %v8247, %v8248
    %8250 = vst.msk [vmem:[#allocation2 + $0xa] sm:$0x1] %vm1867, %v8249
    %v8251 = vsel %vm1859, %v8169, -inf
    %v8252 = vrot.slane %v8251, 4
    %v8253 = vmax.f32 %v8251, %v8252
    %v8254 = vrot.slane %v8253, 2
    %v8255 = vmax.f32 %v8253, %v8254
    %v8256 = vrot.slane %v8255, 1
    %v8257 = vmax.f32 %v8255, %v8256
    %8258 = vst.msk [vmem:[#allocation2 + $0xd] sm:$0x1] %vm1867, %v8257
    %v8259 = vsel %vm1869, %v8169, -inf
    %v8260 = vrot.slane %v8259, 4
    %v8261 = vmax.f32 %v8259, %v8260
    %v8262 = vrot.slane %v8261, 2
    %v8263 = vmax.f32 %v8261, %v8262
    %v8264 = vrot.slane %v8263, 1
    %v8265 = vmax.f32 %v8263, %v8264
    %8266 = vst.msk [vmem:[#allocation2 + $0xe] sm:$0x1] %vm1867, %v8265
    %v8267 = vsel %vm1878, %v8169, -inf
    %v8268 = vrot.slane %v8267, 4
    %v8269 = vmax.f32 %v8267, %v8268
    %v8270 = vrot.slane %v8269, 2
    %v8271 = vmax.f32 %v8269, %v8270
    %v8272 = vrot.slane %v8271, 1
    %v8273 = vmax.f32 %v8271, %v8272
    %8274 = vst.msk [vmem:[#allocation2 + $0xf] sm:$0x1] %vm1867, %v8273
    %v8275 = vsel %vm1887, %v8170, -inf
    %v8276 = vrot.slane %v8275, 4
    %v8277 = vmax.f32 %v8275, %v8276
    %v8278 = vrot.slane %v8277, 2
    %v8279 = vmax.f32 %v8277, %v8278
    %v8280 = vrot.slane %v8279, 1
    %v8281 = vmax.f32 %v8279, %v8280
    %8282 = vst.msk [vmem:[#allocation2 + $0x10] sm:$0x1] %vm1867, %v8281
    %v8283 = vsel %vm1859, %v8171, -inf
    %v8284 = vrot.slane %v8283, 4
    %v8285 = vmax.f32 %v8283, %v8284
    %v8286 = vrot.slane %v8285, 2
    %v8287 = vmax.f32 %v8285, %v8286
    %v8288 = vrot.slane %v8287, 1
    %v8289 = vmax.f32 %v8287, %v8288
    %8290 = vst.msk [vmem:[#allocation2 + $0x13] sm:$0x1] %vm1867, %v8289
    %v8291 = vsel %vm1869, %v8171, -inf
    %v8292 = vrot.slane %v8291, 4
    %v8293 = vmax.f32 %v8291, %v8292
    %v8294 = vrot.slane %v8293, 2
    %v8295 = vmax.f32 %v8293, %v8294
    %v8296 = vrot.slane %v8295, 1
    %v8297 = vmax.f32 %v8295, %v8296
    %8298 = vst.msk [vmem:[#allocation2 + $0x14] sm:$0x1] %vm1867, %v8297
    %v8299 = vsel %vm1878, %v8171, -inf
    %v8300 = vrot.slane %v8299, 4
    %v8301 = vmax.f32 %v8299, %v8300
    %v8302 = vrot.slane %v8301, 2
    %v8303 = vmax.f32 %v8301, %v8302
    %v8304 = vrot.slane %v8303, 1
    %v8305 = vmax.f32 %v8303, %v8304
    %8306 = vst.msk [vmem:[#allocation2 + $0x15] sm:$0x1] %vm1867, %v8305
    %v8307 = vsel %vm1887, %v8172, -inf
    %v8308 = vrot.slane %v8307, 4
    %v8309 = vmax.f32 %v8307, %v8308
    %v8310 = vrot.slane %v8309, 2
    %v8311 = vmax.f32 %v8309, %v8310
    %v8312 = vrot.slane %v8311, 1
    %v8313 = vmax.f32 %v8311, %v8312
    %8314 = vst.msk [vmem:[#allocation2 + $0x16] sm:$0x1] %vm1867, %v8313
    %v8315 = vsel %vm1859, %v8173, -inf
    %v8316 = vrot.slane %v8315, 4
    %v8317 = vmax.f32 %v8315, %v8316
    %v8318 = vrot.slane %v8317, 2
    %v8319 = vmax.f32 %v8317, %v8318
    %v8320 = vrot.slane %v8319, 1
    %v8321 = vmax.f32 %v8319, %v8320
    %8322 = vst.msk [vmem:[#allocation2 + $0x19] sm:$0x1] %vm1867, %v8321
    %v8323 = vsel %vm1869, %v8173, -inf
    %v8324 = vrot.slane %v8323, 4
    %v8325 = vmax.f32 %v8323, %v8324
    %v8326 = vrot.slane %v8325, 2
    %v8327 = vmax.f32 %v8325, %v8326
    %v8328 = vrot.slane %v8327, 1
    %v8329 = vmax.f32 %v8327, %v8328
    %8330 = vst.msk [vmem:[#allocation2 + $0x1a] sm:$0x1] %vm1867, %v8329
    %v8331 = vsel %vm1878, %v8173, -inf
    %v8332 = vrot.slane %v8331, 4
    %v8333 = vmax.f32 %v8331, %v8332
    %v8334 = vrot.slane %v8333, 2
    %v8335 = vmax.f32 %v8333, %v8334
    %v8336 = vrot.slane %v8335, 1
    %v8337 = vmax.f32 %v8335, %v8336
    %8338 = vst.msk [vmem:[#allocation2 + $0x1b] sm:$0x1] %vm1867, %v8337
    %v8339 = vsel %vm1887, %v8174, -inf
    %v8340 = vrot.slane %v8339, 4
    %v8341 = vmax.f32 %v8339, %v8340
    %v8342 = vrot.slane %v8341, 2
    %v8343 = vmax.f32 %v8341, %v8342
    %v8344 = vrot.slane %v8343, 1
    %v8345 = vmax.f32 %v8343, %v8344
    %8346 = vst.msk [vmem:[#allocation2 + $0x1c] sm:$0x1] %vm1867, %v8345
    %v8347 = vsel %vm1859, %v8175, -inf
    %v8348 = vrot.slane %v8347, 4
    %v8349 = vmax.f32 %v8347, %v8348
    %v8350 = vrot.slane %v8349, 2
    %v8351 = vmax.f32 %v8349, %v8350
    %v8352 = vrot.slane %v8351, 1
    %v8353 = vmax.f32 %v8351, %v8352
    %8354 = vst.msk [vmem:[#allocation2 + $0x1f] sm:$0x1] %vm1867, %v8353
    %v8355 = vsel %vm1869, %v8175, -inf
    %v8356 = vrot.slane %v8355, 4
    %v8357 = vmax.f32 %v8355, %v8356
    %v8358 = vrot.slane %v8357, 2
    %v8359 = vmax.f32 %v8357, %v8358
    %v8360 = vrot.slane %v8359, 1
    %v8361 = vmax.f32 %v8359, %v8360
    %8362 = vst.msk [vmem:[#allocation2 + $0x20] sm:$0x1] %vm1867, %v8361
    %v8363 = vsel %vm1878, %v8175, -inf
    %v8364 = vrot.slane %v8363, 4
    %v8365 = vmax.f32 %v8363, %v8364
    %v8366 = vrot.slane %v8365, 2
    %v8367 = vmax.f32 %v8365, %v8366
    %v8368 = vrot.slane %v8367, 1
    %v8369 = vmax.f32 %v8367, %v8368
    %8370 = vst.msk [vmem:[#allocation2 + $0x21] sm:$0x1] %vm1867, %v8369
    %v8371 = vsel %vm1887, %v8176, -inf
    %v8372 = vrot.slane %v8371, 4
    %v8373 = vmax.f32 %v8371, %v8372
    %v8374 = vrot.slane %v8373, 2
    %v8375 = vmax.f32 %v8373, %v8374
    %v8376 = vrot.slane %v8375, 1
    %v8377 = vmax.f32 %v8375, %v8376
    %8378 = vst.msk [vmem:[#allocation2 + $0x22] sm:$0x1] %vm1867, %v8377
    %v8379 = vsel %vm1859, %v8177, -inf
    %v8380 = vrot.slane %v8379, 4
    %v8381 = vmax.f32 %v8379, %v8380
    %v8382 = vrot.slane %v8381, 2
    %v8383 = vmax.f32 %v8381, %v8382
    %v8384 = vrot.slane %v8383, 1
    %v8385 = vmax.f32 %v8383, %v8384
    %8386 = vst.msk [vmem:[#allocation2 + $0x25] sm:$0x1] %vm1867, %v8385
    %v8387 = vsel %vm1869, %v8177, -inf
    %v8388 = vrot.slane %v8387, 4
    %v8389 = vmax.f32 %v8387, %v8388
    %v8390 = vrot.slane %v8389, 2
    %v8391 = vmax.f32 %v8389, %v8390
    %v8392 = vrot.slane %v8391, 1
    %v8393 = vmax.f32 %v8391, %v8392
    %8394 = vst.msk [vmem:[#allocation2 + $0x26] sm:$0x1] %vm1867, %v8393
    %v8395 = vsel %vm1878, %v8177, -inf
    %v8396 = vrot.slane %v8395, 4
    %v8397 = vmax.f32 %v8395, %v8396
    %v8398 = vrot.slane %v8397, 2
    %v8399 = vmax.f32 %v8397, %v8398
    %v8400 = vrot.slane %v8399, 1
    %v8401 = vmax.f32 %v8399, %v8400
    %8402 = vst.msk [vmem:[#allocation2 + $0x27] sm:$0x1] %vm1867, %v8401
    %v8403 = vsel %vm1887, %v8178, -inf
    %v8404 = vrot.slane %v8403, 4
    %v8405 = vmax.f32 %v8403, %v8404
    %v8406 = vrot.slane %v8405, 2
    %v8407 = vmax.f32 %v8405, %v8406
    %v8408 = vrot.slane %v8407, 1
    %v8409 = vmax.f32 %v8407, %v8408
    %8410 = vst.msk [vmem:[#allocation2 + $0x28] sm:$0x1] %vm1867, %v8409
    %v8411 = vsel %vm1859, %v8179, -inf
    %v8412 = vrot.slane %v8411, 4
    %v8413 = vmax.f32 %v8411, %v8412
    %v8414 = vrot.slane %v8413, 2
    %v8415 = vmax.f32 %v8413, %v8414
    %v8416 = vrot.slane %v8415, 1
    %v8417 = vmax.f32 %v8415, %v8416
    %8418 = vst.msk [vmem:[#allocation2 + $0x2b] sm:$0x1] %vm1867, %v8417
    %v8419 = vsel %vm1869, %v8179, -inf
    %v8420 = vrot.slane %v8419, 4
    %v8421 = vmax.f32 %v8419, %v8420
    %v8422 = vrot.slane %v8421, 2
    %v8423 = vmax.f32 %v8421, %v8422
    %v8424 = vrot.slane %v8423, 1
    %v8425 = vmax.f32 %v8423, %v8424
    %8426 = vst.msk [vmem:[#allocation2 + $0x2c] sm:$0x1] %vm1867, %v8425
    %v8427 = vsel %vm1878, %v8179, -inf
    %v8428 = vrot.slane %v8427, 4
    %v8429 = vmax.f32 %v8427, %v8428
    %v8430 = vrot.slane %v8429, 2
    %v8431 = vmax.f32 %v8429, %v8430
    %v8432 = vrot.slane %v8431, 1
    %v8433 = vmax.f32 %v8431, %v8432
    %8434 = vst.msk [vmem:[#allocation2 + $0x2d] sm:$0x1] %vm1867, %v8433
    %v8435 = vsel %vm1887, %v8180, -inf
    %v8436 = vrot.slane %v8435, 4
    %v8437 = vmax.f32 %v8435, %v8436
    %v8438 = vrot.slane %v8437, 2
    %v8439 = vmax.f32 %v8437, %v8438
    %v8440 = vrot.slane %v8439, 1
    %v8441 = vmax.f32 %v8439, %v8440
    %8442 = vst.msk [vmem:[#allocation2 + $0x2e] sm:$0x1] %vm1867, %v8441
    %v8443 = vld [vmem:[#allocation2] sm:$0xff]
    %v8444 = vld [vmem:[#allocation2 + $0x8] sm:$0xff]
    %v8445 = vld [vmem:[#allocation2 + $0x10] sm:$0xff]
    %v8446 = vld [vmem:[#allocation2 + $0x18] sm:$0xff]
    %v8447 = vld [vmem:[#allocation2 + $0x20] sm:$0xff]
    %v8448 = vld [vmem:[#allocation2 + $0x28] sm:$0x3f]
    %v8449 = vld [vmem:[#allocation10] sm:$0xff]
    %v8450 = vld [vmem:[#allocation10 + $0x8] sm:$0xff]
    %v8451 = vld [vmem:[#allocation10 + $0x10] sm:$0xff]
    %v8452 = vld [vmem:[#allocation10 + $0x18] sm:$0xff]
    %v8453 = vld [vmem:[#allocation10 + $0x20] sm:$0xff]
    %v8454 = vld [vmem:[#allocation10 + $0x28] sm:$0xff]
    %v8455 = vld [vmem:[#allocation10 + $0x30] sm:$0xff]
    %v8456 = vld [vmem:[#allocation10 + $0x38] sm:$0xff]
    %v8457 = vld [vmem:[#allocation2 + $0x1] sm:$0xff]
    %v8458 = vld [vmem:[#allocation2 + $0x9] sm:$0xff]
    %v8459 = vld [vmem:[#allocation2 + $0x11] sm:$0xff]
    %v8460 = vld [vmem:[#allocation2 + $0x19] sm:$0xff]
    %v8461 = vld [vmem:[#allocation2 + $0x21] sm:$0xff]
    %v8462 = vld [vmem:[#allocation2 + $0x29] sm:$0x3f]
    %s8463 = scalar_lea.vmem [#allocation10], 64
    %v8464 = vld [vmem:[%s8463] sm:$0xff]
    %v8465 = vld [vmem:[%s8463 + $0x8] sm:$0xff]
    %v8466 = vld [vmem:[%s8463 + $0x10] sm:$0xff]
    %v8467 = vld [vmem:[%s8463 + $0x18] sm:$0xff]
    %v8468 = vld [vmem:[%s8463 + $0x20] sm:$0xff]
    %v8469 = vld [vmem:[%s8463 + $0x28] sm:$0xff]
    %v8470 = vld [vmem:[%s8463 + $0x30] sm:$0xff]
    %v8471 = vld [vmem:[%s8463 + $0x38] sm:$0xff]
    %v8473 = vsel %vm1852, %v8457, 0
    %v8476 = vsel %vm1852, %v8458, 0
    %v8479 = vsel %vm1852, %v8459, 0
    %v8482 = vsel %vm1852, %v8460, 0
    %v8485 = vsel %vm1852, %v8461, 0
    %v8488 = vsel %vm1852, %v8462, 0
    %8490 = vmatprep.subr.mxu0 0.0
    %8491 = vmatpush1.msra.mxu0 %v8464
    %8492 = vmatprep.subr.mxu0 0.0
    %8493 = vmatpush1.msra.mxu0 %v8465
    %8494 = vmatprep.subr.mxu0 0.0
    %8495 = vmatpush1.msra.mxu0 %v8466
    %8496 = vmatprep.subr.mxu0 0.0
    %8497 = vmatpush1.msra.mxu0 %v8467
    %8498 = vmatprep.subr.mxu0 0.0
    %8499 = vmatpush1.msra.mxu0 %v8468
    %8500 = vmatprep.subr.mxu0 0.0
    %8501 = vmatpush1.msra.mxu0 %v8469
    %8502 = vmatprep.subr.mxu0 0.0
    %8503 = vmatpush1.msra.mxu0 %v8470
    %8504 = vmatprep.subr.mxu0 0.0
    %8505 = vmatpush1.msra.mxu0 %v8471
    %8506 = vmatprep.subr.mxu0 0.0
    %8507 = vmatpush1.msra.mxu0 0.0
    %8508 = vmatprep.subr.mxu0 0.0
    %8509 = vmatpush1.msra.mxu0 0.0
    %8510 = vmatprep.subr.mxu0 0.0
    %8511 = vmatpush1.msra.mxu0 0.0
    %8512 = vmatprep.subr.mxu0 0.0
    %8513 = vmatpush1.msra.mxu0 0.0
    %8514 = vmatprep.subr.mxu0 0.0
    %8515 = vmatpush1.msra.mxu0 0.0
    %8516 = vmatprep.subr.mxu0 0.0
    %8517 = vmatpush1.msra.mxu0 0.0
    %8518 = vmatprep.subr.mxu0 0.0
    %8519 = vmatpush1.msra.mxu0 0.0
    %8520 = vmatprep.subr.mxu0 0.0
    %8521 = vmatpush1.msra.mxu0 0.0
    %8522 = vmatprep.subr.mxu0 0.0
    %8523 = vmatpush1.msra.mxu0 0.0
    %8524 = vmatprep.subr.mxu0 0.0
    %8525 = vmatpush1.msra.mxu0 0.0
    %8526 = vmatprep.subr.mxu0 0.0
    %8527 = vmatpush1.msra.mxu0 0.0
    %8528 = vmatprep.subr.mxu0 0.0
    %8529 = vmatpush1.msra.mxu0 0.0
    %8530 = vmatprep.subr.mxu0 0.0
    %8531 = vmatpush1.msra.mxu0 0.0
    %8532 = vmatprep.subr.mxu0 0.0
    %8533 = vmatpush1.msra.mxu0 0.0
    %8534 = vmatprep.subr.mxu0 0.0
    %8535 = vmatpush1.msra.mxu0 0.0
    %8536 = vmatprep.subr.mxu0 0.0
    %8537 = vmatpush1.msra.mxu0 0.0
    %8538 = vmatprep.subr.mxu0 0.0
    %8539 = vmatpush1.msra.mxu0 0.0
    %8540 = vmatprep.subr.mxu0 0.0
    %8541 = vmatpush1.msra.mxu0 0.0
    %8542 = vmatprep.subr.mxu0 0.0
    %8543 = vmatpush1.msra.mxu0 0.0
    %8544 = vmatprep.subr.mxu0 0.0
    %8545 = vmatpush1.msra.mxu0 0.0
    %8546 = vmatprep.subr.mxu0 0.0
    %8547 = vmatpush1.msra.mxu0 0.0
    %8548 = vmatprep.subr.mxu0 0.0
    %8549 = vmatpush1.msra.mxu0 0.0
    %8550 = vmatprep.subr.mxu0 0.0
    %8551 = vmatpush1.msra.mxu0 0.0
    %8552 = vmatprep.subr.mxu0 0.0
    %8553 = vmatpush1.msra.mxu0 0.0
    %8554 = vmatprep.mubr.f32.mxu0 0.0
    %8555 = vmatmul.mubr.f32.gmra.mrb[0].mxu0 %v8473
    %v8556 = vpop.f32.mrb[0].mxu0
    %v8557 = vadd.f32 0.0, %v8556
    %v8558 = vpop.f32.mrb[0].mxu0
    %8559 = vmatprep.mubr.f32.mxu0 0.0
    %8560 = vmatmul.mubr.f32.gmra.mrb[0].mxu0 %v8476
    %v8561 = vpop.f32.mrb[0].mxu0
    %v8562 = vadd.f32 0.0, %v8561
    %v8563 = vpop.f32.mrb[0].mxu0
    %8564 = vmatprep.mubr.f32.mxu0 0.0
    %8565 = vmatmul.mubr.f32.gmra.mrb[0].mxu0 %v8479
    %v8566 = vpop.f32.mrb[0].mxu0
    %v8567 = vadd.f32 0.0, %v8566
    %v8568 = vpop.f32.mrb[0].mxu0
    %8569 = vmatprep.mubr.f32.mxu0 0.0
    %8570 = vmatmul.mubr.f32.gmra.mrb[0].mxu0 %v8482
    %v8571 = vpop.f32.mrb[0].mxu0
    %v8572 = vadd.f32 0.0, %v8571
    %v8573 = vpop.f32.mrb[0].mxu0
    %8574 = vmatprep.mubr.f32.mxu0 0.0
    %8575 = vmatmul.mubr.f32.gmra.mrb[0].mxu0 %v8485
    %v8576 = vpop.f32.mrb[0].mxu0
    %v8577 = vadd.f32 0.0, %v8576
    %v8578 = vpop.f32.mrb[0].mxu0
    %8579 = vmatprep.mubr.f32.mxu0 0.0
    %8580 = vmatmul.mubr.f32.gmra.mrb[0].mxu0 %v8488
    %v8581 = vpop.f32.mrb[0].mxu0
    %v8582 = vadd.f32 0.0, %v8581
    %v8583 = vpop.f32.mrb[0].mxu0
    %8584 = vdwg.mxu0
    %v8586 = vsel %vm1852, %v8443, 0
    %v8589 = vsel %vm1852, %v8444, 0
    %v8592 = vsel %vm1852, %v8445, 0
    %v8595 = vsel %vm1852, %v8446, 0
    %v8598 = vsel %vm1852, %v8447, 0
    %v8601 = vsel %vm1852, %v8448, 0
    %8603 = vmatprep.subr.mxu0 0.0
    %8604 = vmatpush1.msra.mxu0 %v8449
    %8605 = vmatprep.subr.mxu0 0.0
    %8606 = vmatpush1.msra.mxu0 %v8450
    %8607 = vmatprep.subr.mxu0 0.0
    %8608 = vmatpush1.msra.mxu0 %v8451
    %8609 = vmatprep.subr.mxu0 0.0
    %8610 = vmatpush1.msra.mxu0 %v8452
    %8611 = vmatprep.subr.mxu0 0.0
    %8612 = vmatpush1.msra.mxu0 %v8453
    %8613 = vmatprep.subr.mxu0 0.0
    %8614 = vmatpush1.msra.mxu0 %v8454
    %8615 = vmatprep.subr.mxu0 0.0
    %8616 = vmatpush1.msra.mxu0 %v8455
    %8617 = vmatprep.subr.mxu0 0.0
    %8618 = vmatpush1.msra.mxu0 %v8456
    %8619 = vmatprep.subr.mxu0 0.0
    %8620 = vmatpush1.msra.mxu0 0.0
    %8621 = vmatprep.subr.mxu0 0.0
    %8622 = vmatpush1.msra.mxu0 0.0
    %8623 = vmatprep.subr.mxu0 0.0
    %8624 = vmatpush1.msra.mxu0 0.0
    %8625 = vmatprep.subr.mxu0 0.0
    %8626 = vmatpush1.msra.mxu0 0.0
    %8627 = vmatprep.subr.mxu0 0.0
    %8628 = vmatpush1.msra.mxu0 0.0
    %8629 = vmatprep.subr.mxu0 0.0
    %8630 = vmatpush1.msra.mxu0 0.0
    %8631 = vmatprep.subr.mxu0 0.0
    %8632 = vmatpush1.msra.mxu0 0.0
    %8633 = vmatprep.subr.mxu0 0.0
    %8634 = vmatpush1.msra.mxu0 0.0
    %8635 = vmatprep.subr.mxu0 0.0
    %8636 = vmatpush1.msra.mxu0 0.0
    %8637 = vmatprep.subr.mxu0 0.0
    %8638 = vmatpush1.msra.mxu0 0.0
    %8639 = vmatprep.subr.mxu0 0.0
    %8640 = vmatpush1.msra.mxu0 0.0
    %8641 = vmatprep.subr.mxu0 0.0
    %8642 = vmatpush1.msra.mxu0 0.0
    %8643 = vmatprep.subr.mxu0 0.0
    %8644 = vmatpush1.msra.mxu0 0.0
    %8645 = vmatprep.subr.mxu0 0.0
    %8646 = vmatpush1.msra.mxu0 0.0
    %8647 = vmatprep.subr.mxu0 0.0
    %8648 = vmatpush1.msra.mxu0 0.0
    %8649 = vmatprep.subr.mxu0 0.0
    %8650 = vmatpush1.msra.mxu0 0.0
    %8651 = vmatprep.subr.mxu0 0.0
    %8652 = vmatpush1.msra.mxu0 0.0
    %8653 = vmatprep.subr.mxu0 0.0
    %8654 = vmatpush1.msra.mxu0 0.0
    %8655 = vmatprep.subr.mxu0 0.0
    %8656 = vmatpush1.msra.mxu0 0.0
    %8657 = vmatprep.subr.mxu0 0.0
    %8658 = vmatpush1.msra.mxu0 0.0
    %8659 = vmatprep.subr.mxu0 0.0
    %8660 = vmatpush1.msra.mxu0 0.0
    %8661 = vmatprep.subr.mxu0 0.0
    %8662 = vmatpush1.msra.mxu0 0.0
    %8663 = vmatprep.subr.mxu0 0.0
    %8664 = vmatpush1.msra.mxu0 0.0
    %8665 = vmatprep.subr.mxu0 0.0
    %8666 = vmatpush1.msra.mxu0 0.0
    %8667 = vmatprep.mubr.f32.mxu0 0.0
    %8668 = vmatmul.mubr.f32.gmra.mrb[0].mxu0 %v8586
    %v8669 = vpop.f32.mrb[0].mxu0
    %v8670 = vadd.f32 %v8557, %v8669
    %v8671 = vpop.f32.mrb[0].mxu0
    %8672 = vmatprep.mubr.f32.mxu0 0.0
    %8673 = vmatmul.mubr.f32.gmra.mrb[0].mxu0 %v8589
    %v8674 = vpop.f32.mrb[0].mxu0
    %v8675 = vadd.f32 %v8562, %v8674
    %v8676 = vpop.f32.mrb[0].mxu0
    %8677 = vmatprep.mubr.f32.mxu0 0.0
    %8678 = vmatmul.mubr.f32.gmra.mrb[0].mxu0 %v8592
    %v8679 = vpop.f32.mrb[0].mxu0
    %v8680 = vadd.f32 %v8567, %v8679
    %v8681 = vpop.f32.mrb[0].mxu0
    %8682 = vmatprep.mubr.f32.mxu0 0.0
    %8683 = vmatmul.mubr.f32.gmra.mrb[0].mxu0 %v8595
    %v8684 = vpop.f32.mrb[0].mxu0
    %v8685 = vadd.f32 %v8572, %v8684
    %v8686 = vpop.f32.mrb[0].mxu0
    %8687 = vmatprep.mubr.f32.mxu0 0.0
    %8688 = vmatmul.mubr.f32.gmra.mrb[0].mxu0 %v8598
    %v8689 = vpop.f32.mrb[0].mxu0
    %v8690 = vadd.f32 %v8577, %v8689
    %v8691 = vpop.f32.mrb[0].mxu0
    %8692 = vmatprep.mubr.f32.mxu0 0.0
    %8693 = vmatmul.mubr.f32.gmra.mrb[0].mxu0 %v8601
    %v8694 = vpop.f32.mrb[0].mxu0
    %v8695 = vadd.f32 %v8582, %v8694
    %v8696 = vpop.f32.mrb[0].mxu0
    %8697 = vdwg.mxu0
    %v8698 = vld [vmem:[#allocation2 + $0x2] sm:$0xff]
    %v8699 = vld [vmem:[#allocation2 + $0xa] sm:$0xff]
    %v8700 = vld [vmem:[#allocation2 + $0x12] sm:$0xff]
    %v8701 = vld [vmem:[#allocation2 + $0x1a] sm:$0xff]
    %v8702 = vld [vmem:[#allocation2 + $0x22] sm:$0xff]
    %v8703 = vld [vmem:[#allocation2 + $0x2a] sm:$0x3f]
    %s8704 = scalar_lea.vmem [#allocation10], 128
    %v8705 = vld [vmem:[%s8704] sm:$0xff]
    %v8706 = vld [vmem:[%s8704 + $0x8] sm:$0xff]
    %v8707 = vld [vmem:[%s8704 + $0x10] sm:$0xff]
    %v8708 = vld [vmem:[%s8704 + $0x18] sm:$0xff]
    %v8709 = vld [vmem:[%s8704 + $0x20] sm:$0xff]
    %v8710 = vld [vmem:[%s8704 + $0x28] sm:$0xff]
    %v8711 = vld [vmem:[%s8704 + $0x30] sm:$0xff]
    %v8712 = vld [vmem:[%s8704 + $0x38] sm:$0xff]
    %v8714 = vsel %vm1852, %v8698, 0
    %v8717 = vsel %vm1852, %v8699, 0
    %v8720 = vsel %vm1852, %v8700, 0
    %v8723 = vsel %vm1852, %v8701, 0
    %v8726 = vsel %vm1852, %v8702, 0
    %v8729 = vsel %vm1852, %v8703, 0
    %8731 = vmatprep.subr.mxu0 0.0
    %8732 = vmatpush1.msra.mxu0 %v8705
    %8733 = vmatprep.subr.mxu0 0.0
    %8734 = vmatpush1.msra.mxu0 %v8706
    %8735 = vmatprep.subr.mxu0 0.0
    %8736 = vmatpush1.msra.mxu0 %v8707
    %8737 = vmatprep.subr.mxu0 0.0
    %8738 = vmatpush1.msra.mxu0 %v8708
    %8739 = vmatprep.subr.mxu0 0.0
    %8740 = vmatpush1.msra.mxu0 %v8709
    %8741 = vmatprep.subr.mxu0 0.0
    %8742 = vmatpush1.msra.mxu0 %v8710
    %8743 = vmatprep.subr.mxu0 0.0
    %8744 = vmatpush1.msra.mxu0 %v8711
    %8745 = vmatprep.subr.mxu0 0.0
    %8746 = vmatpush1.msra.mxu0 %v8712
    %8747 = vmatprep.subr.mxu0 0.0
    %8748 = vmatpush1.msra.mxu0 0.0
    %8749 = vmatprep.subr.mxu0 0.0
    %8750 = vmatpush1.msra.mxu0 0.0
    %8751 = vmatprep.subr.mxu0 0.0
    %8752 = vmatpush1.msra.mxu0 0.0
    %8753 = vmatprep.subr.mxu0 0.0
    %8754 = vmatpush1.msra.mxu0 0.0
    %8755 = vmatprep.subr.mxu0 0.0
    %8756 = vmatpush1.msra.mxu0 0.0
    %8757 = vmatprep.subr.mxu0 0.0
    %8758 = vmatpush1.msra.mxu0 0.0
    %8759 = vmatprep.subr.mxu0 0.0
    %8760 = vmatpush1.msra.mxu0 0.0
    %8761 = vmatprep.subr.mxu0 0.0
    %8762 = vmatpush1.msra.mxu0 0.0
    %8763 = vmatprep.subr.mxu0 0.0
    %8764 = vmatpush1.msra.mxu0 0.0
    %8765 = vmatprep.subr.mxu0 0.0
    %8766 = vmatpush1.msra.mxu0 0.0
    %8767 = vmatprep.subr.mxu0 0.0
    %8768 = vmatpush1.msra.mxu0 0.0
    %8769 = vmatprep.subr.mxu0 0.0
    %8770 = vmatpush1.msra.mxu0 0.0
    %8771 = vmatprep.subr.mxu0 0.0
    %8772 = vmatpush1.msra.mxu0 0.0
    %8773 = vmatprep.subr.mxu0 0.0
    %8774 = vmatpush1.msra.mxu0 0.0
    %8775 = vmatprep.subr.mxu0 0.0
    %8776 = vmatpush1.msra.mxu0 0.0
    %8777 = vmatprep.subr.mxu0 0.0
    %8778 = vmatpush1.msra.mxu0 0.0
    %8779 = vmatprep.subr.mxu0 0.0
    %8780 = vmatpush1.msra.mxu0 0.0
    %8781 = vmatprep.subr.mxu0 0.0
    %8782 = vmatpush1.msra.mxu0 0.0
    %8783 = vmatprep.subr.mxu0 0.0
    %8784 = vmatpush1.msra.mxu0 0.0
    %8785 = vmatprep.subr.mxu0 0.0
    %8786 = vmatpush1.msra.mxu0 0.0
    %8787 = vmatprep.subr.mxu0 0.0
    %8788 = vmatpush1.msra.mxu0 0.0
    %8789 = vmatprep.subr.mxu0 0.0
    %8790 = vmatpush1.msra.mxu0 0.0
    %8791 = vmatprep.subr.mxu0 0.0
    %8792 = vmatpush1.msra.mxu0 0.0
    %8793 = vmatprep.subr.mxu0 0.0
    %8794 = vmatpush1.msra.mxu0 0.0
    %8795 = vmatprep.mubr.f32.mxu0 0.0
    %8796 = vmatmul.mubr.f32.gmra.mrb[0].mxu0 %v8714
    %v8797 = vpop.f32.mrb[0].mxu0
    %v8798 = vadd.f32 0.0, %v8797
    %v8799 = vpop.f32.mrb[0].mxu0
    %8800 = vmatprep.mubr.f32.mxu0 0.0
    %8801 = vmatmul.mubr.f32.gmra.mrb[0].mxu0 %v8717
    %v8802 = vpop.f32.mrb[0].mxu0
    %v8803 = vadd.f32 0.0, %v8802
    %v8804 = vpop.f32.mrb[0].mxu0
    %8805 = vmatprep.mubr.f32.mxu0 0.0
    %8806 = vmatmul.mubr.f32.gmra.mrb[0].mxu0 %v8720
    %v8807 = vpop.f32.mrb[0].mxu0
    %v8808 = vadd.f32 0.0, %v8807
    %v8809 = vpop.f32.mrb[0].mxu0
    %8810 = vmatprep.mubr.f32.mxu0 0.0
    %8811 = vmatmul.mubr.f32.gmra.mrb[0].mxu0 %v8723
    %v8812 = vpop.f32.mrb[0].mxu0
    %v8813 = vadd.f32 0.0, %v8812
    %v8814 = vpop.f32.mrb[0].mxu0
    %8815 = vmatprep.mubr.f32.mxu0 0.0
    %8816 = vmatmul.mubr.f32.gmra.mrb[0].mxu0 %v8726
    %v8817 = vpop.f32.mrb[0].mxu0
    %v8818 = vadd.f32 0.0, %v8817
    %v8819 = vpop.f32.mrb[0].mxu0
    %8820 = vmatprep.mubr.f32.mxu0 0.0
    %8821 = vmatmul.mubr.f32.gmra.mrb[0].mxu0 %v8729
    %v8822 = vpop.f32.mrb[0].mxu0
    %v8823 = vadd.f32 0.0, %v8822
    %v8824 = vpop.f32.mrb[0].mxu0
    %8825 = vdwg.mxu0
    %v8826 = vadd.f32 %v8670, %v8798
    %v8827 = vadd.f32 %v8675, %v8803
    %v8828 = vadd.f32 %v8680, %v8808
    %v8829 = vadd.f32 %v8685, %v8813
    %v8830 = vadd.f32 %v8690, %v8818
    %v8831 = vadd.f32 %v8695, %v8823
    %v8832 = vld [vmem:[%s12] sm:$0x1]
    %v8834 = vlaneseq
    %v8835 = vshrl.u32 %v8834, 7
    %v8836 = vsub.s32 0, %v8835
    %v8837 = vrot.slane %v8832, %v8836
    %v8839 = vadd.f32 %v8826, %v8837
    %v8840 = vadd.f32 %v8827, %v8837
    %v8841 = vadd.f32 %v8828, %v8837
    %v8842 = vadd.f32 %v8829, %v8837
    %v8843 = vadd.f32 %v8830, %v8837
    %v8844 = vadd.f32 %v8831, %v8837
    %v8845 = vmax.f32 %v8839, 0.0
    %v8846 = vmax.f32 %v8840, 0.0
    %v8847 = vmax.f32 %v8841, 0.0
    %v8848 = vmax.f32 %v8842, 0.0
    %v8849 = vmax.f32 %v8843, 0.0
    %v8850 = vmax.f32 %v8844, 0.0
    %v8851 = vsel %vm2528, %v8845, -inf
    %v8852 = vrot.slane %v8851, 4
    %v8853 = vmax.f32 %v8851, %v8852
    %v8854 = vrot.slane %v8853, 2
    %v8855 = vmax.f32 %v8853, %v8854
    %v8856 = vrot.slane %v8855, 1
    %v8857 = vmax.f32 %v8855, %v8856
    %8858 = vst [vmem:[%s13 + $0x10] sm:$0x1] %v8857
    %v8859 = vsel %vm2537, %v8845, -inf
    %v8860 = vsel %vm2539, %v8846, -inf
    %v8861 = vmax.f32 %v8859, %v8860
    %v8862 = vrot.slane %v8861, 4
    %v8863 = vmax.f32 %v8861, %v8862
    %v8864 = vrot.slane %v8863, 2
    %v8865 = vmax.f32 %v8863, %v8864
    %v8866 = vrot.slane %v8865, 1
    %v8867 = vmax.f32 %v8865, %v8866
    %8868 = vst [vmem:[%s13 + $0x11] sm:$0x1] %v8867
    %v8869 = vsel %vm2549, %v8846, -inf
    %v8870 = vrot.slane %v8869, 4
    %v8871 = vmax.f32 %v8869, %v8870
    %v8872 = vrot.slane %v8871, 2
    %v8873 = vmax.f32 %v8871, %v8872
    %v8874 = vrot.slane %v8873, 1
    %v8875 = vmax.f32 %v8873, %v8874
    %8876 = vst [vmem:[%s13 + $0x12] sm:$0x1] %v8875
    %v8877 = vsel %vm2558, %v8847, -inf
    %v8878 = vrot.slane %v8877, 4
    %v8879 = vmax.f32 %v8877, %v8878
    %v8880 = vrot.slane %v8879, 2
    %v8881 = vmax.f32 %v8879, %v8880
    %v8882 = vrot.slane %v8881, 1
    %v8883 = vmax.f32 %v8881, %v8882
    %8884 = vst [vmem:[%s13 + $0x13] sm:$0x1] %v8883
    %v8885 = vsel %vm2528, %v8848, -inf
    %v8886 = vrot.slane %v8885, 4
    %v8887 = vmax.f32 %v8885, %v8886
    %v8888 = vrot.slane %v8887, 2
    %v8889 = vmax.f32 %v8887, %v8888
    %v8890 = vrot.slane %v8889, 1
    %v8891 = vmax.f32 %v8889, %v8890
    %8892 = vst [vmem:[%s13 + $0x14] sm:$0x1] %v8891
    %v8893 = vsel %vm2537, %v8848, -inf
    %v8894 = vsel %vm2539, %v8849, -inf
    %v8895 = vmax.f32 %v8893, %v8894
    %v8896 = vrot.slane %v8895, 4
    %v8897 = vmax.f32 %v8895, %v8896
    %v8898 = vrot.slane %v8897, 2
    %v8899 = vmax.f32 %v8897, %v8898
    %v8900 = vrot.slane %v8899, 1
    %v8901 = vmax.f32 %v8899, %v8900
    %8902 = vst [vmem:[%s13 + $0x15] sm:$0x1] %v8901
    %v8903 = vsel %vm2549, %v8849, -inf
    %v8904 = vrot.slane %v8903, 4
    %v8905 = vmax.f32 %v8903, %v8904
    %v8906 = vrot.slane %v8905, 2
    %v8907 = vmax.f32 %v8905, %v8906
    %v8908 = vrot.slane %v8907, 1
    %v8909 = vmax.f32 %v8907, %v8908
    %8910 = vst [vmem:[%s13 + $0x16] sm:$0x1] %v8909
    %v8911 = vsel %vm2558, %v8850, -inf
    %v8912 = vrot.slane %v8911, 4
    %v8913 = vmax.f32 %v8911, %v8912
    %v8914 = vrot.slane %v8913, 2
    %v8915 = vmax.f32 %v8913, %v8914
    %v8916 = vrot.slane %v8915, 1
    %v8917 = vmax.f32 %v8915, %v8916
    %8918 = vst [vmem:[%s13 + $0x17] sm:$0x1] %v8917
    // Predicated region
    $region74: #{_lambda_.1} parent=1 // pred_check
      _
    $region75: #{_lambda_.1} parent=1 // pred_check_branch
      %8920 = sbr.rel (0) target = $region77
    $region76: #{_lambda_.1} parent=1 // pred_region
      _
    $region77: #{_lambda_.1} parent=1 // pred_fallthru
      _
    // Predicated region
    $region78: #{_lambda_.1} parent=1 // pred_check
      _
    $region79: #{_lambda_.1} parent=1 // pred_check_branch
      %8922 = sbr.rel (0) target = $region81
    $region80: #{_lambda_.1} parent=1 // pred_region
      _
    $region81: #{_lambda_.1} parent=1 // pred_fallthru
      _
    %8923 = vsyncpa [#allocation4], 1
    %8924 = vsyncpa [#allocation6], 1
    %8925 = vsyncpa [#allocation9], 1

</llo_original>
